<compile_context>
chip_gen: v6e
topology: v6e:2x2x1
jax: 0.10.0
libtpu: 0.0.40
codegen_flags: <defaults>
</compile_context>

<pallas_src>
import functools

import jax
import jax.numpy as jnp
from jax import lax
from jax.experimental import pallas as pl
from jax.experimental.pallas import tpu as pltpu

EPS = 1e-5


# --------------------------------------------------------------------------- #
# Fused matmul kernels (MXU in bf16, f32 accumulation).
#   "relu":    Conv2d -> (pre-folded) BatchNorm2d -> ReLU
#   "relu_bn": Linear -> ReLU -> BatchNorm1d (eval)
# --------------------------------------------------------------------------- #
def _mm_relu_kernel(x_ref, w_ref, b_ref, o_ref):
    y = jnp.dot(x_ref[...].astype(jnp.bfloat16), w_ref[...],
                preferred_element_type=jnp.float32)
    o_ref[...] = jnp.maximum(y + b_ref[...], 0.0)


def _mm_relu_bn_kernel(x_ref, w_ref, b_ref, s_ref, t_ref, o_ref):
    y = jnp.dot(x_ref[...].astype(jnp.bfloat16), w_ref[...],
                preferred_element_type=jnp.float32)
    o_ref[...] = jnp.maximum(y + b_ref[...], 0.0) * s_ref[...] + t_ref[...]


def matmul_fused(x, w, b, scale=None, shift=None, mode="relu", tm=512):
    """x: (M, K) f32, w: (K, N) bf16 (pre-cast), b/scale/shift: (1, N) f32."""
    M, K = x.shape
    N = w.shape[1]
    # Full-array block for modest M (avoids a mostly-padded remainder tile),
    # otherwise 512-row tiles over a software-pipelined "parallel" grid.
    bm = M if M <= 2 * tm else tm
    grid_m = pl.cdiv(M, bm)
    if mode == "relu":
        kernel = _mm_relu_kernel
        args = (x, w, b)
        in_specs = [
            pl.BlockSpec((bm, K), lambda i: (i, 0)),
            pl.BlockSpec((K, N), lambda i: (0, 0)),
            pl.BlockSpec((1, N), lambda i: (0, 0)),
        ]
    else:  # "relu_bn"
        kernel = _mm_relu_bn_kernel
        args = (x, w, b, scale, shift)
        in_specs = [
            pl.BlockSpec((bm, K), lambda i: (i, 0)),
            pl.BlockSpec((K, N), lambda i: (0, 0)),
            pl.BlockSpec((1, N), lambda i: (0, 0)),
            pl.BlockSpec((1, N), lambda i: (0, 0)),
            pl.BlockSpec((1, N), lambda i: (0, 0)),
        ]
    return pl.pallas_call(
        kernel,
        out_shape=jax.ShapeDtypeStruct((M, N), jnp.float32),
        grid=(grid_m,),
        in_specs=in_specs,
        out_specs=pl.BlockSpec((bm, N), lambda i: (i, 0)),
        compiler_params=pltpu.CompilerParams(dimension_semantics=("parallel",)),
    )(*args)


# --------------------------------------------------------------------------- #
# Fused bidirectional nn.LSTM layer: input projection for both directions +
# full time recurrence + combined (T, B, 2R) output, all in one kernel.
# PyTorch gate order: i, f, g, o.
# --------------------------------------------------------------------------- #
def _bilstm_kernel(x_ref, wx_ref, b_ref, wh_ref, o_ref,
                   xw_sc, hf, cf, hr, cr, of_sc, or_sc):
    T, B, _ = x_ref.shape
    R = o_ref.shape[-1] // 2
    unroll = min(T, 8)

    # Fused input projection: xw[t] = x[t] @ [W_ih_f^T | W_ih_r^T] + biases.
    def proj(t, carry):
        xw_sc[t] = jnp.dot(x_ref[t].astype(jnp.bfloat16), wx_ref[...],
                           preferred_element_type=jnp.float32) + b_ref[...]
        return carry

    lax.fori_loop(0, T, proj, 0, unroll=unroll)

    hf[...] = jnp.zeros_like(hf)
    cf[...] = jnp.zeros_like(cf)
    hr[...] = jnp.zeros_like(hr)
    cr[...] = jnp.zeros_like(cr)

    def cell(gates, c_prev):
        i = jax.nn.sigmoid(gates[:, 0 * R:1 * R])
        f = jax.nn.sigmoid(gates[:, 1 * R:2 * R])
        g = jnp.tanh(gates[:, 2 * R:3 * R])
        o = jax.nn.sigmoid(gates[:, 3 * R:4 * R])
        c = f * c_prev + i * g
        return o * jnp.tanh(c), c

    def step(s, carry):
        tr = T - 1 - s
        # One block-diagonal (B, 2R) @ (2R, 8R) dot covers both directions.
        h_cat = jnp.concatenate([hf[...], hr[...]], axis=-1).astype(jnp.bfloat16)
        gh = jnp.dot(h_cat, wh_ref[...], preferred_element_type=jnp.float32)
        gf = xw_sc[s][:, :4 * R] + gh[:, :4 * R]
        gr = xw_sc[tr][:, 4 * R:] + gh[:, 4 * R:]

        h_f, c_f = cell(gf, cf[...])
        hf[...] = h_f
        cf[...] = c_f
        of_sc[s] = h_f

        h_r, c_r = cell(gr, cr[...])
        hr[...] = h_r
        cr[...] = c_r
        or_sc[tr] = h_r
        return carry

    lax.fori_loop(0, T, step, 0, unroll=unroll)
    # Single combined output store (fwd | rev), no wrapper-side concatenate.
    o_ref[...] = jnp.concatenate([of_sc[...], or_sc[...]], axis=-1)


def bilstm(x, lp):
    # x: (T, B, In) time-major -> (T, B, 2R): fwd in [..., :R], rev in [..., R:].
    T, B, In = x.shape
    R = lp["whh_big"].shape[0] // 2
    return pl.pallas_call(
        _bilstm_kernel,
        out_shape=jax.ShapeDtypeStruct((T, B, 2 * R), jnp.float32),
        grid=(1,),
        in_specs=[
            pl.BlockSpec((T, B, In), lambda i: (0, 0, 0)),
            pl.BlockSpec((In, 8 * R), lambda i: (0, 0)),
            pl.BlockSpec((1, 8 * R), lambda i: (0, 0)),
            pl.BlockSpec((2 * R, 8 * R), lambda i: (0, 0)),
        ],
        out_specs=pl.BlockSpec((T, B, 2 * R), lambda i: (0, 0, 0)),
        scratch_shapes=[
            pltpu.VMEM((T, B, 8 * R), jnp.float32),   # gate slab (in-kernel only)
            pltpu.VMEM((B, R), jnp.float32),          # h fwd
            pltpu.VMEM((B, R), jnp.float32),          # c fwd
            pltpu.VMEM((B, R), jnp.float32),          # h rev
            pltpu.VMEM((B, R), jnp.float32),          # c rev
            pltpu.VMEM((T, B, R), jnp.float32),       # out fwd
            pltpu.VMEM((T, B, R), jnp.float32),       # out rev
        ],
        compiler_params=pltpu.CompilerParams(dimension_semantics=("arbitrary",)),
    )(x, lp["w_in"], lp["b"], lp["whh_big"])


# --------------------------------------------------------------------------- #
# Fused ConvBLSTM (kernel_size=(3,1), same padding): 3-tap spatial input conv,
# both directions, full time recurrence and combined output in one kernel.
# ConvLSTM cell gate order: i, f, o, g.  Rows = folded (B * Hsp) axis; per-batch
# spatial boundaries are masked.
# --------------------------------------------------------------------------- #
def _convblstm_kernel(x_ref, wx_ref, b_ref, wh_ref, o_ref,
                      xz_sc, hf, cf, hr, cr, of_sc, or_sc, *, hsp):
    T, BH, _ = x_ref.shape
    hid = o_ref.shape[-1] // 2
    unroll = min(T, 8)

    # Spatial-neighbour validity masks (zero padding at first/last row of each
    # batch item in the folded row axis).  Hoisted out of the loops.
    row = lax.broadcasted_iota(jnp.int32, (BH, 1), 0)
    has_up = (row % hsp) != 0
    has_dn = (row % hsp) != (hsp - 1)

    def shifted(v):
        z = jnp.zeros((1, v.shape[-1]), v.dtype)
        up = jnp.where(has_up, jnp.concatenate([z, v[:-1, :]], axis=0), 0.0)
        dn = jnp.where(has_dn, jnp.concatenate([v[1:, :], z], axis=0), 0.0)
        return up, dn

    # Fused input conv for both directions: xz[t] = [x_up|x|x_dn] @ wx_big + b.
    def proj(t, carry):
        xt = x_ref[t]
        up, dn = shifted(xt)
        xcat = jnp.concatenate([up, xt, dn], axis=-1).astype(jnp.bfloat16)
        xz_sc[t] = jnp.dot(xcat, wx_ref[...],
                           preferred_element_type=jnp.float32) + b_ref[...]
        return carry

    lax.fori_loop(0, T, proj, 0, unroll=unroll)

    hf[...] = jnp.zeros_like(hf)
    cf[...] = jnp.zeros_like(cf)
    hr[...] = jnp.zeros_like(hr)
    cr[...] = jnp.zeros_like(cr)

    def cell(gates, c_prev):
        i = jax.nn.sigmoid(gates[:, 0 * hid:1 * hid])
        f = jax.nn.sigmoid(gates[:, 1 * hid:2 * hid])
        o = jax.nn.sigmoid(gates[:, 2 * hid:3 * hid])
        g = jnp.tanh(gates[:, 3 * hid:4 * hid])
        c = f * c_prev + i * g
        return o * jnp.tanh(c), c

    def step(s, carry):
        tr = T - 1 - s
        hf_v = hf[...]
        hr_v = hr[...]
        hf_up, hf_dn = shifted(hf_v)
        hr_up, hr_dn = shifted(hr_v)
        # Single (BH, 6*hid) @ (6*hid, 8*hid) block-diagonal dot for both dirs.
        h_cat = jnp.concatenate(
            [hf_up, hf_v, hf_dn, hr_up, hr_v, hr_dn], axis=-1).astype(jnp.bfloat16)
        gh = jnp.dot(h_cat, wh_ref[...], preferred_element_type=jnp.float32)
        gf = xz_sc[s][:, :4 * hid] + gh[:, :4 * hid]
        gr = xz_sc[tr][:, 4 * hid:] + gh[:, 4 * hid:]

        h_f, c_f = cell(gf, cf[...])
        hf[...] = h_f
        cf[...] = c_f
        of_sc[s] = h_f

        h_r, c_r = cell(gr, cr[...])
        hr[...] = h_r
        cr[...] = c_r
        or_sc[tr] = h_r
        return carry

    lax.fori_loop(0, T, step, 0, unroll=unroll)
    o_ref[...] = jnp.concatenate([of_sc[...], or_sc[...]], axis=-1)


def conv_blstm(y, cp):
    # y: (B, Hsp, T, Cin) channels-last conv output (spatial Hsp, time T).
    B, Hsp, T, Cin = y.shape
    hid = cp["wh_big"].shape[1] // 8
    xs = jnp.transpose(y, (2, 0, 1, 3)).reshape(T, B * Hsp, Cin)   # time-major rows
    out = pl.pallas_call(
        functools.partial(_convblstm_kernel, hsp=Hsp),
        out_shape=jax.ShapeDtypeStruct((T, B * Hsp, 2 * hid), jnp.float32),
        grid=(1,),
        in_specs=[
            pl.BlockSpec((T, B * Hsp, Cin), lambda i: (0, 0, 0)),
            pl.BlockSpec((3 * Cin, 8 * hid), lambda i: (0, 0)),
            pl.BlockSpec((1, 8 * hid), lambda i: (0, 0)),
            pl.BlockSpec((6 * hid, 8 * hid), lambda i: (0, 0)),
        ],
        out_specs=pl.BlockSpec((T, B * Hsp, 2 * hid), lambda i: (0, 0, 0)),
        scratch_shapes=[
            pltpu.VMEM((T, B * Hsp, 8 * hid), jnp.float32),
            pltpu.VMEM((B * Hsp, hid), jnp.float32),
            pltpu.VMEM((B * Hsp, hid), jnp.float32),
            pltpu.VMEM((B * Hsp, hid), jnp.float32),
            pltpu.VMEM((B * Hsp, hid), jnp.float32),
            pltpu.VMEM((T, B * Hsp, hid), jnp.float32),
            pltpu.VMEM((T, B * Hsp, hid), jnp.float32),
        ],
        compiler_params=pltpu.CompilerParams(dimension_semantics=("arbitrary",)),
    )(xs, cp["wx_big"], cp["b"], cp["wh_big"])
    # Natural layout (feature index = h*2hid + c); the PyTorch c*Hsp+h
    # permutation is folded into lstm_1's input weight at parameter-prep time.
    return out.reshape(T, B, Hsp * 2 * hid)


# --------------------------------------------------------------------------- #
# Glue helpers
# --------------------------------------------------------------------------- #
def im2col_nhwc(x, kh, kw, sh, sw):
    # x: (B, H, W, C) -> rows (B*Ho*Wo, kh*kw*C); column index = (ki*kw + kj)*C + c
    B, H, W, C = x.shape
    Ho = (H - kh) // sh + 1
    Wo = (W - kw) // sw + 1
    pats = []
    for i in range(kh):
        for j in range(kw):
            pats.append(x[:, i:i + sh * Ho:sh, j:j + sw * Wo:sw, :])
    p = jnp.concatenate(pats, axis=-1)
    return p.reshape(B * Ho * Wo, kh * kw * C), Ho, Wo


def conv_w2d(w):
    # PyTorch (Cout, Cin, kh, kw) -> (kh*kw*Cin, Cout), matching im2col_nhwc cols.
    co, ci, kh, kw = w.shape
    return jnp.transpose(w, (2, 3, 1, 0)).reshape(kh * kw * ci, co)


def bn_fold(bnp):
    gamma, beta, mean, var = bnp
    scale = gamma / jnp.sqrt(var + EPS)
    shift = beta - mean * scale
    return scale, shift


def _block_diag(a, b):
    ra, ca = a.shape
    rb, cb = b.shape
    out = jnp.zeros((ra + rb, ca + cb), jnp.float32)
    out = out.at[:ra, :ca].set(a)
    out = out.at[ra:, ca:].set(b)
    return out


# --------------------------------------------------------------------------- #
# One-time parameter preparation (runs OUTSIDE the jitted forward):
# BN folding, im2col weight layout, per-direction weight fusion, lstm_1 input
# permutation, bf16 casts.
# --------------------------------------------------------------------------- #
def prepare_params(p, hsp):
    q = {}
    # Conv blocks: fold BatchNorm2d into the f32 weight/bias, then cast to bf16.
    for i in (1, 2):
        w2d = conv_w2d(p[f"conv{i}_w"])
        s, t = bn_fold(p[f"bn2d_{i}"])
        q[f"conv{i}_w"] = (w2d * s[None, :]).astype(jnp.bfloat16)
        q[f"conv{i}_b"] = (p[f"conv{i}_b"] * s + t).reshape(1, -1).astype(jnp.float32)

    # ConvBLSTM: split conv-over-[x,h] into x-part / h-part, fuse directions.
    c = p["clstm"]
    hid = c["wf"].shape[0] // 4
    cin = c["wf"].shape[1] - hid

    def split(dw):
        wx = jnp.transpose(dw[:, :cin, :, 0], (2, 1, 0)).reshape(3 * cin, 4 * hid)
        wh = jnp.transpose(dw[:, cin:, :, 0], (2, 1, 0)).reshape(3 * hid, 4 * hid)
        return wx, wh

    wxf, whf = split(c["wf"])
    wxr, whr = split(c["wr"])
    q["clstm"] = {
        "wx_big": jnp.concatenate([wxf, wxr], axis=1).astype(jnp.bfloat16),
        "wh_big": _block_diag(whf, whr).astype(jnp.bfloat16),
        "b": jnp.concatenate([c["bf"], c["br"]]).reshape(1, -1).astype(jnp.float32),
    }

    # BiLSTM layers + Linear/ReLU/BatchNorm1d projections.
    for l in (1, 2, 3):
        lp = p[f"lstm_{l}"]
        R = lp["whh_f"].shape[1]
        w_in = jnp.concatenate([lp["wih_f"].T, lp["wih_r"].T], axis=1)  # (In, 8R)
        if l == 1:
            # Absorb the ConvBLSTM output permutation (PyTorch feature index
            # c*Hsp + h -> kernel-natural h*C + c) into the input weight rows.
            In = w_in.shape[0]
            ch = In // hsp
            w_in = w_in.reshape(ch, hsp, 8 * R).transpose(1, 0, 2).reshape(In, 8 * R)
        q[f"lstm_{l}"] = {
            "w_in": w_in.astype(jnp.bfloat16),
            "whh_big": _block_diag(lp["whh_f"].T, lp["whh_r"].T).astype(jnp.bfloat16),
            "b": jnp.concatenate([lp["bih_f"] + lp["bhh_f"],
                                  lp["bih_r"] + lp["bhh_r"]]).reshape(1, -1),
        }
        pr = p[f"proj_{l}"]
        s, t = bn_fold(p[f"bn1d_{l}"])
        q[f"proj_{l}"] = {
            "w": pr["w"].T.astype(jnp.bfloat16),
            "b": pr["b"].reshape(1, -1).astype(jnp.float32),
            "scale": s.reshape(1, -1).astype(jnp.float32),
            "shift": t.reshape(1, -1).astype(jnp.float32),
        }
    return q


# --------------------------------------------------------------------------- #
# Encoder forward (uses prepared params only)
# --------------------------------------------------------------------------- #
def encoder_forward(x, p):
    B, T, D = x.shape
    xc = jnp.transpose(x, (0, 2, 1))[..., None]                 # (B, D, T, 1) NHWC

    # Conv block 1: Conv2d(1->32, k3, s2) + (folded) BN + ReLU  (Dropout = identity)
    cols, H1, W1 = im2col_nhwc(xc, 3, 3, 2, 2)
    y = matmul_fused(cols, p["conv1_w"], p["conv1_b"],
                     mode="relu").reshape(B, H1, W1, 32)

    # Conv block 2
    cols, H2, W2 = im2col_nhwc(y, 3, 3, 2, 2)
    y = matmul_fused(cols, p["conv2_w"], p["conv2_b"],
                     mode="relu").reshape(B, H2, W2, 32)

    # ConvBLSTM over time = W2, spatial = H2 -> time-major (Tp, B, 608).
    out = conv_blstm(y, p["clstm"])
    Tp = W2

    # Three (BiLSTM -> Linear -> ReLU -> BatchNorm1d) blocks, all time-major.
    for l in range(1, 4):
        out = bilstm(out, p[f"lstm_{l}"])                       # (Tp, B, 2R)
        pr = p[f"proj_{l}"]
        F = out.shape[-1]
        out = matmul_fused(out.reshape(Tp * B, F), pr["w"], pr["b"],
                           pr["scale"], pr["shift"],
                           mode="relu_bn").reshape(Tp, B, -1)
    return jnp.transpose(out, (1, 0, 2))                        # (B, Tp, 2R)


# --------------------------------------------------------------------------- #
# Deterministic synthetic PyTorch-layout parameters
# --------------------------------------------------------------------------- #
def init_params(key, R, D):
    keys = iter(jax.random.split(key, 64))

    def nrm(shape, s=0.1):
        return s * jax.random.normal(next(keys), shape, jnp.float32)

    def bn(c):
        return (1.0 + nrm((c,)), nrm((c,)),
                jnp.zeros((c,), jnp.float32), jnp.ones((c,), jnp.float32))

    p = {}
    p["conv1_w"] = nrm((32, 1, 3, 3))
    p["conv1_b"] = nrm((32,))
    p["bn2d_1"] = bn(32)
    p["conv2_w"] = nrm((32, 32, 3, 3))
    p["conv2_b"] = nrm((32,))
    p["bn2d_2"] = bn(32)

    hid = 32 // 2  # ConvBLSTM: hidden_channels // 2 per direction
    p["clstm"] = {"wf": nrm((4 * hid, 32 + hid, 3, 1)), "bf": nrm((4 * hid,)),
                  "wr": nrm((4 * hid, 32 + hid, 3, 1)), "br": nrm((4 * hid,))}

    H1 = (D - 3) // 2 + 1
    H2 = (H1 - 3) // 2 + 1
    emb = 2 * hid * H2                                          # 608 for D=80
    ins = [emb, 2 * R, 2 * R]
    for l in (1, 2, 3):
        In = ins[l - 1]
        p[f"lstm_{l}"] = {
            "wih_f": nrm((4 * R, In)), "whh_f": nrm((4 * R, R)),
            "bih_f": nrm((4 * R,)), "bhh_f": nrm((4 * R,)),
            "wih_r": nrm((4 * R, In)), "whh_r": nrm((4 * R, R)),
            "bih_r": nrm((4 * R,)), "bhh_r": nrm((4 * R,)),
        }
        p[f"proj_{l}"] = {"w": nrm((2 * R, 2 * R)), "b": nrm((2 * R,))}
        p[f"bn1d_{l}"] = bn(2 * R)
    return p, H2


if __name__ == "__main__":
    key = jax.random.PRNGKey(0)
    kx, kp = jax.random.split(key)
    # (B, encoder_T, dim): dim=80 so that 32 * H2 == embedding_size == 608.
    B, T, D = 2, 16, 80
    R = 32  # rnn_hidden_size, bidirectional=True
    x = jax.random.normal(kx, (B, T, D), jnp.float32)

    raw_params, H2 = init_params(kp, R=R, D=D)
    params = prepare_params(raw_params, hsp=H2)   # one-time folding, outside jit

    fwd = jax.jit(encoder_forward)
    out = jax.block_until_ready(fwd(x, params))

    Tp = (((T - 3) // 2 + 1) - 3) // 2 + 1                      # decoder_T = 3
    assert out.shape == (B, Tp, 2 * R), out.shape
    assert bool(jnp.all(jnp.isfinite(out)))
    print("KERNEL_OK")
</pallas_src>

<mosaic_0001>
module attributes {stable_mosaic.version = 11 : i64} {
  func.func @_mm_relu_kernel(%arg0: i32, %arg1: memref<546x9xf32, #tpu.memory_space<vmem>>, %arg2: memref<9x32xbf16, #tpu.memory_space<vmem>>, %arg3: memref<1x32xf32, #tpu.memory_space<vmem>>, %arg4: memref<546x32xf32, #tpu.memory_space<vmem>>) attributes {dimension_semantics = [#tpu.dimension_semantics<parallel>], iteration_bounds = array<i64: 1>, scalar_prefetch = 0 : i64, scratch_operands = 0 : i64, tpu.core_type = #tpu.core_type<tc>, window_params = [{transform_indices = @transform_0, window_bounds = array<i64: 546, 9>}, {pipeline_mode = #tpu.pipeline_mode<synchronous>, transform_indices = @transform_1, window_bounds = array<i64: 9, 32>}, {pipeline_mode = #tpu.pipeline_mode<synchronous>, transform_indices = @transform_2, window_bounds = array<i64: 1, 32>}, {transform_indices = @transform_3, window_bounds = array<i64: 546, 32>}]} {
    %c0 = arith.constant 0 : index
    %c0_0 = arith.constant 0 : index
    %0 = vector.load %arg1[%c0, %c0_0] : memref<546x9xf32, #tpu.memory_space<vmem>>, vector<546x9xf32>
    %1 = arith.truncf %0 : vector<546x9xf32> to vector<546x9xbf16>
    %c0_1 = arith.constant 0 : index
    %c0_2 = arith.constant 0 : index
    %2 = vector.load %arg2[%c0_1, %c0_2] : memref<9x32xbf16, #tpu.memory_space<vmem>>, vector<9x32xbf16>
    %cst = arith.constant dense<0.000000e+00> : vector<546x32xf32>
    %3 = tpu.matmul %1, %2, %cst {dimension_numbers = #tpu.dot_dimension_numbers<[1], [0], [0], [1], [0, 0, 1, 1], [], []>} : vector<546x9xbf16>, vector<9x32xbf16>, vector<546x32xf32> -> vector<546x32xf32>
    %c0_3 = arith.constant 0 : index
    %c0_4 = arith.constant 0 : index
    %4 = vector.load %arg3[%c0_3, %c0_4] : memref<1x32xf32, #tpu.memory_space<vmem>>, vector<1x32xf32>
    %5 = vector.broadcast %4 : vector<1x32xf32> to vector<546x32xf32>
    %6 = arith.addf %3, %5 : vector<546x32xf32>
    %cst_5 = arith.constant 0.000000e+00 : f32
    %7 = vector.broadcast %cst_5 : f32 to vector<546x32xf32>
    %8 = arith.maximumf %6, %7 : vector<546x32xf32>
    %c0_6 = arith.constant 0 : index
    %c0_7 = arith.constant 0 : index
    %9 = vector.load %arg4[%c0_6, %c0_7] : memref<546x32xf32, #tpu.memory_space<vmem>>, vector<546x32xf32>
    tpu.vector_store %arg4[%c0_6, %c0_7], %8 {strides = array<i32>} : memref<546x32xf32, #tpu.memory_space<vmem>>, vector<546x32xf32>,
    return
  }
  func.func @transform_0(%arg0: i32) -> (i32, i32) {
    %c0_i32 = arith.constant 0 : i32
    %c0_i32_0 = arith.constant 0 : i32
    return %arg0, %c0_i32 : i32, i32
  }
  func.func @transform_1(%arg0: i32) -> (i32, i32) {
    %c0_i32 = arith.constant 0 : i32
    %c0_i32_0 = arith.constant 0 : i32
    %c0_i32_1 = arith.constant 0 : i32
    return %c0_i32, %c0_i32_0 : i32, i32
  }
  func.func @transform_2(%arg0: i32) -> (i32, i32) {
    %c0_i32 = arith.constant 0 : i32
    %c0_i32_0 = arith.constant 0 : i32
    %c0_i32_1 = arith.constant 0 : i32
    return %c0_i32, %c0_i32_0 : i32, i32
  }
  func.func @transform_3(%arg0: i32) -> (i32, i32) {
    %c0_i32 = arith.constant 0 : i32
    %c0_i32_0 = arith.constant 0 : i32
    return %arg0, %c0_i32 : i32, i32
  }
}

module attributes {stable_mosaic.version = 11 : i64} {
  func.func @_mm_relu_kernel(%arg0: i32, %arg1: memref<114x288xf32, #tpu.memory_space<vmem>>, %arg2: memref<288x32xbf16, #tpu.memory_space<vmem>>, %arg3: memref<1x32xf32, #tpu.memory_space<vmem>>, %arg4: memref<114x32xf32, #tpu.memory_space<vmem>>) attributes {dimension_semantics = [#tpu.dimension_semantics<parallel>], iteration_bounds = array<i64: 1>, scalar_prefetch = 0 : i64, scratch_operands = 0 : i64, tpu.core_type = #tpu.core_type<tc>, window_params = [{transform_indices = @transform_0, window_bounds = array<i64: 114, 288>}, {pipeline_mode = #tpu.pipeline_mode<synchronous>, transform_indices = @transform_1, window_bounds = array<i64: 288, 32>}, {pipeline_mode = #tpu.pipeline_mode<synchronous>, transform_indices = @transform_2, window_bounds = array<i64: 1, 32>}, {transform_indices = @transform_3, window_bounds = array<i64: 114, 32>}]} {
    %c0 = arith.constant 0 : index
    %c0_0 = arith.constant 0 : index
    %0 = vector.load %arg1[%c0, %c0_0] : memref<114x288xf32, #tpu.memory_space<vmem>>, vector<114x288xf32>
    %1 = arith.truncf %0 : vector<114x288xf32> to vector<114x288xbf16>
    %c0_1 = arith.constant 0 : index
    %c0_2 = arith.constant 0 : index
    %2 = vector.load %arg2[%c0_1, %c0_2] : memref<288x32xbf16, #tpu.memory_space<vmem>>, vector<288x32xbf16>
    %cst = arith.constant dense<0.000000e+00> : vector<114x32xf32>
    %3 = tpu.matmul %1, %2, %cst {dimension_numbers = #tpu.dot_dimension_numbers<[1], [0], [0], [1], [0, 0, 1, 1], [], []>} : vector<114x288xbf16>, vector<288x32xbf16>, vector<114x32xf32> -> vector<114x32xf32>
    %c0_3 = arith.constant 0 : index
    %c0_4 = arith.constant 0 : index
    %4 = vector.load %arg3[%c0_3, %c0_4] : memref<1x32xf32, #tpu.memory_space<vmem>>, vector<1x32xf32>
    %5 = vector.broadcast %4 : vector<1x32xf32> to vector<114x32xf32>
    %6 = arith.addf %3, %5 : vector<114x32xf32>
    %cst_5 = arith.constant 0.000000e+00 : f32
    %7 = vector.broadcast %cst_5 : f32 to vector<114x32xf32>
    %8 = arith.maximumf %6, %7 : vector<114x32xf32>
    %c0_6 = arith.constant 0 : index
    %c0_7 = arith.constant 0 : index
    %9 = vector.load %arg4[%c0_6, %c0_7] : memref<114x32xf32, #tpu.memory_space<vmem>>, vector<114x32xf32>
    tpu.vector_store %arg4[%c0_6, %c0_7], %8 {strides = array<i32>} : memref<114x32xf32, #tpu.memory_space<vmem>>, vector<114x32xf32>,
    return
  }
  func.func @transform_0(%arg0: i32) -> (i32, i32) {
    %c0_i32 = arith.constant 0 : i32
    %c0_i32_0 = arith.constant 0 : i32
    return %arg0, %c0_i32 : i32, i32
  }
  func.func @transform_1(%arg0: i32) -> (i32, i32) {
    %c0_i32 = arith.constant 0 : i32
    %c0_i32_0 = arith.constant 0 : i32
    %c0_i32_1 = arith.constant 0 : i32
    return %c0_i32, %c0_i32_0 : i32, i32
  }
  func.func @transform_2(%arg0: i32) -> (i32, i32) {
    %c0_i32 = arith.constant 0 : i32
    %c0_i32_0 = arith.constant 0 : i32
    %c0_i32_1 = arith.constant 0 : i32
    return %c0_i32, %c0_i32_0 : i32, i32
  }
  func.func @transform_3(%arg0: i32) -> (i32, i32) {
    %c0_i32 = arith.constant 0 : i32
    %c0_i32_0 = arith.constant 0 : i32
    return %arg0, %c0_i32 : i32, i32
  }
}

module attributes {stable_mosaic.version = 11 : i64} {
  func.func @_convblstm_kernel(%arg0: i32, %arg1: memref<3x38x32xf32, #tpu.memory_space<vmem>>, %arg2: memref<96x128xbf16, #tpu.memory_space<vmem>>, %arg3: memref<1x128xf32, #tpu.memory_space<vmem>>, %arg4: memref<96x128xbf16, #tpu.memory_space<vmem>>, %arg5: memref<3x38x32xf32, #tpu.memory_space<vmem>>, %arg6: memref<3x38x128xf32, #tpu.memory_space<vmem>>, %arg7: memref<38x16xf32, #tpu.memory_space<vmem>>, %arg8: memref<38x16xf32, #tpu.memory_space<vmem>>, %arg9: memref<38x16xf32, #tpu.memory_space<vmem>>, %arg10: memref<38x16xf32, #tpu.memory_space<vmem>>, %arg11: memref<3x38x16xf32, #tpu.memory_space<vmem>>, %arg12: memref<3x38x16xf32, #tpu.memory_space<vmem>>) attributes {dimension_semantics = [#tpu.dimension_semantics<arbitrary>], iteration_bounds = array<i64: 1>, scalar_prefetch = 0 : i64, scratch_operands = 7 : i64, tpu.core_type = #tpu.core_type<tc>, window_params = [{pipeline_mode = #tpu.pipeline_mode<synchronous>, transform_indices = @transform_0, window_bounds = array<i64: 3, 38, 32>}, {pipeline_mode = #tpu.pipeline_mode<synchronous>, transform_indices = @transform_1, window_bounds = array<i64: 96, 128>}, {pipeline_mode = #tpu.pipeline_mode<synchronous>, transform_indices = @transform_2, window_bounds = array<i64: 1, 128>}, {pipeline_mode = #tpu.pipeline_mode<synchronous>, transform_indices = @transform_3, window_bounds = array<i64: 96, 128>}, {pipeline_mode = #tpu.pipeline_mode<synchronous>, transform_indices = @transform_4, window_bounds = array<i64: 3, 38, 32>}]} {
    %0 = tpu.iota {dimensions = array<i32: 0>} : vector<38x1xi32>
    %c19_i32 = arith.constant 19 : i32
    %c0_i32 = arith.constant 0 : i32
    %1 = arith.cmpi eq, %c19_i32, %c0_i32 : i32
    %c1_i32 = arith.constant 1 : i32
    %2 = arith.select %1, %c1_i32, %c19_i32 : i32
    %3 = vector.broadcast %2 : i32 to vector<38x1xi32>
    %4 = arith.remsi %0, %3 : vector<38x1xi32>
    %c0_i32_0 = arith.constant 0 : i32
    %5 = vector.broadcast %c0_i32_0 : i32 to vector<38x1xi32>
    %6 = arith.cmpi ne, %4, %5 : vector<38x1xi32>
    %c0_i32_1 = arith.constant 0 : i32
    %7 = vector.broadcast %c0_i32_1 : i32 to vector<38x1xi32>
    %8 = arith.cmpi slt, %4, %7 : vector<38x1xi32>
    %c0_i32_2 = arith.constant 0 : i32
    %9 = arith.cmpi slt, %2, %c0_i32_2 : i32
    %10 = vector.broadcast %9 : i1 to vector<38x1xi1>
    %11 = vector.broadcast %10 : vector<38x1xi1> to vector<38x1xi1>
    %12 = arith.xori %8, %11 : vector<38x1xi1>
    %13 = arith.andi %12, %6 : vector<38x1xi1>
    %14 = vector.broadcast %2 : i32 to vector<38x1xi32>
    %15 = arith.addi %4, %14 : vector<38x1xi32>
    %16 = arith.select %13, %15, %4 : vector<38x1xi1>, vector<38x1xi32>
    %c0_i32_3 = arith.constant 0 : i32
    %17 = vector.broadcast %c0_i32_3 : i32 to vector<38x1xi32>
    %18 = arith.cmpi ne, %16, %17 : vector<38x1xi32>
    %c19_i32_4 = arith.constant 19 : i32
    %c0_i32_5 = arith.constant 0 : i32
    %19 = arith.cmpi eq, %c19_i32_4, %c0_i32_5 : i32
    %c1_i32_6 = arith.constant 1 : i32
    %20 = arith.select %19, %c1_i32_6, %c19_i32_4 : i32
    %21 = vector.broadcast %20 : i32 to vector<38x1xi32>
    %22 = arith.remsi %0, %21 : vector<38x1xi32>
    %c0_i32_7 = arith.constant 0 : i32
    %23 = vector.broadcast %c0_i32_7 : i32 to vector<38x1xi32>
    %24 = arith.cmpi ne, %22, %23 : vector<38x1xi32>
    %c0_i32_8 = arith.constant 0 : i32
    %25 = vector.broadcast %c0_i32_8 : i32 to vector<38x1xi32>
    %26 = arith.cmpi slt, %22, %25 : vector<38x1xi32>
    %c0_i32_9 = arith.constant 0 : i32
    %27 = arith.cmpi slt, %20, %c0_i32_9 : i32
    %28 = vector.broadcast %27 : i1 to vector<38x1xi1>
    %29 = vector.broadcast %28 : vector<38x1xi1> to vector<38x1xi1>
    %30 = arith.xori %26, %29 : vector<38x1xi1>
    %31 = arith.andi %30, %24 : vector<38x1xi1>
    %32 = vector.broadcast %20 : i32 to vector<38x1xi32>
    %33 = arith.addi %22, %32 : vector<38x1xi32>
    %34 = arith.select %31, %33, %22 : vector<38x1xi1>, vector<38x1xi32>
    %c18_i32 = arith.constant 18 : i32
    %35 = vector.broadcast %c18_i32 : i32 to vector<38x1xi32>
    %36 = arith.cmpi ne, %34, %35 : vector<38x1xi32>
    %c0_i32_10 = arith.constant 0 : i32
    %37 = arith.index_cast %c0_i32_10 : i32 to index
    %c0 = arith.constant 0 : index
    %c0_11 = arith.constant 0 : index
    %38 = vector.load %arg1[%37, %c0, %c0_11] : memref<3x38x32xf32, #tpu.memory_space<vmem>>, vector<1x38x32xf32>
    %39 = vector.shape_cast %38 : vector<1x38x32xf32> to vector<38x32xf32>
    %cst = arith.constant 0.000000e+00 : f32
    %40 = vector.broadcast %cst : f32 to vector<1x32xf32>
    %41 = vector.extract_strided_slice %39 {offsets = [0, 0], sizes = [37, 32], strides = [1, 1]} : vector<38x32xf32> to vector<37x32xf32>
    %42 = tpu.concatenate %40, %41 in 0 : vector<1x32xf32>, vector<37x32xf32> -> vector<38x32xf32>
    %cst_12 = arith.constant 0.000000e+00 : f32
    %43 = vector.shape_cast %18 : vector<38x1xi1> to vector<38x1xi1>
    %44 = vector.broadcast %43 : vector<38x1xi1> to vector<38x32xi1>
    %45 = vector.broadcast %cst_12 : f32 to vector<38x32xf32>
    %46 = arith.select %44, %42, %45 : vector<38x32xi1>, vector<38x32xf32>
    %47 = vector.extract_strided_slice %39 {offsets = [1, 0], sizes = [37, 32], strides = [1, 1]} : vector<38x32xf32> to vector<37x32xf32>
    %48 = tpu.concatenate %47, %40 in 0 : vector<37x32xf32>, vector<1x32xf32> -> vector<38x32xf32>
    %cst_13 = arith.constant 0.000000e+00 : f32
    %49 = vector.shape_cast %36 : vector<38x1xi1> to vector<38x1xi1>
    %50 = vector.broadcast %49 : vector<38x1xi1> to vector<38x32xi1>
    %51 = vector.broadcast %cst_13 : f32 to vector<38x32xf32>
    %52 = arith.select %50, %48, %51 : vector<38x32xi1>, vector<38x32xf32>
    %53 = tpu.concatenate %46, %39, %52 in 1 : vector<38x32xf32>, vector<38x32xf32>, vector<38x32xf32> -> vector<38x96xf32>
    %54 = arith.truncf %53 : vector<38x96xf32> to vector<38x96xbf16>
    %c0_14 = arith.constant 0 : index
    %c0_15 = arith.constant 0 : index
    %55 = vector.load %arg2[%c0_14, %c0_15] : memref<96x128xbf16, #tpu.memory_space<vmem>>, vector<96x128xbf16>
    %cst_16 = arith.constant dense<0.000000e+00> : vector<38x128xf32>
    %56 = tpu.matmul %54, %55, %cst_16 {dimension_numbers = #tpu.dot_dimension_numbers<[1], [0], [0], [1], [0, 0, 1, 1], [], []>} : vector<38x96xbf16>, vector<96x128xbf16>, vector<38x128xf32> -> vector<38x128xf32>
    %c0_17 = arith.constant 0 : index
    %c0_18 = arith.constant 0 : index
    %57 = vector.load %arg3[%c0_17, %c0_18] : memref<1x128xf32, #tpu.memory_space<vmem>>, vector<1x128xf32>
    %58 = vector.broadcast %57 : vector<1x128xf32> to vector<38x128xf32>
    %59 = arith.addf %56, %58 : vector<38x128xf32>
    %60 = arith.index_cast %c0_i32_10 : i32 to index
    %c0_19 = arith.constant 0 : index
    %c0_20 = arith.constant 0 : index
    %61 = vector.load %arg6[%60, %c0_19, %c0_20] : memref<3x38x128xf32, #tpu.memory_space<vmem>>, vector<1x38x128xf32>
    %62 = vector.shape_cast %61 : vector<1x38x128xf32> to vector<38x128xf32>
    %63 = vector.shape_cast %59 : vector<38x128xf32> to vector<1x38x128xf32>
    tpu.vector_store %arg6[%60, %c0_19, %c0_20], %63 {strides = array<i32>} : memref<3x38x128xf32, #tpu.memory_space<vmem>>, vector<1x38x128xf32>,
    %c1_i32_21 = arith.constant 1 : i32
    %64 = arith.index_cast %c1_i32_21 : i32 to index
    %c0_22 = arith.constant 0 : index
    %c0_23 = arith.constant 0 : index
    %65 = vector.load %arg1[%64, %c0_22, %c0_23] : memref<3x38x32xf32, #tpu.memory_space<vmem>>, vector<1x38x32xf32>
    %66 = vector.shape_cast %65 : vector<1x38x32xf32> to vector<38x32xf32>
    %cst_24 = arith.constant 0.000000e+00 : f32
    %67 = vector.broadcast %cst_24 : f32 to vector<1x32xf32>
    %68 = vector.extract_strided_slice %66 {offsets = [0, 0], sizes = [37, 32], strides = [1, 1]} : vector<38x32xf32> to vector<37x32xf32>
    %69 = tpu.concatenate %67, %68 in 0 : vector<1x32xf32>, vector<37x32xf32> -> vector<38x32xf32>
    %cst_25 = arith.constant 0.000000e+00 : f32
    %70 = vector.shape_cast %18 : vector<38x1xi1> to vector<38x1xi1>
    %71 = vector.broadcast %70 : vector<38x1xi1> to vector<38x32xi1>
    %72 = vector.broadcast %cst_25 : f32 to vector<38x32xf32>
    %73 = arith.select %71, %69, %72 : vector<38x32xi1>, vector<38x32xf32>
    %74 = vector.extract_strided_slice %66 {offsets = [1, 0], sizes = [37, 32], strides = [1, 1]} : vector<38x32xf32> to vector<37x32xf32>
    %75 = tpu.concatenate %74, %67 in 0 : vector<37x32xf32>, vector<1x32xf32> -> vector<38x32xf32>
    %cst_26 = arith.constant 0.000000e+00 : f32
    %76 = vector.shape_cast %36 : vector<38x1xi1> to vector<38x1xi1>
    %77 = vector.broadcast %76 : vector<38x1xi1> to vector<38x32xi1>
    %78 = vector.broadcast %cst_26 : f32 to vector<38x32xf32>
    %79 = arith.select %77, %75, %78 : vector<38x32xi1>, vector<38x32xf32>
    %80 = tpu.concatenate %73, %66, %79 in 1 : vector<38x32xf32>, vector<38x32xf32>, vector<38x32xf32> -> vector<38x96xf32>
    %81 = arith.truncf %80 : vector<38x96xf32> to vector<38x96xbf16>
    %c0_27 = arith.constant 0 : index
    %c0_28 = arith.constant 0 : index
    %82 = vector.load %arg2[%c0_27, %c0_28] : memref<96x128xbf16, #tpu.memory_space<vmem>>, vector<96x128xbf16>
    %cst_29 = arith.constant dense<0.000000e+00> : vector<38x128xf32>
    %83 = tpu.matmul %81, %82, %cst_29 {dimension_numbers = #tpu.dot_dimension_numbers<[1], [0], [0], [1], [0, 0, 1, 1], [], []>} : vector<38x96xbf16>, vector<96x128xbf16>, vector<38x128xf32> -> vector<38x128xf32>
    %c0_30 = arith.constant 0 : index
    %c0_31 = arith.constant 0 : index
    %84 = vector.load %arg3[%c0_30, %c0_31] : memref<1x128xf32, #tpu.memory_space<vmem>>, vector<1x128xf32>
    %85 = vector.broadcast %84 : vector<1x128xf32> to vector<38x128xf32>
    %86 = arith.addf %83, %85 : vector<38x128xf32>
    %87 = arith.index_cast %c1_i32_21 : i32 to index
    %c0_32 = arith.constant 0 : index
    %c0_33 = arith.constant 0 : index
    %88 = vector.load %arg6[%87, %c0_32, %c0_33] : memref<3x38x128xf32, #tpu.memory_space<vmem>>, vector<1x38x128xf32>
    %89 = vector.shape_cast %88 : vector<1x38x128xf32> to vector<38x128xf32>
    %90 = vector.shape_cast %86 : vector<38x128xf32> to vector<1x38x128xf32>
    tpu.vector_store %arg6[%87, %c0_32, %c0_33], %90 {strides = array<i32>} : memref<3x38x128xf32, #tpu.memory_space<vmem>>, vector<1x38x128xf32>,
    %c2_i32 = arith.constant 2 : i32
    %91 = arith.index_cast %c2_i32 : i32 to index
    %c0_34 = arith.constant 0 : index
    %c0_35 = arith.constant 0 : index
    %92 = vector.load %arg1[%91, %c0_34, %c0_35] : memref<3x38x32xf32, #tpu.memory_space<vmem>>, vector<1x38x32xf32>
    %93 = vector.shape_cast %92 : vector<1x38x32xf32> to vector<38x32xf32>
    %cst_36 = arith.constant 0.000000e+00 : f32
    %94 = vector.broadcast %cst_36 : f32 to vector<1x32xf32>
    %95 = vector.extract_strided_slice %93 {offsets = [0, 0], sizes = [37, 32], strides = [1, 1]} : vector<38x32xf32> to vector<37x32xf32>
    %96 = tpu.concatenate %94, %95 in 0 : vector<1x32xf32>, vector<37x32xf32> -> vector<38x32xf32>
    %cst_37 = arith.constant 0.000000e+00 : f32
    %97 = vector.shape_cast %18 : vector<38x1xi1> to vector<38x1xi1>
    %98 = vector.broadcast %97 : vector<38x1xi1> to vector<38x32xi1>
    %99 = vector.broadcast %cst_37 : f32 to vector<38x32xf32>
    %100 = arith.select %98, %96, %99 : vector<38x32xi1>, vector<38x32xf32>
    %101 = vector.extract_strided_slice %93 {offsets = [1, 0], sizes = [37, 32], strides = [1, 1]} : vector<38x32xf32> to vector<37x32xf32>
    %102 = tpu.concatenate %101, %94 in 0 : vector<37x32xf32>, vector<1x32xf32> -> vector<38x32xf32>
    %cst_38 = arith.constant 0.000000e+00 : f32
    %103 = vector.shape_cast %36 : vector<38x1xi1> to vector<38x1xi1>
    %104 = vector.broadcast %103 : vector<38x1xi1> to vector<38x32xi1>
    %105 = vector.broadcast %cst_38 : f32 to vector<38x32xf32>
    %106 = arith.select %104, %102, %105 : vector<38x32xi1>, vector<38x32xf32>
    %107 = tpu.concatenate %100, %93, %106 in 1 : vector<38x32xf32>, vector<38x32xf32>, vector<38x32xf32> -> vector<38x96xf32>
    %108 = arith.truncf %107 : vector<38x96xf32> to vector<38x96xbf16>
    %c0_39 = arith.constant 0 : index
    %c0_40 = arith.constant 0 : index
    %109 = vector.load %arg2[%c0_39, %c0_40] : memref<96x128xbf16, #tpu.memory_space<vmem>>, vector<96x128xbf16>
    %cst_41 = arith.constant dense<0.000000e+00> : vector<38x128xf32>
    %110 = tpu.matmul %108, %109, %cst_41 {dimension_numbers = #tpu.dot_dimension_numbers<[1], [0], [0], [1], [0, 0, 1, 1], [], []>} : vector<38x96xbf16>, vector<96x128xbf16>, vector<38x128xf32> -> vector<38x128xf32>
    %c0_42 = arith.constant 0 : index
    %c0_43 = arith.constant 0 : index
    %111 = vector.load %arg3[%c0_42, %c0_43] : memref<1x128xf32, #tpu.memory_space<vmem>>, vector<1x128xf32>
    %112 = vector.broadcast %111 : vector<1x128xf32> to vector<38x128xf32>
    %113 = arith.addf %110, %112 : vector<38x128xf32>
    %114 = arith.index_cast %c2_i32 : i32 to index
    %c0_44 = arith.constant 0 : index
    %c0_45 = arith.constant 0 : index
    %115 = vector.load %arg6[%114, %c0_44, %c0_45] : memref<3x38x128xf32, #tpu.memory_space<vmem>>, vector<1x38x128xf32>
    %116 = vector.shape_cast %115 : vector<1x38x128xf32> to vector<38x128xf32>
    %117 = vector.shape_cast %113 : vector<38x128xf32> to vector<1x38x128xf32>
    tpu.vector_store %arg6[%114, %c0_44, %c0_45], %117 {strides = array<i32>} : memref<3x38x128xf32, #tpu.memory_space<vmem>>, vector<1x38x128xf32>,
    %c3_i32 = arith.constant 3 : i32
    %cst_46 = arith.constant 0.000000e+00 : f32
    %118 = vector.broadcast %cst_46 : f32 to vector<38x16xf32>
    %c0_47 = arith.constant 0 : index
    %c0_48 = arith.constant 0 : index
    %119 = vector.load %arg7[%c0_47, %c0_48] : memref<38x16xf32, #tpu.memory_space<vmem>>, vector<38x16xf32>
    tpu.vector_store %arg7[%c0_47, %c0_48], %118 {strides = array<i32>} : memref<38x16xf32, #tpu.memory_space<vmem>>, vector<38x16xf32>,
    %cst_49 = arith.constant 0.000000e+00 : f32
    %120 = vector.broadcast %cst_49 : f32 to vector<38x16xf32>
    %c0_50 = arith.constant 0 : index
    %c0_51 = arith.constant 0 : index
    %121 = vector.load %arg8[%c0_50, %c0_51] : memref<38x16xf32, #tpu.memory_space<vmem>>, vector<38x16xf32>
    tpu.vector_store %arg8[%c0_50, %c0_51], %120 {strides = array<i32>} : memref<38x16xf32, #tpu.memory_space<vmem>>, vector<38x16xf32>,
    %cst_52 = arith.constant 0.000000e+00 : f32
    %122 = vector.broadcast %cst_52 : f32 to vector<38x16xf32>
    %c0_53 = arith.constant 0 : index
    %c0_54 = arith.constant 0 : index
    %123 = vector.load %arg9[%c0_53, %c0_54] : memref<38x16xf32, #tpu.memory_space<vmem>>, vector<38x16xf32>
    tpu.vector_store %arg9[%c0_53, %c0_54], %122 {strides = array<i32>} : memref<38x16xf32, #tpu.memory_space<vmem>>, vector<38x16xf32>,
    %cst_55 = arith.constant 0.000000e+00 : f32
    %124 = vector.broadcast %cst_55 : f32 to vector<38x16xf32>
    %c0_56 = arith.constant 0 : index
    %c0_57 = arith.constant 0 : index
    %125 = vector.load %arg10[%c0_56, %c0_57] : memref<38x16xf32, #tpu.memory_space<vmem>>, vector<38x16xf32>
    tpu.vector_store %arg10[%c0_56, %c0_57], %124 {strides = array<i32>} : memref<38x16xf32, #tpu.memory_space<vmem>>, vector<38x16xf32>,
    %c0_i32_58 = arith.constant 0 : i32
    %c2_i32_59 = arith.constant 2 : i32
    %126 = arith.subi %c2_i32_59, %c0_i32_58 : i32
    %c0_60 = arith.constant 0 : index
    %c0_61 = arith.constant 0 : index
    %127 = vector.load %arg7[%c0_60, %c0_61] : memref<38x16xf32, #tpu.memory_space<vmem>>, vector<38x16xf32>
    %c0_62 = arith.constant 0 : index
    %c0_63 = arith.constant 0 : index
    %128 = vector.load %arg9[%c0_62, %c0_63] : memref<38x16xf32, #tpu.memory_space<vmem>>, vector<38x16xf32>
    %cst_64 = arith.constant 0.000000e+00 : f32
    %129 = vector.broadcast %cst_64 : f32 to vector<1x16xf32>
    %130 = vector.extract_strided_slice %127 {offsets = [0, 0], sizes = [37, 16], strides = [1, 1]} : vector<38x16xf32> to vector<37x16xf32>
    %131 = tpu.concatenate %129, %130 in 0 : vector<1x16xf32>, vector<37x16xf32> -> vector<38x16xf32>
    %cst_65 = arith.constant 0.000000e+00 : f32
    %132 = vector.shape_cast %18 : vector<38x1xi1> to vector<38x1xi1>
    %133 = vector.broadcast %132 : vector<38x1xi1> to vector<38x16xi1>
    %134 = vector.broadcast %cst_65 : f32 to vector<38x16xf32>
    %135 = arith.select %133, %131, %134 : vector<38x16xi1>, vector<38x16xf32>
    %136 = vector.extract_strided_slice %127 {offsets = [1, 0], sizes = [37, 16], strides = [1, 1]} : vector<38x16xf32> to vector<37x16xf32>
    %137 = tpu.concatenate %136, %129 in 0 : vector<37x16xf32>, vector<1x16xf32> -> vector<38x16xf32>
    %cst_66 = arith.constant 0.000000e+00 : f32
    %138 = vector.shape_cast %36 : vector<38x1xi1> to vector<38x1xi1>
    %139 = vector.broadcast %138 : vector<38x1xi1> to vector<38x16xi1>
    %140 = vector.broadcast %cst_66 : f32 to vector<38x16xf32>
    %141 = arith.select %139, %137, %140 : vector<38x16xi1>, vector<38x16xf32>
    %cst_67 = arith.constant 0.000000e+00 : f32
    %142 = vector.broadcast %cst_67 : f32 to vector<1x16xf32>
    %143 = vector.extract_strided_slice %128 {offsets = [0, 0], sizes = [37, 16], strides = [1, 1]} : vector<38x16xf32> to vector<37x16xf32>
    %144 = tpu.concatenate %142, %143 in 0 : vector<1x16xf32>, vector<37x16xf32> -> vector<38x16xf32>
    %cst_68 = arith.constant 0.000000e+00 : f32
    %145 = vector.shape_cast %18 : vector<38x1xi1> to vector<38x1xi1>
    %146 = vector.broadcast %145 : vector<38x1xi1> to vector<38x16xi1>
    %147 = vector.broadcast %cst_68 : f32 to vector<38x16xf32>
    %148 = arith.select %146, %144, %147 : vector<38x16xi1>, vector<38x16xf32>
    %149 = vector.extract_strided_slice %128 {offsets = [1, 0], sizes = [37, 16], strides = [1, 1]} : vector<38x16xf32> to vector<37x16xf32>
    %150 = tpu.concatenate %149, %142 in 0 : vector<37x16xf32>, vector<1x16xf32> -> vector<38x16xf32>
    %cst_69 = arith.constant 0.000000e+00 : f32
    %151 = vector.shape_cast %36 : vector<38x1xi1> to vector<38x1xi1>
    %152 = vector.broadcast %151 : vector<38x1xi1> to vector<38x16xi1>
    %153 = vector.broadcast %cst_69 : f32 to vector<38x16xf32>
    %154 = arith.select %152, %150, %153 : vector<38x16xi1>, vector<38x16xf32>
    %155 = tpu.concatenate %135, %127, %141, %148, %128, %154 in 1 : vector<38x16xf32>, vector<38x16xf32>, vector<38x16xf32>, vector<38x16xf32>, vector<38x16xf32>, vector<38x16xf32> -> vector<38x96xf32>
    %156 = arith.truncf %155 : vector<38x96xf32> to vector<38x96xbf16>
    %c0_70 = arith.constant 0 : index
    %c0_71 = arith.constant 0 : index
    %157 = vector.load %arg4[%c0_70, %c0_71] : memref<96x128xbf16, #tpu.memory_space<vmem>>, vector<96x128xbf16>
    %cst_72 = arith.constant dense<0.000000e+00> : vector<38x128xf32>
    %158 = tpu.matmul %156, %157, %cst_72 {dimension_numbers = #tpu.dot_dimension_numbers<[1], [0], [0], [1], [0, 0, 1, 1], [], []>} : vector<38x96xbf16>, vector<96x128xbf16>, vector<38x128xf32> -> vector<38x128xf32>
    %159 = arith.index_cast %c0_i32_58 : i32 to index
    %c0_73 = arith.constant 0 : index
    %c0_74 = arith.constant 0 : index
    %160 = vector.load %arg6[%159, %c0_73, %c0_74] : memref<3x38x128xf32, #tpu.memory_space<vmem>>, vector<1x38x128xf32>
    %161 = vector.shape_cast %160 : vector<1x38x128xf32> to vector<38x128xf32>
    %162 = vector.extract_strided_slice %161 {offsets = [0, 0], sizes = [38, 64], strides = [1, 1]} : vector<38x128xf32> to vector<38x64xf32>
    %163 = vector.extract_strided_slice %158 {offsets = [0, 0], sizes = [38, 64], strides = [1, 1]} : vector<38x128xf32> to vector<38x64xf32>
    %164 = arith.addf %162, %163 : vector<38x64xf32>
    %165 = arith.index_cast %126 : i32 to index
    %c0_75 = arith.constant 0 : index
    %c0_76 = arith.constant 0 : index
    %166 = vector.load %arg6[%165, %c0_75, %c0_76] : memref<3x38x128xf32, #tpu.memory_space<vmem>>, vector<1x38x128xf32>
    %167 = vector.shape_cast %166 : vector<1x38x128xf32> to vector<38x128xf32>
    %168 = vector.extract_strided_slice %167 {offsets = [0, 64], sizes = [38, 64], strides = [1, 1]} : vector<38x128xf32> to vector<38x64xf32>
    %169 = vector.extract_strided_slice %158 {offsets = [0, 64], sizes = [38, 64], strides = [1, 1]} : vector<38x128xf32> to vector<38x64xf32>
    %170 = arith.addf %168, %169 : vector<38x64xf32>
    %c0_77 = arith.constant 0 : index
    %c0_78 = arith.constant 0 : index
    %171 = vector.load %arg8[%c0_77, %c0_78] : memref<38x16xf32, #tpu.memory_space<vmem>>, vector<38x16xf32>
    %172 = vector.extract_strided_slice %164 {offsets = [0, 0], sizes = [38, 16], strides = [1, 1]} : vector<38x64xf32> to vector<38x16xf32>
    %173 = arith.negf %172 : vector<38x16xf32>
    %174 = math.exp %173 : vector<38x16xf32>
    %cst_79 = arith.constant 1.000000e+00 : f32
    %175 = vector.broadcast %cst_79 : f32 to vector<38x16xf32>
    %176 = arith.addf %175, %174 : vector<38x16xf32>
    %177 = arith.divf %175, %176 : vector<38x16xf32>
    %178 = vector.extract_strided_slice %164 {offsets = [0, 16], sizes = [38, 16], strides = [1, 1]} : vector<38x64xf32> to vector<38x16xf32>
    %179 = arith.negf %178 : vector<38x16xf32>
    %180 = math.exp %179 : vector<38x16xf32>
    %cst_80 = arith.constant 1.000000e+00 : f32
    %181 = vector.broadcast %cst_80 : f32 to vector<38x16xf32>
    %182 = arith.addf %181, %180 : vector<38x16xf32>
    %183 = arith.divf %181, %182 : vector<38x16xf32>
    %184 = vector.extract_strided_slice %164 {offsets = [0, 32], sizes = [38, 16], strides = [1, 1]} : vector<38x64xf32> to vector<38x16xf32>
    %185 = arith.negf %184 : vector<38x16xf32>
    %186 = math.exp %185 : vector<38x16xf32>
    %cst_81 = arith.constant 1.000000e+00 : f32
    %187 = vector.broadcast %cst_81 : f32 to vector<38x16xf32>
    %188 = arith.addf %187, %186 : vector<38x16xf32>
    %189 = arith.divf %187, %188 : vector<38x16xf32>
    %190 = vector.extract_strided_slice %164 {offsets = [0, 48], sizes = [38, 16], strides = [1, 1]} : vector<38x64xf32> to vector<38x16xf32>
    %191 = math.tanh %190 : vector<38x16xf32>
    %192 = arith.mulf %183, %171 : vector<38x16xf32>
    %193 = arith.mulf %177, %191 : vector<38x16xf32>
    %194 = arith.addf %192, %193 : vector<38x16xf32>
    %195 = math.tanh %194 : vector<38x16xf32>
    %196 = arith.mulf %189, %195 : vector<38x16xf32>
    %c0_82 = arith.constant 0 : index
    %c0_83 = arith.constant 0 : index
    %197 = vector.load %arg7[%c0_82, %c0_83] : memref<38x16xf32, #tpu.memory_space<vmem>>, vector<38x16xf32>
    tpu.vector_store %arg7[%c0_82, %c0_83], %196 {strides = array<i32>} : memref<38x16xf32, #tpu.memory_space<vmem>>, vector<38x16xf32>,
    %c0_84 = arith.constant 0 : index
    %c0_85 = arith.constant 0 : index
    %198 = vector.load %arg8[%c0_84, %c0_85] : memref<38x16xf32, #tpu.memory_space<vmem>>, vector<38x16xf32>
    tpu.vector_store %arg8[%c0_84, %c0_85], %194 {strides = array<i32>} : memref<38x16xf32, #tpu.memory_space<vmem>>, vector<38x16xf32>,
    %199 = arith.index_cast %c0_i32_58 : i32 to index
    %c0_86 = arith.constant 0 : index
    %c0_87 = arith.constant 0 : index
    %200 = vector.load %arg11[%199, %c0_86, %c0_87] : memref<3x38x16xf32, #tpu.memory_space<vmem>>, vector<1x38x16xf32>
    %201 = vector.shape_cast %200 : vector<1x38x16xf32> to vector<38x16xf32>
    %202 = vector.shape_cast %196 : vector<38x16xf32> to vector<1x38x16xf32>
    tpu.vector_store %arg11[%199, %c0_86, %c0_87], %202 {strides = array<i32>} : memref<3x38x16xf32, #tpu.memory_space<vmem>>, vector<1x38x16xf32>,
    %c0_88 = arith.constant 0 : index
    %c0_89 = arith.constant 0 : index
    %203 = vector.load %arg10[%c0_88, %c0_89] : memref<38x16xf32, #tpu.memory_space<vmem>>, vector<38x16xf32>
    %204 = vector.extract_strided_slice %170 {offsets = [0, 0], sizes = [38, 16], strides = [1, 1]} : vector<38x64xf32> to vector<38x16xf32>
    %205 = arith.negf %204 : vector<38x16xf32>
    %206 = math.exp %205 : vector<38x16xf32>
    %cst_90 = arith.constant 1.000000e+00 : f32
    %207 = vector.broadcast %cst_90 : f32 to vector<38x16xf32>
    %208 = arith.addf %207, %206 : vector<38x16xf32>
    %209 = arith.divf %207, %208 : vector<38x16xf32>
    %210 = vector.extract_strided_slice %170 {offsets = [0, 16], sizes = [38, 16], strides = [1, 1]} : vector<38x64xf32> to vector<38x16xf32>
    %211 = arith.negf %210 : vector<38x16xf32>
    %212 = math.exp %211 : vector<38x16xf32>
    %cst_91 = arith.constant 1.000000e+00 : f32
    %213 = vector.broadcast %cst_91 : f32 to vector<38x16xf32>
    %214 = arith.addf %213, %212 : vector<38x16xf32>
    %215 = arith.divf %213, %214 : vector<38x16xf32>
    %216 = vector.extract_strided_slice %170 {offsets = [0, 32], sizes = [38, 16], strides = [1, 1]} : vector<38x64xf32> to vector<38x16xf32>
    %217 = arith.negf %216 : vector<38x16xf32>
    %218 = math.exp %217 : vector<38x16xf32>
    %cst_92 = arith.constant 1.000000e+00 : f32
    %219 = vector.broadcast %cst_92 : f32 to vector<38x16xf32>
    %220 = arith.addf %219, %218 : vector<38x16xf32>
    %221 = arith.divf %219, %220 : vector<38x16xf32>
    %222 = vector.extract_strided_slice %170 {offsets = [0, 48], sizes = [38, 16], strides = [1, 1]} : vector<38x64xf32> to vector<38x16xf32>
    %223 = math.tanh %222 : vector<38x16xf32>
    %224 = arith.mulf %215, %203 : vector<38x16xf32>
    %225 = arith.mulf %209, %223 : vector<38x16xf32>
    %226 = arith.addf %224, %225 : vector<38x16xf32>
    %227 = math.tanh %226 : vector<38x16xf32>
    %228 = arith.mulf %221, %227 : vector<38x16xf32>
    %c0_93 = arith.constant 0 : index
    %c0_94 = arith.constant 0 : index
    %229 = vector.load %arg9[%c0_93, %c0_94] : memref<38x16xf32, #tpu.memory_space<vmem>>, vector<38x16xf32>
    tpu.vector_store %arg9[%c0_93, %c0_94], %228 {strides = array<i32>} : memref<38x16xf32, #tpu.memory_space<vmem>>, vector<38x16xf32>,
    %c0_95 = arith.constant 0 : index
    %c0_96 = arith.constant 0 : index
    %230 = vector.load %arg10[%c0_95, %c0_96] : memref<38x16xf32, #tpu.memory_space<vmem>>, vector<38x16xf32>
    tpu.vector_store %arg10[%c0_95, %c0_96], %226 {strides = array<i32>} : memref<38x16xf32, #tpu.memory_space<vmem>>, vector<38x16xf32>,
    %231 = arith.index_cast %126 : i32 to index
    %c0_97 = arith.constant 0 : index
    %c0_98 = arith.constant 0 : index
    %232 = vector.load %arg12[%231, %c0_97, %c0_98] : memref<3x38x16xf32, #tpu.memory_space<vmem>>, vector<1x38x16xf32>
    %233 = vector.shape_cast %232 : vector<1x38x16xf32> to vector<38x16xf32>
    %234 = vector.shape_cast %228 : vector<38x16xf32> to vector<1x38x16xf32>
    tpu.vector_store %arg12[%231, %c0_97, %c0_98], %234 {strides = array<i32>} : memref<3x38x16xf32, #tpu.memory_space<vmem>>, vector<1x38x16xf32>,
    %c1_i32_99 = arith.constant 1 : i32
    %c2_i32_100 = arith.constant 2 : i32
    %235 = arith.subi %c2_i32_100, %c1_i32_99 : i32
    %c0_101 = arith.constant 0 : index
    %c0_102 = arith.constant 0 : index
    %236 = vector.load %arg7[%c0_101, %c0_102] : memref<38x16xf32, #tpu.memory_space<vmem>>, vector<38x16xf32>
    %c0_103 = arith.constant 0 : index
    %c0_104 = arith.constant 0 : index
    %237 = vector.load %arg9[%c0_103, %c0_104] : memref<38x16xf32, #tpu.memory_space<vmem>>, vector<38x16xf32>
    %cst_105 = arith.constant 0.000000e+00 : f32
    %238 = vector.broadcast %cst_105 : f32 to vector<1x16xf32>
    %239 = vector.extract_strided_slice %236 {offsets = [0, 0], sizes = [37, 16], strides = [1, 1]} : vector<38x16xf32> to vector<37x16xf32>
    %240 = tpu.concatenate %238, %239 in 0 : vector<1x16xf32>, vector<37x16xf32> -> vector<38x16xf32>
    %cst_106 = arith.constant 0.000000e+00 : f32
    %241 = vector.shape_cast %18 : vector<38x1xi1> to vector<38x1xi1>
    %242 = vector.broadcast %241 : vector<38x1xi1> to vector<38x16xi1>
    %243 = vector.broadcast %cst_106 : f32 to vector<38x16xf32>
    %244 = arith.select %242, %240, %243 : vector<38x16xi1>, vector<38x16xf32>
    %245 = vector.extract_strided_slice %236 {offsets = [1, 0], sizes = [37, 16], strides = [1, 1]} : vector<38x16xf32> to vector<37x16xf32>
    %246 = tpu.concatenate %245, %238 in 0 : vector<37x16xf32>, vector<1x16xf32> -> vector<38x16xf32>
    %cst_107 = arith.constant 0.000000e+00 : f32
    %247 = vector.shape_cast %36 : vector<38x1xi1> to vector<38x1xi1>
    %248 = vector.broadcast %247 : vector<38x1xi1> to vector<38x16xi1>
    %249 = vector.broadcast %cst_107 : f32 to vector<38x16xf32>
    %250 = arith.select %248, %246, %249 : vector<38x16xi1>, vector<38x16xf32>
    %cst_108 = arith.constant 0.000000e+00 : f32
    %251 = vector.broadcast %cst_108 : f32 to vector<1x16xf32>
    %252 = vector.extract_strided_slice %237 {offsets = [0, 0], sizes = [37, 16], strides = [1, 1]} : vector<38x16xf32> to vector<37x16xf32>
    %253 = tpu.concatenate %251, %252 in 0 : vector<1x16xf32>, vector<37x16xf32> -> vector<38x16xf32>
    %cst_109 = arith.constant 0.000000e+00 : f32
    %254 = vector.shape_cast %18 : vector<38x1xi1> to vector<38x1xi1>
    %255 = vector.broadcast %254 : vector<38x1xi1> to vector<38x16xi1>
    %256 = vector.broadcast %cst_109 : f32 to vector<38x16xf32>
    %257 = arith.select %255, %253, %256 : vector<38x16xi1>, vector<38x16xf32>
    %258 = vector.extract_strided_slice %237 {offsets = [1, 0], sizes = [37, 16], strides = [1, 1]} : vector<38x16xf32> to vector<37x16xf32>
    %259 = tpu.concatenate %258, %251 in 0 : vector<37x16xf32>, vector<1x16xf32> -> vector<38x16xf32>
    %cst_110 = arith.constant 0.000000e+00 : f32
    %260 = vector.shape_cast %36 : vector<38x1xi1> to vector<38x1xi1>
    %261 = vector.broadcast %260 : vector<38x1xi1> to vector<38x16xi1>
    %262 = vector.broadcast %cst_110 : f32 to vector<38x16xf32>
    %263 = arith.select %261, %259, %262 : vector<38x16xi1>, vector<38x16xf32>
    %264 = tpu.concatenate %244, %236, %250, %257, %237, %263 in 1 : vector<38x16xf32>, vector<38x16xf32>, vector<38x16xf32>, vector<38x16xf32>, vector<38x16xf32>, vector<38x16xf32> -> vector<38x96xf32>
    %265 = arith.truncf %264 : vector<38x96xf32> to vector<38x96xbf16>
    %c0_111 = arith.constant 0 : index
    %c0_112 = arith.constant 0 : index
    %266 = vector.load %arg4[%c0_111, %c0_112] : memref<96x128xbf16, #tpu.memory_space<vmem>>, vector<96x128xbf16>
    %cst_113 = arith.constant dense<0.000000e+00> : vector<38x128xf32>
    %267 = tpu.matmul %265, %266, %cst_113 {dimension_numbers = #tpu.dot_dimension_numbers<[1], [0], [0], [1], [0, 0, 1, 1], [], []>} : vector<38x96xbf16>, vector<96x128xbf16>, vector<38x128xf32> -> vector<38x128xf32>
    %268 = arith.index_cast %c1_i32_99 : i32 to index
    %c0_114 = arith.constant 0 : index
    %c0_115 = arith.constant 0 : index
    %269 = vector.load %arg6[%268, %c0_114, %c0_115] : memref<3x38x128xf32, #tpu.memory_space<vmem>>, vector<1x38x128xf32>
    %270 = vector.shape_cast %269 : vector<1x38x128xf32> to vector<38x128xf32>
    %271 = vector.extract_strided_slice %270 {offsets = [0, 0], sizes = [38, 64], strides = [1, 1]} : vector<38x128xf32> to vector<38x64xf32>
    %272 = vector.extract_strided_slice %267 {offsets = [0, 0], sizes = [38, 64], strides = [1, 1]} : vector<38x128xf32> to vector<38x64xf32>
    %273 = arith.addf %271, %272 : vector<38x64xf32>
    %274 = arith.index_cast %235 : i32 to index
    %c0_116 = arith.constant 0 : index
    %c0_117 = arith.constant 0 : index
    %275 = vector.load %arg6[%274, %c0_116, %c0_117] : memref<3x38x128xf32, #tpu.memory_space<vmem>>, vector<1x38x128xf32>
    %276 = vector.shape_cast %275 : vector<1x38x128xf32> to vector<38x128xf32>
    %277 = vector.extract_strided_slice %276 {offsets = [0, 64], sizes = [38, 64], strides = [1, 1]} : vector<38x128xf32> to vector<38x64xf32>
    %278 = vector.extract_strided_slice %267 {offsets = [0, 64], sizes = [38, 64], strides = [1, 1]} : vector<38x128xf32> to vector<38x64xf32>
    %279 = arith.addf %277, %278 : vector<38x64xf32>
    %c0_118 = arith.constant 0 : index
    %c0_119 = arith.constant 0 : index
    %280 = vector.load %arg8[%c0_118, %c0_119] : memref<38x16xf32, #tpu.memory_space<vmem>>, vector<38x16xf32>
    %281 = vector.extract_strided_slice %273 {offsets = [0, 0], sizes = [38, 16], strides = [1, 1]} : vector<38x64xf32> to vector<38x16xf32>
    %282 = arith.negf %281 : vector<38x16xf32>
    %283 = math.exp %282 : vector<38x16xf32>
    %cst_120 = arith.constant 1.000000e+00 : f32
    %284 = vector.broadcast %cst_120 : f32 to vector<38x16xf32>
    %285 = arith.addf %284, %283 : vector<38x16xf32>
    %286 = arith.divf %284, %285 : vector<38x16xf32>
    %287 = vector.extract_strided_slice %273 {offsets = [0, 16], sizes = [38, 16], strides = [1, 1]} : vector<38x64xf32> to vector<38x16xf32>
    %288 = arith.negf %287 : vector<38x16xf32>
    %289 = math.exp %288 : vector<38x16xf32>
    %cst_121 = arith.constant 1.000000e+00 : f32
    %290 = vector.broadcast %cst_121 : f32 to vector<38x16xf32>
    %291 = arith.addf %290, %289 : vector<38x16xf32>
    %292 = arith.divf %290, %291 : vector<38x16xf32>
    %293 = vector.extract_strided_slice %273 {offsets = [0, 32], sizes = [38, 16], strides = [1, 1]} : vector<38x64xf32> to vector<38x16xf32>
    %294 = arith.negf %293 : vector<38x16xf32>
    %295 = math.exp %294 : vector<38x16xf32>
    %cst_122 = arith.constant 1.000000e+00 : f32
    %296 = vector.broadcast %cst_122 : f32 to vector<38x16xf32>
    %297 = arith.addf %296, %295 : vector<38x16xf32>
    %298 = arith.divf %296, %297 : vector<38x16xf32>
    %299 = vector.extract_strided_slice %273 {offsets = [0, 48], sizes = [38, 16], strides = [1, 1]} : vector<38x64xf32> to vector<38x16xf32>
    %300 = math.tanh %299 : vector<38x16xf32>
    %301 = arith.mulf %292, %280 : vector<38x16xf32>
    %302 = arith.mulf %286, %300 : vector<38x16xf32>
    %303 = arith.addf %301, %302 : vector<38x16xf32>
    %304 = math.tanh %303 : vector<38x16xf32>
    %305 = arith.mulf %298, %304 : vector<38x16xf32>
    %c0_123 = arith.constant 0 : index
    %c0_124 = arith.constant 0 : index
    %306 = vector.load %arg7[%c0_123, %c0_124] : memref<38x16xf32, #tpu.memory_space<vmem>>, vector<38x16xf32>
    tpu.vector_store %arg7[%c0_123, %c0_124], %305 {strides = array<i32>} : memref<38x16xf32, #tpu.memory_space<vmem>>, vector<38x16xf32>,
    %c0_125 = arith.constant 0 : index
    %c0_126 = arith.constant 0 : index
    %307 = vector.load %arg8[%c0_125, %c0_126] : memref<38x16xf32, #tpu.memory_space<vmem>>, vector<38x16xf32>
    tpu.vector_store %arg8[%c0_125, %c0_126], %303 {strides = array<i32>} : memref<38x16xf32, #tpu.memory_space<vmem>>, vector<38x16xf32>,
    %308 = arith.index_cast %c1_i32_99 : i32 to index
    %c0_127 = arith.constant 0 : index
    %c0_128 = arith.constant 0 : index
    %309 = vector.load %arg11[%308, %c0_127, %c0_128] : memref<3x38x16xf32, #tpu.memory_space<vmem>>, vector<1x38x16xf32>
    %310 = vector.shape_cast %309 : vector<1x38x16xf32> to vector<38x16xf32>
    %311 = vector.shape_cast %305 : vector<38x16xf32> to vector<1x38x16xf32>
    tpu.vector_store %arg11[%308, %c0_127, %c0_128], %311 {strides = array<i32>} : memref<3x38x16xf32, #tpu.memory_space<vmem>>, vector<1x38x16xf32>,
    %c0_129 = arith.constant 0 : index
    %c0_130 = arith.constant 0 : index
    %312 = vector.load %arg10[%c0_129, %c0_130] : memref<38x16xf32, #tpu.memory_space<vmem>>, vector<38x16xf32>
    %313 = vector.extract_strided_slice %279 {offsets = [0, 0], sizes = [38, 16], strides = [1, 1]} : vector<38x64xf32> to vector<38x16xf32>
    %314 = arith.negf %313 : vector<38x16xf32>
    %315 = math.exp %314 : vector<38x16xf32>
    %cst_131 = arith.constant 1.000000e+00 : f32
    %316 = vector.broadcast %cst_131 : f32 to vector<38x16xf32>
    %317 = arith.addf %316, %315 : vector<38x16xf32>
    %318 = arith.divf %316, %317 : vector<38x16xf32>
    %319 = vector.extract_strided_slice %279 {offsets = [0, 16], sizes = [38, 16], strides = [1, 1]} : vector<38x64xf32> to vector<38x16xf32>
    %320 = arith.negf %319 : vector<38x16xf32>
    %321 = math.exp %320 : vector<38x16xf32>
    %cst_132 = arith.constant 1.000000e+00 : f32
    %322 = vector.broadcast %cst_132 : f32 to vector<38x16xf32>
    %323 = arith.addf %322, %321 : vector<38x16xf32>
    %324 = arith.divf %322, %323 : vector<38x16xf32>
    %325 = vector.extract_strided_slice %279 {offsets = [0, 32], sizes = [38, 16], strides = [1, 1]} : vector<38x64xf32> to vector<38x16xf32>
    %326 = arith.negf %325 : vector<38x16xf32>
    %327 = math.exp %326 : vector<38x16xf32>
    %cst_133 = arith.constant 1.000000e+00 : f32
    %328 = vector.broadcast %cst_133 : f32 to vector<38x16xf32>
    %329 = arith.addf %328, %327 : vector<38x16xf32>
    %330 = arith.divf %328, %329 : vector<38x16xf32>
    %331 = vector.extract_strided_slice %279 {offsets = [0, 48], sizes = [38, 16], strides = [1, 1]} : vector<38x64xf32> to vector<38x16xf32>
    %332 = math.tanh %331 : vector<38x16xf32>
    %333 = arith.mulf %324, %312 : vector<38x16xf32>
    %334 = arith.mulf %318, %332 : vector<38x16xf32>
    %335 = arith.addf %333, %334 : vector<38x16xf32>
    %336 = math.tanh %335 : vector<38x16xf32>
    %337 = arith.mulf %330, %336 : vector<38x16xf32>
    %c0_134 = arith.constant 0 : index
    %c0_135 = arith.constant 0 : index
    %338 = vector.load %arg9[%c0_134, %c0_135] : memref<38x16xf32, #tpu.memory_space<vmem>>, vector<38x16xf32>
    tpu.vector_store %arg9[%c0_134, %c0_135], %337 {strides = array<i32>} : memref<38x16xf32, #tpu.memory_space<vmem>>, vector<38x16xf32>,
    %c0_136 = arith.constant 0 : index
    %c0_137 = arith.constant 0 : index
    %339 = vector.load %arg10[%c0_136, %c0_137] : memref<38x16xf32, #tpu.memory_space<vmem>>, vector<38x16xf32>
    tpu.vector_store %arg10[%c0_136, %c0_137], %335 {strides = array<i32>} : memref<38x16xf32, #tpu.memory_space<vmem>>, vector<38x16xf32>,
    %340 = arith.index_cast %235 : i32 to index
    %c0_138 = arith.constant 0 : index
    %c0_139 = arith.constant 0 : index
    %341 = vector.load %arg12[%340, %c0_138, %c0_139] : memref<3x38x16xf32, #tpu.memory_space<vmem>>, vector<1x38x16xf32>
    %342 = vector.shape_cast %341 : vector<1x38x16xf32> to vector<38x16xf32>
    %343 = vector.shape_cast %337 : vector<38x16xf32> to vector<1x38x16xf32>
    tpu.vector_store %arg12[%340, %c0_138, %c0_139], %343 {strides = array<i32>} : memref<3x38x16xf32, #tpu.memory_space<vmem>>, vector<1x38x16xf32>,
    %c2_i32_140 = arith.constant 2 : i32
    %c2_i32_141 = arith.constant 2 : i32
    %344 = arith.subi %c2_i32_141, %c2_i32_140 : i32
    %c0_142 = arith.constant 0 : index
    %c0_143 = arith.constant 0 : index
    %345 = vector.load %arg7[%c0_142, %c0_143] : memref<38x16xf32, #tpu.memory_space<vmem>>, vector<38x16xf32>
    %c0_144 = arith.constant 0 : index
    %c0_145 = arith.constant 0 : index
    %346 = vector.load %arg9[%c0_144, %c0_145] : memref<38x16xf32, #tpu.memory_space<vmem>>, vector<38x16xf32>
    %cst_146 = arith.constant 0.000000e+00 : f32
    %347 = vector.broadcast %cst_146 : f32 to vector<1x16xf32>
    %348 = vector.extract_strided_slice %345 {offsets = [0, 0], sizes = [37, 16], strides = [1, 1]} : vector<38x16xf32> to vector<37x16xf32>
    %349 = tpu.concatenate %347, %348 in 0 : vector<1x16xf32>, vector<37x16xf32> -> vector<38x16xf32>
    %cst_147 = arith.constant 0.000000e+00 : f32
    %350 = vector.shape_cast %18 : vector<38x1xi1> to vector<38x1xi1>
    %351 = vector.broadcast %350 : vector<38x1xi1> to vector<38x16xi1>
    %352 = vector.broadcast %cst_147 : f32 to vector<38x16xf32>
    %353 = arith.select %351, %349, %352 : vector<38x16xi1>, vector<38x16xf32>
    %354 = vector.extract_strided_slice %345 {offsets = [1, 0], sizes = [37, 16], strides = [1, 1]} : vector<38x16xf32> to vector<37x16xf32>
    %355 = tpu.concatenate %354, %347 in 0 : vector<37x16xf32>, vector<1x16xf32> -> vector<38x16xf32>
    %cst_148 = arith.constant 0.000000e+00 : f32
    %356 = vector.shape_cast %36 : vector<38x1xi1> to vector<38x1xi1>
    %357 = vector.broadcast %356 : vector<38x1xi1> to vector<38x16xi1>
    %358 = vector.broadcast %cst_148 : f32 to vector<38x16xf32>
    %359 = arith.select %357, %355, %358 : vector<38x16xi1>, vector<38x16xf32>
    %cst_149 = arith.constant 0.000000e+00 : f32
    %360 = vector.broadcast %cst_149 : f32 to vector<1x16xf32>
    %361 = vector.extract_strided_slice %346 {offsets = [0, 0], sizes = [37, 16], strides = [1, 1]} : vector<38x16xf32> to vector<37x16xf32>
    %362 = tpu.concatenate %360, %361 in 0 : vector<1x16xf32>, vector<37x16xf32> -> vector<38x16xf32>
    %cst_150 = arith.constant 0.000000e+00 : f32
    %363 = vector.shape_cast %18 : vector<38x1xi1> to vector<38x1xi1>
    %364 = vector.broadcast %363 : vector<38x1xi1> to vector<38x16xi1>
    %365 = vector.broadcast %cst_150 : f32 to vector<38x16xf32>
    %366 = arith.select %364, %362, %365 : vector<38x16xi1>, vector<38x16xf32>
    %367 = vector.extract_strided_slice %346 {offsets = [1, 0], sizes = [37, 16], strides = [1, 1]} : vector<38x16xf32> to vector<37x16xf32>
    %368 = tpu.concatenate %367, %360 in 0 : vector<37x16xf32>, vector<1x16xf32> -> vector<38x16xf32>
    %cst_151 = arith.constant 0.000000e+00 : f32
    %369 = vector.shape_cast %36 : vector<38x1xi1> to vector<38x1xi1>
    %370 = vector.broadcast %369 : vector<38x1xi1> to vector<38x16xi1>
    %371 = vector.broadcast %cst_151 : f32 to vector<38x16xf32>
    %372 = arith.select %370, %368, %371 : vector<38x16xi1>, vector<38x16xf32>
    %373 = tpu.concatenate %353, %345, %359, %366, %346, %372 in 1 : vector<38x16xf32>, vector<38x16xf32>, vector<38x16xf32>, vector<38x16xf32>, vector<38x16xf32>, vector<38x16xf32> -> vector<38x96xf32>
    %374 = arith.truncf %373 : vector<38x96xf32> to vector<38x96xbf16>
    %c0_152 = arith.constant 0 : index
    %c0_153 = arith.constant 0 : index
    %375 = vector.load %arg4[%c0_152, %c0_153] : memref<96x128xbf16, #tpu.memory_space<vmem>>, vector<96x128xbf16>
    %cst_154 = arith.constant dense<0.000000e+00> : vector<38x128xf32>
    %376 = tpu.matmul %374, %375, %cst_154 {dimension_numbers = #tpu.dot_dimension_numbers<[1], [0], [0], [1], [0, 0, 1, 1], [], []>} : vector<38x96xbf16>, vector<96x128xbf16>, vector<38x128xf32> -> vector<38x128xf32>
    %377 = arith.index_cast %c2_i32_140 : i32 to index
    %c0_155 = arith.constant 0 : index
    %c0_156 = arith.constant 0 : index
    %378 = vector.load %arg6[%377, %c0_155, %c0_156] : memref<3x38x128xf32, #tpu.memory_space<vmem>>, vector<1x38x128xf32>
    %379 = vector.shape_cast %378 : vector<1x38x128xf32> to vector<38x128xf32>
    %380 = vector.extract_strided_slice %379 {offsets = [0, 0], sizes = [38, 64], strides = [1, 1]} : vector<38x128xf32> to vector<38x64xf32>
    %381 = vector.extract_strided_slice %376 {offsets = [0, 0], sizes = [38, 64], strides = [1, 1]} : vector<38x128xf32> to vector<38x64xf32>
    %382 = arith.addf %380, %381 : vector<38x64xf32>
    %383 = arith.index_cast %344 : i32 to index
    %c0_157 = arith.constant 0 : index
    %c0_158 = arith.constant 0 : index
    %384 = vector.load %arg6[%383, %c0_157, %c0_158] : memref<3x38x128xf32, #tpu.memory_space<vmem>>, vector<1x38x128xf32>
    %385 = vector.shape_cast %384 : vector<1x38x128xf32> to vector<38x128xf32>
    %386 = vector.extract_strided_slice %385 {offsets = [0, 64], sizes = [38, 64], strides = [1, 1]} : vector<38x128xf32> to vector<38x64xf32>
    %387 = vector.extract_strided_slice %376 {offsets = [0, 64], sizes = [38, 64], strides = [1, 1]} : vector<38x128xf32> to vector<38x64xf32>
    %388 = arith.addf %386, %387 : vector<38x64xf32>
    %c0_159 = arith.constant 0 : index
    %c0_160 = arith.constant 0 : index
    %389 = vector.load %arg8[%c0_159, %c0_160] : memref<38x16xf32, #tpu.memory_space<vmem>>, vector<38x16xf32>
    %390 = vector.extract_strided_slice %382 {offsets = [0, 0], sizes = [38, 16], strides = [1, 1]} : vector<38x64xf32> to vector<38x16xf32>
    %391 = arith.negf %390 : vector<38x16xf32>
    %392 = math.exp %391 : vector<38x16xf32>
    %cst_161 = arith.constant 1.000000e+00 : f32
    %393 = vector.broadcast %cst_161 : f32 to vector<38x16xf32>
    %394 = arith.addf %393, %392 : vector<38x16xf32>
    %395 = arith.divf %393, %394 : vector<38x16xf32>
    %396 = vector.extract_strided_slice %382 {offsets = [0, 16], sizes = [38, 16], strides = [1, 1]} : vector<38x64xf32> to vector<38x16xf32>
    %397 = arith.negf %396 : vector<38x16xf32>
    %398 = math.exp %397 : vector<38x16xf32>
    %cst_162 = arith.constant 1.000000e+00 : f32
    %399 = vector.broadcast %cst_162 : f32 to vector<38x16xf32>
    %400 = arith.addf %399, %398 : vector<38x16xf32>
    %401 = arith.divf %399, %400 : vector<38x16xf32>
    %402 = vector.extract_strided_slice %382 {offsets = [0, 32], sizes = [38, 16], strides = [1, 1]} : vector<38x64xf32> to vector<38x16xf32>
    %403 = arith.negf %402 : vector<38x16xf32>
    %404 = math.exp %403 : vector<38x16xf32>
    %cst_163 = arith.constant 1.000000e+00 : f32
    %405 = vector.broadcast %cst_163 : f32 to vector<38x16xf32>
    %406 = arith.addf %405, %404 : vector<38x16xf32>
    %407 = arith.divf %405, %406 : vector<38x16xf32>
    %408 = vector.extract_strided_slice %382 {offsets = [0, 48], sizes = [38, 16], strides = [1, 1]} : vector<38x64xf32> to vector<38x16xf32>
    %409 = math.tanh %408 : vector<38x16xf32>
    %410 = arith.mulf %401, %389 : vector<38x16xf32>
    %411 = arith.mulf %395, %409 : vector<38x16xf32>
    %412 = arith.addf %410, %411 : vector<38x16xf32>
    %413 = math.tanh %412 : vector<38x16xf32>
    %414 = arith.mulf %407, %413 : vector<38x16xf32>
    %c0_164 = arith.constant 0 : index
    %c0_165 = arith.constant 0 : index
    %415 = vector.load %arg7[%c0_164, %c0_165] : memref<38x16xf32, #tpu.memory_space<vmem>>, vector<38x16xf32>
    tpu.vector_store %arg7[%c0_164, %c0_165], %414 {strides = array<i32>} : memref<38x16xf32, #tpu.memory_space<vmem>>, vector<38x16xf32>,
    %c0_166 = arith.constant 0 : index
    %c0_167 = arith.constant 0 : index
    %416 = vector.load %arg8[%c0_166, %c0_167] : memref<38x16xf32, #tpu.memory_space<vmem>>, vector<38x16xf32>
    tpu.vector_store %arg8[%c0_166, %c0_167], %412 {strides = array<i32>} : memref<38x16xf32, #tpu.memory_space<vmem>>, vector<38x16xf32>,
    %417 = arith.index_cast %c2_i32_140 : i32 to index
    %c0_168 = arith.constant 0 : index
    %c0_169 = arith.constant 0 : index
    %418 = vector.load %arg11[%417, %c0_168, %c0_169] : memref<3x38x16xf32, #tpu.memory_space<vmem>>, vector<1x38x16xf32>
    %419 = vector.shape_cast %418 : vector<1x38x16xf32> to vector<38x16xf32>
    %420 = vector.shape_cast %414 : vector<38x16xf32> to vector<1x38x16xf32>
    tpu.vector_store %arg11[%417, %c0_168, %c0_169], %420 {strides = array<i32>} : memref<3x38x16xf32, #tpu.memory_space<vmem>>, vector<1x38x16xf32>,
    %c0_170 = arith.constant 0 : index
    %c0_171 = arith.constant 0 : index
    %421 = vector.load %arg10[%c0_170, %c0_171] : memref<38x16xf32, #tpu.memory_space<vmem>>, vector<38x16xf32>
    %422 = vector.extract_strided_slice %388 {offsets = [0, 0], sizes = [38, 16], strides = [1, 1]} : vector<38x64xf32> to vector<38x16xf32>
    %423 = arith.negf %422 : vector<38x16xf32>
    %424 = math.exp %423 : vector<38x16xf32>
    %cst_172 = arith.constant 1.000000e+00 : f32
    %425 = vector.broadcast %cst_172 : f32 to vector<38x16xf32>
    %426 = arith.addf %425, %424 : vector<38x16xf32>
    %427 = arith.divf %425, %426 : vector<38x16xf32>
    %428 = vector.extract_strided_slice %388 {offsets = [0, 16], sizes = [38, 16], strides = [1, 1]} : vector<38x64xf32> to vector<38x16xf32>
    %429 = arith.negf %428 : vector<38x16xf32>
    %430 = math.exp %429 : vector<38x16xf32>
    %cst_173 = arith.constant 1.000000e+00 : f32
    %431 = vector.broadcast %cst_173 : f32 to vector<38x16xf32>
    %432 = arith.addf %431, %430 : vector<38x16xf32>
    %433 = arith.divf %431, %432 : vector<38x16xf32>
    %434 = vector.extract_strided_slice %388 {offsets = [0, 32], sizes = [38, 16], strides = [1, 1]} : vector<38x64xf32> to vector<38x16xf32>
    %435 = arith.negf %434 : vector<38x16xf32>
    %436 = math.exp %435 : vector<38x16xf32>
    %cst_174 = arith.constant 1.000000e+00 : f32
    %437 = vector.broadcast %cst_174 : f32 to vector<38x16xf32>
    %438 = arith.addf %437, %436 : vector<38x16xf32>
    %439 = arith.divf %437, %438 : vector<38x16xf32>
    %440 = vector.extract_strided_slice %388 {offsets = [0, 48], sizes = [38, 16], strides = [1, 1]} : vector<38x64xf32> to vector<38x16xf32>
    %441 = math.tanh %440 : vector<38x16xf32>
    %442 = arith.mulf %433, %421 : vector<38x16xf32>
    %443 = arith.mulf %427, %441 : vector<38x16xf32>
    %444 = arith.addf %442, %443 : vector<38x16xf32>
    %445 = math.tanh %444 : vector<38x16xf32>
    %446 = arith.mulf %439, %445 : vector<38x16xf32>
    %c0_175 = arith.constant 0 : index
    %c0_176 = arith.constant 0 : index
    %447 = vector.load %arg9[%c0_175, %c0_176] : memref<38x16xf32, #tpu.memory_space<vmem>>, vector<38x16xf32>
    tpu.vector_store %arg9[%c0_175, %c0_176], %446 {strides = array<i32>} : memref<38x16xf32, #tpu.memory_space<vmem>>, vector<38x16xf32>,
    %c0_177 = arith.constant 0 : index
    %c0_178 = arith.constant 0 : index
    %448 = vector.load %arg10[%c0_177, %c0_178] : memref<38x16xf32, #tpu.memory_space<vmem>>, vector<38x16xf32>
    tpu.vector_store %arg10[%c0_177, %c0_178], %444 {strides = array<i32>} : memref<38x16xf32, #tpu.memory_space<vmem>>, vector<38x16xf32>,
    %449 = arith.index_cast %344 : i32 to index
    %c0_179 = arith.constant 0 : index
    %c0_180 = arith.constant 0 : index
    %450 = vector.load %arg12[%449, %c0_179, %c0_180] : memref<3x38x16xf32, #tpu.memory_space<vmem>>, vector<1x38x16xf32>
    %451 = vector.shape_cast %450 : vector<1x38x16xf32> to vector<38x16xf32>
    %452 = vector.shape_cast %446 : vector<38x16xf32> to vector<1x38x16xf32>
    tpu.vector_store %arg12[%449, %c0_179, %c0_180], %452 {strides = array<i32>} : memref<3x38x16xf32, #tpu.memory_space<vmem>>, vector<1x38x16xf32>,
    %c3_i32_181 = arith.constant 3 : i32
    %c0_182 = arith.constant 0 : index
    %c0_183 = arith.constant 0 : index
    %c0_184 = arith.constant 0 : index
    %453 = vector.load %arg11[%c0_182, %c0_183, %c0_184] : memref<3x38x16xf32, #tpu.memory_space<vmem>>, vector<3x38x16xf32>
    %c0_185 = arith.constant 0 : index
    %c0_186 = arith.constant 0 : index
    %c0_187 = arith.constant 0 : index
    %454 = vector.load %arg12[%c0_185, %c0_186, %c0_187] : memref<3x38x16xf32, #tpu.memory_space<vmem>>, vector<3x38x16xf32>
    %455 = tpu.concatenate %453, %454 in 2 : vector<3x38x16xf32>, vector<3x38x16xf32> -> vector<3x38x32xf32>
    %c0_188 = arith.constant 0 : index
    %c0_189 = arith.constant 0 : index
    %c0_190 = arith.constant 0 : index
    %456 = vector.load %arg5[%c0_188, %c0_189, %c0_190] : memref<3x38x32xf32, #tpu.memory_space<vmem>>, vector<3x38x32xf32>
    tpu.vector_store %arg5[%c0_188, %c0_189, %c0_190], %455 {strides = array<i32>} : memref<3x38x32xf32, #tpu.memory_space<vmem>>, vector<3x38x32xf32>,
    return
  }
  func.func @transform_0(%arg0: i32) -> (i32, i32, i32) {
    %c0_i32 = arith.constant 0 : i32
    %c0_i32_0 = arith.constant 0 : i32
    %c0_i32_1 = arith.constant 0 : i32
    %c0_i32_2 = arith.constant 0 : i32
    return %c0_i32, %c0_i32_0, %c0_i32_1 : i32, i32, i32
  }
  func.func @transform_1(%arg0: i32) -> (i32, i32) {
    %c0_i32 = arith.constant 0 : i32
    %c0_i32_0 = arith.constant 0 : i32
    %c0_i32_1 = arith.constant 0 : i32
    return %c0_i32, %c0_i32_0 : i32, i32
  }
  func.func @transform_2(%arg0: i32) -> (i32, i32) {
    %c0_i32 = arith.constant 0 : i32
    %c0_i32_0 = arith.constant 0 : i32
    %c0_i32_1 = arith.constant 0 : i32
    return %c0_i32, %c0_i32_0 : i32, i32
  }
  func.func @transform_3(%arg0: i32) -> (i32, i32) {
    %c0_i32 = arith.constant 0 : i32
    %c0_i32_0 = arith.constant 0 : i32
    %c0_i32_1 = arith.constant 0 : i32
    return %c0_i32, %c0_i32_0 : i32, i32
  }
  func.func @transform_4(%arg0: i32) -> (i32, i32, i32) {
    %c0_i32 = arith.constant 0 : i32
    %c0_i32_0 = arith.constant 0 : i32
    %c0_i32_1 = arith.constant 0 : i32
    %c0_i32_2 = arith.constant 0 : i32
    return %c0_i32, %c0_i32_0, %c0_i32_1 : i32, i32, i32
  }
}

module attributes {stable_mosaic.version = 11 : i64} {
  func.func @_bilstm_kernel(%arg0: i32, %arg1: memref<3x2x608xf32, #tpu.memory_space<vmem>>, %arg2: memref<608x256xbf16, #tpu.memory_space<vmem>>, %arg3: memref<1x256xf32, #tpu.memory_space<vmem>>, %arg4: memref<64x256xbf16, #tpu.memory_space<vmem>>, %arg5: memref<3x2x64xf32, #tpu.memory_space<vmem>>, %arg6: memref<3x2x256xf32, #tpu.memory_space<vmem>>, %arg7: memref<2x32xf32, #tpu.memory_space<vmem>>, %arg8: memref<2x32xf32, #tpu.memory_space<vmem>>, %arg9: memref<2x32xf32, #tpu.memory_space<vmem>>, %arg10: memref<2x32xf32, #tpu.memory_space<vmem>>, %arg11: memref<3x2x32xf32, #tpu.memory_space<vmem>>, %arg12: memref<3x2x32xf32, #tpu.memory_space<vmem>>) attributes {dimension_semantics = [#tpu.dimension_semantics<arbitrary>], iteration_bounds = array<i64: 1>, scalar_prefetch = 0 : i64, scratch_operands = 7 : i64, tpu.core_type = #tpu.core_type<tc>, window_params = [{pipeline_mode = #tpu.pipeline_mode<synchronous>, transform_indices = @transform_0, window_bounds = array<i64: 3, 2, 608>}, {pipeline_mode = #tpu.pipeline_mode<synchronous>, transform_indices = @transform_1, window_bounds = array<i64: 608, 256>}, {pipeline_mode = #tpu.pipeline_mode<synchronous>, transform_indices = @transform_2, window_bounds = array<i64: 1, 256>}, {pipeline_mode = #tpu.pipeline_mode<synchronous>, transform_indices = @transform_3, window_bounds = array<i64: 64, 256>}, {pipeline_mode = #tpu.pipeline_mode<synchronous>, transform_indices = @transform_4, window_bounds = array<i64: 3, 2, 64>}]} {
    %c0_i32 = arith.constant 0 : i32
    %0 = arith.index_cast %c0_i32 : i32 to index
    %c0 = arith.constant 0 : index
    %c0_0 = arith.constant 0 : index
    %1 = vector.load %arg1[%0, %c0, %c0_0] : memref<3x2x608xf32, #tpu.memory_space<vmem>>, vector<1x2x608xf32>
    %2 = vector.shape_cast %1 : vector<1x2x608xf32> to vector<2x608xf32>
    %3 = arith.truncf %2 : vector<2x608xf32> to vector<2x608xbf16>
    %c0_1 = arith.constant 0 : index
    %c0_2 = arith.constant 0 : index
    %4 = vector.load %arg2[%c0_1, %c0_2] : memref<608x256xbf16, #tpu.memory_space<vmem>>, vector<608x256xbf16>
    %cst = arith.constant dense<0.000000e+00> : vector<2x256xf32>
    %5 = tpu.matmul %3, %4, %cst {dimension_numbers = #tpu.dot_dimension_numbers<[1], [0], [0], [1], [0, 0, 1, 1], [], []>} : vector<2x608xbf16>, vector<608x256xbf16>, vector<2x256xf32> -> vector<2x256xf32>
    %c0_3 = arith.constant 0 : index
    %c0_4 = arith.constant 0 : index
    %6 = vector.load %arg3[%c0_3, %c0_4] : memref<1x256xf32, #tpu.memory_space<vmem>>, vector<1x256xf32>
    %7 = vector.broadcast %6 : vector<1x256xf32> to vector<2x256xf32>
    %8 = arith.addf %5, %7 : vector<2x256xf32>
    %9 = arith.index_cast %c0_i32 : i32 to index
    %c0_5 = arith.constant 0 : index
    %c0_6 = arith.constant 0 : index
    %10 = vector.load %arg6[%9, %c0_5, %c0_6] : memref<3x2x256xf32, #tpu.memory_space<vmem>>, vector<1x2x256xf32>
    %11 = vector.shape_cast %10 : vector<1x2x256xf32> to vector<2x256xf32>
    %12 = vector.shape_cast %8 : vector<2x256xf32> to vector<1x2x256xf32>
    tpu.vector_store %arg6[%9, %c0_5, %c0_6], %12 {strides = array<i32>} : memref<3x2x256xf32, #tpu.memory_space<vmem>>, vector<1x2x256xf32>,
    %c1_i32 = arith.constant 1 : i32
    %13 = arith.index_cast %c1_i32 : i32 to index
    %c0_7 = arith.constant 0 : index
    %c0_8 = arith.constant 0 : index
    %14 = vector.load %arg1[%13, %c0_7, %c0_8] : memref<3x2x608xf32, #tpu.memory_space<vmem>>, vector<1x2x608xf32>
    %15 = vector.shape_cast %14 : vector<1x2x608xf32> to vector<2x608xf32>
    %16 = arith.truncf %15 : vector<2x608xf32> to vector<2x608xbf16>
    %c0_9 = arith.constant 0 : index
    %c0_10 = arith.constant 0 : index
    %17 = vector.load %arg2[%c0_9, %c0_10] : memref<608x256xbf16, #tpu.memory_space<vmem>>, vector<608x256xbf16>
    %cst_11 = arith.constant dense<0.000000e+00> : vector<2x256xf32>
    %18 = tpu.matmul %16, %17, %cst_11 {dimension_numbers = #tpu.dot_dimension_numbers<[1], [0], [0], [1], [0, 0, 1, 1], [], []>} : vector<2x608xbf16>, vector<608x256xbf16>, vector<2x256xf32> -> vector<2x256xf32>
    %c0_12 = arith.constant 0 : index
    %c0_13 = arith.constant 0 : index
    %19 = vector.load %arg3[%c0_12, %c0_13] : memref<1x256xf32, #tpu.memory_space<vmem>>, vector<1x256xf32>
    %20 = vector.broadcast %19 : vector<1x256xf32> to vector<2x256xf32>
    %21 = arith.addf %18, %20 : vector<2x256xf32>
    %22 = arith.index_cast %c1_i32 : i32 to index
    %c0_14 = arith.constant 0 : index
    %c0_15 = arith.constant 0 : index
    %23 = vector.load %arg6[%22, %c0_14, %c0_15] : memref<3x2x256xf32, #tpu.memory_space<vmem>>, vector<1x2x256xf32>
    %24 = vector.shape_cast %23 : vector<1x2x256xf32> to vector<2x256xf32>
    %25 = vector.shape_cast %21 : vector<2x256xf32> to vector<1x2x256xf32>
    tpu.vector_store %arg6[%22, %c0_14, %c0_15], %25 {strides = array<i32>} : memref<3x2x256xf32, #tpu.memory_space<vmem>>, vector<1x2x256xf32>,
    %c2_i32 = arith.constant 2 : i32
    %26 = arith.index_cast %c2_i32 : i32 to index
    %c0_16 = arith.constant 0 : index
    %c0_17 = arith.constant 0 : index
    %27 = vector.load %arg1[%26, %c0_16, %c0_17] : memref<3x2x608xf32, #tpu.memory_space<vmem>>, vector<1x2x608xf32>
    %28 = vector.shape_cast %27 : vector<1x2x608xf32> to vector<2x608xf32>
    %29 = arith.truncf %28 : vector<2x608xf32> to vector<2x608xbf16>
    %c0_18 = arith.constant 0 : index
    %c0_19 = arith.constant 0 : index
    %30 = vector.load %arg2[%c0_18, %c0_19] : memref<608x256xbf16, #tpu.memory_space<vmem>>, vector<608x256xbf16>
    %cst_20 = arith.constant dense<0.000000e+00> : vector<2x256xf32>
    %31 = tpu.matmul %29, %30, %cst_20 {dimension_numbers = #tpu.dot_dimension_numbers<[1], [0], [0], [1], [0, 0, 1, 1], [], []>} : vector<2x608xbf16>, vector<608x256xbf16>, vector<2x256xf32> -> vector<2x256xf32>
    %c0_21 = arith.constant 0 : index
    %c0_22 = arith.constant 0 : index
    %32 = vector.load %arg3[%c0_21, %c0_22] : memref<1x256xf32, #tpu.memory_space<vmem>>, vector<1x256xf32>
    %33 = vector.broadcast %32 : vector<1x256xf32> to vector<2x256xf32>
    %34 = arith.addf %31, %33 : vector<2x256xf32>
    %35 = arith.index_cast %c2_i32 : i32 to index
    %c0_23 = arith.constant 0 : index
    %c0_24 = arith.constant 0 : index
    %36 = vector.load %arg6[%35, %c0_23, %c0_24] : memref<3x2x256xf32, #tpu.memory_space<vmem>>, vector<1x2x256xf32>
    %37 = vector.shape_cast %36 : vector<1x2x256xf32> to vector<2x256xf32>
    %38 = vector.shape_cast %34 : vector<2x256xf32> to vector<1x2x256xf32>
    tpu.vector_store %arg6[%35, %c0_23, %c0_24], %38 {strides = array<i32>} : memref<3x2x256xf32, #tpu.memory_space<vmem>>, vector<1x2x256xf32>,
    %c3_i32 = arith.constant 3 : i32
    %cst_25 = arith.constant 0.000000e+00 : f32
    %39 = vector.broadcast %cst_25 : f32 to vector<2x32xf32>
    %c0_26 = arith.constant 0 : index
    %c0_27 = arith.constant 0 : index
    %40 = vector.load %arg7[%c0_26, %c0_27] : memref<2x32xf32, #tpu.memory_space<vmem>>, vector<2x32xf32>
    tpu.vector_store %arg7[%c0_26, %c0_27], %39 {strides = array<i32>} : memref<2x32xf32, #tpu.memory_space<vmem>>, vector<2x32xf32>,
    %cst_28 = arith.constant 0.000000e+00 : f32
    %41 = vector.broadcast %cst_28 : f32 to vector<2x32xf32>
    %c0_29 = arith.constant 0 : index
    %c0_30 = arith.constant 0 : index
    %42 = vector.load %arg8[%c0_29, %c0_30] : memref<2x32xf32, #tpu.memory_space<vmem>>, vector<2x32xf32>
    tpu.vector_store %arg8[%c0_29, %c0_30], %41 {strides = array<i32>} : memref<2x32xf32, #tpu.memory_space<vmem>>, vector<2x32xf32>,
    %cst_31 = arith.constant 0.000000e+00 : f32
    %43 = vector.broadcast %cst_31 : f32 to vector<2x32xf32>
    %c0_32 = arith.constant 0 : index
    %c0_33 = arith.constant 0 : index
    %44 = vector.load %arg9[%c0_32, %c0_33] : memref<2x32xf32, #tpu.memory_space<vmem>>, vector<2x32xf32>
    tpu.vector_store %arg9[%c0_32, %c0_33], %43 {strides = array<i32>} : memref<2x32xf32, #tpu.memory_space<vmem>>, vector<2x32xf32>,
    %cst_34 = arith.constant 0.000000e+00 : f32
    %45 = vector.broadcast %cst_34 : f32 to vector<2x32xf32>
    %c0_35 = arith.constant 0 : index
    %c0_36 = arith.constant 0 : index
    %46 = vector.load %arg10[%c0_35, %c0_36] : memref<2x32xf32, #tpu.memory_space<vmem>>, vector<2x32xf32>
    tpu.vector_store %arg10[%c0_35, %c0_36], %45 {strides = array<i32>} : memref<2x32xf32, #tpu.memory_space<vmem>>, vector<2x32xf32>,
    %c0_i32_37 = arith.constant 0 : i32
    %c2_i32_38 = arith.constant 2 : i32
    %47 = arith.subi %c2_i32_38, %c0_i32_37 : i32
    %c0_39 = arith.constant 0 : index
    %c0_40 = arith.constant 0 : index
    %48 = vector.load %arg7[%c0_39, %c0_40] : memref<2x32xf32, #tpu.memory_space<vmem>>, vector<2x32xf32>
    %c0_41 = arith.constant 0 : index
    %c0_42 = arith.constant 0 : index
    %49 = vector.load %arg9[%c0_41, %c0_42] : memref<2x32xf32, #tpu.memory_space<vmem>>, vector<2x32xf32>
    %50 = tpu.concatenate %48, %49 in 1 : vector<2x32xf32>, vector<2x32xf32> -> vector<2x64xf32>
    %51 = arith.truncf %50 : vector<2x64xf32> to vector<2x64xbf16>
    %c0_43 = arith.constant 0 : index
    %c0_44 = arith.constant 0 : index
    %52 = vector.load %arg4[%c0_43, %c0_44] : memref<64x256xbf16, #tpu.memory_space<vmem>>, vector<64x256xbf16>
    %cst_45 = arith.constant dense<0.000000e+00> : vector<2x256xf32>
    %53 = tpu.matmul %51, %52, %cst_45 {dimension_numbers = #tpu.dot_dimension_numbers<[1], [0], [0], [1], [0, 0, 1, 1], [], []>} : vector<2x64xbf16>, vector<64x256xbf16>, vector<2x256xf32> -> vector<2x256xf32>
    %54 = arith.index_cast %c0_i32_37 : i32 to index
    %c0_46 = arith.constant 0 : index
    %c0_47 = arith.constant 0 : index
    %55 = vector.load %arg6[%54, %c0_46, %c0_47] : memref<3x2x256xf32, #tpu.memory_space<vmem>>, vector<1x2x256xf32>
    %56 = vector.shape_cast %55 : vector<1x2x256xf32> to vector<2x256xf32>
    %57 = vector.extract_strided_slice %56 {offsets = [0, 0], sizes = [2, 128], strides = [1, 1]} : vector<2x256xf32> to vector<2x128xf32>
    %58 = vector.extract_strided_slice %53 {offsets = [0, 0], sizes = [2, 128], strides = [1, 1]} : vector<2x256xf32> to vector<2x128xf32>
    %59 = arith.addf %57, %58 : vector<2x128xf32>
    %60 = arith.index_cast %47 : i32 to index
    %c0_48 = arith.constant 0 : index
    %c0_49 = arith.constant 0 : index
    %61 = vector.load %arg6[%60, %c0_48, %c0_49] : memref<3x2x256xf32, #tpu.memory_space<vmem>>, vector<1x2x256xf32>
    %62 = vector.shape_cast %61 : vector<1x2x256xf32> to vector<2x256xf32>
    %63 = vector.extract_strided_slice %62 {offsets = [0, 128], sizes = [2, 128], strides = [1, 1]} : vector<2x256xf32> to vector<2x128xf32>
    %64 = vector.extract_strided_slice %53 {offsets = [0, 128], sizes = [2, 128], strides = [1, 1]} : vector<2x256xf32> to vector<2x128xf32>
    %65 = arith.addf %63, %64 : vector<2x128xf32>
    %c0_50 = arith.constant 0 : index
    %c0_51 = arith.constant 0 : index
    %66 = vector.load %arg8[%c0_50, %c0_51] : memref<2x32xf32, #tpu.memory_space<vmem>>, vector<2x32xf32>
    %67 = vector.extract_strided_slice %59 {offsets = [0, 0], sizes = [2, 32], strides = [1, 1]} : vector<2x128xf32> to vector<2x32xf32>
    %68 = arith.negf %67 : vector<2x32xf32>
    %69 = math.exp %68 : vector<2x32xf32>
    %cst_52 = arith.constant 1.000000e+00 : f32
    %70 = vector.broadcast %cst_52 : f32 to vector<2x32xf32>
    %71 = arith.addf %70, %69 : vector<2x32xf32>
    %72 = arith.divf %70, %71 : vector<2x32xf32>
    %73 = vector.extract_strided_slice %59 {offsets = [0, 32], sizes = [2, 32], strides = [1, 1]} : vector<2x128xf32> to vector<2x32xf32>
    %74 = arith.negf %73 : vector<2x32xf32>
    %75 = math.exp %74 : vector<2x32xf32>
    %cst_53 = arith.constant 1.000000e+00 : f32
    %76 = vector.broadcast %cst_53 : f32 to vector<2x32xf32>
    %77 = arith.addf %76, %75 : vector<2x32xf32>
    %78 = arith.divf %76, %77 : vector<2x32xf32>
    %79 = vector.extract_strided_slice %59 {offsets = [0, 64], sizes = [2, 32], strides = [1, 1]} : vector<2x128xf32> to vector<2x32xf32>
    %80 = math.tanh %79 : vector<2x32xf32>
    %81 = vector.extract_strided_slice %59 {offsets = [0, 96], sizes = [2, 32], strides = [1, 1]} : vector<2x128xf32> to vector<2x32xf32>
    %82 = arith.negf %81 : vector<2x32xf32>
    %83 = math.exp %82 : vector<2x32xf32>
    %cst_54 = arith.constant 1.000000e+00 : f32
    %84 = vector.broadcast %cst_54 : f32 to vector<2x32xf32>
    %85 = arith.addf %84, %83 : vector<2x32xf32>
    %86 = arith.divf %84, %85 : vector<2x32xf32>
    %87 = arith.mulf %78, %66 : vector<2x32xf32>
    %88 = arith.mulf %72, %80 : vector<2x32xf32>
    %89 = arith.addf %87, %88 : vector<2x32xf32>
    %90 = math.tanh %89 : vector<2x32xf32>
    %91 = arith.mulf %86, %90 : vector<2x32xf32>
    %c0_55 = arith.constant 0 : index
    %c0_56 = arith.constant 0 : index
    %92 = vector.load %arg7[%c0_55, %c0_56] : memref<2x32xf32, #tpu.memory_space<vmem>>, vector<2x32xf32>
    tpu.vector_store %arg7[%c0_55, %c0_56], %91 {strides = array<i32>} : memref<2x32xf32, #tpu.memory_space<vmem>>, vector<2x32xf32>,
    %c0_57 = arith.constant 0 : index
    %c0_58 = arith.constant 0 : index
    %93 = vector.load %arg8[%c0_57, %c0_58] : memref<2x32xf32, #tpu.memory_space<vmem>>, vector<2x32xf32>
    tpu.vector_store %arg8[%c0_57, %c0_58], %89 {strides = array<i32>} : memref<2x32xf32, #tpu.memory_space<vmem>>, vector<2x32xf32>,
    %94 = arith.index_cast %c0_i32_37 : i32 to index
    %c0_59 = arith.constant 0 : index
    %c0_60 = arith.constant 0 : index
    %95 = vector.load %arg11[%94, %c0_59, %c0_60] : memref<3x2x32xf32, #tpu.memory_space<vmem>>, vector<1x2x32xf32>
    %96 = vector.shape_cast %95 : vector<1x2x32xf32> to vector<2x32xf32>
    %97 = vector.shape_cast %91 : vector<2x32xf32> to vector<1x2x32xf32>
    tpu.vector_store %arg11[%94, %c0_59, %c0_60], %97 {strides = array<i32>} : memref<3x2x32xf32, #tpu.memory_space<vmem>>, vector<1x2x32xf32>,
    %c0_61 = arith.constant 0 : index
    %c0_62 = arith.constant 0 : index
    %98 = vector.load %arg10[%c0_61, %c0_62] : memref<2x32xf32, #tpu.memory_space<vmem>>, vector<2x32xf32>
    %99 = vector.extract_strided_slice %65 {offsets = [0, 0], sizes = [2, 32], strides = [1, 1]} : vector<2x128xf32> to vector<2x32xf32>
    %100 = arith.negf %99 : vector<2x32xf32>
    %101 = math.exp %100 : vector<2x32xf32>
    %cst_63 = arith.constant 1.000000e+00 : f32
    %102 = vector.broadcast %cst_63 : f32 to vector<2x32xf32>
    %103 = arith.addf %102, %101 : vector<2x32xf32>
    %104 = arith.divf %102, %103 : vector<2x32xf32>
    %105 = vector.extract_strided_slice %65 {offsets = [0, 32], sizes = [2, 32], strides = [1, 1]} : vector<2x128xf32> to vector<2x32xf32>
    %106 = arith.negf %105 : vector<2x32xf32>
    %107 = math.exp %106 : vector<2x32xf32>
    %cst_64 = arith.constant 1.000000e+00 : f32
    %108 = vector.broadcast %cst_64 : f32 to vector<2x32xf32>
    %109 = arith.addf %108, %107 : vector<2x32xf32>
    %110 = arith.divf %108, %109 : vector<2x32xf32>
    %111 = vector.extract_strided_slice %65 {offsets = [0, 64], sizes = [2, 32], strides = [1, 1]} : vector<2x128xf32> to vector<2x32xf32>
    %112 = math.tanh %111 : vector<2x32xf32>
    %113 = vector.extract_strided_slice %65 {offsets = [0, 96], sizes = [2, 32], strides = [1, 1]} : vector<2x128xf32> to vector<2x32xf32>
    %114 = arith.negf %113 : vector<2x32xf32>
    %115 = math.exp %114 : vector<2x32xf32>
    %cst_65 = arith.constant 1.000000e+00 : f32
    %116 = vector.broadcast %cst_65 : f32 to vector<2x32xf32>
    %117 = arith.addf %116, %115 : vector<2x32xf32>
    %118 = arith.divf %116, %117 : vector<2x32xf32>
    %119 = arith.mulf %110, %98 : vector<2x32xf32>
    %120 = arith.mulf %104, %112 : vector<2x32xf32>
    %121 = arith.addf %119, %120 : vector<2x32xf32>
    %122 = math.tanh %121 : vector<2x32xf32>
    %123 = arith.mulf %118, %122 : vector<2x32xf32>
    %c0_66 = arith.constant 0 : index
    %c0_67 = arith.constant 0 : index
    %124 = vector.load %arg9[%c0_66, %c0_67] : memref<2x32xf32, #tpu.memory_space<vmem>>, vector<2x32xf32>
    tpu.vector_store %arg9[%c0_66, %c0_67], %123 {strides = array<i32>} : memref<2x32xf32, #tpu.memory_space<vmem>>, vector<2x32xf32>,
    %c0_68 = arith.constant 0 : index
    %c0_69 = arith.constant 0 : index
    %125 = vector.load %arg10[%c0_68, %c0_69] : memref<2x32xf32, #tpu.memory_space<vmem>>, vector<2x32xf32>
    tpu.vector_store %arg10[%c0_68, %c0_69], %121 {strides = array<i32>} : memref<2x32xf32, #tpu.memory_space<vmem>>, vector<2x32xf32>,
    %126 = arith.index_cast %47 : i32 to index
    %c0_70 = arith.constant 0 : index
    %c0_71 = arith.constant 0 : index
    %127 = vector.load %arg12[%126, %c0_70, %c0_71] : memref<3x2x32xf32, #tpu.memory_space<vmem>>, vector<1x2x32xf32>
    %128 = vector.shape_cast %127 : vector<1x2x32xf32> to vector<2x32xf32>
    %129 = vector.shape_cast %123 : vector<2x32xf32> to vector<1x2x32xf32>
    tpu.vector_store %arg12[%126, %c0_70, %c0_71], %129 {strides = array<i32>} : memref<3x2x32xf32, #tpu.memory_space<vmem>>, vector<1x2x32xf32>,
    %c1_i32_72 = arith.constant 1 : i32
    %c2_i32_73 = arith.constant 2 : i32
    %130 = arith.subi %c2_i32_73, %c1_i32_72 : i32
    %c0_74 = arith.constant 0 : index
    %c0_75 = arith.constant 0 : index
    %131 = vector.load %arg7[%c0_74, %c0_75] : memref<2x32xf32, #tpu.memory_space<vmem>>, vector<2x32xf32>
    %c0_76 = arith.constant 0 : index
    %c0_77 = arith.constant 0 : index
    %132 = vector.load %arg9[%c0_76, %c0_77] : memref<2x32xf32, #tpu.memory_space<vmem>>, vector<2x32xf32>
    %133 = tpu.concatenate %131, %132 in 1 : vector<2x32xf32>, vector<2x32xf32> -> vector<2x64xf32>
    %134 = arith.truncf %133 : vector<2x64xf32> to vector<2x64xbf16>
    %c0_78 = arith.constant 0 : index
    %c0_79 = arith.constant 0 : index
    %135 = vector.load %arg4[%c0_78, %c0_79] : memref<64x256xbf16, #tpu.memory_space<vmem>>, vector<64x256xbf16>
    %cst_80 = arith.constant dense<0.000000e+00> : vector<2x256xf32>
    %136 = tpu.matmul %134, %135, %cst_80 {dimension_numbers = #tpu.dot_dimension_numbers<[1], [0], [0], [1], [0, 0, 1, 1], [], []>} : vector<2x64xbf16>, vector<64x256xbf16>, vector<2x256xf32> -> vector<2x256xf32>
    %137 = arith.index_cast %c1_i32_72 : i32 to index
    %c0_81 = arith.constant 0 : index
    %c0_82 = arith.constant 0 : index
    %138 = vector.load %arg6[%137, %c0_81, %c0_82] : memref<3x2x256xf32, #tpu.memory_space<vmem>>, vector<1x2x256xf32>
    %139 = vector.shape_cast %138 : vector<1x2x256xf32> to vector<2x256xf32>
    %140 = vector.extract_strided_slice %139 {offsets = [0, 0], sizes = [2, 128], strides = [1, 1]} : vector<2x256xf32> to vector<2x128xf32>
    %141 = vector.extract_strided_slice %136 {offsets = [0, 0], sizes = [2, 128], strides = [1, 1]} : vector<2x256xf32> to vector<2x128xf32>
    %142 = arith.addf %140, %141 : vector<2x128xf32>
    %143 = arith.index_cast %130 : i32 to index
    %c0_83 = arith.constant 0 : index
    %c0_84 = arith.constant 0 : index
    %144 = vector.load %arg6[%143, %c0_83, %c0_84] : memref<3x2x256xf32, #tpu.memory_space<vmem>>, vector<1x2x256xf32>
    %145 = vector.shape_cast %144 : vector<1x2x256xf32> to vector<2x256xf32>
    %146 = vector.extract_strided_slice %145 {offsets = [0, 128], sizes = [2, 128], strides = [1, 1]} : vector<2x256xf32> to vector<2x128xf32>
    %147 = vector.extract_strided_slice %136 {offsets = [0, 128], sizes = [2, 128], strides = [1, 1]} : vector<2x256xf32> to vector<2x128xf32>
    %148 = arith.addf %146, %147 : vector<2x128xf32>
    %c0_85 = arith.constant 0 : index
    %c0_86 = arith.constant 0 : index
    %149 = vector.load %arg8[%c0_85, %c0_86] : memref<2x32xf32, #tpu.memory_space<vmem>>, vector<2x32xf32>
    %150 = vector.extract_strided_slice %142 {offsets = [0, 0], sizes = [2, 32], strides = [1, 1]} : vector<2x128xf32> to vector<2x32xf32>
    %151 = arith.negf %150 : vector<2x32xf32>
    %152 = math.exp %151 : vector<2x32xf32>
    %cst_87 = arith.constant 1.000000e+00 : f32
    %153 = vector.broadcast %cst_87 : f32 to vector<2x32xf32>
    %154 = arith.addf %153, %152 : vector<2x32xf32>
    %155 = arith.divf %153, %154 : vector<2x32xf32>
    %156 = vector.extract_strided_slice %142 {offsets = [0, 32], sizes = [2, 32], strides = [1, 1]} : vector<2x128xf32> to vector<2x32xf32>
    %157 = arith.negf %156 : vector<2x32xf32>
    %158 = math.exp %157 : vector<2x32xf32>
    %cst_88 = arith.constant 1.000000e+00 : f32
    %159 = vector.broadcast %cst_88 : f32 to vector<2x32xf32>
    %160 = arith.addf %159, %158 : vector<2x32xf32>
    %161 = arith.divf %159, %160 : vector<2x32xf32>
    %162 = vector.extract_strided_slice %142 {offsets = [0, 64], sizes = [2, 32], strides = [1, 1]} : vector<2x128xf32> to vector<2x32xf32>
    %163 = math.tanh %162 : vector<2x32xf32>
    %164 = vector.extract_strided_slice %142 {offsets = [0, 96], sizes = [2, 32], strides = [1, 1]} : vector<2x128xf32> to vector<2x32xf32>
    %165 = arith.negf %164 : vector<2x32xf32>
    %166 = math.exp %165 : vector<2x32xf32>
    %cst_89 = arith.constant 1.000000e+00 : f32
    %167 = vector.broadcast %cst_89 : f32 to vector<2x32xf32>
    %168 = arith.addf %167, %166 : vector<2x32xf32>
    %169 = arith.divf %167, %168 : vector<2x32xf32>
    %170 = arith.mulf %161, %149 : vector<2x32xf32>
    %171 = arith.mulf %155, %163 : vector<2x32xf32>
    %172 = arith.addf %170, %171 : vector<2x32xf32>
    %173 = math.tanh %172 : vector<2x32xf32>
    %174 = arith.mulf %169, %173 : vector<2x32xf32>
    %c0_90 = arith.constant 0 : index
    %c0_91 = arith.constant 0 : index
    %175 = vector.load %arg7[%c0_90, %c0_91] : memref<2x32xf32, #tpu.memory_space<vmem>>, vector<2x32xf32>
    tpu.vector_store %arg7[%c0_90, %c0_91], %174 {strides = array<i32>} : memref<2x32xf32, #tpu.memory_space<vmem>>, vector<2x32xf32>,
    %c0_92 = arith.constant 0 : index
    %c0_93 = arith.constant 0 : index
    %176 = vector.load %arg8[%c0_92, %c0_93] : memref<2x32xf32, #tpu.memory_space<vmem>>, vector<2x32xf32>
    tpu.vector_store %arg8[%c0_92, %c0_93], %172 {strides = array<i32>} : memref<2x32xf32, #tpu.memory_space<vmem>>, vector<2x32xf32>,
    %177 = arith.index_cast %c1_i32_72 : i32 to index
    %c0_94 = arith.constant 0 : index
    %c0_95 = arith.constant 0 : index
    %178 = vector.load %arg11[%177, %c0_94, %c0_95] : memref<3x2x32xf32, #tpu.memory_space<vmem>>, vector<1x2x32xf32>
    %179 = vector.shape_cast %178 : vector<1x2x32xf32> to vector<2x32xf32>
    %180 = vector.shape_cast %174 : vector<2x32xf32> to vector<1x2x32xf32>
    tpu.vector_store %arg11[%177, %c0_94, %c0_95], %180 {strides = array<i32>} : memref<3x2x32xf32, #tpu.memory_space<vmem>>, vector<1x2x32xf32>,
    %c0_96 = arith.constant 0 : index
    %c0_97 = arith.constant 0 : index
    %181 = vector.load %arg10[%c0_96, %c0_97] : memref<2x32xf32, #tpu.memory_space<vmem>>, vector<2x32xf32>
    %182 = vector.extract_strided_slice %148 {offsets = [0, 0], sizes = [2, 32], strides = [1, 1]} : vector<2x128xf32> to vector<2x32xf32>
    %183 = arith.negf %182 : vector<2x32xf32>
    %184 = math.exp %183 : vector<2x32xf32>
    %cst_98 = arith.constant 1.000000e+00 : f32
    %185 = vector.broadcast %cst_98 : f32 to vector<2x32xf32>
    %186 = arith.addf %185, %184 : vector<2x32xf32>
    %187 = arith.divf %185, %186 : vector<2x32xf32>
    %188 = vector.extract_strided_slice %148 {offsets = [0, 32], sizes = [2, 32], strides = [1, 1]} : vector<2x128xf32> to vector<2x32xf32>
    %189 = arith.negf %188 : vector<2x32xf32>
    %190 = math.exp %189 : vector<2x32xf32>
    %cst_99 = arith.constant 1.000000e+00 : f32
    %191 = vector.broadcast %cst_99 : f32 to vector<2x32xf32>
    %192 = arith.addf %191, %190 : vector<2x32xf32>
    %193 = arith.divf %191, %192 : vector<2x32xf32>
    %194 = vector.extract_strided_slice %148 {offsets = [0, 64], sizes = [2, 32], strides = [1, 1]} : vector<2x128xf32> to vector<2x32xf32>
    %195 = math.tanh %194 : vector<2x32xf32>
    %196 = vector.extract_strided_slice %148 {offsets = [0, 96], sizes = [2, 32], strides = [1, 1]} : vector<2x128xf32> to vector<2x32xf32>
    %197 = arith.negf %196 : vector<2x32xf32>
    %198 = math.exp %197 : vector<2x32xf32>
    %cst_100 = arith.constant 1.000000e+00 : f32
    %199 = vector.broadcast %cst_100 : f32 to vector<2x32xf32>
    %200 = arith.addf %199, %198 : vector<2x32xf32>
    %201 = arith.divf %199, %200 : vector<2x32xf32>
    %202 = arith.mulf %193, %181 : vector<2x32xf32>
    %203 = arith.mulf %187, %195 : vector<2x32xf32>
    %204 = arith.addf %202, %203 : vector<2x32xf32>
    %205 = math.tanh %204 : vector<2x32xf32>
    %206 = arith.mulf %201, %205 : vector<2x32xf32>
    %c0_101 = arith.constant 0 : index
    %c0_102 = arith.constant 0 : index
    %207 = vector.load %arg9[%c0_101, %c0_102] : memref<2x32xf32, #tpu.memory_space<vmem>>, vector<2x32xf32>
    tpu.vector_store %arg9[%c0_101, %c0_102], %206 {strides = array<i32>} : memref<2x32xf32, #tpu.memory_space<vmem>>, vector<2x32xf32>,
    %c0_103 = arith.constant 0 : index
    %c0_104 = arith.constant 0 : index
    %208 = vector.load %arg10[%c0_103, %c0_104] : memref<2x32xf32, #tpu.memory_space<vmem>>, vector<2x32xf32>
    tpu.vector_store %arg10[%c0_103, %c0_104], %204 {strides = array<i32>} : memref<2x32xf32, #tpu.memory_space<vmem>>, vector<2x32xf32>,
    %209 = arith.index_cast %130 : i32 to index
    %c0_105 = arith.constant 0 : index
    %c0_106 = arith.constant 0 : index
    %210 = vector.load %arg12[%209, %c0_105, %c0_106] : memref<3x2x32xf32, #tpu.memory_space<vmem>>, vector<1x2x32xf32>
    %211 = vector.shape_cast %210 : vector<1x2x32xf32> to vector<2x32xf32>
    %212 = vector.shape_cast %206 : vector<2x32xf32> to vector<1x2x32xf32>
    tpu.vector_store %arg12[%209, %c0_105, %c0_106], %212 {strides = array<i32>} : memref<3x2x32xf32, #tpu.memory_space<vmem>>, vector<1x2x32xf32>,
    %c2_i32_107 = arith.constant 2 : i32
    %c2_i32_108 = arith.constant 2 : i32
    %213 = arith.subi %c2_i32_108, %c2_i32_107 : i32
    %c0_109 = arith.constant 0 : index
    %c0_110 = arith.constant 0 : index
    %214 = vector.load %arg7[%c0_109, %c0_110] : memref<2x32xf32, #tpu.memory_space<vmem>>, vector<2x32xf32>
    %c0_111 = arith.constant 0 : index
    %c0_112 = arith.constant 0 : index
    %215 = vector.load %arg9[%c0_111, %c0_112] : memref<2x32xf32, #tpu.memory_space<vmem>>, vector<2x32xf32>
    %216 = tpu.concatenate %214, %215 in 1 : vector<2x32xf32>, vector<2x32xf32> -> vector<2x64xf32>
    %217 = arith.truncf %216 : vector<2x64xf32> to vector<2x64xbf16>
    %c0_113 = arith.constant 0 : index
    %c0_114 = arith.constant 0 : index
    %218 = vector.load %arg4[%c0_113, %c0_114] : memref<64x256xbf16, #tpu.memory_space<vmem>>, vector<64x256xbf16>
    %cst_115 = arith.constant dense<0.000000e+00> : vector<2x256xf32>
    %219 = tpu.matmul %217, %218, %cst_115 {dimension_numbers = #tpu.dot_dimension_numbers<[1], [0], [0], [1], [0, 0, 1, 1], [], []>} : vector<2x64xbf16>, vector<64x256xbf16>, vector<2x256xf32> -> vector<2x256xf32>
    %220 = arith.index_cast %c2_i32_107 : i32 to index
    %c0_116 = arith.constant 0 : index
    %c0_117 = arith.constant 0 : index
    %221 = vector.load %arg6[%220, %c0_116, %c0_117] : memref<3x2x256xf32, #tpu.memory_space<vmem>>, vector<1x2x256xf32>
    %222 = vector.shape_cast %221 : vector<1x2x256xf32> to vector<2x256xf32>
    %223 = vector.extract_strided_slice %222 {offsets = [0, 0], sizes = [2, 128], strides = [1, 1]} : vector<2x256xf32> to vector<2x128xf32>
    %224 = vector.extract_strided_slice %219 {offsets = [0, 0], sizes = [2, 128], strides = [1, 1]} : vector<2x256xf32> to vector<2x128xf32>
    %225 = arith.addf %223, %224 : vector<2x128xf32>
    %226 = arith.index_cast %213 : i32 to index
    %c0_118 = arith.constant 0 : index
    %c0_119 = arith.constant 0 : index
    %227 = vector.load %arg6[%226, %c0_118, %c0_119] : memref<3x2x256xf32, #tpu.memory_space<vmem>>, vector<1x2x256xf32>
    %228 = vector.shape_cast %227 : vector<1x2x256xf32> to vector<2x256xf32>
    %229 = vector.extract_strided_slice %228 {offsets = [0, 128], sizes = [2, 128], strides = [1, 1]} : vector<2x256xf32> to vector<2x128xf32>
    %230 = vector.extract_strided_slice %219 {offsets = [0, 128], sizes = [2, 128], strides = [1, 1]} : vector<2x256xf32> to vector<2x128xf32>
    %231 = arith.addf %229, %230 : vector<2x128xf32>
    %c0_120 = arith.constant 0 : index
    %c0_121 = arith.constant 0 : index
    %232 = vector.load %arg8[%c0_120, %c0_121] : memref<2x32xf32, #tpu.memory_space<vmem>>, vector<2x32xf32>
    %233 = vector.extract_strided_slice %225 {offsets = [0, 0], sizes = [2, 32], strides = [1, 1]} : vector<2x128xf32> to vector<2x32xf32>
    %234 = arith.negf %233 : vector<2x32xf32>
    %235 = math.exp %234 : vector<2x32xf32>
    %cst_122 = arith.constant 1.000000e+00 : f32
    %236 = vector.broadcast %cst_122 : f32 to vector<2x32xf32>
    %237 = arith.addf %236, %235 : vector<2x32xf32>
    %238 = arith.divf %236, %237 : vector<2x32xf32>
    %239 = vector.extract_strided_slice %225 {offsets = [0, 32], sizes = [2, 32], strides = [1, 1]} : vector<2x128xf32> to vector<2x32xf32>
    %240 = arith.negf %239 : vector<2x32xf32>
    %241 = math.exp %240 : vector<2x32xf32>
    %cst_123 = arith.constant 1.000000e+00 : f32
    %242 = vector.broadcast %cst_123 : f32 to vector<2x32xf32>
    %243 = arith.addf %242, %241 : vector<2x32xf32>
    %244 = arith.divf %242, %243 : vector<2x32xf32>
    %245 = vector.extract_strided_slice %225 {offsets = [0, 64], sizes = [2, 32], strides = [1, 1]} : vector<2x128xf32> to vector<2x32xf32>
    %246 = math.tanh %245 : vector<2x32xf32>
    %247 = vector.extract_strided_slice %225 {offsets = [0, 96], sizes = [2, 32], strides = [1, 1]} : vector<2x128xf32> to vector<2x32xf32>
    %248 = arith.negf %247 : vector<2x32xf32>
    %249 = math.exp %248 : vector<2x32xf32>
    %cst_124 = arith.constant 1.000000e+00 : f32
    %250 = vector.broadcast %cst_124 : f32 to vector<2x32xf32>
    %251 = arith.addf %250, %249 : vector<2x32xf32>
    %252 = arith.divf %250, %251 : vector<2x32xf32>
    %253 = arith.mulf %244, %232 : vector<2x32xf32>
    %254 = arith.mulf %238, %246 : vector<2x32xf32>
    %255 = arith.addf %253, %254 : vector<2x32xf32>
    %256 = math.tanh %255 : vector<2x32xf32>
    %257 = arith.mulf %252, %256 : vector<2x32xf32>
    %c0_125 = arith.constant 0 : index
    %c0_126 = arith.constant 0 : index
    %258 = vector.load %arg7[%c0_125, %c0_126] : memref<2x32xf32, #tpu.memory_space<vmem>>, vector<2x32xf32>
    tpu.vector_store %arg7[%c0_125, %c0_126], %257 {strides = array<i32>} : memref<2x32xf32, #tpu.memory_space<vmem>>, vector<2x32xf32>,
    %c0_127 = arith.constant 0 : index
    %c0_128 = arith.constant 0 : index
    %259 = vector.load %arg8[%c0_127, %c0_128] : memref<2x32xf32, #tpu.memory_space<vmem>>, vector<2x32xf32>
    tpu.vector_store %arg8[%c0_127, %c0_128], %255 {strides = array<i32>} : memref<2x32xf32, #tpu.memory_space<vmem>>, vector<2x32xf32>,
    %260 = arith.index_cast %c2_i32_107 : i32 to index
    %c0_129 = arith.constant 0 : index
    %c0_130 = arith.constant 0 : index
    %261 = vector.load %arg11[%260, %c0_129, %c0_130] : memref<3x2x32xf32, #tpu.memory_space<vmem>>, vector<1x2x32xf32>
    %262 = vector.shape_cast %261 : vector<1x2x32xf32> to vector<2x32xf32>
    %263 = vector.shape_cast %257 : vector<2x32xf32> to vector<1x2x32xf32>
    tpu.vector_store %arg11[%260, %c0_129, %c0_130], %263 {strides = array<i32>} : memref<3x2x32xf32, #tpu.memory_space<vmem>>, vector<1x2x32xf32>,
    %c0_131 = arith.constant 0 : index
    %c0_132 = arith.constant 0 : index
    %264 = vector.load %arg10[%c0_131, %c0_132] : memref<2x32xf32, #tpu.memory_space<vmem>>, vector<2x32xf32>
    %265 = vector.extract_strided_slice %231 {offsets = [0, 0], sizes = [2, 32], strides = [1, 1]} : vector<2x128xf32> to vector<2x32xf32>
    %266 = arith.negf %265 : vector<2x32xf32>
    %267 = math.exp %266 : vector<2x32xf32>
    %cst_133 = arith.constant 1.000000e+00 : f32
    %268 = vector.broadcast %cst_133 : f32 to vector<2x32xf32>
    %269 = arith.addf %268, %267 : vector<2x32xf32>
    %270 = arith.divf %268, %269 : vector<2x32xf32>
    %271 = vector.extract_strided_slice %231 {offsets = [0, 32], sizes = [2, 32], strides = [1, 1]} : vector<2x128xf32> to vector<2x32xf32>
    %272 = arith.negf %271 : vector<2x32xf32>
    %273 = math.exp %272 : vector<2x32xf32>
    %cst_134 = arith.constant 1.000000e+00 : f32
    %274 = vector.broadcast %cst_134 : f32 to vector<2x32xf32>
    %275 = arith.addf %274, %273 : vector<2x32xf32>
    %276 = arith.divf %274, %275 : vector<2x32xf32>
    %277 = vector.extract_strided_slice %231 {offsets = [0, 64], sizes = [2, 32], strides = [1, 1]} : vector<2x128xf32> to vector<2x32xf32>
    %278 = math.tanh %277 : vector<2x32xf32>
    %279 = vector.extract_strided_slice %231 {offsets = [0, 96], sizes = [2, 32], strides = [1, 1]} : vector<2x128xf32> to vector<2x32xf32>
    %280 = arith.negf %279 : vector<2x32xf32>
    %281 = math.exp %280 : vector<2x32xf32>
    %cst_135 = arith.constant 1.000000e+00 : f32
    %282 = vector.broadcast %cst_135 : f32 to vector<2x32xf32>
    %283 = arith.addf %282, %281 : vector<2x32xf32>
    %284 = arith.divf %282, %283 : vector<2x32xf32>
    %285 = arith.mulf %276, %264 : vector<2x32xf32>
    %286 = arith.mulf %270, %278 : vector<2x32xf32>
    %287 = arith.addf %285, %286 : vector<2x32xf32>
    %288 = math.tanh %287 : vector<2x32xf32>
    %289 = arith.mulf %284, %288 : vector<2x32xf32>
    %c0_136 = arith.constant 0 : index
    %c0_137 = arith.constant 0 : index
    %290 = vector.load %arg9[%c0_136, %c0_137] : memref<2x32xf32, #tpu.memory_space<vmem>>, vector<2x32xf32>
    tpu.vector_store %arg9[%c0_136, %c0_137], %289 {strides = array<i32>} : memref<2x32xf32, #tpu.memory_space<vmem>>, vector<2x32xf32>,
    %c0_138 = arith.constant 0 : index
    %c0_139 = arith.constant 0 : index
    %291 = vector.load %arg10[%c0_138, %c0_139] : memref<2x32xf32, #tpu.memory_space<vmem>>, vector<2x32xf32>
    tpu.vector_store %arg10[%c0_138, %c0_139], %287 {strides = array<i32>} : memref<2x32xf32, #tpu.memory_space<vmem>>, vector<2x32xf32>,
    %292 = arith.index_cast %213 : i32 to index
    %c0_140 = arith.constant 0 : index
    %c0_141 = arith.constant 0 : index
    %293 = vector.load %arg12[%292, %c0_140, %c0_141] : memref<3x2x32xf32, #tpu.memory_space<vmem>>, vector<1x2x32xf32>
    %294 = vector.shape_cast %293 : vector<1x2x32xf32> to vector<2x32xf32>
    %295 = vector.shape_cast %289 : vector<2x32xf32> to vector<1x2x32xf32>
    tpu.vector_store %arg12[%292, %c0_140, %c0_141], %295 {strides = array<i32>} : memref<3x2x32xf32, #tpu.memory_space<vmem>>, vector<1x2x32xf32>,
    %c3_i32_142 = arith.constant 3 : i32
    %c0_143 = arith.constant 0 : index
    %c0_144 = arith.constant 0 : index
    %c0_145 = arith.constant 0 : index
    %296 = vector.load %arg11[%c0_143, %c0_144, %c0_145] : memref<3x2x32xf32, #tpu.memory_space<vmem>>, vector<3x2x32xf32>
    %c0_146 = arith.constant 0 : index
    %c0_147 = arith.constant 0 : index
    %c0_148 = arith.constant 0 : index
    %297 = vector.load %arg12[%c0_146, %c0_147, %c0_148] : memref<3x2x32xf32, #tpu.memory_space<vmem>>, vector<3x2x32xf32>
    %298 = tpu.concatenate %296, %297 in 2 : vector<3x2x32xf32>, vector<3x2x32xf32> -> vector<3x2x64xf32>
    %c0_149 = arith.constant 0 : index
    %c0_150 = arith.constant 0 : index
    %c0_151 = arith.constant 0 : index
    %299 = vector.load %arg5[%c0_149, %c0_150, %c0_151] : memref<3x2x64xf32, #tpu.memory_space<vmem>>, vector<3x2x64xf32>
    tpu.vector_store %arg5[%c0_149, %c0_150, %c0_151], %298 {strides = array<i32>} : memref<3x2x64xf32, #tpu.memory_space<vmem>>, vector<3x2x64xf32>,
    return
  }
  func.func @transform_0(%arg0: i32) -> (i32, i32, i32) {
    %c0_i32 = arith.constant 0 : i32
    %c0_i32_0 = arith.constant 0 : i32
    %c0_i32_1 = arith.constant 0 : i32
    %c0_i32_2 = arith.constant 0 : i32
    return %c0_i32, %c0_i32_0, %c0_i32_1 : i32, i32, i32
  }
  func.func @transform_1(%arg0: i32) -> (i32, i32) {
    %c0_i32 = arith.constant 0 : i32
    %c0_i32_0 = arith.constant 0 : i32
    %c0_i32_1 = arith.constant 0 : i32
    return %c0_i32, %c0_i32_0 : i32, i32
  }
  func.func @transform_2(%arg0: i32) -> (i32, i32) {
    %c0_i32 = arith.constant 0 : i32
    %c0_i32_0 = arith.constant 0 : i32
    %c0_i32_1 = arith.constant 0 : i32
    return %c0_i32, %c0_i32_0 : i32, i32
  }
  func.func @transform_3(%arg0: i32) -> (i32, i32) {
    %c0_i32 = arith.constant 0 : i32
    %c0_i32_0 = arith.constant 0 : i32
    %c0_i32_1 = arith.constant 0 : i32
    return %c0_i32, %c0_i32_0 : i32, i32
  }
  func.func @transform_4(%arg0: i32) -> (i32, i32, i32) {
    %c0_i32 = arith.constant 0 : i32
    %c0_i32_0 = arith.constant 0 : i32
    %c0_i32_1 = arith.constant 0 : i32
    %c0_i32_2 = arith.constant 0 : i32
    return %c0_i32, %c0_i32_0, %c0_i32_1 : i32, i32, i32
  }
}

module attributes {stable_mosaic.version = 11 : i64} {
  func.func @_mm_relu_bn_kernel(%arg0: i32, %arg1: memref<6x64xf32, #tpu.memory_space<vmem>>, %arg2: memref<64x64xbf16, #tpu.memory_space<vmem>>, %arg3: memref<1x64xf32, #tpu.memory_space<vmem>>, %arg4: memref<1x64xf32, #tpu.memory_space<vmem>>, %arg5: memref<1x64xf32, #tpu.memory_space<vmem>>, %arg6: memref<6x64xf32, #tpu.memory_space<vmem>>) attributes {dimension_semantics = [#tpu.dimension_semantics<parallel>], iteration_bounds = array<i64: 1>, scalar_prefetch = 0 : i64, scratch_operands = 0 : i64, tpu.core_type = #tpu.core_type<tc>, window_params = [{transform_indices = @transform_0, window_bounds = array<i64: 6, 64>}, {pipeline_mode = #tpu.pipeline_mode<synchronous>, transform_indices = @transform_1, window_bounds = array<i64: 64, 64>}, {pipeline_mode = #tpu.pipeline_mode<synchronous>, transform_indices = @transform_2, window_bounds = array<i64: 1, 64>}, {pipeline_mode = #tpu.pipeline_mode<synchronous>, transform_indices = @transform_3, window_bounds = array<i64: 1, 64>}, {pipeline_mode = #tpu.pipeline_mode<synchronous>, transform_indices = @transform_4, window_bounds = array<i64: 1, 64>}, {transform_indices = @transform_5, window_bounds = array<i64: 6, 64>}]} {
    %c0 = arith.constant 0 : index
    %c0_0 = arith.constant 0 : index
    %0 = vector.load %arg1[%c0, %c0_0] : memref<6x64xf32, #tpu.memory_space<vmem>>, vector<6x64xf32>
    %1 = arith.truncf %0 : vector<6x64xf32> to vector<6x64xbf16>
    %c0_1 = arith.constant 0 : index
    %c0_2 = arith.constant 0 : index
    %2 = vector.load %arg2[%c0_1, %c0_2] : memref<64x64xbf16, #tpu.memory_space<vmem>>, vector<64x64xbf16>
    %cst = arith.constant dense<0.000000e+00> : vector<6x64xf32>
    %3 = tpu.matmul %1, %2, %cst {dimension_numbers = #tpu.dot_dimension_numbers<[1], [0], [0], [1], [0, 0, 1, 1], [], []>} : vector<6x64xbf16>, vector<64x64xbf16>, vector<6x64xf32> -> vector<6x64xf32>
    %c0_3 = arith.constant 0 : index
    %c0_4 = arith.constant 0 : index
    %4 = vector.load %arg3[%c0_3, %c0_4] : memref<1x64xf32, #tpu.memory_space<vmem>>, vector<1x64xf32>
    %5 = vector.broadcast %4 : vector<1x64xf32> to vector<6x64xf32>
    %6 = arith.addf %3, %5 : vector<6x64xf32>
    %cst_5 = arith.constant 0.000000e+00 : f32
    %7 = vector.broadcast %cst_5 : f32 to vector<6x64xf32>
    %8 = arith.maximumf %6, %7 : vector<6x64xf32>
    %c0_6 = arith.constant 0 : index
    %c0_7 = arith.constant 0 : index
    %9 = vector.load %arg4[%c0_6, %c0_7] : memref<1x64xf32, #tpu.memory_space<vmem>>, vector<1x64xf32>
    %10 = vector.broadcast %9 : vector<1x64xf32> to vector<6x64xf32>
    %11 = arith.mulf %8, %10 : vector<6x64xf32>
    %c0_8 = arith.constant 0 : index
    %c0_9 = arith.constant 0 : index
    %12 = vector.load %arg5[%c0_8, %c0_9] : memref<1x64xf32, #tpu.memory_space<vmem>>, vector<1x64xf32>
    %13 = vector.broadcast %12 : vector<1x64xf32> to vector<6x64xf32>
    %14 = arith.addf %11, %13 : vector<6x64xf32>
    %c0_10 = arith.constant 0 : index
    %c0_11 = arith.constant 0 : index
    %15 = vector.load %arg6[%c0_10, %c0_11] : memref<6x64xf32, #tpu.memory_space<vmem>>, vector<6x64xf32>
    tpu.vector_store %arg6[%c0_10, %c0_11], %14 {strides = array<i32>} : memref<6x64xf32, #tpu.memory_space<vmem>>, vector<6x64xf32>,
    return
  }
  func.func @transform_0(%arg0: i32) -> (i32, i32) {
    %c0_i32 = arith.constant 0 : i32
    %c0_i32_0 = arith.constant 0 : i32
    return %arg0, %c0_i32 : i32, i32
  }
  func.func @transform_1(%arg0: i32) -> (i32, i32) {
    %c0_i32 = arith.constant 0 : i32
    %c0_i32_0 = arith.constant 0 : i32
    %c0_i32_1 = arith.constant 0 : i32
    return %c0_i32, %c0_i32_0 : i32, i32
  }
  func.func @transform_2(%arg0: i32) -> (i32, i32) {
    %c0_i32 = arith.constant 0 : i32
    %c0_i32_0 = arith.constant 0 : i32
    %c0_i32_1 = arith.constant 0 : i32
    return %c0_i32, %c0_i32_0 : i32, i32
  }
  func.func @transform_3(%arg0: i32) -> (i32, i32) {
    %c0_i32 = arith.constant 0 : i32
    %c0_i32_0 = arith.constant 0 : i32
    %c0_i32_1 = arith.constant 0 : i32
    return %c0_i32, %c0_i32_0 : i32, i32
  }
  func.func @transform_4(%arg0: i32) -> (i32, i32) {
    %c0_i32 = arith.constant 0 : i32
    %c0_i32_0 = arith.constant 0 : i32
    %c0_i32_1 = arith.constant 0 : i32
    return %c0_i32, %c0_i32_0 : i32, i32
  }
  func.func @transform_5(%arg0: i32) -> (i32, i32) {
    %c0_i32 = arith.constant 0 : i32
    %c0_i32_0 = arith.constant 0 : i32
    return %arg0, %c0_i32 : i32, i32
  }
}

module attributes {stable_mosaic.version = 11 : i64} {
  func.func @_bilstm_kernel(%arg0: i32, %arg1: memref<3x2x64xf32, #tpu.memory_space<vmem>>, %arg2: memref<64x256xbf16, #tpu.memory_space<vmem>>, %arg3: memref<1x256xf32, #tpu.memory_space<vmem>>, %arg4: memref<64x256xbf16, #tpu.memory_space<vmem>>, %arg5: memref<3x2x64xf32, #tpu.memory_space<vmem>>, %arg6: memref<3x2x256xf32, #tpu.memory_space<vmem>>, %arg7: memref<2x32xf32, #tpu.memory_space<vmem>>, %arg8: memref<2x32xf32, #tpu.memory_space<vmem>>, %arg9: memref<2x32xf32, #tpu.memory_space<vmem>>, %arg10: memref<2x32xf32, #tpu.memory_space<vmem>>, %arg11: memref<3x2x32xf32, #tpu.memory_space<vmem>>, %arg12: memref<3x2x32xf32, #tpu.memory_space<vmem>>) attributes {dimension_semantics = [#tpu.dimension_semantics<arbitrary>], iteration_bounds = array<i64: 1>, scalar_prefetch = 0 : i64, scratch_operands = 7 : i64, tpu.core_type = #tpu.core_type<tc>, window_params = [{pipeline_mode = #tpu.pipeline_mode<synchronous>, transform_indices = @transform_0, window_bounds = array<i64: 3, 2, 64>}, {pipeline_mode = #tpu.pipeline_mode<synchronous>, transform_indices = @transform_1, window_bounds = array<i64: 64, 256>}, {pipeline_mode = #tpu.pipeline_mode<synchronous>, transform_indices = @transform_2, window_bounds = array<i64: 1, 256>}, {pipeline_mode = #tpu.pipeline_mode<synchronous>, transform_indices = @transform_3, window_bounds = array<i64: 64, 256>}, {pipeline_mode = #tpu.pipeline_mode<synchronous>, transform_indices = @transform_4, window_bounds = array<i64: 3, 2, 64>}]} {
    %c0_i32 = arith.constant 0 : i32
    %0 = arith.index_cast %c0_i32 : i32 to index
    %c0 = arith.constant 0 : index
    %c0_0 = arith.constant 0 : index
    %1 = vector.load %arg1[%0, %c0, %c0_0] : memref<3x2x64xf32, #tpu.memory_space<vmem>>, vector<1x2x64xf32>
    %2 = vector.shape_cast %1 : vector<1x2x64xf32> to vector<2x64xf32>
    %3 = arith.truncf %2 : vector<2x64xf32> to vector<2x64xbf16>
    %c0_1 = arith.constant 0 : index
    %c0_2 = arith.constant 0 : index
    %4 = vector.load %arg2[%c0_1, %c0_2] : memref<64x256xbf16, #tpu.memory_space<vmem>>, vector<64x256xbf16>
    %cst = arith.constant dense<0.000000e+00> : vector<2x256xf32>
    %5 = tpu.matmul %3, %4, %cst {dimension_numbers = #tpu.dot_dimension_numbers<[1], [0], [0], [1], [0, 0, 1, 1], [], []>} : vector<2x64xbf16>, vector<64x256xbf16>, vector<2x256xf32> -> vector<2x256xf32>
    %c0_3 = arith.constant 0 : index
    %c0_4 = arith.constant 0 : index
    %6 = vector.load %arg3[%c0_3, %c0_4] : memref<1x256xf32, #tpu.memory_space<vmem>>, vector<1x256xf32>
    %7 = vector.broadcast %6 : vector<1x256xf32> to vector<2x256xf32>
    %8 = arith.addf %5, %7 : vector<2x256xf32>
    %9 = arith.index_cast %c0_i32 : i32 to index
    %c0_5 = arith.constant 0 : index
    %c0_6 = arith.constant 0 : index
    %10 = vector.load %arg6[%9, %c0_5, %c0_6] : memref<3x2x256xf32, #tpu.memory_space<vmem>>, vector<1x2x256xf32>
    %11 = vector.shape_cast %10 : vector<1x2x256xf32> to vector<2x256xf32>
    %12 = vector.shape_cast %8 : vector<2x256xf32> to vector<1x2x256xf32>
    tpu.vector_store %arg6[%9, %c0_5, %c0_6], %12 {strides = array<i32>} : memref<3x2x256xf32, #tpu.memory_space<vmem>>, vector<1x2x256xf32>,
    %c1_i32 = arith.constant 1 : i32
    %13 = arith.index_cast %c1_i32 : i32 to index
    %c0_7 = arith.constant 0 : index
    %c0_8 = arith.constant 0 : index
    %14 = vector.load %arg1[%13, %c0_7, %c0_8] : memref<3x2x64xf32, #tpu.memory_space<vmem>>, vector<1x2x64xf32>
    %15 = vector.shape_cast %14 : vector<1x2x64xf32> to vector<2x64xf32>
    %16 = arith.truncf %15 : vector<2x64xf32> to vector<2x64xbf16>
    %c0_9 = arith.constant 0 : index
    %c0_10 = arith.constant 0 : index
    %17 = vector.load %arg2[%c0_9, %c0_10] : memref<64x256xbf16, #tpu.memory_space<vmem>>, vector<64x256xbf16>
    %cst_11 = arith.constant dense<0.000000e+00> : vector<2x256xf32>
    %18 = tpu.matmul %16, %17, %cst_11 {dimension_numbers = #tpu.dot_dimension_numbers<[1], [0], [0], [1], [0, 0, 1, 1], [], []>} : vector<2x64xbf16>, vector<64x256xbf16>, vector<2x256xf32> -> vector<2x256xf32>
    %c0_12 = arith.constant 0 : index
    %c0_13 = arith.constant 0 : index
    %19 = vector.load %arg3[%c0_12, %c0_13] : memref<1x256xf32, #tpu.memory_space<vmem>>, vector<1x256xf32>
    %20 = vector.broadcast %19 : vector<1x256xf32> to vector<2x256xf32>
    %21 = arith.addf %18, %20 : vector<2x256xf32>
    %22 = arith.index_cast %c1_i32 : i32 to index
    %c0_14 = arith.constant 0 : index
    %c0_15 = arith.constant 0 : index
    %23 = vector.load %arg6[%22, %c0_14, %c0_15] : memref<3x2x256xf32, #tpu.memory_space<vmem>>, vector<1x2x256xf32>
    %24 = vector.shape_cast %23 : vector<1x2x256xf32> to vector<2x256xf32>
    %25 = vector.shape_cast %21 : vector<2x256xf32> to vector<1x2x256xf32>
    tpu.vector_store %arg6[%22, %c0_14, %c0_15], %25 {strides = array<i32>} : memref<3x2x256xf32, #tpu.memory_space<vmem>>, vector<1x2x256xf32>,
    %c2_i32 = arith.constant 2 : i32
    %26 = arith.index_cast %c2_i32 : i32 to index
    %c0_16 = arith.constant 0 : index
    %c0_17 = arith.constant 0 : index
    %27 = vector.load %arg1[%26, %c0_16, %c0_17] : memref<3x2x64xf32, #tpu.memory_space<vmem>>, vector<1x2x64xf32>
    %28 = vector.shape_cast %27 : vector<1x2x64xf32> to vector<2x64xf32>
    %29 = arith.truncf %28 : vector<2x64xf32> to vector<2x64xbf16>
    %c0_18 = arith.constant 0 : index
    %c0_19 = arith.constant 0 : index
    %30 = vector.load %arg2[%c0_18, %c0_19] : memref<64x256xbf16, #tpu.memory_space<vmem>>, vector<64x256xbf16>
    %cst_20 = arith.constant dense<0.000000e+00> : vector<2x256xf32>
    %31 = tpu.matmul %29, %30, %cst_20 {dimension_numbers = #tpu.dot_dimension_numbers<[1], [0], [0], [1], [0, 0, 1, 1], [], []>} : vector<2x64xbf16>, vector<64x256xbf16>, vector<2x256xf32> -> vector<2x256xf32>
    %c0_21 = arith.constant 0 : index
    %c0_22 = arith.constant 0 : index
    %32 = vector.load %arg3[%c0_21, %c0_22] : memref<1x256xf32, #tpu.memory_space<vmem>>, vector<1x256xf32>
    %33 = vector.broadcast %32 : vector<1x256xf32> to vector<2x256xf32>
    %34 = arith.addf %31, %33 : vector<2x256xf32>
    %35 = arith.index_cast %c2_i32 : i32 to index
    %c0_23 = arith.constant 0 : index
    %c0_24 = arith.constant 0 : index
    %36 = vector.load %arg6[%35, %c0_23, %c0_24] : memref<3x2x256xf32, #tpu.memory_space<vmem>>, vector<1x2x256xf32>
    %37 = vector.shape_cast %36 : vector<1x2x256xf32> to vector<2x256xf32>
    %38 = vector.shape_cast %34 : vector<2x256xf32> to vector<1x2x256xf32>
    tpu.vector_store %arg6[%35, %c0_23, %c0_24], %38 {strides = array<i32>} : memref<3x2x256xf32, #tpu.memory_space<vmem>>, vector<1x2x256xf32>,
    %c3_i32 = arith.constant 3 : i32
    %cst_25 = arith.constant 0.000000e+00 : f32
    %39 = vector.broadcast %cst_25 : f32 to vector<2x32xf32>
    %c0_26 = arith.constant 0 : index
    %c0_27 = arith.constant 0 : index
    %40 = vector.load %arg7[%c0_26, %c0_27] : memref<2x32xf32, #tpu.memory_space<vmem>>, vector<2x32xf32>
    tpu.vector_store %arg7[%c0_26, %c0_27], %39 {strides = array<i32>} : memref<2x32xf32, #tpu.memory_space<vmem>>, vector<2x32xf32>,
    %cst_28 = arith.constant 0.000000e+00 : f32
    %41 = vector.broadcast %cst_28 : f32 to vector<2x32xf32>
    %c0_29 = arith.constant 0 : index
    %c0_30 = arith.constant 0 : index
    %42 = vector.load %arg8[%c0_29, %c0_30] : memref<2x32xf32, #tpu.memory_space<vmem>>, vector<2x32xf32>
    tpu.vector_store %arg8[%c0_29, %c0_30], %41 {strides = array<i32>} : memref<2x32xf32, #tpu.memory_space<vmem>>, vector<2x32xf32>,
    %cst_31 = arith.constant 0.000000e+00 : f32
    %43 = vector.broadcast %cst_31 : f32 to vector<2x32xf32>
    %c0_32 = arith.constant 0 : index
    %c0_33 = arith.constant 0 : index
    %44 = vector.load %arg9[%c0_32, %c0_33] : memref<2x32xf32, #tpu.memory_space<vmem>>, vector<2x32xf32>
    tpu.vector_store %arg9[%c0_32, %c0_33], %43 {strides = array<i32>} : memref<2x32xf32, #tpu.memory_space<vmem>>, vector<2x32xf32>,
    %cst_34 = arith.constant 0.000000e+00 : f32
    %45 = vector.broadcast %cst_34 : f32 to vector<2x32xf32>
    %c0_35 = arith.constant 0 : index
    %c0_36 = arith.constant 0 : index
    %46 = vector.load %arg10[%c0_35, %c0_36] : memref<2x32xf32, #tpu.memory_space<vmem>>, vector<2x32xf32>
    tpu.vector_store %arg10[%c0_35, %c0_36], %45 {strides = array<i32>} : memref<2x32xf32, #tpu.memory_space<vmem>>, vector<2x32xf32>,
    %c0_i32_37 = arith.constant 0 : i32
    %c2_i32_38 = arith.constant 2 : i32
    %47 = arith.subi %c2_i32_38, %c0_i32_37 : i32
    %c0_39 = arith.constant 0 : index
    %c0_40 = arith.constant 0 : index
    %48 = vector.load %arg7[%c0_39, %c0_40] : memref<2x32xf32, #tpu.memory_space<vmem>>, vector<2x32xf32>
    %c0_41 = arith.constant 0 : index
    %c0_42 = arith.constant 0 : index
    %49 = vector.load %arg9[%c0_41, %c0_42] : memref<2x32xf32, #tpu.memory_space<vmem>>, vector<2x32xf32>
    %50 = tpu.concatenate %48, %49 in 1 : vector<2x32xf32>, vector<2x32xf32> -> vector<2x64xf32>
    %51 = arith.truncf %50 : vector<2x64xf32> to vector<2x64xbf16>
    %c0_43 = arith.constant 0 : index
    %c0_44 = arith.constant 0 : index
    %52 = vector.load %arg4[%c0_43, %c0_44] : memref<64x256xbf16, #tpu.memory_space<vmem>>, vector<64x256xbf16>
    %cst_45 = arith.constant dense<0.000000e+00> : vector<2x256xf32>
    %53 = tpu.matmul %51, %52, %cst_45 {dimension_numbers = #tpu.dot_dimension_numbers<[1], [0], [0], [1], [0, 0, 1, 1], [], []>} : vector<2x64xbf16>, vector<64x256xbf16>, vector<2x256xf32> -> vector<2x256xf32>
    %54 = arith.index_cast %c0_i32_37 : i32 to index
    %c0_46 = arith.constant 0 : index
    %c0_47 = arith.constant 0 : index
    %55 = vector.load %arg6[%54, %c0_46, %c0_47] : memref<3x2x256xf32, #tpu.memory_space<vmem>>, vector<1x2x256xf32>
    %56 = vector.shape_cast %55 : vector<1x2x256xf32> to vector<2x256xf32>
    %57 = vector.extract_strided_slice %56 {offsets = [0, 0], sizes = [2, 128], strides = [1, 1]} : vector<2x256xf32> to vector<2x128xf32>
    %58 = vector.extract_strided_slice %53 {offsets = [0, 0], sizes = [2, 128], strides = [1, 1]} : vector<2x256xf32> to vector<2x128xf32>
    %59 = arith.addf %57, %58 : vector<2x128xf32>
    %60 = arith.index_cast %47 : i32 to index
    %c0_48 = arith.constant 0 : index
    %c0_49 = arith.constant 0 : index
    %61 = vector.load %arg6[%60, %c0_48, %c0_49] : memref<3x2x256xf32, #tpu.memory_space<vmem>>, vector<1x2x256xf32>
    %62 = vector.shape_cast %61 : vector<1x2x256xf32> to vector<2x256xf32>
    %63 = vector.extract_strided_slice %62 {offsets = [0, 128], sizes = [2, 128], strides = [1, 1]} : vector<2x256xf32> to vector<2x128xf32>
    %64 = vector.extract_strided_slice %53 {offsets = [0, 128], sizes = [2, 128], strides = [1, 1]} : vector<2x256xf32> to vector<2x128xf32>
    %65 = arith.addf %63, %64 : vector<2x128xf32>
    %c0_50 = arith.constant 0 : index
    %c0_51 = arith.constant 0 : index
    %66 = vector.load %arg8[%c0_50, %c0_51] : memref<2x32xf32, #tpu.memory_space<vmem>>, vector<2x32xf32>
    %67 = vector.extract_strided_slice %59 {offsets = [0, 0], sizes = [2, 32], strides = [1, 1]} : vector<2x128xf32> to vector<2x32xf32>
    %68 = arith.negf %67 : vector<2x32xf32>
    %69 = math.exp %68 : vector<2x32xf32>
    %cst_52 = arith.constant 1.000000e+00 : f32
    %70 = vector.broadcast %cst_52 : f32 to vector<2x32xf32>
    %71 = arith.addf %70, %69 : vector<2x32xf32>
    %72 = arith.divf %70, %71 : vector<2x32xf32>
    %73 = vector.extract_strided_slice %59 {offsets = [0, 32], sizes = [2, 32], strides = [1, 1]} : vector<2x128xf32> to vector<2x32xf32>
    %74 = arith.negf %73 : vector<2x32xf32>
    %75 = math.exp %74 : vector<2x32xf32>
    %cst_53 = arith.constant 1.000000e+00 : f32
    %76 = vector.broadcast %cst_53 : f32 to vector<2x32xf32>
    %77 = arith.addf %76, %75 : vector<2x32xf32>
    %78 = arith.divf %76, %77 : vector<2x32xf32>
    %79 = vector.extract_strided_slice %59 {offsets = [0, 64], sizes = [2, 32], strides = [1, 1]} : vector<2x128xf32> to vector<2x32xf32>
    %80 = math.tanh %79 : vector<2x32xf32>
    %81 = vector.extract_strided_slice %59 {offsets = [0, 96], sizes = [2, 32], strides = [1, 1]} : vector<2x128xf32> to vector<2x32xf32>
    %82 = arith.negf %81 : vector<2x32xf32>
    %83 = math.exp %82 : vector<2x32xf32>
    %cst_54 = arith.constant 1.000000e+00 : f32
    %84 = vector.broadcast %cst_54 : f32 to vector<2x32xf32>
    %85 = arith.addf %84, %83 : vector<2x32xf32>
    %86 = arith.divf %84, %85 : vector<2x32xf32>
    %87 = arith.mulf %78, %66 : vector<2x32xf32>
    %88 = arith.mulf %72, %80 : vector<2x32xf32>
    %89 = arith.addf %87, %88 : vector<2x32xf32>
    %90 = math.tanh %89 : vector<2x32xf32>
    %91 = arith.mulf %86, %90 : vector<2x32xf32>
    %c0_55 = arith.constant 0 : index
    %c0_56 = arith.constant 0 : index
    %92 = vector.load %arg7[%c0_55, %c0_56] : memref<2x32xf32, #tpu.memory_space<vmem>>, vector<2x32xf32>
    tpu.vector_store %arg7[%c0_55, %c0_56], %91 {strides = array<i32>} : memref<2x32xf32, #tpu.memory_space<vmem>>, vector<2x32xf32>,
    %c0_57 = arith.constant 0 : index
    %c0_58 = arith.constant 0 : index
    %93 = vector.load %arg8[%c0_57, %c0_58] : memref<2x32xf32, #tpu.memory_space<vmem>>, vector<2x32xf32>
    tpu.vector_store %arg8[%c0_57, %c0_58], %89 {strides = array<i32>} : memref<2x32xf32, #tpu.memory_space<vmem>>, vector<2x32xf32>,
    %94 = arith.index_cast %c0_i32_37 : i32 to index
    %c0_59 = arith.constant 0 : index
    %c0_60 = arith.constant 0 : index
    %95 = vector.load %arg11[%94, %c0_59, %c0_60] : memref<3x2x32xf32, #tpu.memory_space<vmem>>, vector<1x2x32xf32>
    %96 = vector.shape_cast %95 : vector<1x2x32xf32> to vector<2x32xf32>
    %97 = vector.shape_cast %91 : vector<2x32xf32> to vector<1x2x32xf32>
    tpu.vector_store %arg11[%94, %c0_59, %c0_60], %97 {strides = array<i32>} : memref<3x2x32xf32, #tpu.memory_space<vmem>>, vector<1x2x32xf32>,
    %c0_61 = arith.constant 0 : index
    %c0_62 = arith.constant 0 : index
    %98 = vector.load %arg10[%c0_61, %c0_62] : memref<2x32xf32, #tpu.memory_space<vmem>>, vector<2x32xf32>
    %99 = vector.extract_strided_slice %65 {offsets = [0, 0], sizes = [2, 32], strides = [1, 1]} : vector<2x128xf32> to vector<2x32xf32>
    %100 = arith.negf %99 : vector<2x32xf32>
    %101 = math.exp %100 : vector<2x32xf32>
    %cst_63 = arith.constant 1.000000e+00 : f32
    %102 = vector.broadcast %cst_63 : f32 to vector<2x32xf32>
    %103 = arith.addf %102, %101 : vector<2x32xf32>
    %104 = arith.divf %102, %103 : vector<2x32xf32>
    %105 = vector.extract_strided_slice %65 {offsets = [0, 32], sizes = [2, 32], strides = [1, 1]} : vector<2x128xf32> to vector<2x32xf32>
    %106 = arith.negf %105 : vector<2x32xf32>
    %107 = math.exp %106 : vector<2x32xf32>
    %cst_64 = arith.constant 1.000000e+00 : f32
    %108 = vector.broadcast %cst_64 : f32 to vector<2x32xf32>
    %109 = arith.addf %108, %107 : vector<2x32xf32>
    %110 = arith.divf %108, %109 : vector<2x32xf32>
    %111 = vector.extract_strided_slice %65 {offsets = [0, 64], sizes = [2, 32], strides = [1, 1]} : vector<2x128xf32> to vector<2x32xf32>
    %112 = math.tanh %111 : vector<2x32xf32>
    %113 = vector.extract_strided_slice %65 {offsets = [0, 96], sizes = [2, 32], strides = [1, 1]} : vector<2x128xf32> to vector<2x32xf32>
    %114 = arith.negf %113 : vector<2x32xf32>
    %115 = math.exp %114 : vector<2x32xf32>
    %cst_65 = arith.constant 1.000000e+00 : f32
    %116 = vector.broadcast %cst_65 : f32 to vector<2x32xf32>
    %117 = arith.addf %116, %115 : vector<2x32xf32>
    %118 = arith.divf %116, %117 : vector<2x32xf32>
    %119 = arith.mulf %110, %98 : vector<2x32xf32>
    %120 = arith.mulf %104, %112 : vector<2x32xf32>
    %121 = arith.addf %119, %120 : vector<2x32xf32>
    %122 = math.tanh %121 : vector<2x32xf32>
    %123 = arith.mulf %118, %122 : vector<2x32xf32>
    %c0_66 = arith.constant 0 : index
    %c0_67 = arith.constant 0 : index
    %124 = vector.load %arg9[%c0_66, %c0_67] : memref<2x32xf32, #tpu.memory_space<vmem>>, vector<2x32xf32>
    tpu.vector_store %arg9[%c0_66, %c0_67], %123 {strides = array<i32>} : memref<2x32xf32, #tpu.memory_space<vmem>>, vector<2x32xf32>,
    %c0_68 = arith.constant 0 : index
    %c0_69 = arith.constant 0 : index
    %125 = vector.load %arg10[%c0_68, %c0_69] : memref<2x32xf32, #tpu.memory_space<vmem>>, vector<2x32xf32>
    tpu.vector_store %arg10[%c0_68, %c0_69], %121 {strides = array<i32>} : memref<2x32xf32, #tpu.memory_space<vmem>>, vector<2x32xf32>,
    %126 = arith.index_cast %47 : i32 to index
    %c0_70 = arith.constant 0 : index
    %c0_71 = arith.constant 0 : index
    %127 = vector.load %arg12[%126, %c0_70, %c0_71] : memref<3x2x32xf32, #tpu.memory_space<vmem>>, vector<1x2x32xf32>
    %128 = vector.shape_cast %127 : vector<1x2x32xf32> to vector<2x32xf32>
    %129 = vector.shape_cast %123 : vector<2x32xf32> to vector<1x2x32xf32>
    tpu.vector_store %arg12[%126, %c0_70, %c0_71], %129 {strides = array<i32>} : memref<3x2x32xf32, #tpu.memory_space<vmem>>, vector<1x2x32xf32>,
    %c1_i32_72 = arith.constant 1 : i32
    %c2_i32_73 = arith.constant 2 : i32
    %130 = arith.subi %c2_i32_73, %c1_i32_72 : i32
    %c0_74 = arith.constant 0 : index
    %c0_75 = arith.constant 0 : index
    %131 = vector.load %arg7[%c0_74, %c0_75] : memref<2x32xf32, #tpu.memory_space<vmem>>, vector<2x32xf32>
    %c0_76 = arith.constant 0 : index
    %c0_77 = arith.constant 0 : index
    %132 = vector.load %arg9[%c0_76, %c0_77] : memref<2x32xf32, #tpu.memory_space<vmem>>, vector<2x32xf32>
    %133 = tpu.concatenate %131, %132 in 1 : vector<2x32xf32>, vector<2x32xf32> -> vector<2x64xf32>
    %134 = arith.truncf %133 : vector<2x64xf32> to vector<2x64xbf16>
    %c0_78 = arith.constant 0 : index
    %c0_79 = arith.constant 0 : index
    %135 = vector.load %arg4[%c0_78, %c0_79] : memref<64x256xbf16, #tpu.memory_space<vmem>>, vector<64x256xbf16>
    %cst_80 = arith.constant dense<0.000000e+00> : vector<2x256xf32>
    %136 = tpu.matmul %134, %135, %cst_80 {dimension_numbers = #tpu.dot_dimension_numbers<[1], [0], [0], [1], [0, 0, 1, 1], [], []>} : vector<2x64xbf16>, vector<64x256xbf16>, vector<2x256xf32> -> vector<2x256xf32>
    %137 = arith.index_cast %c1_i32_72 : i32 to index
    %c0_81 = arith.constant 0 : index
    %c0_82 = arith.constant 0 : index
    %138 = vector.load %arg6[%137, %c0_81, %c0_82] : memref<3x2x256xf32, #tpu.memory_space<vmem>>, vector<1x2x256xf32>
    %139 = vector.shape_cast %138 : vector<1x2x256xf32> to vector<2x256xf32>
    %140 = vector.extract_strided_slice %139 {offsets = [0, 0], sizes = [2, 128], strides = [1, 1]} : vector<2x256xf32> to vector<2x128xf32>
    %141 = vector.extract_strided_slice %136 {offsets = [0, 0], sizes = [2, 128], strides = [1, 1]} : vector<2x256xf32> to vector<2x128xf32>
    %142 = arith.addf %140, %141 : vector<2x128xf32>
    %143 = arith.index_cast %130 : i32 to index
    %c0_83 = arith.constant 0 : index
    %c0_84 = arith.constant 0 : index
    %144 = vector.load %arg6[%143, %c0_83, %c0_84] : memref<3x2x256xf32, #tpu.memory_space<vmem>>, vector<1x2x256xf32>
    %145 = vector.shape_cast %144 : vector<1x2x256xf32> to vector<2x256xf32>
    %146 = vector.extract_strided_slice %145 {offsets = [0, 128], sizes = [2, 128], strides = [1, 1]} : vector<2x256xf32> to vector<2x128xf32>
    %147 = vector.extract_strided_slice %136 {offsets = [0, 128], sizes = [2, 128], strides = [1, 1]} : vector<2x256xf32> to vector<2x128xf32>
    %148 = arith.addf %146, %147 : vector<2x128xf32>
    %c0_85 = arith.constant 0 : index
    %c0_86 = arith.constant 0 : index
    %149 = vector.load %arg8[%c0_85, %c0_86] : memref<2x32xf32, #tpu.memory_space<vmem>>, vector<2x32xf32>
    %150 = vector.extract_strided_slice %142 {offsets = [0, 0], sizes = [2, 32], strides = [1, 1]} : vector<2x128xf32> to vector<2x32xf32>
    %151 = arith.negf %150 : vector<2x32xf32>
    %152 = math.exp %151 : vector<2x32xf32>
    %cst_87 = arith.constant 1.000000e+00 : f32
    %153 = vector.broadcast %cst_87 : f32 to vector<2x32xf32>
    %154 = arith.addf %153, %152 : vector<2x32xf32>
    %155 = arith.divf %153, %154 : vector<2x32xf32>
    %156 = vector.extract_strided_slice %142 {offsets = [0, 32], sizes = [2, 32], strides = [1, 1]} : vector<2x128xf32> to vector<2x32xf32>
    %157 = arith.negf %156 : vector<2x32xf32>
    %158 = math.exp %157 : vector<2x32xf32>
    %cst_88 = arith.constant 1.000000e+00 : f32
    %159 = vector.broadcast %cst_88 : f32 to vector<2x32xf32>
    %160 = arith.addf %159, %158 : vector<2x32xf32>
    %161 = arith.divf %159, %160 : vector<2x32xf32>
    %162 = vector.extract_strided_slice %142 {offsets = [0, 64], sizes = [2, 32], strides = [1, 1]} : vector<2x128xf32> to vector<2x32xf32>
    %163 = math.tanh %162 : vector<2x32xf32>
    %164 = vector.extract_strided_slice %142 {offsets = [0, 96], sizes = [2, 32], strides = [1, 1]} : vector<2x128xf32> to vector<2x32xf32>
    %165 = arith.negf %164 : vector<2x32xf32>
    %166 = math.exp %165 : vector<2x32xf32>
    %cst_89 = arith.constant 1.000000e+00 : f32
    %167 = vector.broadcast %cst_89 : f32 to vector<2x32xf32>
    %168 = arith.addf %167, %166 : vector<2x32xf32>
    %169 = arith.divf %167, %168 : vector<2x32xf32>
    %170 = arith.mulf %161, %149 : vector<2x32xf32>
    %171 = arith.mulf %155, %163 : vector<2x32xf32>
    %172 = arith.addf %170, %171 : vector<2x32xf32>
    %173 = math.tanh %172 : vector<2x32xf32>
    %174 = arith.mulf %169, %173 : vector<2x32xf32>
    %c0_90 = arith.constant 0 : index
    %c0_91 = arith.constant 0 : index
    %175 = vector.load %arg7[%c0_90, %c0_91] : memref<2x32xf32, #tpu.memory_space<vmem>>, vector<2x32xf32>
    tpu.vector_store %arg7[%c0_90, %c0_91], %174 {strides = array<i32>} : memref<2x32xf32, #tpu.memory_space<vmem>>, vector<2x32xf32>,
    %c0_92 = arith.constant 0 : index
    %c0_93 = arith.constant 0 : index
    %176 = vector.load %arg8[%c0_92, %c0_93] : memref<2x32xf32, #tpu.memory_space<vmem>>, vector<2x32xf32>
    tpu.vector_store %arg8[%c0_92, %c0_93], %172 {strides = array<i32>} : memref<2x32xf32, #tpu.memory_space<vmem>>, vector<2x32xf32>,
    %177 = arith.index_cast %c1_i32_72 : i32 to index
    %c0_94 = arith.constant 0 : index
    %c0_95 = arith.constant 0 : index
    %178 = vector.load %arg11[%177, %c0_94, %c0_95] : memref<3x2x32xf32, #tpu.memory_space<vmem>>, vector<1x2x32xf32>
    %179 = vector.shape_cast %178 : vector<1x2x32xf32> to vector<2x32xf32>
    %180 = vector.shape_cast %174 : vector<2x32xf32> to vector<1x2x32xf32>
    tpu.vector_store %arg11[%177, %c0_94, %c0_95], %180 {strides = array<i32>} : memref<3x2x32xf32, #tpu.memory_space<vmem>>, vector<1x2x32xf32>,
    %c0_96 = arith.constant 0 : index
    %c0_97 = arith.constant 0 : index
    %181 = vector.load %arg10[%c0_96, %c0_97] : memref<2x32xf32, #tpu.memory_space<vmem>>, vector<2x32xf32>
    %182 = vector.extract_strided_slice %148 {offsets = [0, 0], sizes = [2, 32], strides = [1, 1]} : vector<2x128xf32> to vector<2x32xf32>
    %183 = arith.negf %182 : vector<2x32xf32>
    %184 = math.exp %183 : vector<2x32xf32>
    %cst_98 = arith.constant 1.000000e+00 : f32
    %185 = vector.broadcast %cst_98 : f32 to vector<2x32xf32>
    %186 = arith.addf %185, %184 : vector<2x32xf32>
    %187 = arith.divf %185, %186 : vector<2x32xf32>
    %188 = vector.extract_strided_slice %148 {offsets = [0, 32], sizes = [2, 32], strides = [1, 1]} : vector<2x128xf32> to vector<2x32xf32>
    %189 = arith.negf %188 : vector<2x32xf32>
    %190 = math.exp %189 : vector<2x32xf32>
    %cst_99 = arith.constant 1.000000e+00 : f32
    %191 = vector.broadcast %cst_99 : f32 to vector<2x32xf32>
    %192 = arith.addf %191, %190 : vector<2x32xf32>
    %193 = arith.divf %191, %192 : vector<2x32xf32>
    %194 = vector.extract_strided_slice %148 {offsets = [0, 64], sizes = [2, 32], strides = [1, 1]} : vector<2x128xf32> to vector<2x32xf32>
    %195 = math.tanh %194 : vector<2x32xf32>
    %196 = vector.extract_strided_slice %148 {offsets = [0, 96], sizes = [2, 32], strides = [1, 1]} : vector<2x128xf32> to vector<2x32xf32>
    %197 = arith.negf %196 : vector<2x32xf32>
    %198 = math.exp %197 : vector<2x32xf32>
    %cst_100 = arith.constant 1.000000e+00 : f32
    %199 = vector.broadcast %cst_100 : f32 to vector<2x32xf32>
    %200 = arith.addf %199, %198 : vector<2x32xf32>
    %201 = arith.divf %199, %200 : vector<2x32xf32>
    %202 = arith.mulf %193, %181 : vector<2x32xf32>
    %203 = arith.mulf %187, %195 : vector<2x32xf32>
    %204 = arith.addf %202, %203 : vector<2x32xf32>
    %205 = math.tanh %204 : vector<2x32xf32>
    %206 = arith.mulf %201, %205 : vector<2x32xf32>
    %c0_101 = arith.constant 0 : index
    %c0_102 = arith.constant 0 : index
    %207 = vector.load %arg9[%c0_101, %c0_102] : memref<2x32xf32, #tpu.memory_space<vmem>>, vector<2x32xf32>
    tpu.vector_store %arg9[%c0_101, %c0_102], %206 {strides = array<i32>} : memref<2x32xf32, #tpu.memory_space<vmem>>, vector<2x32xf32>,
    %c0_103 = arith.constant 0 : index
    %c0_104 = arith.constant 0 : index
    %208 = vector.load %arg10[%c0_103, %c0_104] : memref<2x32xf32, #tpu.memory_space<vmem>>, vector<2x32xf32>
    tpu.vector_store %arg10[%c0_103, %c0_104], %204 {strides = array<i32>} : memref<2x32xf32, #tpu.memory_space<vmem>>, vector<2x32xf32>,
    %209 = arith.index_cast %130 : i32 to index
    %c0_105 = arith.constant 0 : index
    %c0_106 = arith.constant 0 : index
    %210 = vector.load %arg12[%209, %c0_105, %c0_106] : memref<3x2x32xf32, #tpu.memory_space<vmem>>, vector<1x2x32xf32>
    %211 = vector.shape_cast %210 : vector<1x2x32xf32> to vector<2x32xf32>
    %212 = vector.shape_cast %206 : vector<2x32xf32> to vector<1x2x32xf32>
    tpu.vector_store %arg12[%209, %c0_105, %c0_106], %212 {strides = array<i32>} : memref<3x2x32xf32, #tpu.memory_space<vmem>>, vector<1x2x32xf32>,
    %c2_i32_107 = arith.constant 2 : i32
    %c2_i32_108 = arith.constant 2 : i32
    %213 = arith.subi %c2_i32_108, %c2_i32_107 : i32
    %c0_109 = arith.constant 0 : index
    %c0_110 = arith.constant 0 : index
    %214 = vector.load %arg7[%c0_109, %c0_110] : memref<2x32xf32, #tpu.memory_space<vmem>>, vector<2x32xf32>
    %c0_111 = arith.constant 0 : index
    %c0_112 = arith.constant 0 : index
    %215 = vector.load %arg9[%c0_111, %c0_112] : memref<2x32xf32, #tpu.memory_space<vmem>>, vector<2x32xf32>
    %216 = tpu.concatenate %214, %215 in 1 : vector<2x32xf32>, vector<2x32xf32> -> vector<2x64xf32>
    %217 = arith.truncf %216 : vector<2x64xf32> to vector<2x64xbf16>
    %c0_113 = arith.constant 0 : index
    %c0_114 = arith.constant 0 : index
    %218 = vector.load %arg4[%c0_113, %c0_114] : memref<64x256xbf16, #tpu.memory_space<vmem>>, vector<64x256xbf16>
    %cst_115 = arith.constant dense<0.000000e+00> : vector<2x256xf32>
    %219 = tpu.matmul %217, %218, %cst_115 {dimension_numbers = #tpu.dot_dimension_numbers<[1], [0], [0], [1], [0, 0, 1, 1], [], []>} : vector<2x64xbf16>, vector<64x256xbf16>, vector<2x256xf32> -> vector<2x256xf32>
    %220 = arith.index_cast %c2_i32_107 : i32 to index
    %c0_116 = arith.constant 0 : index
    %c0_117 = arith.constant 0 : index
    %221 = vector.load %arg6[%220, %c0_116, %c0_117] : memref<3x2x256xf32, #tpu.memory_space<vmem>>, vector<1x2x256xf32>
    %222 = vector.shape_cast %221 : vector<1x2x256xf32> to vector<2x256xf32>
    %223 = vector.extract_strided_slice %222 {offsets = [0, 0], sizes = [2, 128], strides = [1, 1]} : vector<2x256xf32> to vector<2x128xf32>
    %224 = vector.extract_strided_slice %219 {offsets = [0, 0], sizes = [2, 128], strides = [1, 1]} : vector<2x256xf32> to vector<2x128xf32>
    %225 = arith.addf %223, %224 : vector<2x128xf32>
    %226 = arith.index_cast %213 : i32 to index
    %c0_118 = arith.constant 0 : index
    %c0_119 = arith.constant 0 : index
    %227 = vector.load %arg6[%226, %c0_118, %c0_119] : memref<3x2x256xf32, #tpu.memory_space<vmem>>, vector<1x2x256xf32>
    %228 = vector.shape_cast %227 : vector<1x2x256xf32> to vector<2x256xf32>
    %229 = vector.extract_strided_slice %228 {offsets = [0, 128], sizes = [2, 128], strides = [1, 1]} : vector<2x256xf32> to vector<2x128xf32>
    %230 = vector.extract_strided_slice %219 {offsets = [0, 128], sizes = [2, 128], strides = [1, 1]} : vector<2x256xf32> to vector<2x128xf32>
    %231 = arith.addf %229, %230 : vector<2x128xf32>
    %c0_120 = arith.constant 0 : index
    %c0_121 = arith.constant 0 : index
    %232 = vector.load %arg8[%c0_120, %c0_121] : memref<2x32xf32, #tpu.memory_space<vmem>>, vector<2x32xf32>
    %233 = vector.extract_strided_slice %225 {offsets = [0, 0], sizes = [2, 32], strides = [1, 1]} : vector<2x128xf32> to vector<2x32xf32>
    %234 = arith.negf %233 : vector<2x32xf32>
    %235 = math.exp %234 : vector<2x32xf32>
    %cst_122 = arith.constant 1.000000e+00 : f32
    %236 = vector.broadcast %cst_122 : f32 to vector<2x32xf32>
    %237 = arith.addf %236, %235 : vector<2x32xf32>
    %238 = arith.divf %236, %237 : vector<2x32xf32>
    %239 = vector.extract_strided_slice %225 {offsets = [0, 32], sizes = [2, 32], strides = [1, 1]} : vector<2x128xf32> to vector<2x32xf32>
    %240 = arith.negf %239 : vector<2x32xf32>
    %241 = math.exp %240 : vector<2x32xf32>
    %cst_123 = arith.constant 1.000000e+00 : f32
    %242 = vector.broadcast %cst_123 : f32 to vector<2x32xf32>
    %243 = arith.addf %242, %241 : vector<2x32xf32>
    %244 = arith.divf %242, %243 : vector<2x32xf32>
    %245 = vector.extract_strided_slice %225 {offsets = [0, 64], sizes = [2, 32], strides = [1, 1]} : vector<2x128xf32> to vector<2x32xf32>
    %246 = math.tanh %245 : vector<2x32xf32>
    %247 = vector.extract_strided_slice %225 {offsets = [0, 96], sizes = [2, 32], strides = [1, 1]} : vector<2x128xf32> to vector<2x32xf32>
    %248 = arith.negf %247 : vector<2x32xf32>
    %249 = math.exp %248 : vector<2x32xf32>
    %cst_124 = arith.constant 1.000000e+00 : f32
    %250 = vector.broadcast %cst_124 : f32 to vector<2x32xf32>
    %251 = arith.addf %250, %249 : vector<2x32xf32>
    %252 = arith.divf %250, %251 : vector<2x32xf32>
    %253 = arith.mulf %244, %232 : vector<2x32xf32>
    %254 = arith.mulf %238, %246 : vector<2x32xf32>
    %255 = arith.addf %253, %254 : vector<2x32xf32>
    %256 = math.tanh %255 : vector<2x32xf32>
    %257 = arith.mulf %252, %256 : vector<2x32xf32>
    %c0_125 = arith.constant 0 : index
    %c0_126 = arith.constant 0 : index
    %258 = vector.load %arg7[%c0_125, %c0_126] : memref<2x32xf32, #tpu.memory_space<vmem>>, vector<2x32xf32>
    tpu.vector_store %arg7[%c0_125, %c0_126], %257 {strides = array<i32>} : memref<2x32xf32, #tpu.memory_space<vmem>>, vector<2x32xf32>,
    %c0_127 = arith.constant 0 : index
    %c0_128 = arith.constant 0 : index
    %259 = vector.load %arg8[%c0_127, %c0_128] : memref<2x32xf32, #tpu.memory_space<vmem>>, vector<2x32xf32>
    tpu.vector_store %arg8[%c0_127, %c0_128], %255 {strides = array<i32>} : memref<2x32xf32, #tpu.memory_space<vmem>>, vector<2x32xf32>,
    %260 = arith.index_cast %c2_i32_107 : i32 to index
    %c0_129 = arith.constant 0 : index
    %c0_130 = arith.constant 0 : index
    %261 = vector.load %arg11[%260, %c0_129, %c0_130] : memref<3x2x32xf32, #tpu.memory_space<vmem>>, vector<1x2x32xf32>
    %262 = vector.shape_cast %261 : vector<1x2x32xf32> to vector<2x32xf32>
    %263 = vector.shape_cast %257 : vector<2x32xf32> to vector<1x2x32xf32>
    tpu.vector_store %arg11[%260, %c0_129, %c0_130], %263 {strides = array<i32>} : memref<3x2x32xf32, #tpu.memory_space<vmem>>, vector<1x2x32xf32>,
    %c0_131 = arith.constant 0 : index
    %c0_132 = arith.constant 0 : index
    %264 = vector.load %arg10[%c0_131, %c0_132] : memref<2x32xf32, #tpu.memory_space<vmem>>, vector<2x32xf32>
    %265 = vector.extract_strided_slice %231 {offsets = [0, 0], sizes = [2, 32], strides = [1, 1]} : vector<2x128xf32> to vector<2x32xf32>
    %266 = arith.negf %265 : vector<2x32xf32>
    %267 = math.exp %266 : vector<2x32xf32>
    %cst_133 = arith.constant 1.000000e+00 : f32
    %268 = vector.broadcast %cst_133 : f32 to vector<2x32xf32>
    %269 = arith.addf %268, %267 : vector<2x32xf32>
    %270 = arith.divf %268, %269 : vector<2x32xf32>
    %271 = vector.extract_strided_slice %231 {offsets = [0, 32], sizes = [2, 32], strides = [1, 1]} : vector<2x128xf32> to vector<2x32xf32>
    %272 = arith.negf %271 : vector<2x32xf32>
    %273 = math.exp %272 : vector<2x32xf32>
    %cst_134 = arith.constant 1.000000e+00 : f32
    %274 = vector.broadcast %cst_134 : f32 to vector<2x32xf32>
    %275 = arith.addf %274, %273 : vector<2x32xf32>
    %276 = arith.divf %274, %275 : vector<2x32xf32>
    %277 = vector.extract_strided_slice %231 {offsets = [0, 64], sizes = [2, 32], strides = [1, 1]} : vector<2x128xf32> to vector<2x32xf32>
    %278 = math.tanh %277 : vector<2x32xf32>
    %279 = vector.extract_strided_slice %231 {offsets = [0, 96], sizes = [2, 32], strides = [1, 1]} : vector<2x128xf32> to vector<2x32xf32>
    %280 = arith.negf %279 : vector<2x32xf32>
    %281 = math.exp %280 : vector<2x32xf32>
    %cst_135 = arith.constant 1.000000e+00 : f32
    %282 = vector.broadcast %cst_135 : f32 to vector<2x32xf32>
    %283 = arith.addf %282, %281 : vector<2x32xf32>
    %284 = arith.divf %282, %283 : vector<2x32xf32>
    %285 = arith.mulf %276, %264 : vector<2x32xf32>
    %286 = arith.mulf %270, %278 : vector<2x32xf32>
    %287 = arith.addf %285, %286 : vector<2x32xf32>
    %288 = math.tanh %287 : vector<2x32xf32>
    %289 = arith.mulf %284, %288 : vector<2x32xf32>
    %c0_136 = arith.constant 0 : index
    %c0_137 = arith.constant 0 : index
    %290 = vector.load %arg9[%c0_136, %c0_137] : memref<2x32xf32, #tpu.memory_space<vmem>>, vector<2x32xf32>
    tpu.vector_store %arg9[%c0_136, %c0_137], %289 {strides = array<i32>} : memref<2x32xf32, #tpu.memory_space<vmem>>, vector<2x32xf32>,
    %c0_138 = arith.constant 0 : index
    %c0_139 = arith.constant 0 : index
    %291 = vector.load %arg10[%c0_138, %c0_139] : memref<2x32xf32, #tpu.memory_space<vmem>>, vector<2x32xf32>
    tpu.vector_store %arg10[%c0_138, %c0_139], %287 {strides = array<i32>} : memref<2x32xf32, #tpu.memory_space<vmem>>, vector<2x32xf32>,
    %292 = arith.index_cast %213 : i32 to index
    %c0_140 = arith.constant 0 : index
    %c0_141 = arith.constant 0 : index
    %293 = vector.load %arg12[%292, %c0_140, %c0_141] : memref<3x2x32xf32, #tpu.memory_space<vmem>>, vector<1x2x32xf32>
    %294 = vector.shape_cast %293 : vector<1x2x32xf32> to vector<2x32xf32>
    %295 = vector.shape_cast %289 : vector<2x32xf32> to vector<1x2x32xf32>
    tpu.vector_store %arg12[%292, %c0_140, %c0_141], %295 {strides = array<i32>} : memref<3x2x32xf32, #tpu.memory_space<vmem>>, vector<1x2x32xf32>,
    %c3_i32_142 = arith.constant 3 : i32
    %c0_143 = arith.constant 0 : index
    %c0_144 = arith.constant 0 : index
    %c0_145 = arith.constant 0 : index
    %296 = vector.load %arg11[%c0_143, %c0_144, %c0_145] : memref<3x2x32xf32, #tpu.memory_space<vmem>>, vector<3x2x32xf32>
    %c0_146 = arith.constant 0 : index
    %c0_147 = arith.constant 0 : index
    %c0_148 = arith.constant 0 : index
    %297 = vector.load %arg12[%c0_146, %c0_147, %c0_148] : memref<3x2x32xf32, #tpu.memory_space<vmem>>, vector<3x2x32xf32>
    %298 = tpu.concatenate %296, %297 in 2 : vector<3x2x32xf32>, vector<3x2x32xf32> -> vector<3x2x64xf32>
    %c0_149 = arith.constant 0 : index
    %c0_150 = arith.constant 0 : index
    %c0_151 = arith.constant 0 : index
    %299 = vector.load %arg5[%c0_149, %c0_150, %c0_151] : memref<3x2x64xf32, #tpu.memory_space<vmem>>, vector<3x2x64xf32>
    tpu.vector_store %arg5[%c0_149, %c0_150, %c0_151], %298 {strides = array<i32>} : memref<3x2x64xf32, #tpu.memory_space<vmem>>, vector<3x2x64xf32>,
    return
  }
  func.func @transform_0(%arg0: i32) -> (i32, i32, i32) {
    %c0_i32 = arith.constant 0 : i32
    %c0_i32_0 = arith.constant 0 : i32
    %c0_i32_1 = arith.constant 0 : i32
    %c0_i32_2 = arith.constant 0 : i32
    return %c0_i32, %c0_i32_0, %c0_i32_1 : i32, i32, i32
  }
  func.func @transform_1(%arg0: i32) -> (i32, i32) {
    %c0_i32 = arith.constant 0 : i32
    %c0_i32_0 = arith.constant 0 : i32
    %c0_i32_1 = arith.constant 0 : i32
    return %c0_i32, %c0_i32_0 : i32, i32
  }
  func.func @transform_2(%arg0: i32) -> (i32, i32) {
    %c0_i32 = arith.constant 0 : i32
    %c0_i32_0 = arith.constant 0 : i32
    %c0_i32_1 = arith.constant 0 : i32
    return %c0_i32, %c0_i32_0 : i32, i32
  }
  func.func @transform_3(%arg0: i32) -> (i32, i32) {
    %c0_i32 = arith.constant 0 : i32
    %c0_i32_0 = arith.constant 0 : i32
    %c0_i32_1 = arith.constant 0 : i32
    return %c0_i32, %c0_i32_0 : i32, i32
  }
  func.func @transform_4(%arg0: i32) -> (i32, i32, i32) {
    %c0_i32 = arith.constant 0 : i32
    %c0_i32_0 = arith.constant 0 : i32
    %c0_i32_1 = arith.constant 0 : i32
    %c0_i32_2 = arith.constant 0 : i32
    return %c0_i32, %c0_i32_0, %c0_i32_1 : i32, i32, i32
  }
}

</mosaic_0001>

<llo_original>
// kernel: encoder_forward.9
$region0: #{encoder_forward.9}
  #allocation0 [shape = 'u32[]', space=smem, size = 0x4, offset = 0x4, fixed_abs, tag = 'smem constant byte address 0x4 - core index']
  #allocation1 [shape = 'u32[144,128]{1,0:T(1,128)}', space=vmem, size = 0x12000, scoped, tag = 'internal scratch']
  %s0 = inlined_call_operand.vmem [shape: f32[546,9], index: 0, kind: input, shape index: {}]
  %s1 = inlined_call_operand.vmem [shape: bf16[9,32], index: 1, kind: input, shape index: {}]
  %s2 = inlined_call_operand.vmem [shape: f32[1,32], index: 2, kind: input, shape index: {}]
  %s3 = inlined_call_operand.vmem [shape: f32[546,32], index: 3, kind: output, shape index: {}]
  %s4 = sld [smem:[#allocation0]]
  $region22: #{encoder_forward.9} parent=0
    _
  %s6 = ssub.s32 1, %s4
  %s7 = scalar_select 0, %s6, %s4
  // Predicated region
  $region2: #{encoder_forward.9} parent=0 // pred_check
    _
  $region3: #{encoder_forward.9} parent=0 // pred_check_branch
    %9 = sbr.rel (0) target = $region5
  $region4: #{encoder_forward.9} parent=0 // pred_region
    _
  $region5: #{encoder_forward.9} parent=0 // pred_fallthru
    _
  // Predicated region
  $region6: #{encoder_forward.9} parent=0 // pred_check
    _
  $region7: #{encoder_forward.9} parent=0 // pred_check_branch
    %11 = sbr.rel (0) target = $region9
  $region8: #{encoder_forward.9} parent=0 // pred_region
    _
  $region9: #{encoder_forward.9} parent=0 // pred_fallthru
    _
  // Predicated region
  $region10: #{encoder_forward.9} parent=0 // pred_check
    _
  $region11: #{encoder_forward.9} parent=0 // pred_check_branch
    %13 = sbr.rel (0) target = $region13
  $region12: #{encoder_forward.9} parent=0 // pred_region
    _
  $region13: #{encoder_forward.9} parent=0 // pred_fallthru
    _
  %v15 = vld [vmem:[%s0] sm:$0xff]
  %v16 = vld [vmem:[%s0 + $0x8] sm:$0xff]
  %v17 = vld [vmem:[%s0 + $0x10] sm:$0xff]
  %v18 = vld [vmem:[%s0 + $0x18] sm:$0xff]
  %v19 = vld [vmem:[%s0 + $0x20] sm:$0xff]
  %v20 = vld [vmem:[%s0 + $0x28] sm:$0xff]
  %v21 = vld [vmem:[%s0 + $0x30] sm:$0xff]
  %v22 = vld [vmem:[%s0 + $0x38] sm:$0xff]
  %v23 = vld [vmem:[%s0 + $0x40] sm:$0xff]
  %v24 = vld [vmem:[%s0 + $0x48] sm:$0xff]
  %v25 = vld [vmem:[%s0 + $0x50] sm:$0xff]
  %v26 = vld [vmem:[%s0 + $0x58] sm:$0xff]
  %v27 = vld [vmem:[%s0 + $0x60] sm:$0xff]
  %v28 = vld [vmem:[%s0 + $0x68] sm:$0xff]
  %v29 = vld [vmem:[%s0 + $0x70] sm:$0xff]
  %v30 = vld [vmem:[%s0 + $0x78] sm:$0xff]
  %v31 = vld [vmem:[%s0 + $0x80] sm:$0xff]
  %v32 = vld [vmem:[%s0 + $0x88] sm:$0xff]
  %v33 = vld [vmem:[%s0 + $0x90] sm:$0xff]
  %v34 = vld [vmem:[%s0 + $0x98] sm:$0xff]
  %v35 = vld [vmem:[%s0 + $0xa0] sm:$0xff]
  %v36 = vld [vmem:[%s0 + $0xa8] sm:$0xff]
  %v37 = vld [vmem:[%s0 + $0xb0] sm:$0xff]
  %v38 = vld [vmem:[%s0 + $0xb8] sm:$0xff]
  %v39 = vld [vmem:[%s0 + $0xc0] sm:$0xff]
  %v40 = vld [vmem:[%s0 + $0xc8] sm:$0xff]
  %v41 = vld [vmem:[%s0 + $0xd0] sm:$0xff]
  %v42 = vld [vmem:[%s0 + $0xd8] sm:$0xff]
  %v43 = vld [vmem:[%s0 + $0xe0] sm:$0xff]
  %v44 = vld [vmem:[%s0 + $0xe8] sm:$0xff]
  %v45 = vld [vmem:[%s0 + $0xf0] sm:$0xff]
  %v46 = vld [vmem:[%s0 + $0xf8] sm:$0xff]
  %v47 = vld [vmem:[%s0 + $0x100] sm:$0xff]
  %v48 = vld [vmem:[%s0 + $0x108] sm:$0xff]
  %v49 = vld [vmem:[%s0 + $0x110] sm:$0xff]
  %v50 = vld [vmem:[%s0 + $0x118] sm:$0xff]
  %v51 = vld [vmem:[%s0 + $0x120] sm:$0xff]
  %v52 = vld [vmem:[%s0 + $0x128] sm:$0xff]
  %v53 = vld [vmem:[%s0 + $0x130] sm:$0xff]
  %v54 = vld [vmem:[%s0 + $0x138] sm:$0xff]
  %v55 = vld [vmem:[%s0 + $0x140] sm:$0xff]
  %v56 = vld [vmem:[%s0 + $0x148] sm:$0xff]
  %v57 = vld [vmem:[%s0 + $0x150] sm:$0xff]
  %v58 = vld [vmem:[%s0 + $0x158] sm:$0xff]
  %v59 = vld [vmem:[%s0 + $0x160] sm:$0xff]
  %v60 = vld [vmem:[%s0 + $0x168] sm:$0xff]
  %v61 = vld [vmem:[%s0 + $0x170] sm:$0xff]
  %v62 = vld [vmem:[%s0 + $0x178] sm:$0xff]
  %v63 = vld [vmem:[%s0 + $0x180] sm:$0xff]
  %v64 = vld [vmem:[%s0 + $0x188] sm:$0xff]
  %v65 = vld [vmem:[%s0 + $0x190] sm:$0xff]
  %v66 = vld [vmem:[%s0 + $0x198] sm:$0xff]
  %v67 = vld [vmem:[%s0 + $0x1a0] sm:$0xff]
  %v68 = vld [vmem:[%s0 + $0x1a8] sm:$0xff]
  %v69 = vld [vmem:[%s0 + $0x1b0] sm:$0xff]
  %v70 = vld [vmem:[%s0 + $0x1b8] sm:$0xff]
  %v71 = vld [vmem:[%s0 + $0x1c0] sm:$0xff]
  %v72 = vld [vmem:[%s0 + $0x1c8] sm:$0xff]
  %v73 = vld [vmem:[%s0 + $0x1d0] sm:$0xff]
  %v74 = vld [vmem:[%s0 + $0x1d8] sm:$0xff]
  %v75 = vld [vmem:[%s0 + $0x1e0] sm:$0xff]
  %v76 = vld [vmem:[%s0 + $0x1e8] sm:$0xff]
  %v77 = vld [vmem:[%s0 + $0x1f0] sm:$0xff]
  %v78 = vld [vmem:[%s0 + $0x1f8] sm:$0xff]
  %v79 = vld [vmem:[%s0 + $0x200] sm:$0xff]
  %v80 = vld [vmem:[%s0 + $0x208] sm:$0xff]
  %v81 = vld [vmem:[%s0 + $0x210] sm:$0xff]
  %v82 = vld [vmem:[%s0 + $0x218] sm:$0xff]
  %v83 = vld [vmem:[%s0 + $0x220] sm:$0x3]
  %v84 = vpack.c.bf16 %v16, %v15
  %v85 = vpack.c.bf16 %v18, %v17
  %v86 = vpack.c.bf16 %v20, %v19
  %v87 = vpack.c.bf16 %v22, %v21
  %v88 = vpack.c.bf16 %v24, %v23
  %v89 = vpack.c.bf16 %v26, %v25
  %v90 = vpack.c.bf16 %v28, %v27
  %v91 = vpack.c.bf16 %v30, %v29
  %v92 = vpack.c.bf16 %v32, %v31
  %v93 = vpack.c.bf16 %v34, %v33
  %v94 = vpack.c.bf16 %v36, %v35
  %v95 = vpack.c.bf16 %v38, %v37
  %v96 = vpack.c.bf16 %v40, %v39
  %v97 = vpack.c.bf16 %v42, %v41
  %v98 = vpack.c.bf16 %v44, %v43
  %v99 = vpack.c.bf16 %v46, %v45
  %v100 = vpack.c.bf16 %v48, %v47
  %v101 = vpack.c.bf16 %v50, %v49
  %v102 = vpack.c.bf16 %v52, %v51
  %v103 = vpack.c.bf16 %v54, %v53
  %v104 = vpack.c.bf16 %v56, %v55
  %v105 = vpack.c.bf16 %v58, %v57
  %v106 = vpack.c.bf16 %v60, %v59
  %v107 = vpack.c.bf16 %v62, %v61
  %v108 = vpack.c.bf16 %v64, %v63
  %v109 = vpack.c.bf16 %v66, %v65
  %v110 = vpack.c.bf16 %v68, %v67
  %v111 = vpack.c.bf16 %v70, %v69
  %v112 = vpack.c.bf16 %v72, %v71
  %v113 = vpack.c.bf16 %v74, %v73
  %v114 = vpack.c.bf16 %v76, %v75
  %v115 = vpack.c.bf16 %v78, %v77
  %v116 = vpack.c.bf16 %v80, %v79
  %v117 = vpack.c.bf16 %v82, %v81
  %v118 = vpack.c.bf16 %v83, %v83
  %v119 = vld [vmem:[%s1] sm:$0xf]
  %v120 = vld [vmem:[%s1 + $0x4] sm:$0x1]
  %v121 = vld [vmem:[%s2] sm:$0x1]
  %v123 = vlaneseq
  %v124 = vshrl.u32 %v123, 7
  %v125 = vsub.s32 0, %v124
  %v126 = vrot.slane %v121, %v125
  %v130 = vunpack.c.l.b16 %v119
  %v131 = vunpack.c.l.b16 %v120
  %v132 = vpack.c.b16 %v131, %v130
  %vm133 = vcmask 72704
  %v135 = vsel %vm133, %v84, 0
  %v138 = vsel %vm133, %v85, 0
  %v141 = vsel %vm133, %v86, 0
  %v144 = vsel %vm133, %v87, 0
  %v147 = vsel %vm133, %v88, 0
  %v150 = vsel %vm133, %v89, 0
  %v153 = vsel %vm133, %v90, 0
  %v156 = vsel %vm133, %v91, 0
  %v159 = vsel %vm133, %v92, 0
  %v162 = vsel %vm133, %v93, 0
  %v165 = vsel %vm133, %v94, 0
  %v168 = vsel %vm133, %v95, 0
  %v171 = vsel %vm133, %v96, 0
  %v174 = vsel %vm133, %v97, 0
  %v177 = vsel %vm133, %v98, 0
  %v180 = vsel %vm133, %v99, 0
  %v183 = vsel %vm133, %v100, 0
  %v186 = vsel %vm133, %v101, 0
  %v189 = vsel %vm133, %v102, 0
  %v192 = vsel %vm133, %v103, 0
  %v195 = vsel %vm133, %v104, 0
  %v198 = vsel %vm133, %v105, 0
  %v201 = vsel %vm133, %v106, 0
  %v204 = vsel %vm133, %v107, 0
  %v207 = vsel %vm133, %v108, 0
  %v210 = vsel %vm133, %v109, 0
  %v213 = vsel %vm133, %v110, 0
  %v216 = vsel %vm133, %v111, 0
  %v219 = vsel %vm133, %v112, 0
  %v222 = vsel %vm133, %v113, 0
  %v225 = vsel %vm133, %v114, 0
  %v228 = vsel %vm133, %v115, 0
  %v231 = vsel %vm133, %v116, 0
  %v234 = vsel %vm133, %v117, 0
  %v237 = vsel %vm133, %v118, 0
  %vm239 = vcmask 1043456
  %vm240 = vcmask 1044480
  %v241 = vsel %vm239, 4294967295, 65535
  %v242 = vsel %vm240, %v241, 0
  %v244 = vand.u32 %v132, %v242
  %246 = vmatprep.subr.bf16.mxu0 0
  %247 = vmatpush1.bf16.msra.mxu0 0
  %248 = vmatprep.subr.bf16.mxu0 0
  %249 = vmatpush1.bf16.msra.mxu0 0
  %250 = vmatprep.subr.bf16.mxu0 0
  %251 = vmatpush1.bf16.msra.mxu0 0
  %252 = vmatprep.subr.bf16.mxu0 0
  %253 = vmatpush1.bf16.msra.mxu0 0
  %254 = vmatprep.subr.bf16.mxu0 0
  %255 = vmatpush1.bf16.msra.mxu0 0
  %256 = vmatprep.subr.bf16.mxu0 0
  %257 = vmatpush1.bf16.msra.mxu0 0
  %258 = vmatprep.subr.bf16.mxu0 0
  %259 = vmatpush1.bf16.msra.mxu0 0
  %260 = vmatprep.subr.bf16.mxu0 0
  %261 = vmatpush1.bf16.msra.mxu0 %v244
  %262 = vmatprep.subr.bf16.mxu0 0
  %263 = vmatpush2.bf16.msra.mxu0 0
  %264 = vmatprep.subr.bf16.mxu0 0
  %265 = vmatpush2.bf16.msra.mxu0 0
  %266 = vmatprep.subr.bf16.mxu0 0
  %267 = vmatpush2.bf16.msra.mxu0 0
  %268 = vmatprep.subr.bf16.mxu0 0
  %269 = vmatpush2.bf16.msra.mxu0 0
  %270 = vmatprep.subr.bf16.mxu0 0
  %271 = vmatpush2.bf16.msra.mxu0 0
  %272 = vmatprep.subr.bf16.mxu0 0
  %273 = vmatpush2.bf16.msra.mxu0 0
  %274 = vmatprep.subr.bf16.mxu0 0
  %275 = vmatpush2.bf16.msra.mxu0 0
  %276 = vmatprep.subr.bf16.mxu0 0
  %277 = vmatpush2.bf16.msra.mxu0 0
  %278 = vmatprep.mubr.bf16.mxu0 0
  %279 = vmatmul.mubr.bf16.gmra.mxu0 %v135
  %v280 = vpop.f32.mrf.mxu0
  %v281 = vadd.f32 %v126, %v280
  %v282 = vpop.f32.mrf.mxu0
  %v283 = vpop.f32.mrf.mxu0
  %v284 = vadd.f32 %v126, %v283
  %v285 = vpop.f32.mrf.mxu0
  %286 = vmatprep.mubr.bf16.mxu0 0
  %287 = vmatmul.mubr.bf16.gmra.mxu0 %v138
  %v288 = vpop.f32.mrf.mxu0
  %v289 = vadd.f32 %v126, %v288
  %v290 = vpop.f32.mrf.mxu0
  %v291 = vpop.f32.mrf.mxu0
  %v292 = vadd.f32 %v126, %v291
  %v293 = vpop.f32.mrf.mxu0
  %294 = vmatprep.mubr.bf16.mxu0 0
  %295 = vmatmul.mubr.bf16.gmra.mxu0 %v141
  %v296 = vpop.f32.mrf.mxu0
  %v297 = vadd.f32 %v126, %v296
  %v298 = vpop.f32.mrf.mxu0
  %v299 = vpop.f32.mrf.mxu0
  %v300 = vadd.f32 %v126, %v299
  %v301 = vpop.f32.mrf.mxu0
  %302 = vmatprep.mubr.bf16.mxu0 0
  %303 = vmatmul.mubr.bf16.gmra.mxu0 %v144
  %v304 = vpop.f32.mrf.mxu0
  %v305 = vadd.f32 %v126, %v304
  %v306 = vpop.f32.mrf.mxu0
  %v307 = vpop.f32.mrf.mxu0
  %v308 = vadd.f32 %v126, %v307
  %v309 = vpop.f32.mrf.mxu0
  %310 = vmatprep.mubr.bf16.mxu0 0
  %311 = vmatmul.mubr.bf16.gmra.mxu0 %v147
  %v312 = vpop.f32.mrf.mxu0
  %v313 = vadd.f32 %v126, %v312
  %v314 = vpop.f32.mrf.mxu0
  %v315 = vpop.f32.mrf.mxu0
  %v316 = vadd.f32 %v126, %v315
  %v317 = vpop.f32.mrf.mxu0
  %318 = vmatprep.mubr.bf16.mxu0 0
  %319 = vmatmul.mubr.bf16.gmra.mxu0 %v150
  %v320 = vpop.f32.mrf.mxu0
  %v321 = vadd.f32 %v126, %v320
  %v322 = vpop.f32.mrf.mxu0
  %v323 = vpop.f32.mrf.mxu0
  %v324 = vadd.f32 %v126, %v323
  %v325 = vpop.f32.mrf.mxu0
  %326 = vmatprep.mubr.bf16.mxu0 0
  %327 = vmatmul.mubr.bf16.gmra.mxu0 %v153
  %v328 = vpop.f32.mrf.mxu0
  %v329 = vadd.f32 %v126, %v328
  %v330 = vpop.f32.mrf.mxu0
  %v331 = vpop.f32.mrf.mxu0
  %v332 = vadd.f32 %v126, %v331
  %v333 = vpop.f32.mrf.mxu0
  %334 = vmatprep.mubr.bf16.mxu0 0
  %335 = vmatmul.mubr.bf16.gmra.mxu0 %v156
  %v336 = vpop.f32.mrf.mxu0
  %v337 = vadd.f32 %v126, %v336
  %v338 = vpop.f32.mrf.mxu0
  %v339 = vpop.f32.mrf.mxu0
  %v340 = vadd.f32 %v126, %v339
  %v341 = vpop.f32.mrf.mxu0
  %342 = vmatprep.mubr.bf16.mxu0 0
  %343 = vmatmul.mubr.bf16.gmra.mxu0 %v159
  %v344 = vpop.f32.mrf.mxu0
  %v345 = vadd.f32 %v126, %v344
  %v346 = vpop.f32.mrf.mxu0
  %v347 = vpop.f32.mrf.mxu0
  %v348 = vadd.f32 %v126, %v347
  %v349 = vpop.f32.mrf.mxu0
  %350 = vmatprep.mubr.bf16.mxu0 0
  %351 = vmatmul.mubr.bf16.gmra.mxu0 %v162
  %v352 = vpop.f32.mrf.mxu0
  %v353 = vadd.f32 %v126, %v352
  %v354 = vpop.f32.mrf.mxu0
  %v355 = vpop.f32.mrf.mxu0
  %v356 = vadd.f32 %v126, %v355
  %v357 = vpop.f32.mrf.mxu0
  %358 = vmatprep.mubr.bf16.mxu0 0
  %359 = vmatmul.mubr.bf16.gmra.mxu0 %v165
  %v360 = vpop.f32.mrf.mxu0
  %v361 = vadd.f32 %v126, %v360
  %v362 = vpop.f32.mrf.mxu0
  %v363 = vpop.f32.mrf.mxu0
  %v364 = vadd.f32 %v126, %v363
  %v365 = vpop.f32.mrf.mxu0
  %366 = vmatprep.mubr.bf16.mxu0 0
  %367 = vmatmul.mubr.bf16.gmra.mxu0 %v168
  %v368 = vpop.f32.mrf.mxu0
  %v369 = vadd.f32 %v126, %v368
  %v370 = vpop.f32.mrf.mxu0
  %v371 = vpop.f32.mrf.mxu0
  %v372 = vadd.f32 %v126, %v371
  %v373 = vpop.f32.mrf.mxu0
  %374 = vmatprep.mubr.bf16.mxu0 0
  %375 = vmatmul.mubr.bf16.gmra.mxu0 %v171
  %v376 = vpop.f32.mrf.mxu0
  %v377 = vadd.f32 %v126, %v376
  %v378 = vpop.f32.mrf.mxu0
  %v379 = vpop.f32.mrf.mxu0
  %v380 = vadd.f32 %v126, %v379
  %v381 = vpop.f32.mrf.mxu0
  %382 = vmatprep.mubr.bf16.mxu0 0
  %383 = vmatmul.mubr.bf16.gmra.mxu0 %v174
  %v384 = vpop.f32.mrf.mxu0
  %v385 = vadd.f32 %v126, %v384
  %v386 = vpop.f32.mrf.mxu0
  %v387 = vpop.f32.mrf.mxu0
  %v388 = vadd.f32 %v126, %v387
  %v389 = vpop.f32.mrf.mxu0
  %390 = vmatprep.mubr.bf16.mxu0 0
  %391 = vmatmul.mubr.bf16.gmra.mxu0 %v177
  %v392 = vpop.f32.mrf.mxu0
  %v393 = vadd.f32 %v126, %v392
  %v394 = vpop.f32.mrf.mxu0
  %v395 = vpop.f32.mrf.mxu0
  %v396 = vadd.f32 %v126, %v395
  %v397 = vpop.f32.mrf.mxu0
  %398 = vmatprep.mubr.bf16.mxu0 0
  %399 = vmatmul.mubr.bf16.gmra.mxu0 %v180
  %v400 = vpop.f32.mrf.mxu0
  %v401 = vadd.f32 %v126, %v400
  %v402 = vpop.f32.mrf.mxu0
  %v403 = vpop.f32.mrf.mxu0
  %v404 = vadd.f32 %v126, %v403
  %v405 = vpop.f32.mrf.mxu0
  %406 = vmatprep.mubr.bf16.mxu0 0
  %407 = vmatmul.mubr.bf16.gmra.mxu0 %v183
  %v408 = vpop.f32.mrf.mxu0
  %v409 = vadd.f32 %v126, %v408
  %v410 = vpop.f32.mrf.mxu0
  %v411 = vpop.f32.mrf.mxu0
  %v412 = vadd.f32 %v126, %v411
  %v413 = vpop.f32.mrf.mxu0
  %414 = vmatprep.mubr.bf16.mxu0 0
  %415 = vmatmul.mubr.bf16.gmra.mxu0 %v186
  %v416 = vpop.f32.mrf.mxu0
  %v417 = vadd.f32 %v126, %v416
  %v418 = vpop.f32.mrf.mxu0
  %v419 = vpop.f32.mrf.mxu0
  %v420 = vadd.f32 %v126, %v419
  %v421 = vpop.f32.mrf.mxu0
  %422 = vmatprep.mubr.bf16.mxu0 0
  %423 = vmatmul.mubr.bf16.gmra.mxu0 %v189
  %v424 = vpop.f32.mrf.mxu0
  %v425 = vadd.f32 %v126, %v424
  %v426 = vpop.f32.mrf.mxu0
  %v427 = vpop.f32.mrf.mxu0
  %v428 = vadd.f32 %v126, %v427
  %v429 = vpop.f32.mrf.mxu0
  %430 = vmatprep.mubr.bf16.mxu0 0
  %431 = vmatmul.mubr.bf16.gmra.mxu0 %v192
  %v432 = vpop.f32.mrf.mxu0
  %v433 = vadd.f32 %v126, %v432
  %v434 = vpop.f32.mrf.mxu0
  %v435 = vpop.f32.mrf.mxu0
  %v436 = vadd.f32 %v126, %v435
  %v437 = vpop.f32.mrf.mxu0
  %438 = vmatprep.mubr.bf16.mxu0 0
  %439 = vmatmul.mubr.bf16.gmra.mxu0 %v195
  %v440 = vpop.f32.mrf.mxu0
  %v441 = vadd.f32 %v126, %v440
  %v442 = vpop.f32.mrf.mxu0
  %v443 = vpop.f32.mrf.mxu0
  %v444 = vadd.f32 %v126, %v443
  %v445 = vpop.f32.mrf.mxu0
  %446 = vmatprep.mubr.bf16.mxu0 0
  %447 = vmatmul.mubr.bf16.gmra.mxu0 %v198
  %v448 = vpop.f32.mrf.mxu0
  %v449 = vadd.f32 %v126, %v448
  %v450 = vpop.f32.mrf.mxu0
  %v451 = vpop.f32.mrf.mxu0
  %v452 = vadd.f32 %v126, %v451
  %v453 = vpop.f32.mrf.mxu0
  %454 = vmatprep.mubr.bf16.mxu0 0
  %455 = vmatmul.mubr.bf16.gmra.mxu0 %v201
  %v456 = vpop.f32.mrf.mxu0
  %v457 = vadd.f32 %v126, %v456
  %v458 = vpop.f32.mrf.mxu0
  %v459 = vpop.f32.mrf.mxu0
  %v460 = vadd.f32 %v126, %v459
  %v461 = vpop.f32.mrf.mxu0
  %462 = vmatprep.mubr.bf16.mxu0 0
  %463 = vmatmul.mubr.bf16.gmra.mxu0 %v204
  %v464 = vpop.f32.mrf.mxu0
  %v465 = vadd.f32 %v126, %v464
  %v466 = vpop.f32.mrf.mxu0
  %v467 = vpop.f32.mrf.mxu0
  %v468 = vadd.f32 %v126, %v467
  %v469 = vpop.f32.mrf.mxu0
  %470 = vmatprep.mubr.bf16.mxu0 0
  %471 = vmatmul.mubr.bf16.gmra.mxu0 %v207
  %v472 = vpop.f32.mrf.mxu0
  %v473 = vadd.f32 %v126, %v472
  %v474 = vpop.f32.mrf.mxu0
  %v475 = vpop.f32.mrf.mxu0
  %v476 = vadd.f32 %v126, %v475
  %v477 = vpop.f32.mrf.mxu0
  %478 = vmatprep.mubr.bf16.mxu0 0
  %479 = vmatmul.mubr.bf16.gmra.mxu0 %v210
  %v480 = vpop.f32.mrf.mxu0
  %v481 = vadd.f32 %v126, %v480
  %v482 = vpop.f32.mrf.mxu0
  %v483 = vpop.f32.mrf.mxu0
  %v484 = vadd.f32 %v126, %v483
  %v485 = vpop.f32.mrf.mxu0
  %486 = vmatprep.mubr.bf16.mxu0 0
  %487 = vmatmul.mubr.bf16.gmra.mxu0 %v213
  %v488 = vpop.f32.mrf.mxu0
  %v489 = vadd.f32 %v126, %v488
  %v490 = vpop.f32.mrf.mxu0
  %v491 = vpop.f32.mrf.mxu0
  %v492 = vadd.f32 %v126, %v491
  %v493 = vpop.f32.mrf.mxu0
  %494 = vmatprep.mubr.bf16.mxu0 0
  %495 = vmatmul.mubr.bf16.gmra.mxu0 %v216
  %v496 = vpop.f32.mrf.mxu0
  %v497 = vadd.f32 %v126, %v496
  %v498 = vpop.f32.mrf.mxu0
  %v499 = vpop.f32.mrf.mxu0
  %v500 = vadd.f32 %v126, %v499
  %v501 = vpop.f32.mrf.mxu0
  %502 = vmatprep.mubr.bf16.mxu0 0
  %503 = vmatmul.mubr.bf16.gmra.mxu0 %v219
  %v504 = vpop.f32.mrf.mxu0
  %v505 = vadd.f32 %v126, %v504
  %v506 = vpop.f32.mrf.mxu0
  %v507 = vpop.f32.mrf.mxu0
  %v508 = vadd.f32 %v126, %v507
  %v509 = vpop.f32.mrf.mxu0
  %510 = vmatprep.mubr.bf16.mxu0 0
  %511 = vmatmul.mubr.bf16.gmra.mxu0 %v222
  %v512 = vpop.f32.mrf.mxu0
  %v513 = vadd.f32 %v126, %v512
  %v514 = vpop.f32.mrf.mxu0
  %v515 = vpop.f32.mrf.mxu0
  %v516 = vadd.f32 %v126, %v515
  %v517 = vpop.f32.mrf.mxu0
  %518 = vmatprep.mubr.bf16.mxu0 0
  %519 = vmatmul.mubr.bf16.gmra.mxu0 %v225
  %v520 = vpop.f32.mrf.mxu0
  %v521 = vadd.f32 %v126, %v520
  %v522 = vpop.f32.mrf.mxu0
  %v523 = vpop.f32.mrf.mxu0
  %v524 = vadd.f32 %v126, %v523
  %v525 = vpop.f32.mrf.mxu0
  %526 = vmatprep.mubr.bf16.mxu0 0
  %527 = vmatmul.mubr.bf16.gmra.mxu0 %v228
  %v528 = vpop.f32.mrf.mxu0
  %v529 = vadd.f32 %v126, %v528
  %v530 = vpop.f32.mrf.mxu0
  %v531 = vpop.f32.mrf.mxu0
  %v532 = vadd.f32 %v126, %v531
  %v533 = vpop.f32.mrf.mxu0
  %534 = vmatprep.mubr.bf16.mxu0 0
  %535 = vmatmul.mubr.bf16.gmra.mxu0 %v231
  %v536 = vpop.f32.mrf.mxu0
  %v537 = vadd.f32 %v126, %v536
  %v538 = vpop.f32.mrf.mxu0
  %v539 = vpop.f32.mrf.mxu0
  %v540 = vadd.f32 %v126, %v539
  %v541 = vpop.f32.mrf.mxu0
  %542 = vmatprep.mubr.bf16.mxu0 0
  %543 = vmatmul.mubr.bf16.gmra.mxu0 %v234
  %v544 = vpop.f32.mrf.mxu0
  %v545 = vadd.f32 %v126, %v544
  %v546 = vpop.f32.mrf.mxu0
  %v547 = vpop.f32.mrf.mxu0
  %v548 = vadd.f32 %v126, %v547
  %v549 = vpop.f32.mrf.mxu0
  %550 = vmatprep.mubr.bf16.mxu0 0
  %551 = vmatmul.mubr.bf16.gmra.mxu0 %v237
  %v552 = vpop.f32.mrf.mxu0
  %v553 = vadd.f32 %v126, %v552
  %v554 = vpop.f32.mrf.mxu0
  %v555 = vpop.f32.mrf.mxu0
  %v556 = vpop.f32.mrf.mxu0
  %557 = vdwg.mxu0
  %v558 = vmax.f32 %v281, 0.0
  %v559 = vmax.f32 %v284, 0.0
  %v560 = vmax.f32 %v289, 0.0
  %v561 = vmax.f32 %v292, 0.0
  %v562 = vmax.f32 %v297, 0.0
  %v563 = vmax.f32 %v300, 0.0
  %v564 = vmax.f32 %v305, 0.0
  %v565 = vmax.f32 %v308, 0.0
  %v566 = vmax.f32 %v313, 0.0
  %v567 = vmax.f32 %v316, 0.0
  %v568 = vmax.f32 %v321, 0.0
  %v569 = vmax.f32 %v324, 0.0
  %v570 = vmax.f32 %v329, 0.0
  %v571 = vmax.f32 %v332, 0.0
  %v572 = vmax.f32 %v337, 0.0
  %v573 = vmax.f32 %v340, 0.0
  %v574 = vmax.f32 %v345, 0.0
  %v575 = vmax.f32 %v348, 0.0
  %v576 = vmax.f32 %v353, 0.0
  %v577 = vmax.f32 %v356, 0.0
  %v578 = vmax.f32 %v361, 0.0
  %v579 = vmax.f32 %v364, 0.0
  %v580 = vmax.f32 %v369, 0.0
  %v581 = vmax.f32 %v372, 0.0
  %v582 = vmax.f32 %v377, 0.0
  %v583 = vmax.f32 %v380, 0.0
  %v584 = vmax.f32 %v385, 0.0
  %v585 = vmax.f32 %v388, 0.0
  %v586 = vmax.f32 %v393, 0.0
  %v587 = vmax.f32 %v396, 0.0
  %v588 = vmax.f32 %v401, 0.0
  %v589 = vmax.f32 %v404, 0.0
  %v590 = vmax.f32 %v409, 0.0
  %v591 = vmax.f32 %v412, 0.0
  %v592 = vmax.f32 %v417, 0.0
  %v593 = vmax.f32 %v420, 0.0
  %v594 = vmax.f32 %v425, 0.0
  %v595 = vmax.f32 %v428, 0.0
  %v596 = vmax.f32 %v433, 0.0
  %v597 = vmax.f32 %v436, 0.0
  %v598 = vmax.f32 %v441, 0.0
  %v599 = vmax.f32 %v444, 0.0
  %v600 = vmax.f32 %v449, 0.0
  %v601 = vmax.f32 %v452, 0.0
  %v602 = vmax.f32 %v457, 0.0
  %v603 = vmax.f32 %v460, 0.0
  %v604 = vmax.f32 %v465, 0.0
  %v605 = vmax.f32 %v468, 0.0
  %v606 = vmax.f32 %v473, 0.0
  %v607 = vmax.f32 %v476, 0.0
  %v608 = vmax.f32 %v481, 0.0
  %v609 = vmax.f32 %v484, 0.0
  %v610 = vmax.f32 %v489, 0.0
  %v611 = vmax.f32 %v492, 0.0
  %v612 = vmax.f32 %v497, 0.0
  %v613 = vmax.f32 %v500, 0.0
  %v614 = vmax.f32 %v505, 0.0
  %v615 = vmax.f32 %v508, 0.0
  %v616 = vmax.f32 %v513, 0.0
  %v617 = vmax.f32 %v516, 0.0
  %v618 = vmax.f32 %v521, 0.0
  %v619 = vmax.f32 %v524, 0.0
  %v620 = vmax.f32 %v529, 0.0
  %v621 = vmax.f32 %v532, 0.0
  %v622 = vmax.f32 %v537, 0.0
  %v623 = vmax.f32 %v540, 0.0
  %v624 = vmax.f32 %v545, 0.0
  %v625 = vmax.f32 %v548, 0.0
  %v626 = vmax.f32 %v553, 0.0
  %vm627 = vcmask 261120
  %628 = vst.msk [vmem:[%s3] sm:$0xff] %vm627, %v558
  %629 = vst.msk [vmem:[%s3 + $0x8] sm:$0xff] %vm627, %v559
  %630 = vst.msk [vmem:[%s3 + $0x10] sm:$0xff] %vm627, %v560
  %631 = vst.msk [vmem:[%s3 + $0x18] sm:$0xff] %vm627, %v561
  %632 = vst.msk [vmem:[%s3 + $0x20] sm:$0xff] %vm627, %v562
  %633 = vst.msk [vmem:[%s3 + $0x28] sm:$0xff] %vm627, %v563
  %634 = vst.msk [vmem:[%s3 + $0x30] sm:$0xff] %vm627, %v564
  %635 = vst.msk [vmem:[%s3 + $0x38] sm:$0xff] %vm627, %v565
  %636 = vst.msk [vmem:[%s3 + $0x40] sm:$0xff] %vm627, %v566
  %637 = vst.msk [vmem:[%s3 + $0x48] sm:$0xff] %vm627, %v567
  %638 = vst.msk [vmem:[%s3 + $0x50] sm:$0xff] %vm627, %v568
  %639 = vst.msk [vmem:[%s3 + $0x58] sm:$0xff] %vm627, %v569
  %640 = vst.msk [vmem:[%s3 + $0x60] sm:$0xff] %vm627, %v570
  %641 = vst.msk [vmem:[%s3 + $0x68] sm:$0xff] %vm627, %v571
  %642 = vst.msk [vmem:[%s3 + $0x70] sm:$0xff] %vm627, %v572
  %643 = vst.msk [vmem:[%s3 + $0x78] sm:$0xff] %vm627, %v573
  %644 = vst.msk [vmem:[%s3 + $0x80] sm:$0xff] %vm627, %v574
  %645 = vst.msk [vmem:[%s3 + $0x88] sm:$0xff] %vm627, %v575
  %646 = vst.msk [vmem:[%s3 + $0x90] sm:$0xff] %vm627, %v576
  %647 = vst.msk [vmem:[%s3 + $0x98] sm:$0xff] %vm627, %v577
  %648 = vst.msk [vmem:[%s3 + $0xa0] sm:$0xff] %vm627, %v578
  %649 = vst.msk [vmem:[%s3 + $0xa8] sm:$0xff] %vm627, %v579
  %650 = vst.msk [vmem:[%s3 + $0xb0] sm:$0xff] %vm627, %v580
  %651 = vst.msk [vmem:[%s3 + $0xb8] sm:$0xff] %vm627, %v581
  %652 = vst.msk [vmem:[%s3 + $0xc0] sm:$0xff] %vm627, %v582
  %653 = vst.msk [vmem:[%s3 + $0xc8] sm:$0xff] %vm627, %v583
  %654 = vst.msk [vmem:[%s3 + $0xd0] sm:$0xff] %vm627, %v584
  %655 = vst.msk [vmem:[%s3 + $0xd8] sm:$0xff] %vm627, %v585
  %656 = vst.msk [vmem:[%s3 + $0xe0] sm:$0xff] %vm627, %v586
  %657 = vst.msk [vmem:[%s3 + $0xe8] sm:$0xff] %vm627, %v587
  %658 = vst.msk [vmem:[%s3 + $0xf0] sm:$0xff] %vm627, %v588
  %659 = vst.msk [vmem:[%s3 + $0xf8] sm:$0xff] %vm627, %v589
  %660 = vst.msk [vmem:[%s3 + $0x100] sm:$0xff] %vm627, %v590
  %661 = vst.msk [vmem:[%s3 + $0x108] sm:$0xff] %vm627, %v591
  %662 = vst.msk [vmem:[%s3 + $0x110] sm:$0xff] %vm627, %v592
  %663 = vst.msk [vmem:[%s3 + $0x118] sm:$0xff] %vm627, %v593
  %664 = vst.msk [vmem:[%s3 + $0x120] sm:$0xff] %vm627, %v594
  %665 = vst.msk [vmem:[%s3 + $0x128] sm:$0xff] %vm627, %v595
  %666 = vst.msk [vmem:[%s3 + $0x130] sm:$0xff] %vm627, %v596
  %667 = vst.msk [vmem:[%s3 + $0x138] sm:$0xff] %vm627, %v597
  %668 = vst.msk [vmem:[%s3 + $0x140] sm:$0xff] %vm627, %v598
  %669 = vst.msk [vmem:[%s3 + $0x148] sm:$0xff] %vm627, %v599
  %670 = vst.msk [vmem:[%s3 + $0x150] sm:$0xff] %vm627, %v600
  %671 = vst.msk [vmem:[%s3 + $0x158] sm:$0xff] %vm627, %v601
  %672 = vst.msk [vmem:[%s3 + $0x160] sm:$0xff] %vm627, %v602
  %673 = vst.msk [vmem:[%s3 + $0x168] sm:$0xff] %vm627, %v603
  %674 = vst.msk [vmem:[%s3 + $0x170] sm:$0xff] %vm627, %v604
  %675 = vst.msk [vmem:[%s3 + $0x178] sm:$0xff] %vm627, %v605
  %676 = vst.msk [vmem:[%s3 + $0x180] sm:$0xff] %vm627, %v606
  %677 = vst.msk [vmem:[%s3 + $0x188] sm:$0xff] %vm627, %v607
  %678 = vst.msk [vmem:[%s3 + $0x190] sm:$0xff] %vm627, %v608
  %679 = vst.msk [vmem:[%s3 + $0x198] sm:$0xff] %vm627, %v609
  %680 = vst.msk [vmem:[%s3 + $0x1a0] sm:$0xff] %vm627, %v610
  %681 = vst.msk [vmem:[%s3 + $0x1a8] sm:$0xff] %vm627, %v611
  %682 = vst.msk [vmem:[%s3 + $0x1b0] sm:$0xff] %vm627, %v612
  %683 = vst.msk [vmem:[%s3 + $0x1b8] sm:$0xff] %vm627, %v613
  %684 = vst.msk [vmem:[%s3 + $0x1c0] sm:$0xff] %vm627, %v614
  %685 = vst.msk [vmem:[%s3 + $0x1c8] sm:$0xff] %vm627, %v615
  %686 = vst.msk [vmem:[%s3 + $0x1d0] sm:$0xff] %vm627, %v616
  %687 = vst.msk [vmem:[%s3 + $0x1d8] sm:$0xff] %vm627, %v617
  %688 = vst.msk [vmem:[%s3 + $0x1e0] sm:$0xff] %vm627, %v618
  %689 = vst.msk [vmem:[%s3 + $0x1e8] sm:$0xff] %vm627, %v619
  %690 = vst.msk [vmem:[%s3 + $0x1f0] sm:$0xff] %vm627, %v620
  %691 = vst.msk [vmem:[%s3 + $0x1f8] sm:$0xff] %vm627, %v621
  %692 = vst.msk [vmem:[%s3 + $0x200] sm:$0xff] %vm627, %v622
  %693 = vst.msk [vmem:[%s3 + $0x208] sm:$0xff] %vm627, %v623
  %694 = vst.msk [vmem:[%s3 + $0x210] sm:$0xff] %vm627, %v624
  %695 = vst.msk [vmem:[%s3 + $0x218] sm:$0xff] %vm627, %v625
  %vm696 = vcmask 254976
  %697 = vst.msk [vmem:[%s3 + $0x220] sm:$0x3] %vm696, %v626
  // Predicated region
  $region14: #{encoder_forward.9} parent=0 // pred_check
    _
  $region15: #{encoder_forward.9} parent=0 // pred_check_branch
    %699 = sbr.rel (0) target = $region17
  $region16: #{encoder_forward.9} parent=0 // pred_region
    _
  $region17: #{encoder_forward.9} parent=0 // pred_fallthru
    _
  // Predicated region
  $region18: #{encoder_forward.9} parent=0 // pred_check
    _
  $region19: #{encoder_forward.9} parent=0 // pred_check_branch
    %701 = sbr.rel (0) target = $region21
  $region20: #{encoder_forward.9} parent=0 // pred_region
    _
  $region21: #{encoder_forward.9} parent=0 // pred_fallthru
    _

// kernel: encoder_forward.10
$region0: #{encoder_forward.10}
  #allocation0 [shape = 'u32[]', space=smem, size = 0x4, offset = 0x4, fixed_abs, tag = 'smem constant byte address 0x4 - core index']
  #allocation1 [shape = 'u32[144,128]{1,0:T(1,128)}', space=vmem, size = 0x12000, scoped, tag = 'internal scratch']
  %s0 = inlined_call_operand.vmem [shape: f32[114,288], index: 0, kind: input, shape index: {}]
  %s1 = inlined_call_operand.vmem [shape: bf16[288,32], index: 1, kind: input, shape index: {}]
  %s2 = inlined_call_operand.vmem [shape: f32[1,32], index: 2, kind: input, shape index: {}]
  %s3 = inlined_call_operand.vmem [shape: f32[114,32], index: 3, kind: output, shape index: {}]
  %s4 = sld [smem:[#allocation0]]
  $region22: #{encoder_forward.10} parent=0
    _
  %s6 = ssub.s32 1, %s4
  %s7 = scalar_select 0, %s6, %s4
  // Predicated region
  $region2: #{encoder_forward.10} parent=0 // pred_check
    _
  $region3: #{encoder_forward.10} parent=0 // pred_check_branch
    %9 = sbr.rel (0) target = $region5
  $region4: #{encoder_forward.10} parent=0 // pred_region
    _
  $region5: #{encoder_forward.10} parent=0 // pred_fallthru
    _
  // Predicated region
  $region6: #{encoder_forward.10} parent=0 // pred_check
    _
  $region7: #{encoder_forward.10} parent=0 // pred_check_branch
    %11 = sbr.rel (0) target = $region9
  $region8: #{encoder_forward.10} parent=0 // pred_region
    _
  $region9: #{encoder_forward.10} parent=0 // pred_fallthru
    _
  // Predicated region
  $region10: #{encoder_forward.10} parent=0 // pred_check
    _
  $region11: #{encoder_forward.10} parent=0 // pred_check_branch
    %13 = sbr.rel (0) target = $region13
  $region12: #{encoder_forward.10} parent=0 // pred_region
    _
  $region13: #{encoder_forward.10} parent=0 // pred_fallthru
    _
  %v15 = vld [vmem:[%s0] sm:$0xff]
  %v16 = vld [vmem:[%s0 + $0x8] sm:$0xff]
  %v17 = vld [vmem:[%s0 + $0x10] sm:$0xff]
  %v18 = vld [vmem:[%s0 + $0x18] sm:$0xff]
  %v19 = vld [vmem:[%s0 + $0x20] sm:$0xff]
  %v20 = vld [vmem:[%s0 + $0x28] sm:$0xff]
  %v21 = vld [vmem:[%s0 + $0x30] sm:$0xff]
  %v22 = vld [vmem:[%s0 + $0x38] sm:$0xff]
  %v23 = vld [vmem:[%s0 + $0x40] sm:$0xff]
  %v24 = vld [vmem:[%s0 + $0x48] sm:$0xff]
  %v25 = vld [vmem:[%s0 + $0x50] sm:$0xff]
  %v26 = vld [vmem:[%s0 + $0x58] sm:$0xff]
  %v27 = vld [vmem:[%s0 + $0x60] sm:$0xff]
  %v28 = vld [vmem:[%s0 + $0x68] sm:$0xff]
  %v29 = vld [vmem:[%s0 + $0x70] sm:$0xff]
  %v30 = vld [vmem:[%s0 + $0x78] sm:$0xff]
  %v31 = vld [vmem:[%s0 + $0x80] sm:$0xff]
  %v32 = vld [vmem:[%s0 + $0x88] sm:$0xff]
  %v33 = vld [vmem:[%s0 + $0x90] sm:$0xff]
  %v34 = vld [vmem:[%s0 + $0x98] sm:$0xff]
  %v35 = vld [vmem:[%s0 + $0xa0] sm:$0xff]
  %v36 = vld [vmem:[%s0 + $0xa8] sm:$0xff]
  %v37 = vld [vmem:[%s0 + $0xb0] sm:$0xff]
  %v38 = vld [vmem:[%s0 + $0xb8] sm:$0xff]
  %v39 = vld [vmem:[%s0 + $0xc0] sm:$0xff]
  %v40 = vld [vmem:[%s0 + $0xc8] sm:$0xff]
  %v41 = vld [vmem:[%s0 + $0xd0] sm:$0xff]
  %v42 = vld [vmem:[%s0 + $0xd8] sm:$0xff]
  %v43 = vld [vmem:[%s0 + $0xe0] sm:$0xff]
  %v44 = vld [vmem:[%s0 + $0xe8] sm:$0xff]
  %v45 = vld [vmem:[%s0 + $0xf0] sm:$0xff]
  %v46 = vld [vmem:[%s0 + $0xf8] sm:$0xff]
  %v47 = vld [vmem:[%s0 + $0x100] sm:$0xff]
  %v48 = vld [vmem:[%s0 + $0x108] sm:$0xff]
  %v49 = vld [vmem:[%s0 + $0x110] sm:$0xff]
  %v50 = vld [vmem:[%s0 + $0x118] sm:$0xff]
  %v51 = vld [vmem:[%s0 + $0x120] sm:$0xff]
  %v52 = vld [vmem:[%s0 + $0x128] sm:$0xff]
  %v53 = vld [vmem:[%s0 + $0x130] sm:$0xff]
  %v54 = vld [vmem:[%s0 + $0x138] sm:$0xff]
  %v55 = vld [vmem:[%s0 + $0x140] sm:$0xff]
  %v56 = vld [vmem:[%s0 + $0x148] sm:$0xff]
  %v57 = vld [vmem:[%s0 + $0x150] sm:$0x3]
  %v58 = vld [vmem:[%s0 + $0x158] sm:$0x3]
  %v59 = vld [vmem:[%s0 + $0x160] sm:$0x3]
  %v60 = vpack.c.bf16 %v18, %v15
  %v61 = vpack.c.bf16 %v19, %v16
  %v62 = vpack.c.bf16 %v20, %v17
  %v63 = vpack.c.bf16 %v24, %v21
  %v64 = vpack.c.bf16 %v25, %v22
  %v65 = vpack.c.bf16 %v26, %v23
  %v66 = vpack.c.bf16 %v30, %v27
  %v67 = vpack.c.bf16 %v31, %v28
  %v68 = vpack.c.bf16 %v32, %v29
  %v69 = vpack.c.bf16 %v36, %v33
  %v70 = vpack.c.bf16 %v37, %v34
  %v71 = vpack.c.bf16 %v38, %v35
  %v72 = vpack.c.bf16 %v42, %v39
  %v73 = vpack.c.bf16 %v43, %v40
  %v74 = vpack.c.bf16 %v44, %v41
  %v75 = vpack.c.bf16 %v48, %v45
  %v76 = vpack.c.bf16 %v49, %v46
  %v77 = vpack.c.bf16 %v50, %v47
  %v78 = vpack.c.bf16 %v54, %v51
  %v79 = vpack.c.bf16 %v55, %v52
  %v80 = vpack.c.bf16 %v56, %v53
  %v81 = vpack.c.bf16 %v57, %v57
  %v82 = vpack.c.bf16 %v58, %v58
  %v83 = vpack.c.bf16 %v59, %v59
  %v84 = vld [vmem:[%s1] sm:$0xf]
  %v85 = vld [vmem:[%s1 + $0x4] sm:$0xf]
  %v86 = vld [vmem:[%s1 + $0x8] sm:$0xf]
  %v87 = vld [vmem:[%s1 + $0xc] sm:$0xf]
  %v88 = vld [vmem:[%s1 + $0x10] sm:$0xf]
  %v89 = vld [vmem:[%s1 + $0x14] sm:$0xf]
  %v90 = vld [vmem:[%s1 + $0x18] sm:$0xf]
  %v91 = vld [vmem:[%s1 + $0x1c] sm:$0xf]
  %v92 = vld [vmem:[%s1 + $0x20] sm:$0xf]
  %v93 = vld [vmem:[%s1 + $0x24] sm:$0xf]
  %v94 = vld [vmem:[%s1 + $0x28] sm:$0xf]
  %v95 = vld [vmem:[%s1 + $0x2c] sm:$0xf]
  %v96 = vld [vmem:[%s1 + $0x30] sm:$0xf]
  %v97 = vld [vmem:[%s1 + $0x34] sm:$0xf]
  %v98 = vld [vmem:[%s1 + $0x38] sm:$0xf]
  %v99 = vld [vmem:[%s1 + $0x3c] sm:$0xf]
  %v100 = vld [vmem:[%s1 + $0x40] sm:$0xf]
  %v101 = vld [vmem:[%s1 + $0x44] sm:$0xf]
  %v102 = vld [vmem:[%s1 + $0x48] sm:$0xf]
  %v103 = vld [vmem:[%s1 + $0x4c] sm:$0xf]
  %v104 = vld [vmem:[%s1 + $0x50] sm:$0xf]
  %v105 = vld [vmem:[%s1 + $0x54] sm:$0xf]
  %v106 = vld [vmem:[%s1 + $0x58] sm:$0xf]
  %v107 = vld [vmem:[%s1 + $0x5c] sm:$0xf]
  %v108 = vld [vmem:[%s1 + $0x60] sm:$0xf]
  %v109 = vld [vmem:[%s1 + $0x64] sm:$0xf]
  %v110 = vld [vmem:[%s1 + $0x68] sm:$0xf]
  %v111 = vld [vmem:[%s1 + $0x6c] sm:$0xf]
  %v112 = vld [vmem:[%s1 + $0x70] sm:$0xf]
  %v113 = vld [vmem:[%s1 + $0x74] sm:$0xf]
  %v114 = vld [vmem:[%s1 + $0x78] sm:$0xf]
  %v115 = vld [vmem:[%s1 + $0x7c] sm:$0xf]
  %v116 = vld [vmem:[%s1 + $0x80] sm:$0xf]
  %v117 = vld [vmem:[%s1 + $0x84] sm:$0xf]
  %v118 = vld [vmem:[%s1 + $0x88] sm:$0xf]
  %v119 = vld [vmem:[%s1 + $0x8c] sm:$0xf]
  %v120 = vld [vmem:[%s2] sm:$0x1]
  %v122 = vlaneseq
  %v123 = vshrl.u32 %v122, 7
  %v124 = vsub.s32 0, %v123
  %v125 = vrot.slane %v120, %v124
  %v163 = vunpack.c.l.b16 %v84
  %v164 = vunpack.c.l.b16 %v85
  %v165 = vunpack.c.l.b16 %v86
  %v166 = vunpack.c.l.b16 %v87
  %v167 = vunpack.c.l.b16 %v88
  %v168 = vunpack.c.l.b16 %v89
  %v169 = vunpack.c.l.b16 %v90
  %v170 = vunpack.c.l.b16 %v91
  %v171 = vunpack.c.l.b16 %v92
  %v172 = vunpack.c.l.b16 %v93
  %v173 = vunpack.c.l.b16 %v94
  %v174 = vunpack.c.l.b16 %v95
  %v175 = vunpack.c.l.b16 %v96
  %v176 = vunpack.c.l.b16 %v97
  %v177 = vunpack.c.l.b16 %v98
  %v178 = vunpack.c.l.b16 %v99
  %v179 = vunpack.c.l.b16 %v100
  %v180 = vunpack.c.l.b16 %v101
  %v181 = vunpack.c.l.b16 %v102
  %v182 = vunpack.c.l.b16 %v103
  %v183 = vunpack.c.l.b16 %v104
  %v184 = vunpack.c.l.b16 %v105
  %v185 = vunpack.c.l.b16 %v106
  %v186 = vunpack.c.l.b16 %v107
  %v187 = vunpack.c.l.b16 %v108
  %v188 = vunpack.c.l.b16 %v109
  %v189 = vunpack.c.l.b16 %v110
  %v190 = vunpack.c.l.b16 %v111
  %v191 = vunpack.c.l.b16 %v112
  %v192 = vunpack.c.l.b16 %v113
  %v193 = vunpack.c.l.b16 %v114
  %v194 = vunpack.c.l.b16 %v115
  %v195 = vunpack.c.l.b16 %v116
  %v196 = vunpack.c.l.b16 %v117
  %v197 = vunpack.c.l.b16 %v118
  %v198 = vunpack.c.l.b16 %v119
  %v199 = vpack.c.b16 %v164, %v163
  %v200 = vpack.c.b16 %v166, %v165
  %v201 = vpack.c.b16 %v168, %v167
  %v202 = vpack.c.b16 %v170, %v169
  %v203 = vpack.c.b16 %v172, %v171
  %v204 = vpack.c.b16 %v174, %v173
  %v205 = vpack.c.b16 %v176, %v175
  %v206 = vpack.c.b16 %v178, %v177
  %v207 = vpack.c.b16 %v180, %v179
  %v208 = vpack.c.b16 %v182, %v181
  %v209 = vpack.c.b16 %v184, %v183
  %v210 = vpack.c.b16 %v186, %v185
  %v211 = vpack.c.b16 %v188, %v187
  %v212 = vpack.c.b16 %v190, %v189
  %v213 = vpack.c.b16 %v192, %v191
  %v214 = vpack.c.b16 %v194, %v193
  %v215 = vpack.c.b16 %v196, %v195
  %v216 = vpack.c.b16 %v198, %v197
  %vm235 = vcmask 261120
  %v237 = vsel %vm235, %v62, 0
  %v240 = vsel %vm235, %v65, 0
  %v243 = vsel %vm235, %v68, 0
  %v246 = vsel %vm235, %v71, 0
  %v249 = vsel %vm235, %v74, 0
  %v252 = vsel %vm235, %v77, 0
  %v255 = vsel %vm235, %v80, 0
  %v258 = vsel %vm235, %v83, 0
  %260 = vmatprep.subr.bf16.mxu0 0
  %261 = vmatpush1.bf16.msra.mxu0 %v206
  %262 = vmatprep.subr.bf16.mxu0 0
  %263 = vmatpush1.bf16.msra.mxu0 %v205
  %264 = vmatprep.subr.bf16.mxu0 0
  %265 = vmatpush1.bf16.msra.mxu0 %v204
  %266 = vmatprep.subr.bf16.mxu0 0
  %267 = vmatpush1.bf16.msra.mxu0 %v203
  %268 = vmatprep.subr.bf16.mxu0 0
  %269 = vmatpush1.bf16.msra.mxu0 %v202
  %270 = vmatprep.subr.bf16.mxu0 0
  %271 = vmatpush1.bf16.msra.mxu0 %v201
  %272 = vmatprep.subr.bf16.mxu0 0
  %273 = vmatpush1.bf16.msra.mxu0 %v200
  %274 = vmatprep.subr.bf16.mxu0 0
  %275 = vmatpush1.bf16.msra.mxu0 %v199
  %276 = vmatprep.subr.bf16.mxu0 0
  %277 = vmatpush2.bf16.msra.mxu0 %v214
  %278 = vmatprep.subr.bf16.mxu0 0
  %279 = vmatpush2.bf16.msra.mxu0 %v213
  %280 = vmatprep.subr.bf16.mxu0 0
  %281 = vmatpush2.bf16.msra.mxu0 %v212
  %282 = vmatprep.subr.bf16.mxu0 0
  %283 = vmatpush2.bf16.msra.mxu0 %v211
  %284 = vmatprep.subr.bf16.mxu0 0
  %285 = vmatpush2.bf16.msra.mxu0 %v210
  %286 = vmatprep.subr.bf16.mxu0 0
  %287 = vmatpush2.bf16.msra.mxu0 %v209
  %288 = vmatprep.subr.bf16.mxu0 0
  %289 = vmatpush2.bf16.msra.mxu0 %v208
  %290 = vmatprep.subr.bf16.mxu0 0
  %291 = vmatpush2.bf16.msra.mxu0 %v207
  %292 = vmatprep.mubr.bf16.mxu0 %v61
  %293 = vmatmul.mubr.bf16.gmra.mxu0 %v60
  %v294 = vpop.f32.mrf.mxu0
  %v295 = vadd.f32 %v125, %v294
  %v296 = vpop.f32.mrf.mxu0
  %v297 = vpop.f32.mrf.mxu0
  %v298 = vadd.f32 %v125, %v297
  %v299 = vpop.f32.mrf.mxu0
  %300 = vmatprep.mubr.bf16.mxu0 %v64
  %301 = vmatmul.mubr.bf16.gmra.mxu0 %v63
  %v302 = vpop.f32.mrf.mxu0
  %v303 = vadd.f32 %v125, %v302
  %v304 = vpop.f32.mrf.mxu0
  %v305 = vpop.f32.mrf.mxu0
  %v306 = vadd.f32 %v125, %v305
  %v307 = vpop.f32.mrf.mxu0
  %308 = vmatprep.mubr.bf16.mxu0 %v67
  %309 = vmatmul.mubr.bf16.gmra.mxu0 %v66
  %v310 = vpop.f32.mrf.mxu0
  %v311 = vadd.f32 %v125, %v310
  %v312 = vpop.f32.mrf.mxu0
  %v313 = vpop.f32.mrf.mxu0
  %v314 = vadd.f32 %v125, %v313
  %v315 = vpop.f32.mrf.mxu0
  %316 = vmatprep.mubr.bf16.mxu0 %v70
  %317 = vmatmul.mubr.bf16.gmra.mxu0 %v69
  %v318 = vpop.f32.mrf.mxu0
  %v319 = vadd.f32 %v125, %v318
  %v320 = vpop.f32.mrf.mxu0
  %v321 = vpop.f32.mrf.mxu0
  %v322 = vadd.f32 %v125, %v321
  %v323 = vpop.f32.mrf.mxu0
  %324 = vmatprep.mubr.bf16.mxu0 %v73
  %325 = vmatmul.mubr.bf16.gmra.mxu0 %v72
  %v326 = vpop.f32.mrf.mxu0
  %v327 = vadd.f32 %v125, %v326
  %v328 = vpop.f32.mrf.mxu0
  %v329 = vpop.f32.mrf.mxu0
  %v330 = vadd.f32 %v125, %v329
  %v331 = vpop.f32.mrf.mxu0
  %332 = vmatprep.mubr.bf16.mxu0 %v76
  %333 = vmatmul.mubr.bf16.gmra.mxu0 %v75
  %v334 = vpop.f32.mrf.mxu0
  %v335 = vadd.f32 %v125, %v334
  %v336 = vpop.f32.mrf.mxu0
  %v337 = vpop.f32.mrf.mxu0
  %v338 = vadd.f32 %v125, %v337
  %v339 = vpop.f32.mrf.mxu0
  %340 = vmatprep.mubr.bf16.mxu0 %v79
  %341 = vmatmul.mubr.bf16.gmra.mxu0 %v78
  %v342 = vpop.f32.mrf.mxu0
  %v343 = vadd.f32 %v125, %v342
  %v344 = vpop.f32.mrf.mxu0
  %v345 = vpop.f32.mrf.mxu0
  %v346 = vadd.f32 %v125, %v345
  %v347 = vpop.f32.mrf.mxu0
  %348 = vmatprep.mubr.bf16.mxu0 %v82
  %349 = vmatmul.mubr.bf16.gmra.mxu0 %v81
  %v350 = vpop.f32.mrf.mxu0
  %v351 = vadd.f32 %v125, %v350
  %v352 = vpop.f32.mrf.mxu0
  %v353 = vpop.f32.mrf.mxu0
  %v354 = vpop.f32.mrf.mxu0
  %355 = vdwg.mxu0
  %356 = vmatprep.subr.bf16.mxu0 0
  %357 = vmatpush1.bf16.msra.mxu0 0
  %358 = vmatprep.subr.bf16.mxu0 0
  %359 = vmatpush1.bf16.msra.mxu0 0
  %360 = vmatprep.subr.bf16.mxu0 0
  %361 = vmatpush1.bf16.msra.mxu0 0
  %362 = vmatprep.subr.bf16.mxu0 0
  %363 = vmatpush1.bf16.msra.mxu0 0
  %364 = vmatprep.subr.bf16.mxu0 0
  %365 = vmatpush1.bf16.msra.mxu0 0
  %366 = vmatprep.subr.bf16.mxu0 0
  %367 = vmatpush1.bf16.msra.mxu0 0
  %368 = vmatprep.subr.bf16.mxu0 0
  %369 = vmatpush1.bf16.msra.mxu0 %v216
  %370 = vmatprep.subr.bf16.mxu0 0
  %371 = vmatpush1.bf16.msra.mxu0 %v215
  %372 = vmatprep.subr.bf16.mxu0 0
  %373 = vmatpush2.bf16.msra.mxu0 0
  %374 = vmatprep.subr.bf16.mxu0 0
  %375 = vmatpush2.bf16.msra.mxu0 0
  %376 = vmatprep.subr.bf16.mxu0 0
  %377 = vmatpush2.bf16.msra.mxu0 0
  %378 = vmatprep.subr.bf16.mxu0 0
  %379 = vmatpush2.bf16.msra.mxu0 0
  %380 = vmatprep.subr.bf16.mxu0 0
  %381 = vmatpush2.bf16.msra.mxu0 0
  %382 = vmatprep.subr.bf16.mxu0 0
  %383 = vmatpush2.bf16.msra.mxu0 0
  %384 = vmatprep.subr.bf16.mxu0 0
  %385 = vmatpush2.bf16.msra.mxu0 0
  %386 = vmatprep.subr.bf16.mxu0 0
  %387 = vmatpush2.bf16.msra.mxu0 0
  %388 = vmatprep.mubr.bf16.mxu0 0
  %389 = vmatmul.mubr.bf16.gmra.mxu0 %v237
  %v390 = vpop.f32.mrf.mxu0
  %v391 = vadd.f32 %v295, %v390
  %v392 = vpop.f32.mrf.mxu0
  %v393 = vpop.f32.mrf.mxu0
  %v394 = vadd.f32 %v298, %v393
  %v395 = vpop.f32.mrf.mxu0
  %396 = vmatprep.mubr.bf16.mxu0 0
  %397 = vmatmul.mubr.bf16.gmra.mxu0 %v240
  %v398 = vpop.f32.mrf.mxu0
  %v399 = vadd.f32 %v303, %v398
  %v400 = vpop.f32.mrf.mxu0
  %v401 = vpop.f32.mrf.mxu0
  %v402 = vadd.f32 %v306, %v401
  %v403 = vpop.f32.mrf.mxu0
  %404 = vmatprep.mubr.bf16.mxu0 0
  %405 = vmatmul.mubr.bf16.gmra.mxu0 %v243
  %v406 = vpop.f32.mrf.mxu0
  %v407 = vadd.f32 %v311, %v406
  %v408 = vpop.f32.mrf.mxu0
  %v409 = vpop.f32.mrf.mxu0
  %v410 = vadd.f32 %v314, %v409
  %v411 = vpop.f32.mrf.mxu0
  %412 = vmatprep.mubr.bf16.mxu0 0
  %413 = vmatmul.mubr.bf16.gmra.mxu0 %v246
  %v414 = vpop.f32.mrf.mxu0
  %v415 = vadd.f32 %v319, %v414
  %v416 = vpop.f32.mrf.mxu0
  %v417 = vpop.f32.mrf.mxu0
  %v418 = vadd.f32 %v322, %v417
  %v419 = vpop.f32.mrf.mxu0
  %420 = vmatprep.mubr.bf16.mxu0 0
  %421 = vmatmul.mubr.bf16.gmra.mxu0 %v249
  %v422 = vpop.f32.mrf.mxu0
  %v423 = vadd.f32 %v327, %v422
  %v424 = vpop.f32.mrf.mxu0
  %v425 = vpop.f32.mrf.mxu0
  %v426 = vadd.f32 %v330, %v425
  %v427 = vpop.f32.mrf.mxu0
  %428 = vmatprep.mubr.bf16.mxu0 0
  %429 = vmatmul.mubr.bf16.gmra.mxu0 %v252
  %v430 = vpop.f32.mrf.mxu0
  %v431 = vadd.f32 %v335, %v430
  %v432 = vpop.f32.mrf.mxu0
  %v433 = vpop.f32.mrf.mxu0
  %v434 = vadd.f32 %v338, %v433
  %v435 = vpop.f32.mrf.mxu0
  %436 = vmatprep.mubr.bf16.mxu0 0
  %437 = vmatmul.mubr.bf16.gmra.mxu0 %v255
  %v438 = vpop.f32.mrf.mxu0
  %v439 = vadd.f32 %v343, %v438
  %v440 = vpop.f32.mrf.mxu0
  %v441 = vpop.f32.mrf.mxu0
  %v442 = vadd.f32 %v346, %v441
  %v443 = vpop.f32.mrf.mxu0
  %444 = vmatprep.mubr.bf16.mxu0 0
  %445 = vmatmul.mubr.bf16.gmra.mxu0 %v258
  %v446 = vpop.f32.mrf.mxu0
  %v447 = vadd.f32 %v351, %v446
  %v448 = vpop.f32.mrf.mxu0
  %v449 = vpop.f32.mrf.mxu0
  %v450 = vpop.f32.mrf.mxu0
  %451 = vdwg.mxu0
  %v452 = vmax.f32 %v391, 0.0
  %v453 = vmax.f32 %v394, 0.0
  %v454 = vmax.f32 %v399, 0.0
  %v455 = vmax.f32 %v402, 0.0
  %v456 = vmax.f32 %v407, 0.0
  %v457 = vmax.f32 %v410, 0.0
  %v458 = vmax.f32 %v415, 0.0
  %v459 = vmax.f32 %v418, 0.0
  %v460 = vmax.f32 %v423, 0.0
  %v461 = vmax.f32 %v426, 0.0
  %v462 = vmax.f32 %v431, 0.0
  %v463 = vmax.f32 %v434, 0.0
  %v464 = vmax.f32 %v439, 0.0
  %v465 = vmax.f32 %v442, 0.0
  %v466 = vmax.f32 %v447, 0.0
  %467 = vst.msk [vmem:[%s3] sm:$0xff] %vm235, %v452
  %468 = vst.msk [vmem:[%s3 + $0x8] sm:$0xff] %vm235, %v453
  %469 = vst.msk [vmem:[%s3 + $0x10] sm:$0xff] %vm235, %v454
  %470 = vst.msk [vmem:[%s3 + $0x18] sm:$0xff] %vm235, %v455
  %471 = vst.msk [vmem:[%s3 + $0x20] sm:$0xff] %vm235, %v456
  %472 = vst.msk [vmem:[%s3 + $0x28] sm:$0xff] %vm235, %v457
  %473 = vst.msk [vmem:[%s3 + $0x30] sm:$0xff] %vm235, %v458
  %474 = vst.msk [vmem:[%s3 + $0x38] sm:$0xff] %vm235, %v459
  %475 = vst.msk [vmem:[%s3 + $0x40] sm:$0xff] %vm235, %v460
  %476 = vst.msk [vmem:[%s3 + $0x48] sm:$0xff] %vm235, %v461
  %477 = vst.msk [vmem:[%s3 + $0x50] sm:$0xff] %vm235, %v462
  %478 = vst.msk [vmem:[%s3 + $0x58] sm:$0xff] %vm235, %v463
  %479 = vst.msk [vmem:[%s3 + $0x60] sm:$0xff] %vm235, %v464
  %480 = vst.msk [vmem:[%s3 + $0x68] sm:$0xff] %vm235, %v465
  %vm481 = vcmask 254976
  %482 = vst.msk [vmem:[%s3 + $0x70] sm:$0x3] %vm481, %v466
  // Predicated region
  $region14: #{encoder_forward.10} parent=0 // pred_check
    _
  $region15: #{encoder_forward.10} parent=0 // pred_check_branch
    %484 = sbr.rel (0) target = $region17
  $region16: #{encoder_forward.10} parent=0 // pred_region
    _
  $region17: #{encoder_forward.10} parent=0 // pred_fallthru
    _
  // Predicated region
  $region18: #{encoder_forward.10} parent=0 // pred_check
    _
  $region19: #{encoder_forward.10} parent=0 // pred_check_branch
    %486 = sbr.rel (0) target = $region21
  $region20: #{encoder_forward.10} parent=0 // pred_region
    _
  $region21: #{encoder_forward.10} parent=0 // pred_fallthru
    _

// kernel: encoder_forward.13
$region0: #{encoder_forward.13}
  #allocation0 [shape = 'u32[]', space=smem, size = 0x4, offset = 0x4, fixed_abs, tag = 'smem constant byte address 0x4 - core index']
  #allocation1 [shape = 'u32[144,128]{1,0:T(1,128)}', space=vmem, size = 0x12000, scoped, tag = 'internal scratch']
  %s0 = inlined_call_operand.vmem [shape: f32[6,64], index: 0, kind: input, shape index: {}]
  %s1 = inlined_call_operand.vmem [shape: bf16[64,64], index: 1, kind: input, shape index: {}]
  %s2 = inlined_call_operand.vmem [shape: f32[1,64], index: 2, kind: input, shape index: {}]
  %s3 = inlined_call_operand.vmem [shape: f32[1,64], index: 3, kind: input, shape index: {}]
  %s4 = inlined_call_operand.vmem [shape: f32[1,64], index: 4, kind: input, shape index: {}]
  %s5 = inlined_call_operand.vmem [shape: f32[6,64], index: 5, kind: output, shape index: {}]
  %s6 = sld [smem:[#allocation0]]
  $region30: #{encoder_forward.13} parent=0
    _
  %s8 = ssub.s32 1, %s6
  %s9 = scalar_select 0, %s8, %s6
  // Predicated region
  $region2: #{encoder_forward.13} parent=0 // pred_check
    _
  $region3: #{encoder_forward.13} parent=0 // pred_check_branch
    %11 = sbr.rel (0) target = $region5
  $region4: #{encoder_forward.13} parent=0 // pred_region
    _
  $region5: #{encoder_forward.13} parent=0 // pred_fallthru
    _
  // Predicated region
  $region6: #{encoder_forward.13} parent=0 // pred_check
    _
  $region7: #{encoder_forward.13} parent=0 // pred_check_branch
    %13 = sbr.rel (0) target = $region9
  $region8: #{encoder_forward.13} parent=0 // pred_region
    _
  $region9: #{encoder_forward.13} parent=0 // pred_fallthru
    _
  // Predicated region
  $region10: #{encoder_forward.13} parent=0 // pred_check
    _
  $region11: #{encoder_forward.13} parent=0 // pred_check_branch
    %15 = sbr.rel (0) target = $region13
  $region12: #{encoder_forward.13} parent=0 // pred_region
    _
  $region13: #{encoder_forward.13} parent=0 // pred_fallthru
    _
  // Predicated region
  $region14: #{encoder_forward.13} parent=0 // pred_check
    _
  $region15: #{encoder_forward.13} parent=0 // pred_check_branch
    %17 = sbr.rel (0) target = $region17
  $region16: #{encoder_forward.13} parent=0 // pred_region
    _
  $region17: #{encoder_forward.13} parent=0 // pred_fallthru
    _
  // Predicated region
  $region18: #{encoder_forward.13} parent=0 // pred_check
    _
  $region19: #{encoder_forward.13} parent=0 // pred_check_branch
    %19 = sbr.rel (0) target = $region21
  $region20: #{encoder_forward.13} parent=0 // pred_region
    _
  $region21: #{encoder_forward.13} parent=0 // pred_fallthru
    _
  %v21 = vld [vmem:[%s0] sm:$0x3f]
  %v22 = vpack.c.bf16 %v21, %v21
  %v23 = vld [vmem:[%s1] sm:$0xf]
  %v24 = vld [vmem:[%s1 + $0x4] sm:$0xf]
  %v25 = vld [vmem:[%s1 + $0x8] sm:$0xf]
  %v26 = vld [vmem:[%s1 + $0xc] sm:$0xf]
  %v27 = vld [vmem:[%s1 + $0x10] sm:$0xf]
  %v28 = vld [vmem:[%s1 + $0x14] sm:$0xf]
  %v29 = vld [vmem:[%s1 + $0x18] sm:$0xf]
  %v30 = vld [vmem:[%s1 + $0x1c] sm:$0xf]
  %v31 = vld [vmem:[%s2] sm:$0x1]
  %v33 = vlaneseq
  %v34 = vshrl.u32 %v33, 7
  %v35 = vsub.s32 0, %v34
  %v36 = vrot.slane %v31, %v35
  %v46 = vunpack.c.l.b16 %v23
  %v47 = vunpack.c.l.b16 %v24
  %v48 = vunpack.c.l.b16 %v25
  %v49 = vunpack.c.l.b16 %v26
  %v50 = vunpack.c.l.b16 %v27
  %v51 = vunpack.c.l.b16 %v28
  %v52 = vunpack.c.l.b16 %v29
  %v53 = vunpack.c.l.b16 %v30
  %v54 = vpack.c.b16 %v47, %v46
  %v55 = vpack.c.b16 %v49, %v48
  %v56 = vpack.c.b16 %v51, %v50
  %v57 = vpack.c.b16 %v53, %v52
  %vm62 = vcmask 523264
  %v64 = vsel %vm62, %v22, 0
  %66 = vmatprep.subr.bf16.mxu0 0
  %67 = vmatpush1.bf16.msra.mxu0 0
  %68 = vmatprep.subr.bf16.mxu0 0
  %69 = vmatpush1.bf16.msra.mxu0 0
  %70 = vmatprep.subr.bf16.mxu0 0
  %71 = vmatpush1.bf16.msra.mxu0 0
  %72 = vmatprep.subr.bf16.mxu0 0
  %73 = vmatpush1.bf16.msra.mxu0 0
  %74 = vmatprep.subr.bf16.mxu0 0
  %75 = vmatpush1.bf16.msra.mxu0 %v57
  %76 = vmatprep.subr.bf16.mxu0 0
  %77 = vmatpush1.bf16.msra.mxu0 %v56
  %78 = vmatprep.subr.bf16.mxu0 0
  %79 = vmatpush1.bf16.msra.mxu0 %v55
  %80 = vmatprep.subr.bf16.mxu0 0
  %81 = vmatpush1.bf16.msra.mxu0 %v54
  %82 = vmatprep.subr.bf16.mxu0 0
  %83 = vmatpush2.bf16.msra.mxu0 0
  %84 = vmatprep.subr.bf16.mxu0 0
  %85 = vmatpush2.bf16.msra.mxu0 0
  %86 = vmatprep.subr.bf16.mxu0 0
  %87 = vmatpush2.bf16.msra.mxu0 0
  %88 = vmatprep.subr.bf16.mxu0 0
  %89 = vmatpush2.bf16.msra.mxu0 0
  %90 = vmatprep.subr.bf16.mxu0 0
  %91 = vmatpush2.bf16.msra.mxu0 0
  %92 = vmatprep.subr.bf16.mxu0 0
  %93 = vmatpush2.bf16.msra.mxu0 0
  %94 = vmatprep.subr.bf16.mxu0 0
  %95 = vmatpush2.bf16.msra.mxu0 0
  %96 = vmatprep.subr.bf16.mxu0 0
  %97 = vmatpush2.bf16.msra.mxu0 0
  %98 = vmatprep.mubr.bf16.mxu0 0
  %99 = vmatmul.mubr.bf16.gmra.mxu0 %v64
  %v100 = vpop.f32.mrf.mxu0
  %v101 = vadd.f32 %v36, %v100
  %v102 = vpop.f32.mrf.mxu0
  %v103 = vpop.f32.mrf.mxu0
  %v104 = vpop.f32.mrf.mxu0
  %105 = vdwg.mxu0
  %v106 = vmax.f32 %v101, 0.0
  %v107 = vld [vmem:[%s3] sm:$0x1]
  %v109 = vlaneseq
  %v110 = vshrl.u32 %v109, 7
  %v111 = vsub.s32 0, %v110
  %v112 = vrot.slane %v107, %v111
  %v114 = vmul.f32 %v106, %v112
  %v115 = vld [vmem:[%s4] sm:$0x1]
  %v117 = vlaneseq
  %v118 = vshrl.u32 %v117, 7
  %v119 = vsub.s32 0, %v118
  %v120 = vrot.slane %v115, %v119
  %v122 = vadd.f32 %v114, %v120
  %vm123 = vcmask 521216
  %124 = vst.msk [vmem:[%s5] sm:$0x3f] %vm123, %v122
  // Predicated region
  $region22: #{encoder_forward.13} parent=0 // pred_check
    _
  $region23: #{encoder_forward.13} parent=0 // pred_check_branch
    %126 = sbr.rel (0) target = $region25
  $region24: #{encoder_forward.13} parent=0 // pred_region
    _
  $region25: #{encoder_forward.13} parent=0 // pred_fallthru
    _
  // Predicated region
  $region26: #{encoder_forward.13} parent=0 // pred_check
    _
  $region27: #{encoder_forward.13} parent=0 // pred_check_branch
    %128 = sbr.rel (0) target = $region29
  $region28: #{encoder_forward.13} parent=0 // pred_region
    _
  $region29: #{encoder_forward.13} parent=0 // pred_fallthru
    _

// kernel: encoder_forward.11
$region0: #{encoder_forward.11}
  #allocation0 [shape = 'u32[]', space=smem, size = 0x4, offset = 0x4, fixed_abs, tag = 'smem constant byte address 0x4 - core index']
  #allocation1 [shape = 'u32[144,128]{1,0:T(1,128)}', space=vmem, size = 0x12000, scoped, tag = 'internal scratch']
  #allocation2 [shape = 'f32[3,38,128]{2,1,0:T(8,128)}', space=vmem, size = 0xf000, scoped, tag = 'scratch operand']
  #allocation3 [shape = 'f32[38,16]{1,0:T(8,128)}', space=vmem, size = 0x5000, scoped, tag = 'scratch operand']
  #allocation4 [shape = 'f32[38,16]{1,0:T(8,128)}', space=vmem, size = 0x5000, scoped, tag = 'scratch operand']
  #allocation5 [shape = 'f32[38,16]{1,0:T(8,128)}', space=vmem, size = 0x5000, scoped, tag = 'scratch operand']
  #allocation6 [shape = 'f32[38,16]{1,0:T(8,128)}', space=vmem, size = 0x5000, scoped, tag = 'scratch operand']
  #allocation7 [shape = 'f32[3,38,16]{2,1,0:T(8,128)}', space=vmem, size = 0xf000, scoped, tag = 'scratch operand']
  #allocation8 [shape = 'f32[3,38,16]{2,1,0:T(8,128)}', space=vmem, size = 0xf000, scoped, tag = 'scratch operand']
  %s0 = inlined_call_operand.vmem [shape: f32[3,38,32], index: 0, kind: input, shape index: {}]
  %s1 = inlined_call_operand.vmem [shape: bf16[96,128], index: 1, kind: input, shape index: {}]
  %s2 = inlined_call_operand.vmem [shape: f32[1,128], index: 2, kind: input, shape index: {}]
  %s3 = inlined_call_operand.vmem [shape: bf16[96,128], index: 3, kind: input, shape index: {}]
  %s4 = inlined_call_operand.vmem [shape: f32[3,38,32], index: 4, kind: output, shape index: {}]
  %s5 = sld [smem:[#allocation0]]
  $region26: #{encoder_forward.11} parent=0
    _
  %s7 = ssub.s32 1, %s5
  %s8 = scalar_select 0, %s7, %s5
  // Predicated region
  $region2: #{encoder_forward.11} parent=0 // pred_check
    _
  $region3: #{encoder_forward.11} parent=0 // pred_check_branch
    %10 = sbr.rel (0) target = $region5
  $region4: #{encoder_forward.11} parent=0 // pred_region
    _
  $region5: #{encoder_forward.11} parent=0 // pred_fallthru
    _
  // Predicated region
  $region6: #{encoder_forward.11} parent=0 // pred_check
    _
  $region7: #{encoder_forward.11} parent=0 // pred_check_branch
    %12 = sbr.rel (0) target = $region9
  $region8: #{encoder_forward.11} parent=0 // pred_region
    _
  $region9: #{encoder_forward.11} parent=0 // pred_fallthru
    _
  // Predicated region
  $region10: #{encoder_forward.11} parent=0 // pred_check
    _
  $region11: #{encoder_forward.11} parent=0 // pred_check_branch
    %14 = sbr.rel (0) target = $region13
  $region12: #{encoder_forward.11} parent=0 // pred_region
    _
  $region13: #{encoder_forward.11} parent=0 // pred_fallthru
    _
  // Predicated region
  $region14: #{encoder_forward.11} parent=0 // pred_check
    _
  $region15: #{encoder_forward.11} parent=0 // pred_check_branch
    %16 = sbr.rel (0) target = $region17
  $region16: #{encoder_forward.11} parent=0 // pred_region
    _
  $region17: #{encoder_forward.11} parent=0 // pred_fallthru
    _
  %v18 = vlaneseq
  %v19 = vshrl.u32 %v18, 7
  %v20 = vadd.s32 %v19, 8
  %v21 = vadd.s32 %v19, 16
  %v22 = vadd.s32 %v19, 24
  %v23 = vadd.s32 %v19, 32
  %vm24 = vcmp.lt.s32.totalorder %v19, 0
  %v25 = vsub.s32 0, %v19
  %v26 = vsel %vm24, %v25, %v19
  %v27 = vmul.u32.u64.compose %v26, 3616814565
  %v28 = vextract.low.u32 %v27
  %v29 = vextract.high.u32 %v27
  %vm30 = vc.u32 %v28, 3616814565
  %v31 = vsel %vm30, 1, 0
  %v32 = vadd.s32 %v29, %v31
  %v33 = vshrl.u32 %v32, 4
  %v34 = vmul.u32 %v33, 19
  %v35 = vsub.s32 %v26, %v34
  %v36 = vsub.s32 0, %v35
  %v37 = vsel %vm24, %v36, %v35
  %vm38 = vcmp.lt.s32.totalorder %v20, 0
  %v39 = vsub.s32 0, %v20
  %v40 = vsel %vm38, %v39, %v20
  %v41 = vmul.u32.u64.compose %v40, 3616814565
  %v42 = vextract.low.u32 %v41
  %v43 = vextract.high.u32 %v41
  %vm44 = vc.u32 %v42, 3616814565
  %v45 = vsel %vm44, 1, 0
  %v46 = vadd.s32 %v43, %v45
  %v47 = vshrl.u32 %v46, 4
  %v48 = vmul.u32 %v47, 19
  %v49 = vsub.s32 %v40, %v48
  %v50 = vsub.s32 0, %v49
  %v51 = vsel %vm38, %v50, %v49
  %vm52 = vcmp.lt.s32.totalorder %v21, 0
  %v53 = vsub.s32 0, %v21
  %v54 = vsel %vm52, %v53, %v21
  %v55 = vmul.u32.u64.compose %v54, 3616814565
  %v56 = vextract.low.u32 %v55
  %v57 = vextract.high.u32 %v55
  %vm58 = vc.u32 %v56, 3616814565
  %v59 = vsel %vm58, 1, 0
  %v60 = vadd.s32 %v57, %v59
  %v61 = vshrl.u32 %v60, 4
  %v62 = vmul.u32 %v61, 19
  %v63 = vsub.s32 %v54, %v62
  %v64 = vsub.s32 0, %v63
  %v65 = vsel %vm52, %v64, %v63
  %vm66 = vcmp.lt.s32.totalorder %v22, 0
  %v67 = vsub.s32 0, %v22
  %v68 = vsel %vm66, %v67, %v22
  %v69 = vmul.u32.u64.compose %v68, 3616814565
  %v70 = vextract.low.u32 %v69
  %v71 = vextract.high.u32 %v69
  %vm72 = vc.u32 %v70, 3616814565
  %v73 = vsel %vm72, 1, 0
  %v74 = vadd.s32 %v71, %v73
  %v75 = vshrl.u32 %v74, 4
  %v76 = vmul.u32 %v75, 19
  %v77 = vsub.s32 %v68, %v76
  %v78 = vsub.s32 0, %v77
  %v79 = vsel %vm66, %v78, %v77
  %vm80 = vcmp.lt.s32.totalorder %v23, 0
  %v81 = vsub.s32 0, %v23
  %v82 = vsel %vm80, %v81, %v23
  %v83 = vmul.u32.u64.compose %v82, 3616814565
  %v84 = vextract.low.u32 %v83
  %v85 = vextract.high.u32 %v83
  %vm86 = vc.u32 %v84, 3616814565
  %v87 = vsel %vm86, 1, 0
  %v88 = vadd.s32 %v85, %v87
  %v89 = vshrl.u32 %v88, 4
  %v90 = vmul.u32 %v89, 19
  %v91 = vsub.s32 %v82, %v90
  %v92 = vsub.s32 0, %v91
  %v93 = vsel %vm80, %v92, %v91
  %vm94 = vcmp.ne.s32.totalorder %v37, 0
  %vm95 = vcmp.ne.s32.totalorder %v51, 0
  %vm96 = vcmp.ne.s32.totalorder %v65, 0
  %vm97 = vcmp.ne.s32.totalorder %v79, 0
  %vm98 = vcmp.ne.s32.totalorder %v93, 0
  %vm99 = vcmp.lt.s32.totalorder %v37, 0
  %vm100 = vcmp.lt.s32.totalorder %v51, 0
  %vm101 = vcmp.lt.s32.totalorder %v65, 0
  %vm102 = vcmp.lt.s32.totalorder %v79, 0
  %vm103 = vcmp.lt.s32.totalorder %v93, 0
  %vm104 = vmand %vm99, %vm94
  %vm105 = vmand %vm100, %vm95
  %vm106 = vmand %vm101, %vm96
  %vm107 = vmand %vm102, %vm97
  %vm108 = vmand %vm103, %vm98
  %v109 = vadd.s32 %v37, 19
  %v110 = vadd.s32 %v51, 19
  %v111 = vadd.s32 %v65, 19
  %v112 = vadd.s32 %v79, 19
  %v113 = vadd.s32 %v93, 19
  %v114 = vsel %vm104, %v109, %v37
  %v115 = vsel %vm105, %v110, %v51
  %v116 = vsel %vm106, %v111, %v65
  %v117 = vsel %vm107, %v112, %v79
  %v118 = vsel %vm108, %v113, %v93
  %vm119 = vcmp.ne.s32.totalorder %v114, 0
  %vm120 = vcmp.ne.s32.totalorder %v115, 0
  %vm121 = vcmp.ne.s32.totalorder %v116, 0
  %vm122 = vcmp.ne.s32.totalorder %v117, 0
  %vm123 = vcmp.ne.s32.totalorder %v118, 0
  %vm124 = vcmp.ne.s32.totalorder %v114, 18
  %vm125 = vcmp.ne.s32.totalorder %v115, 18
  %vm126 = vcmp.ne.s32.totalorder %v116, 18
  %vm127 = vcmp.ne.s32.totalorder %v117, 18
  %vm128 = vcmp.ne.s32.totalorder %v118, 18
  %v129 = vld [vmem:[%s0] sm:$0xff]
  %v130 = vld [vmem:[%s0 + $0x8] sm:$0xff]
  %v131 = vld [vmem:[%s0 + $0x10] sm:$0xff]
  %v132 = vld [vmem:[%s0 + $0x18] sm:$0xff]
  %v133 = vld [vmem:[%s0 + $0x20] sm:$0x3f]
  %vm139 = vcmask 1040384
  %v140 = vrot.slane %v129, 7
  %v141 = vrot.slane %v130, 7
  %v142 = vsel %vm139, %v140, %v141
  %v143 = vrot.slane %v131, 7
  %v144 = vsel %vm139, %v141, %v143
  %v145 = vrot.slane %v132, 7
  %v146 = vsel %vm139, %v143, %v145
  %v147 = vrot.slane %v133, 7
  %v148 = vsel %vm139, %v145, %v147
  %v154 = vsel %vm139, 0.0, %v140
  %v155 = vsel %vm119, 1, 0
  %v156 = vsel %vm120, 1, 0
  %v157 = vsel %vm121, 1, 0
  %v158 = vsel %vm122, 1, 0
  %v159 = vsel %vm123, 1, 0
  %vm160 = vcmp.eq.s32.totalorder %v155, 1
  %vm161 = vcmp.eq.s32.totalorder %v156, 1
  %vm162 = vcmp.eq.s32.totalorder %v157, 1
  %vm163 = vcmp.eq.s32.totalorder %v158, 1
  %vm164 = vcmp.eq.s32.totalorder %v159, 1
  %v165 = vsel %vm160, %v154, 0.0
  %v166 = vsel %vm161, %v142, 0.0
  %v167 = vsel %vm162, %v144, 0.0
  %v168 = vsel %vm163, %v146, 0.0
  %v169 = vsel %vm164, %v148, 0.0
  %vm170 = vcmask 1046528
  %v171 = vrot.slane %v129, 1
  %v172 = vrot.slane %v130, 1
  %v173 = vsel %vm170, %v171, %v172
  %v174 = vrot.slane %v131, 1
  %v175 = vsel %vm170, %v172, %v174
  %v176 = vrot.slane %v132, 1
  %v177 = vsel %vm170, %v174, %v176
  %v178 = vrot.slane %v133, 1
  %v179 = vsel %vm170, %v176, %v178
  %vm185 = vcmask 1044480
  %v186 = vsel %vm185, %v178, 0.0
  %v187 = vsel %vm124, 1, 0
  %v188 = vsel %vm125, 1, 0
  %v189 = vsel %vm126, 1, 0
  %v190 = vsel %vm127, 1, 0
  %v191 = vsel %vm128, 1, 0
  %vm192 = vcmp.eq.s32.totalorder %v187, 1
  %vm193 = vcmp.eq.s32.totalorder %v188, 1
  %vm194 = vcmp.eq.s32.totalorder %v189, 1
  %vm195 = vcmp.eq.s32.totalorder %v190, 1
  %vm196 = vcmp.eq.s32.totalorder %v191, 1
  %v197 = vsel %vm192, %v173, 0.0
  %v198 = vsel %vm193, %v175, 0.0
  %v199 = vsel %vm194, %v177, 0.0
  %v200 = vsel %vm195, %v179, 0.0
  %v201 = vsel %vm196, %v186, 0.0
  %202 = vrot.lane.b32.xlu0 %v129, 32
  %v203 = vpop.permute.xlu0 %202
  %204 = vrot.lane.b32.xlu0 %v130, 32
  %v205 = vpop.permute.xlu0 %204
  %206 = vrot.lane.b32.xlu0 %v131, 32
  %v207 = vpop.permute.xlu0 %206
  %208 = vrot.lane.b32.xlu0 %v132, 32
  %v209 = vpop.permute.xlu0 %208
  %210 = vrot.lane.b32.xlu0 %v133, 32
  %v211 = vpop.permute.xlu0 %210
  %222 = vrot.lane.b32.xlu0 %v197, 64
  %v223 = vpop.permute.xlu0 %222
  %224 = vrot.lane.b32.xlu0 %v198, 64
  %v225 = vpop.permute.xlu0 %224
  %226 = vrot.lane.b32.xlu0 %v199, 64
  %v227 = vpop.permute.xlu0 %226
  %228 = vrot.lane.b32.xlu0 %v200, 64
  %v229 = vpop.permute.xlu0 %228
  %230 = vrot.lane.b32.xlu0 %v201, 64
  %v231 = vpop.permute.xlu0 %230
  %vm237 = vcmask 261120
  %v238 = vsel %vm237, %v165, %v203
  %v239 = vsel %vm237, %v166, %v205
  %v240 = vsel %vm237, %v167, %v207
  %v241 = vsel %vm237, %v168, %v209
  %v242 = vsel %vm237, %v169, %v211
  %vm243 = vcmask 523264
  %v244 = vsel %vm243, %v238, %v223
  %v245 = vsel %vm243, %v239, %v225
  %v246 = vsel %vm243, %v240, %v227
  %v247 = vsel %vm243, %v241, %v229
  %v248 = vsel %vm243, %v242, %v231
  %v249 = vpack.c.bf16 %v245, %v244
  %v250 = vpack.c.bf16 %v247, %v246
  %v251 = vpack.c.bf16 %v248, %v248
  %v252 = vld [vmem:[%s1] sm:$0xf]
  %v253 = vld [vmem:[%s1 + $0x4] sm:$0xf]
  %v254 = vld [vmem:[%s1 + $0x8] sm:$0xf]
  %v255 = vld [vmem:[%s1 + $0xc] sm:$0xf]
  %v256 = vld [vmem:[%s1 + $0x10] sm:$0xf]
  %v257 = vld [vmem:[%s1 + $0x14] sm:$0xf]
  %v258 = vld [vmem:[%s1 + $0x18] sm:$0xf]
  %v259 = vld [vmem:[%s1 + $0x1c] sm:$0xf]
  %v260 = vld [vmem:[%s1 + $0x20] sm:$0xf]
  %v261 = vld [vmem:[%s1 + $0x24] sm:$0xf]
  %v262 = vld [vmem:[%s1 + $0x28] sm:$0xf]
  %v263 = vld [vmem:[%s1 + $0x2c] sm:$0xf]
  %v264 = vld [vmem:[%s2] sm:$0x1]
  %v266 = vlaneseq
  %v267 = vshrl.u32 %v266, 7
  %v268 = vsub.s32 0, %v267
  %v269 = vrot.slane %v264, %v268
  %v283 = vunpack.c.l.b16 %v252
  %v284 = vunpack.c.l.b16 %v253
  %v285 = vunpack.c.l.b16 %v254
  %v286 = vunpack.c.l.b16 %v255
  %v287 = vunpack.c.l.b16 %v256
  %v288 = vunpack.c.l.b16 %v257
  %v289 = vunpack.c.l.b16 %v258
  %v290 = vunpack.c.l.b16 %v259
  %v291 = vunpack.c.l.b16 %v260
  %v292 = vunpack.c.l.b16 %v261
  %v293 = vunpack.c.l.b16 %v262
  %v294 = vunpack.c.l.b16 %v263
  %v295 = vpack.c.b16 %v284, %v283
  %v296 = vpack.c.b16 %v286, %v285
  %v297 = vpack.c.b16 %v288, %v287
  %v298 = vpack.c.b16 %v290, %v289
  %v299 = vpack.c.b16 %v292, %v291
  %v300 = vpack.c.b16 %v294, %v293
  %vm307 = vcmask 785408
  %v309 = vsel %vm307, %v249, 0
  %v312 = vsel %vm307, %v250, 0
  %v315 = vsel %vm307, %v251, 0
  %317 = vmatprep.subr.bf16.mxu0 0
  %318 = vmatpush1.bf16.msra.mxu0 0
  %319 = vmatprep.subr.bf16.mxu0 0
  %320 = vmatpush1.bf16.msra.mxu0 0
  %321 = vmatprep.subr.bf16.mxu0 0
  %322 = vmatpush1.bf16.msra.mxu0 %v300
  %323 = vmatprep.subr.bf16.mxu0 0
  %324 = vmatpush1.bf16.msra.mxu0 %v299
  %325 = vmatprep.subr.bf16.mxu0 0
  %326 = vmatpush1.bf16.msra.mxu0 %v298
  %327 = vmatprep.subr.bf16.mxu0 0
  %328 = vmatpush1.bf16.msra.mxu0 %v297
  %329 = vmatprep.subr.bf16.mxu0 0
  %330 = vmatpush1.bf16.msra.mxu0 %v296
  %331 = vmatprep.subr.bf16.mxu0 0
  %332 = vmatpush1.bf16.msra.mxu0 %v295
  %333 = vmatprep.subr.bf16.mxu0 0
  %334 = vmatpush2.bf16.msra.mxu0 0
  %335 = vmatprep.subr.bf16.mxu0 0
  %336 = vmatpush2.bf16.msra.mxu0 0
  %337 = vmatprep.subr.bf16.mxu0 0
  %338 = vmatpush2.bf16.msra.mxu0 0
  %339 = vmatprep.subr.bf16.mxu0 0
  %340 = vmatpush2.bf16.msra.mxu0 0
  %341 = vmatprep.subr.bf16.mxu0 0
  %342 = vmatpush2.bf16.msra.mxu0 0
  %343 = vmatprep.subr.bf16.mxu0 0
  %344 = vmatpush2.bf16.msra.mxu0 0
  %345 = vmatprep.subr.bf16.mxu0 0
  %346 = vmatpush2.bf16.msra.mxu0 0
  %347 = vmatprep.subr.bf16.mxu0 0
  %348 = vmatpush2.bf16.msra.mxu0 0
  %349 = vmatprep.mubr.bf16.mxu0 0
  %350 = vmatmul.mubr.bf16.gmra.mxu0 %v309
  %v351 = vpop.f32.mrf.mxu0
  %v352 = vadd.f32 %v269, %v351
  %v353 = vpop.f32.mrf.mxu0
  %v354 = vpop.f32.mrf.mxu0
  %v355 = vadd.f32 %v269, %v354
  %v356 = vpop.f32.mrf.mxu0
  %357 = vmatprep.mubr.bf16.mxu0 0
  %358 = vmatmul.mubr.bf16.gmra.mxu0 %v312
  %v359 = vpop.f32.mrf.mxu0
  %v360 = vadd.f32 %v269, %v359
  %v361 = vpop.f32.mrf.mxu0
  %v362 = vpop.f32.mrf.mxu0
  %v363 = vadd.f32 %v269, %v362
  %v364 = vpop.f32.mrf.mxu0
  %365 = vmatprep.mubr.bf16.mxu0 0
  %366 = vmatmul.mubr.bf16.gmra.mxu0 %v315
  %v367 = vpop.f32.mrf.mxu0
  %v368 = vadd.f32 %v269, %v367
  %v369 = vpop.f32.mrf.mxu0
  %v370 = vpop.f32.mrf.mxu0
  %v371 = vpop.f32.mrf.mxu0
  %372 = vdwg.mxu0
  %373 = vst [vmem:[#allocation2] sm:$0xff] %v352
  %374 = vst [vmem:[#allocation2 + $0x8] sm:$0xff] %v355
  %375 = vst [vmem:[#allocation2 + $0x10] sm:$0xff] %v360
  %376 = vst [vmem:[#allocation2 + $0x18] sm:$0xff] %v363
  %377 = vst [vmem:[#allocation2 + $0x20] sm:$0x3f] %v368
  %s378 = scalar_lea.vmem %s0, 40
  %v379 = vld [vmem:[%s378] sm:$0xff]
  %v380 = vld [vmem:[%s378 + $0x8] sm:$0xff]
  %v381 = vld [vmem:[%s378 + $0x10] sm:$0xff]
  %v382 = vld [vmem:[%s378 + $0x18] sm:$0xff]
  %v383 = vld [vmem:[%s378 + $0x20] sm:$0x3f]
  %v389 = vrot.slane %v379, 7
  %v390 = vrot.slane %v380, 7
  %v391 = vsel %vm139, %v389, %v390
  %v392 = vrot.slane %v381, 7
  %v393 = vsel %vm139, %v390, %v392
  %v394 = vrot.slane %v382, 7
  %v395 = vsel %vm139, %v392, %v394
  %v396 = vrot.slane %v383, 7
  %v397 = vsel %vm139, %v394, %v396
  %v403 = vsel %vm139, 0.0, %v389
  %v404 = vsel %vm160, %v403, 0.0
  %v405 = vsel %vm161, %v391, 0.0
  %v406 = vsel %vm162, %v393, 0.0
  %v407 = vsel %vm163, %v395, 0.0
  %v408 = vsel %vm164, %v397, 0.0
  %v409 = vrot.slane %v379, 1
  %v410 = vrot.slane %v380, 1
  %v411 = vsel %vm170, %v409, %v410
  %v412 = vrot.slane %v381, 1
  %v413 = vsel %vm170, %v410, %v412
  %v414 = vrot.slane %v382, 1
  %v415 = vsel %vm170, %v412, %v414
  %v416 = vrot.slane %v383, 1
  %v417 = vsel %vm170, %v414, %v416
  %v423 = vsel %vm185, %v416, 0.0
  %v424 = vsel %vm192, %v411, 0.0
  %v425 = vsel %vm193, %v413, 0.0
  %v426 = vsel %vm194, %v415, 0.0
  %v427 = vsel %vm195, %v417, 0.0
  %v428 = vsel %vm196, %v423, 0.0
  %429 = vrot.lane.b32.xlu0 %v379, 32
  %v430 = vpop.permute.xlu0 %429
  %431 = vrot.lane.b32.xlu0 %v380, 32
  %v432 = vpop.permute.xlu0 %431
  %433 = vrot.lane.b32.xlu0 %v381, 32
  %v434 = vpop.permute.xlu0 %433
  %435 = vrot.lane.b32.xlu0 %v382, 32
  %v436 = vpop.permute.xlu0 %435
  %437 = vrot.lane.b32.xlu0 %v383, 32
  %v438 = vpop.permute.xlu0 %437
  %449 = vrot.lane.b32.xlu0 %v424, 64
  %v450 = vpop.permute.xlu0 %449
  %451 = vrot.lane.b32.xlu0 %v425, 64
  %v452 = vpop.permute.xlu0 %451
  %453 = vrot.lane.b32.xlu0 %v426, 64
  %v454 = vpop.permute.xlu0 %453
  %455 = vrot.lane.b32.xlu0 %v427, 64
  %v456 = vpop.permute.xlu0 %455
  %457 = vrot.lane.b32.xlu0 %v428, 64
  %v458 = vpop.permute.xlu0 %457
  %v464 = vsel %vm237, %v404, %v430
  %v465 = vsel %vm237, %v405, %v432
  %v466 = vsel %vm237, %v406, %v434
  %v467 = vsel %vm237, %v407, %v436
  %v468 = vsel %vm237, %v408, %v438
  %v469 = vsel %vm243, %v464, %v450
  %v470 = vsel %vm243, %v465, %v452
  %v471 = vsel %vm243, %v466, %v454
  %v472 = vsel %vm243, %v467, %v456
  %v473 = vsel %vm243, %v468, %v458
  %v474 = vpack.c.bf16 %v470, %v469
  %v475 = vpack.c.bf16 %v472, %v471
  %v476 = vpack.c.bf16 %v473, %v473
  %v477 = vld [vmem:[%s1] sm:$0xf]
  %v478 = vld [vmem:[%s1 + $0x4] sm:$0xf]
  %v479 = vld [vmem:[%s1 + $0x8] sm:$0xf]
  %v480 = vld [vmem:[%s1 + $0xc] sm:$0xf]
  %v481 = vld [vmem:[%s1 + $0x10] sm:$0xf]
  %v482 = vld [vmem:[%s1 + $0x14] sm:$0xf]
  %v483 = vld [vmem:[%s1 + $0x18] sm:$0xf]
  %v484 = vld [vmem:[%s1 + $0x1c] sm:$0xf]
  %v485 = vld [vmem:[%s1 + $0x20] sm:$0xf]
  %v486 = vld [vmem:[%s1 + $0x24] sm:$0xf]
  %v487 = vld [vmem:[%s1 + $0x28] sm:$0xf]
  %v488 = vld [vmem:[%s1 + $0x2c] sm:$0xf]
  %v489 = vld [vmem:[%s2] sm:$0x1]
  %v491 = vlaneseq
  %v492 = vshrl.u32 %v491, 7
  %v493 = vsub.s32 0, %v492
  %v494 = vrot.slane %v489, %v493
  %v508 = vunpack.c.l.b16 %v477
  %v509 = vunpack.c.l.b16 %v478
  %v510 = vunpack.c.l.b16 %v479
  %v511 = vunpack.c.l.b16 %v480
  %v512 = vunpack.c.l.b16 %v481
  %v513 = vunpack.c.l.b16 %v482
  %v514 = vunpack.c.l.b16 %v483
  %v515 = vunpack.c.l.b16 %v484
  %v516 = vunpack.c.l.b16 %v485
  %v517 = vunpack.c.l.b16 %v486
  %v518 = vunpack.c.l.b16 %v487
  %v519 = vunpack.c.l.b16 %v488
  %v520 = vpack.c.b16 %v509, %v508
  %v521 = vpack.c.b16 %v511, %v510
  %v522 = vpack.c.b16 %v513, %v512
  %v523 = vpack.c.b16 %v515, %v514
  %v524 = vpack.c.b16 %v517, %v516
  %v525 = vpack.c.b16 %v519, %v518
  %v533 = vsel %vm307, %v474, 0
  %v536 = vsel %vm307, %v475, 0
  %v539 = vsel %vm307, %v476, 0
  %541 = vmatprep.subr.bf16.mxu0 0
  %542 = vmatpush1.bf16.msra.mxu0 0
  %543 = vmatprep.subr.bf16.mxu0 0
  %544 = vmatpush1.bf16.msra.mxu0 0
  %545 = vmatprep.subr.bf16.mxu0 0
  %546 = vmatpush1.bf16.msra.mxu0 %v525
  %547 = vmatprep.subr.bf16.mxu0 0
  %548 = vmatpush1.bf16.msra.mxu0 %v524
  %549 = vmatprep.subr.bf16.mxu0 0
  %550 = vmatpush1.bf16.msra.mxu0 %v523
  %551 = vmatprep.subr.bf16.mxu0 0
  %552 = vmatpush1.bf16.msra.mxu0 %v522
  %553 = vmatprep.subr.bf16.mxu0 0
  %554 = vmatpush1.bf16.msra.mxu0 %v521
  %555 = vmatprep.subr.bf16.mxu0 0
  %556 = vmatpush1.bf16.msra.mxu0 %v520
  %557 = vmatprep.subr.bf16.mxu0 0
  %558 = vmatpush2.bf16.msra.mxu0 0
  %559 = vmatprep.subr.bf16.mxu0 0
  %560 = vmatpush2.bf16.msra.mxu0 0
  %561 = vmatprep.subr.bf16.mxu0 0
  %562 = vmatpush2.bf16.msra.mxu0 0
  %563 = vmatprep.subr.bf16.mxu0 0
  %564 = vmatpush2.bf16.msra.mxu0 0
  %565 = vmatprep.subr.bf16.mxu0 0
  %566 = vmatpush2.bf16.msra.mxu0 0
  %567 = vmatprep.subr.bf16.mxu0 0
  %568 = vmatpush2.bf16.msra.mxu0 0
  %569 = vmatprep.subr.bf16.mxu0 0
  %570 = vmatpush2.bf16.msra.mxu0 0
  %571 = vmatprep.subr.bf16.mxu0 0
  %572 = vmatpush2.bf16.msra.mxu0 0
  %573 = vmatprep.mubr.bf16.mxu0 0
  %574 = vmatmul.mubr.bf16.gmra.mxu0 %v533
  %v575 = vpop.f32.mrf.mxu0
  %v576 = vadd.f32 %v494, %v575
  %v577 = vpop.f32.mrf.mxu0
  %v578 = vpop.f32.mrf.mxu0
  %v579 = vadd.f32 %v494, %v578
  %v580 = vpop.f32.mrf.mxu0
  %581 = vmatprep.mubr.bf16.mxu0 0
  %582 = vmatmul.mubr.bf16.gmra.mxu0 %v536
  %v583 = vpop.f32.mrf.mxu0
  %v584 = vadd.f32 %v494, %v583
  %v585 = vpop.f32.mrf.mxu0
  %v586 = vpop.f32.mrf.mxu0
  %v587 = vadd.f32 %v494, %v586
  %v588 = vpop.f32.mrf.mxu0
  %589 = vmatprep.mubr.bf16.mxu0 0
  %590 = vmatmul.mubr.bf16.gmra.mxu0 %v539
  %v591 = vpop.f32.mrf.mxu0
  %v592 = vadd.f32 %v494, %v591
  %v593 = vpop.f32.mrf.mxu0
  %v594 = vpop.f32.mrf.mxu0
  %v595 = vpop.f32.mrf.mxu0
  %596 = vdwg.mxu0
  %s597 = scalar_lea.vmem [#allocation2], 40
  %598 = vst [vmem:[%s597] sm:$0xff] %v576
  %599 = vst [vmem:[%s597 + $0x8] sm:$0xff] %v579
  %600 = vst [vmem:[%s597 + $0x10] sm:$0xff] %v584
  %601 = vst [vmem:[%s597 + $0x18] sm:$0xff] %v587
  %602 = vst [vmem:[%s597 + $0x20] sm:$0x3f] %v592
  %s603 = scalar_lea.vmem %s0, 80
  %v604 = vld [vmem:[%s603] sm:$0xff]
  %v605 = vld [vmem:[%s603 + $0x8] sm:$0xff]
  %v606 = vld [vmem:[%s603 + $0x10] sm:$0xff]
  %v607 = vld [vmem:[%s603 + $0x18] sm:$0xff]
  %v608 = vld [vmem:[%s603 + $0x20] sm:$0x3f]
  %v614 = vrot.slane %v604, 7
  %v615 = vrot.slane %v605, 7
  %v616 = vsel %vm139, %v614, %v615
  %v617 = vrot.slane %v606, 7
  %v618 = vsel %vm139, %v615, %v617
  %v619 = vrot.slane %v607, 7
  %v620 = vsel %vm139, %v617, %v619
  %v621 = vrot.slane %v608, 7
  %v622 = vsel %vm139, %v619, %v621
  %v628 = vsel %vm139, 0.0, %v614
  %v629 = vsel %vm160, %v628, 0.0
  %v630 = vsel %vm161, %v616, 0.0
  %v631 = vsel %vm162, %v618, 0.0
  %v632 = vsel %vm163, %v620, 0.0
  %v633 = vsel %vm164, %v622, 0.0
  %v634 = vrot.slane %v604, 1
  %v635 = vrot.slane %v605, 1
  %v636 = vsel %vm170, %v634, %v635
  %v637 = vrot.slane %v606, 1
  %v638 = vsel %vm170, %v635, %v637
  %v639 = vrot.slane %v607, 1
  %v640 = vsel %vm170, %v637, %v639
  %v641 = vrot.slane %v608, 1
  %v642 = vsel %vm170, %v639, %v641
  %v648 = vsel %vm185, %v641, 0.0
  %v649 = vsel %vm192, %v636, 0.0
  %v650 = vsel %vm193, %v638, 0.0
  %v651 = vsel %vm194, %v640, 0.0
  %v652 = vsel %vm195, %v642, 0.0
  %v653 = vsel %vm196, %v648, 0.0
  %654 = vrot.lane.b32.xlu0 %v604, 32
  %v655 = vpop.permute.xlu0 %654
  %656 = vrot.lane.b32.xlu0 %v605, 32
  %v657 = vpop.permute.xlu0 %656
  %658 = vrot.lane.b32.xlu0 %v606, 32
  %v659 = vpop.permute.xlu0 %658
  %660 = vrot.lane.b32.xlu0 %v607, 32
  %v661 = vpop.permute.xlu0 %660
  %662 = vrot.lane.b32.xlu0 %v608, 32
  %v663 = vpop.permute.xlu0 %662
  %674 = vrot.lane.b32.xlu0 %v649, 64
  %v675 = vpop.permute.xlu0 %674
  %676 = vrot.lane.b32.xlu0 %v650, 64
  %v677 = vpop.permute.xlu0 %676
  %678 = vrot.lane.b32.xlu0 %v651, 64
  %v679 = vpop.permute.xlu0 %678
  %680 = vrot.lane.b32.xlu0 %v652, 64
  %v681 = vpop.permute.xlu0 %680
  %682 = vrot.lane.b32.xlu0 %v653, 64
  %v683 = vpop.permute.xlu0 %682
  %v689 = vsel %vm237, %v629, %v655
  %v690 = vsel %vm237, %v630, %v657
  %v691 = vsel %vm237, %v631, %v659
  %v692 = vsel %vm237, %v632, %v661
  %v693 = vsel %vm237, %v633, %v663
  %v694 = vsel %vm243, %v689, %v675
  %v695 = vsel %vm243, %v690, %v677
  %v696 = vsel %vm243, %v691, %v679
  %v697 = vsel %vm243, %v692, %v681
  %v698 = vsel %vm243, %v693, %v683
  %v699 = vpack.c.bf16 %v695, %v694
  %v700 = vpack.c.bf16 %v697, %v696
  %v701 = vpack.c.bf16 %v698, %v698
  %v702 = vld [vmem:[%s1] sm:$0xf]
  %v703 = vld [vmem:[%s1 + $0x4] sm:$0xf]
  %v704 = vld [vmem:[%s1 + $0x8] sm:$0xf]
  %v705 = vld [vmem:[%s1 + $0xc] sm:$0xf]
  %v706 = vld [vmem:[%s1 + $0x10] sm:$0xf]
  %v707 = vld [vmem:[%s1 + $0x14] sm:$0xf]
  %v708 = vld [vmem:[%s1 + $0x18] sm:$0xf]
  %v709 = vld [vmem:[%s1 + $0x1c] sm:$0xf]
  %v710 = vld [vmem:[%s1 + $0x20] sm:$0xf]
  %v711 = vld [vmem:[%s1 + $0x24] sm:$0xf]
  %v712 = vld [vmem:[%s1 + $0x28] sm:$0xf]
  %v713 = vld [vmem:[%s1 + $0x2c] sm:$0xf]
  %v714 = vld [vmem:[%s2] sm:$0x1]
  %v716 = vlaneseq
  %v717 = vshrl.u32 %v716, 7
  %v718 = vsub.s32 0, %v717
  %v719 = vrot.slane %v714, %v718
  %v733 = vunpack.c.l.b16 %v702
  %v734 = vunpack.c.l.b16 %v703
  %v735 = vunpack.c.l.b16 %v704
  %v736 = vunpack.c.l.b16 %v705
  %v737 = vunpack.c.l.b16 %v706
  %v738 = vunpack.c.l.b16 %v707
  %v739 = vunpack.c.l.b16 %v708
  %v740 = vunpack.c.l.b16 %v709
  %v741 = vunpack.c.l.b16 %v710
  %v742 = vunpack.c.l.b16 %v711
  %v743 = vunpack.c.l.b16 %v712
  %v744 = vunpack.c.l.b16 %v713
  %v745 = vpack.c.b16 %v734, %v733
  %v746 = vpack.c.b16 %v736, %v735
  %v747 = vpack.c.b16 %v738, %v737
  %v748 = vpack.c.b16 %v740, %v739
  %v749 = vpack.c.b16 %v742, %v741
  %v750 = vpack.c.b16 %v744, %v743
  %v758 = vsel %vm307, %v699, 0
  %v761 = vsel %vm307, %v700, 0
  %v764 = vsel %vm307, %v701, 0
  %766 = vmatprep.subr.bf16.mxu0 0
  %767 = vmatpush1.bf16.msra.mxu0 0
  %768 = vmatprep.subr.bf16.mxu0 0
  %769 = vmatpush1.bf16.msra.mxu0 0
  %770 = vmatprep.subr.bf16.mxu0 0
  %771 = vmatpush1.bf16.msra.mxu0 %v750
  %772 = vmatprep.subr.bf16.mxu0 0
  %773 = vmatpush1.bf16.msra.mxu0 %v749
  %774 = vmatprep.subr.bf16.mxu0 0
  %775 = vmatpush1.bf16.msra.mxu0 %v748
  %776 = vmatprep.subr.bf16.mxu0 0
  %777 = vmatpush1.bf16.msra.mxu0 %v747
  %778 = vmatprep.subr.bf16.mxu0 0
  %779 = vmatpush1.bf16.msra.mxu0 %v746
  %780 = vmatprep.subr.bf16.mxu0 0
  %781 = vmatpush1.bf16.msra.mxu0 %v745
  %782 = vmatprep.subr.bf16.mxu0 0
  %783 = vmatpush2.bf16.msra.mxu0 0
  %784 = vmatprep.subr.bf16.mxu0 0
  %785 = vmatpush2.bf16.msra.mxu0 0
  %786 = vmatprep.subr.bf16.mxu0 0
  %787 = vmatpush2.bf16.msra.mxu0 0
  %788 = vmatprep.subr.bf16.mxu0 0
  %789 = vmatpush2.bf16.msra.mxu0 0
  %790 = vmatprep.subr.bf16.mxu0 0
  %791 = vmatpush2.bf16.msra.mxu0 0
  %792 = vmatprep.subr.bf16.mxu0 0
  %793 = vmatpush2.bf16.msra.mxu0 0
  %794 = vmatprep.subr.bf16.mxu0 0
  %795 = vmatpush2.bf16.msra.mxu0 0
  %796 = vmatprep.subr.bf16.mxu0 0
  %797 = vmatpush2.bf16.msra.mxu0 0
  %798 = vmatprep.mubr.bf16.mxu0 0
  %799 = vmatmul.mubr.bf16.gmra.mxu0 %v758
  %v800 = vpop.f32.mrf.mxu0
  %v801 = vadd.f32 %v719, %v800
  %v802 = vpop.f32.mrf.mxu0
  %v803 = vpop.f32.mrf.mxu0
  %v804 = vadd.f32 %v719, %v803
  %v805 = vpop.f32.mrf.mxu0
  %806 = vmatprep.mubr.bf16.mxu0 0
  %807 = vmatmul.mubr.bf16.gmra.mxu0 %v761
  %v808 = vpop.f32.mrf.mxu0
  %v809 = vadd.f32 %v719, %v808
  %v810 = vpop.f32.mrf.mxu0
  %v811 = vpop.f32.mrf.mxu0
  %v812 = vadd.f32 %v719, %v811
  %v813 = vpop.f32.mrf.mxu0
  %814 = vmatprep.mubr.bf16.mxu0 0
  %815 = vmatmul.mubr.bf16.gmra.mxu0 %v764
  %v816 = vpop.f32.mrf.mxu0
  %v817 = vadd.f32 %v719, %v816
  %v818 = vpop.f32.mrf.mxu0
  %v819 = vpop.f32.mrf.mxu0
  %v820 = vpop.f32.mrf.mxu0
  %821 = vdwg.mxu0
  %s822 = scalar_lea.vmem [#allocation2], 80
  %823 = vst [vmem:[%s822] sm:$0xff] %v801
  %824 = vst [vmem:[%s822 + $0x8] sm:$0xff] %v804
  %825 = vst [vmem:[%s822 + $0x10] sm:$0xff] %v809
  %826 = vst [vmem:[%s822 + $0x18] sm:$0xff] %v812
  %827 = vst [vmem:[%s822 + $0x20] sm:$0x3f] %v817
  %vm828 = vcmask 130048
  %829 = vst.msk [vmem:[#allocation3] sm:$0xff] %vm828, 0.0
  %830 = vst.msk [vmem:[#allocation3 + $0x8] sm:$0xff] %vm828, 0.0
  %831 = vst.msk [vmem:[#allocation3 + $0x10] sm:$0xff] %vm828, 0.0
  %832 = vst.msk [vmem:[#allocation3 + $0x18] sm:$0xff] %vm828, 0.0
  %vm833 = vcmask 128000
  %834 = vst.msk [vmem:[#allocation3 + $0x20] sm:$0x3f] %vm833, 0.0
  %835 = vst.msk [vmem:[#allocation4] sm:$0xff] %vm828, 0.0
  %836 = vst.msk [vmem:[#allocation4 + $0x8] sm:$0xff] %vm828, 0.0
  %837 = vst.msk [vmem:[#allocation4 + $0x10] sm:$0xff] %vm828, 0.0
  %838 = vst.msk [vmem:[#allocation4 + $0x18] sm:$0xff] %vm828, 0.0
  %839 = vst.msk [vmem:[#allocation4 + $0x20] sm:$0x3f] %vm833, 0.0
  %840 = vst.msk [vmem:[#allocation5] sm:$0xff] %vm828, 0.0
  %841 = vst.msk [vmem:[#allocation5 + $0x8] sm:$0xff] %vm828, 0.0
  %842 = vst.msk [vmem:[#allocation5 + $0x10] sm:$0xff] %vm828, 0.0
  %843 = vst.msk [vmem:[#allocation5 + $0x18] sm:$0xff] %vm828, 0.0
  %844 = vst.msk [vmem:[#allocation5 + $0x20] sm:$0x3f] %vm833, 0.0
  %845 = vst.msk [vmem:[#allocation6] sm:$0xff] %vm828, 0.0
  %846 = vst.msk [vmem:[#allocation6 + $0x8] sm:$0xff] %vm828, 0.0
  %847 = vst.msk [vmem:[#allocation6 + $0x10] sm:$0xff] %vm828, 0.0
  %848 = vst.msk [vmem:[#allocation6 + $0x18] sm:$0xff] %vm828, 0.0
  %849 = vst.msk [vmem:[#allocation6 + $0x20] sm:$0x3f] %vm833, 0.0
  %v850 = vld [vmem:[#allocation3] sm:$0xff]
  %v851 = vld [vmem:[#allocation3 + $0x8] sm:$0xff]
  %v852 = vld [vmem:[#allocation3 + $0x10] sm:$0xff]
  %v853 = vld [vmem:[#allocation3 + $0x18] sm:$0xff]
  %v854 = vld [vmem:[#allocation3 + $0x20] sm:$0x3f]
  %v855 = vld [vmem:[#allocation5] sm:$0xff]
  %v856 = vld [vmem:[#allocation5 + $0x8] sm:$0xff]
  %v857 = vld [vmem:[#allocation5 + $0x10] sm:$0xff]
  %v858 = vld [vmem:[#allocation5 + $0x18] sm:$0xff]
  %v859 = vld [vmem:[#allocation5 + $0x20] sm:$0x3f]
  %v865 = vrot.slane %v850, 7
  %v866 = vrot.slane %v851, 7
  %v867 = vsel %vm139, %v865, %v866
  %v868 = vrot.slane %v852, 7
  %v869 = vsel %vm139, %v866, %v868
  %v870 = vrot.slane %v853, 7
  %v871 = vsel %vm139, %v868, %v870
  %v872 = vrot.slane %v854, 7
  %v873 = vsel %vm139, %v870, %v872
  %v879 = vsel %vm139, 0.0, %v865
  %v880 = vsel %vm160, %v879, 0.0
  %v881 = vsel %vm161, %v867, 0.0
  %v882 = vsel %vm162, %v869, 0.0
  %v883 = vsel %vm163, %v871, 0.0
  %v884 = vsel %vm164, %v873, 0.0
  %v885 = vrot.slane %v850, 1
  %v886 = vrot.slane %v851, 1
  %v887 = vsel %vm170, %v885, %v886
  %v888 = vrot.slane %v852, 1
  %v889 = vsel %vm170, %v886, %v888
  %v890 = vrot.slane %v853, 1
  %v891 = vsel %vm170, %v888, %v890
  %v892 = vrot.slane %v854, 1
  %v893 = vsel %vm170, %v890, %v892
  %v899 = vsel %vm185, %v892, 0.0
  %v900 = vsel %vm192, %v887, 0.0
  %v901 = vsel %vm193, %v889, 0.0
  %v902 = vsel %vm194, %v891, 0.0
  %v903 = vsel %vm195, %v893, 0.0
  %v904 = vsel %vm196, %v899, 0.0
  %v910 = vrot.slane %v855, 7
  %v911 = vrot.slane %v856, 7
  %v912 = vsel %vm139, %v910, %v911
  %v913 = vrot.slane %v857, 7
  %v914 = vsel %vm139, %v911, %v913
  %v915 = vrot.slane %v858, 7
  %v916 = vsel %vm139, %v913, %v915
  %v917 = vrot.slane %v859, 7
  %v918 = vsel %vm139, %v915, %v917
  %v924 = vsel %vm139, 0.0, %v910
  %v925 = vsel %vm160, %v924, 0.0
  %v926 = vsel %vm161, %v912, 0.0
  %v927 = vsel %vm162, %v914, 0.0
  %v928 = vsel %vm163, %v916, 0.0
  %v929 = vsel %vm164, %v918, 0.0
  %v930 = vrot.slane %v855, 1
  %v931 = vrot.slane %v856, 1
  %v932 = vsel %vm170, %v930, %v931
  %v933 = vrot.slane %v857, 1
  %v934 = vsel %vm170, %v931, %v933
  %v935 = vrot.slane %v858, 1
  %v936 = vsel %vm170, %v933, %v935
  %v937 = vrot.slane %v859, 1
  %v938 = vsel %vm170, %v935, %v937
  %v944 = vsel %vm185, %v937, 0.0
  %v945 = vsel %vm192, %v932, 0.0
  %v946 = vsel %vm193, %v934, 0.0
  %v947 = vsel %vm194, %v936, 0.0
  %v948 = vsel %vm195, %v938, 0.0
  %v949 = vsel %vm196, %v944, 0.0
  %950 = vrot.lane.b32.xlu0 %v850, 16
  %v951 = vpop.permute.xlu0 %950
  %952 = vrot.lane.b32.xlu0 %v851, 16
  %v953 = vpop.permute.xlu0 %952
  %954 = vrot.lane.b32.xlu0 %v852, 16
  %v955 = vpop.permute.xlu0 %954
  %956 = vrot.lane.b32.xlu0 %v853, 16
  %v957 = vpop.permute.xlu0 %956
  %958 = vrot.lane.b32.xlu0 %v854, 16
  %v959 = vpop.permute.xlu0 %958
  %970 = vrot.lane.b32.xlu0 %v900, 32
  %v971 = vpop.permute.xlu0 %970
  %972 = vrot.lane.b32.xlu0 %v901, 32
  %v973 = vpop.permute.xlu0 %972
  %974 = vrot.lane.b32.xlu0 %v902, 32
  %v975 = vpop.permute.xlu0 %974
  %976 = vrot.lane.b32.xlu0 %v903, 32
  %v977 = vpop.permute.xlu0 %976
  %978 = vrot.lane.b32.xlu0 %v904, 32
  %v979 = vpop.permute.xlu0 %978
  %990 = vrot.lane.b32.xlu0 %v925, 48
  %v991 = vpop.permute.xlu0 %990
  %992 = vrot.lane.b32.xlu0 %v926, 48
  %v993 = vpop.permute.xlu0 %992
  %994 = vrot.lane.b32.xlu0 %v927, 48
  %v995 = vpop.permute.xlu0 %994
  %996 = vrot.lane.b32.xlu0 %v928, 48
  %v997 = vpop.permute.xlu0 %996
  %998 = vrot.lane.b32.xlu0 %v929, 48
  %v999 = vpop.permute.xlu0 %998
  %1005 = vrot.lane.b32.xlu0 %v855, 64
  %v1006 = vpop.permute.xlu0 %1005
  %1007 = vrot.lane.b32.xlu0 %v856, 64
  %v1008 = vpop.permute.xlu0 %1007
  %1009 = vrot.lane.b32.xlu0 %v857, 64
  %v1010 = vpop.permute.xlu0 %1009
  %1011 = vrot.lane.b32.xlu0 %v858, 64
  %v1012 = vpop.permute.xlu0 %1011
  %1013 = vrot.lane.b32.xlu0 %v859, 64
  %v1014 = vpop.permute.xlu0 %1013
  %1025 = vrot.lane.b32.xlu0 %v945, 80
  %v1026 = vpop.permute.xlu0 %1025
  %1027 = vrot.lane.b32.xlu0 %v946, 80
  %v1028 = vpop.permute.xlu0 %1027
  %1029 = vrot.lane.b32.xlu0 %v947, 80
  %v1030 = vpop.permute.xlu0 %1029
  %1031 = vrot.lane.b32.xlu0 %v948, 80
  %v1032 = vpop.permute.xlu0 %1031
  %1033 = vrot.lane.b32.xlu0 %v949, 80
  %v1034 = vpop.permute.xlu0 %1033
  %v1040 = vsel %vm828, %v880, %v951
  %v1041 = vsel %vm828, %v881, %v953
  %v1042 = vsel %vm828, %v882, %v955
  %v1043 = vsel %vm828, %v883, %v957
  %v1044 = vsel %vm828, %v884, %v959
  %v1045 = vsel %vm237, %v1040, %v971
  %v1046 = vsel %vm237, %v1041, %v973
  %v1047 = vsel %vm237, %v1042, %v975
  %v1048 = vsel %vm237, %v1043, %v977
  %v1049 = vsel %vm237, %v1044, %v979
  %vm1050 = vcmask 392192
  %v1051 = vsel %vm1050, %v1045, %v991
  %v1052 = vsel %vm1050, %v1046, %v993
  %v1053 = vsel %vm1050, %v1047, %v995
  %v1054 = vsel %vm1050, %v1048, %v997
  %v1055 = vsel %vm1050, %v1049, %v999
  %v1056 = vsel %vm243, %v1051, %v1006
  %v1057 = vsel %vm243, %v1052, %v1008
  %v1058 = vsel %vm243, %v1053, %v1010
  %v1059 = vsel %vm243, %v1054, %v1012
  %v1060 = vsel %vm243, %v1055, %v1014
  %vm1061 = vcmask 654336
  %v1062 = vsel %vm1061, %v1056, %v1026
  %v1063 = vsel %vm1061, %v1057, %v1028
  %v1064 = vsel %vm1061, %v1058, %v1030
  %v1065 = vsel %vm1061, %v1059, %v1032
  %v1066 = vsel %vm1061, %v1060, %v1034
  %v1067 = vpack.c.bf16 %v1063, %v1062
  %v1068 = vpack.c.bf16 %v1065, %v1064
  %v1069 = vpack.c.bf16 %v1066, %v1066
  %v1070 = vld [vmem:[%s3] sm:$0xf]
  %v1071 = vld [vmem:[%s3 + $0x4] sm:$0xf]
  %v1072 = vld [vmem:[%s3 + $0x8] sm:$0xf]
  %v1073 = vld [vmem:[%s3 + $0xc] sm:$0xf]
  %v1074 = vld [vmem:[%s3 + $0x10] sm:$0xf]
  %v1075 = vld [vmem:[%s3 + $0x14] sm:$0xf]
  %v1076 = vld [vmem:[%s3 + $0x18] sm:$0xf]
  %v1077 = vld [vmem:[%s3 + $0x1c] sm:$0xf]
  %v1078 = vld [vmem:[%s3 + $0x20] sm:$0xf]
  %v1079 = vld [vmem:[%s3 + $0x24] sm:$0xf]
  %v1080 = vld [vmem:[%s3 + $0x28] sm:$0xf]
  %v1081 = vld [vmem:[%s3 + $0x2c] sm:$0xf]
  %v1094 = vunpack.c.l.b16 %v1070
  %v1095 = vunpack.c.l.b16 %v1071
  %v1096 = vunpack.c.l.b16 %v1072
  %v1097 = vunpack.c.l.b16 %v1073
  %v1098 = vunpack.c.l.b16 %v1074
  %v1099 = vunpack.c.l.b16 %v1075
  %v1100 = vunpack.c.l.b16 %v1076
  %v1101 = vunpack.c.l.b16 %v1077
  %v1102 = vunpack.c.l.b16 %v1078
  %v1103 = vunpack.c.l.b16 %v1079
  %v1104 = vunpack.c.l.b16 %v1080
  %v1105 = vunpack.c.l.b16 %v1081
  %v1106 = vpack.c.b16 %v1095, %v1094
  %v1107 = vpack.c.b16 %v1097, %v1096
  %v1108 = vpack.c.b16 %v1099, %v1098
  %v1109 = vpack.c.b16 %v1101, %v1100
  %v1110 = vpack.c.b16 %v1103, %v1102
  %v1111 = vpack.c.b16 %v1105, %v1104
  %v1119 = vsel %vm307, %v1067, 0
  %v1122 = vsel %vm307, %v1068, 0
  %v1125 = vsel %vm307, %v1069, 0
  %1127 = vmatprep.subr.bf16.mxu0 0
  %1128 = vmatpush1.bf16.msra.mxu0 0
  %1129 = vmatprep.subr.bf16.mxu0 0
  %1130 = vmatpush1.bf16.msra.mxu0 0
  %1131 = vmatprep.subr.bf16.mxu0 0
  %1132 = vmatpush1.bf16.msra.mxu0 %v1111
  %1133 = vmatprep.subr.bf16.mxu0 0
  %1134 = vmatpush1.bf16.msra.mxu0 %v1110
  %1135 = vmatprep.subr.bf16.mxu0 0
  %1136 = vmatpush1.bf16.msra.mxu0 %v1109
  %1137 = vmatprep.subr.bf16.mxu0 0
  %1138 = vmatpush1.bf16.msra.mxu0 %v1108
  %1139 = vmatprep.subr.bf16.mxu0 0
  %1140 = vmatpush1.bf16.msra.mxu0 %v1107
  %1141 = vmatprep.subr.bf16.mxu0 0
  %1142 = vmatpush1.bf16.msra.mxu0 %v1106
  %1143 = vmatprep.subr.bf16.mxu0 0
  %1144 = vmatpush2.bf16.msra.mxu0 0
  %1145 = vmatprep.subr.bf16.mxu0 0
  %1146 = vmatpush2.bf16.msra.mxu0 0
  %1147 = vmatprep.subr.bf16.mxu0 0
  %1148 = vmatpush2.bf16.msra.mxu0 0
  %1149 = vmatprep.subr.bf16.mxu0 0
  %1150 = vmatpush2.bf16.msra.mxu0 0
  %1151 = vmatprep.subr.bf16.mxu0 0
  %1152 = vmatpush2.bf16.msra.mxu0 0
  %1153 = vmatprep.subr.bf16.mxu0 0
  %1154 = vmatpush2.bf16.msra.mxu0 0
  %1155 = vmatprep.subr.bf16.mxu0 0
  %1156 = vmatpush2.bf16.msra.mxu0 0
  %1157 = vmatprep.subr.bf16.mxu0 0
  %1158 = vmatpush2.bf16.msra.mxu0 0
  %1159 = vmatprep.mubr.bf16.mxu0 0
  %1160 = vmatmul.mubr.bf16.gmra.mxu0 %v1119
  %v1161 = vpop.f32.mrf.mxu0
  %v1162 = vadd.f32 0.0, %v1161
  %v1163 = vpop.f32.mrf.mxu0
  %v1164 = vpop.f32.mrf.mxu0
  %v1165 = vadd.f32 0.0, %v1164
  %v1166 = vpop.f32.mrf.mxu0
  %1167 = vmatprep.mubr.bf16.mxu0 0
  %1168 = vmatmul.mubr.bf16.gmra.mxu0 %v1122
  %v1169 = vpop.f32.mrf.mxu0
  %v1170 = vadd.f32 0.0, %v1169
  %v1171 = vpop.f32.mrf.mxu0
  %v1172 = vpop.f32.mrf.mxu0
  %v1173 = vadd.f32 0.0, %v1172
  %v1174 = vpop.f32.mrf.mxu0
  %1175 = vmatprep.mubr.bf16.mxu0 0
  %1176 = vmatmul.mubr.bf16.gmra.mxu0 %v1125
  %v1177 = vpop.f32.mrf.mxu0
  %v1178 = vadd.f32 0.0, %v1177
  %v1179 = vpop.f32.mrf.mxu0
  %v1180 = vpop.f32.mrf.mxu0
  %v1181 = vpop.f32.mrf.mxu0
  %1182 = vdwg.mxu0
  %v1183 = vld [vmem:[#allocation2] sm:$0xff]
  %v1184 = vld [vmem:[#allocation2 + $0x8] sm:$0xff]
  %v1185 = vld [vmem:[#allocation2 + $0x10] sm:$0xff]
  %v1186 = vld [vmem:[#allocation2 + $0x18] sm:$0xff]
  %v1187 = vld [vmem:[#allocation2 + $0x20] sm:$0x3f]
  %v1188 = vadd.f32 %v1183, %v1162
  %v1189 = vadd.f32 %v1184, %v1165
  %v1190 = vadd.f32 %v1185, %v1170
  %v1191 = vadd.f32 %v1186, %v1173
  %v1192 = vadd.f32 %v1187, %v1178
  %v1193 = vld [vmem:[%s822] sm:$0xff]
  %v1194 = vld [vmem:[%s822 + $0x8] sm:$0xff]
  %v1195 = vld [vmem:[%s822 + $0x10] sm:$0xff]
  %v1196 = vld [vmem:[%s822 + $0x18] sm:$0xff]
  %v1197 = vld [vmem:[%s822 + $0x20] sm:$0x3f]
  %v1198 = vadd.f32 %v1193, %v1162
  %v1199 = vadd.f32 %v1194, %v1165
  %v1200 = vadd.f32 %v1195, %v1170
  %v1201 = vadd.f32 %v1196, %v1173
  %v1202 = vadd.f32 %v1197, %v1178
  %v1203 = vld [vmem:[#allocation4] sm:$0xff]
  %v1204 = vld [vmem:[#allocation4 + $0x8] sm:$0xff]
  %v1205 = vld [vmem:[#allocation4 + $0x10] sm:$0xff]
  %v1206 = vld [vmem:[#allocation4 + $0x18] sm:$0xff]
  %v1207 = vld [vmem:[#allocation4 + $0x20] sm:$0x3f]
  %v1208 = vxor.u32 %v1188, 2147483648
  %v1209 = vxor.u32 %v1189, 2147483648
  %v1210 = vxor.u32 %v1190, 2147483648
  %v1211 = vxor.u32 %v1191, 2147483648
  %v1212 = vxor.u32 %v1192, 2147483648
  %v1213 = vmul.f32 %v1208, 1.442695
  %v1214 = vpow.pop %v1213
  %v1215 = vmul.f32 %v1209, 1.442695
  %v1216 = vpow.pop %v1215
  %v1217 = vmul.f32 %v1210, 1.442695
  %v1218 = vpow.pop %v1217
  %v1219 = vmul.f32 %v1211, 1.442695
  %v1220 = vpow.pop %v1219
  %v1221 = vmul.f32 %v1212, 1.442695
  %v1222 = vpow.pop %v1221
  %v1223 = vadd.f32 %v1214, 1.0
  %v1224 = vadd.f32 %v1216, 1.0
  %v1225 = vadd.f32 %v1218, 1.0
  %v1226 = vadd.f32 %v1220, 1.0
  %v1227 = vadd.f32 %v1222, 1.0
  %v1228 = vrcp.pop %v1223
  %v1229 = vmul.f32 1.0, %v1228
  %v1230 = vrcp.pop %v1224
  %v1231 = vmul.f32 1.0, %v1230
  %v1232 = vrcp.pop %v1225
  %v1233 = vmul.f32 1.0, %v1232
  %v1234 = vrcp.pop %v1226
  %v1235 = vmul.f32 1.0, %v1234
  %v1236 = vrcp.pop %v1227
  %v1237 = vmul.f32 1.0, %v1236
  %v1238 = vtanh.pop %v1188
  %v1239 = vtanh.pop %v1189
  %v1240 = vtanh.pop %v1190
  %v1241 = vtanh.pop %v1191
  %v1242 = vtanh.pop %v1192
  %1248 = vrot.lane.b32.xlu0 %v1203, 16
  %v1249 = vpop.permute.xlu0 %1248
  %1250 = vrot.lane.b32.xlu0 %v1204, 16
  %v1251 = vpop.permute.xlu0 %1250
  %1252 = vrot.lane.b32.xlu0 %v1205, 16
  %v1253 = vpop.permute.xlu0 %1252
  %1254 = vrot.lane.b32.xlu0 %v1206, 16
  %v1255 = vpop.permute.xlu0 %1254
  %1256 = vrot.lane.b32.xlu0 %v1207, 16
  %v1257 = vpop.permute.xlu0 %1256
  %v1263 = vmul.f32 %v1229, %v1249
  %v1264 = vmul.f32 %v1231, %v1251
  %v1265 = vmul.f32 %v1233, %v1253
  %v1266 = vmul.f32 %v1235, %v1255
  %v1267 = vmul.f32 %v1237, %v1257
  %1273 = vrot.lane.b32.xlu0 %v1238, 80
  %v1274 = vpop.permute.xlu0 %1273
  %1275 = vrot.lane.b32.xlu0 %v1239, 80
  %v1276 = vpop.permute.xlu0 %1275
  %1277 = vrot.lane.b32.xlu0 %v1240, 80
  %v1278 = vpop.permute.xlu0 %1277
  %1279 = vrot.lane.b32.xlu0 %v1241, 80
  %v1280 = vpop.permute.xlu0 %1279
  %1281 = vrot.lane.b32.xlu0 %v1242, 80
  %v1282 = vpop.permute.xlu0 %1281
  %v1288 = vmul.f32 %v1229, %v1274
  %v1289 = vmul.f32 %v1231, %v1276
  %v1290 = vmul.f32 %v1233, %v1278
  %v1291 = vmul.f32 %v1235, %v1280
  %v1292 = vmul.f32 %v1237, %v1282
  %1298 = vrot.lane.b32.xlu0 %v1288, 16
  %v1299 = vpop.permute.xlu0 %1298
  %1300 = vrot.lane.b32.xlu0 %v1289, 16
  %v1301 = vpop.permute.xlu0 %1300
  %1302 = vrot.lane.b32.xlu0 %v1290, 16
  %v1303 = vpop.permute.xlu0 %1302
  %1304 = vrot.lane.b32.xlu0 %v1291, 16
  %v1305 = vpop.permute.xlu0 %1304
  %1306 = vrot.lane.b32.xlu0 %v1292, 16
  %v1307 = vpop.permute.xlu0 %1306
  %v1313 = vadd.f32 %v1263, %v1299
  %v1314 = vadd.f32 %v1264, %v1301
  %v1315 = vadd.f32 %v1265, %v1303
  %v1316 = vadd.f32 %v1266, %v1305
  %v1317 = vadd.f32 %v1267, %v1307
  %v1318 = vtanh.pop %v1313
  %v1319 = vtanh.pop %v1314
  %v1320 = vtanh.pop %v1315
  %v1321 = vtanh.pop %v1316
  %v1322 = vtanh.pop %v1317
  %1328 = vrot.lane.b32.xlu0 %v1318, 16
  %v1329 = vpop.permute.xlu0 %1328
  %1330 = vrot.lane.b32.xlu0 %v1319, 16
  %v1331 = vpop.permute.xlu0 %1330
  %1332 = vrot.lane.b32.xlu0 %v1320, 16
  %v1333 = vpop.permute.xlu0 %1332
  %1334 = vrot.lane.b32.xlu0 %v1321, 16
  %v1335 = vpop.permute.xlu0 %1334
  %1336 = vrot.lane.b32.xlu0 %v1322, 16
  %v1337 = vpop.permute.xlu0 %1336
  %v1343 = vmul.f32 %v1229, %v1329
  %v1344 = vmul.f32 %v1231, %v1331
  %v1345 = vmul.f32 %v1233, %v1333
  %v1346 = vmul.f32 %v1235, %v1335
  %v1347 = vmul.f32 %v1237, %v1337
  %1353 = vrot.lane.b32.xlu0 %v1343, 96
  %v1354 = vpop.permute.xlu0 %1353
  %1355 = vrot.lane.b32.xlu0 %v1344, 96
  %v1356 = vpop.permute.xlu0 %1355
  %1357 = vrot.lane.b32.xlu0 %v1345, 96
  %v1358 = vpop.permute.xlu0 %1357
  %1359 = vrot.lane.b32.xlu0 %v1346, 96
  %v1360 = vpop.permute.xlu0 %1359
  %1361 = vrot.lane.b32.xlu0 %v1347, 96
  %v1362 = vpop.permute.xlu0 %1361
  %1368 = vst.msk [vmem:[#allocation3] sm:$0xff] %vm828, %v1354
  %1369 = vst.msk [vmem:[#allocation3 + $0x8] sm:$0xff] %vm828, %v1356
  %1370 = vst.msk [vmem:[#allocation3 + $0x10] sm:$0xff] %vm828, %v1358
  %1371 = vst.msk [vmem:[#allocation3 + $0x18] sm:$0xff] %vm828, %v1360
  %1372 = vst.msk [vmem:[#allocation3 + $0x20] sm:$0x3f] %vm833, %v1362
  %1378 = vrot.lane.b32.xlu0 %v1313, 112
  %v1379 = vpop.permute.xlu0 %1378
  %1380 = vrot.lane.b32.xlu0 %v1314, 112
  %v1381 = vpop.permute.xlu0 %1380
  %1382 = vrot.lane.b32.xlu0 %v1315, 112
  %v1383 = vpop.permute.xlu0 %1382
  %1384 = vrot.lane.b32.xlu0 %v1316, 112
  %v1385 = vpop.permute.xlu0 %1384
  %1386 = vrot.lane.b32.xlu0 %v1317, 112
  %v1387 = vpop.permute.xlu0 %1386
  %1393 = vst.msk [vmem:[#allocation4] sm:$0xff] %vm828, %v1379
  %1394 = vst.msk [vmem:[#allocation4 + $0x8] sm:$0xff] %vm828, %v1381
  %1395 = vst.msk [vmem:[#allocation4 + $0x10] sm:$0xff] %vm828, %v1383
  %1396 = vst.msk [vmem:[#allocation4 + $0x18] sm:$0xff] %vm828, %v1385
  %1397 = vst.msk [vmem:[#allocation4 + $0x20] sm:$0x3f] %vm833, %v1387
  %1398 = vst.msk [vmem:[#allocation7] sm:$0xff] %vm828, %v1354
  %1399 = vst.msk [vmem:[#allocation7 + $0x8] sm:$0xff] %vm828, %v1356
  %1400 = vst.msk [vmem:[#allocation7 + $0x10] sm:$0xff] %vm828, %v1358
  %1401 = vst.msk [vmem:[#allocation7 + $0x18] sm:$0xff] %vm828, %v1360
  %1402 = vst.msk [vmem:[#allocation7 + $0x20] sm:$0x3f] %vm833, %v1362
  %v1403 = vld [vmem:[#allocation6] sm:$0xff]
  %v1404 = vld [vmem:[#allocation6 + $0x8] sm:$0xff]
  %v1405 = vld [vmem:[#allocation6 + $0x10] sm:$0xff]
  %v1406 = vld [vmem:[#allocation6 + $0x18] sm:$0xff]
  %v1407 = vld [vmem:[#allocation6 + $0x20] sm:$0x3f]
  %v1408 = vxor.u32 %v1198, 2147483648
  %v1409 = vxor.u32 %v1199, 2147483648
  %v1410 = vxor.u32 %v1200, 2147483648
  %v1411 = vxor.u32 %v1201, 2147483648
  %v1412 = vxor.u32 %v1202, 2147483648
  %v1413 = vmul.f32 %v1408, 1.442695
  %v1414 = vpow.pop %v1413
  %v1415 = vmul.f32 %v1409, 1.442695
  %v1416 = vpow.pop %v1415
  %v1417 = vmul.f32 %v1410, 1.442695
  %v1418 = vpow.pop %v1417
  %v1419 = vmul.f32 %v1411, 1.442695
  %v1420 = vpow.pop %v1419
  %v1421 = vmul.f32 %v1412, 1.442695
  %v1422 = vpow.pop %v1421
  %v1423 = vadd.f32 %v1414, 1.0
  %v1424 = vadd.f32 %v1416, 1.0
  %v1425 = vadd.f32 %v1418, 1.0
  %v1426 = vadd.f32 %v1420, 1.0
  %v1427 = vadd.f32 %v1422, 1.0
  %v1428 = vrcp.pop %v1423
  %v1429 = vmul.f32 1.0, %v1428
  %v1430 = vrcp.pop %v1424
  %v1431 = vmul.f32 1.0, %v1430
  %v1432 = vrcp.pop %v1425
  %v1433 = vmul.f32 1.0, %v1432
  %v1434 = vrcp.pop %v1426
  %v1435 = vmul.f32 1.0, %v1434
  %v1436 = vrcp.pop %v1427
  %v1437 = vmul.f32 1.0, %v1436
  %v1438 = vtanh.pop %v1198
  %v1439 = vtanh.pop %v1199
  %v1440 = vtanh.pop %v1200
  %v1441 = vtanh.pop %v1201
  %v1442 = vtanh.pop %v1202
  %1448 = vrot.lane.b32.xlu0 %v1403, 80
  %v1449 = vpop.permute.xlu0 %1448
  %1450 = vrot.lane.b32.xlu0 %v1404, 80
  %v1451 = vpop.permute.xlu0 %1450
  %1452 = vrot.lane.b32.xlu0 %v1405, 80
  %v1453 = vpop.permute.xlu0 %1452
  %1454 = vrot.lane.b32.xlu0 %v1406, 80
  %v1455 = vpop.permute.xlu0 %1454
  %1456 = vrot.lane.b32.xlu0 %v1407, 80
  %v1457 = vpop.permute.xlu0 %1456
  %v1463 = vmul.f32 %v1429, %v1449
  %v1464 = vmul.f32 %v1431, %v1451
  %v1465 = vmul.f32 %v1433, %v1453
  %v1466 = vmul.f32 %v1435, %v1455
  %v1467 = vmul.f32 %v1437, %v1457
  %1473 = vrot.lane.b32.xlu0 %v1438, 80
  %v1474 = vpop.permute.xlu0 %1473
  %1475 = vrot.lane.b32.xlu0 %v1439, 80
  %v1476 = vpop.permute.xlu0 %1475
  %1477 = vrot.lane.b32.xlu0 %v1440, 80
  %v1478 = vpop.permute.xlu0 %1477
  %1479 = vrot.lane.b32.xlu0 %v1441, 80
  %v1480 = vpop.permute.xlu0 %1479
  %1481 = vrot.lane.b32.xlu0 %v1442, 80
  %v1482 = vpop.permute.xlu0 %1481
  %v1488 = vmul.f32 %v1429, %v1474
  %v1489 = vmul.f32 %v1431, %v1476
  %v1490 = vmul.f32 %v1433, %v1478
  %v1491 = vmul.f32 %v1435, %v1480
  %v1492 = vmul.f32 %v1437, %v1482
  %1498 = vrot.lane.b32.xlu0 %v1488, 16
  %v1499 = vpop.permute.xlu0 %1498
  %1500 = vrot.lane.b32.xlu0 %v1489, 16
  %v1501 = vpop.permute.xlu0 %1500
  %1502 = vrot.lane.b32.xlu0 %v1490, 16
  %v1503 = vpop.permute.xlu0 %1502
  %1504 = vrot.lane.b32.xlu0 %v1491, 16
  %v1505 = vpop.permute.xlu0 %1504
  %1506 = vrot.lane.b32.xlu0 %v1492, 16
  %v1507 = vpop.permute.xlu0 %1506
  %v1513 = vadd.f32 %v1463, %v1499
  %v1514 = vadd.f32 %v1464, %v1501
  %v1515 = vadd.f32 %v1465, %v1503
  %v1516 = vadd.f32 %v1466, %v1505
  %v1517 = vadd.f32 %v1467, %v1507
  %v1518 = vtanh.pop %v1513
  %v1519 = vtanh.pop %v1514
  %v1520 = vtanh.pop %v1515
  %v1521 = vtanh.pop %v1516
  %v1522 = vtanh.pop %v1517
  %1528 = vrot.lane.b32.xlu0 %v1518, 16
  %v1529 = vpop.permute.xlu0 %1528
  %1530 = vrot.lane.b32.xlu0 %v1519, 16
  %v1531 = vpop.permute.xlu0 %1530
  %1532 = vrot.lane.b32.xlu0 %v1520, 16
  %v1533 = vpop.permute.xlu0 %1532
  %1534 = vrot.lane.b32.xlu0 %v1521, 16
  %v1535 = vpop.permute.xlu0 %1534
  %1536 = vrot.lane.b32.xlu0 %v1522, 16
  %v1537 = vpop.permute.xlu0 %1536
  %v1543 = vmul.f32 %v1429, %v1529
  %v1544 = vmul.f32 %v1431, %v1531
  %v1545 = vmul.f32 %v1433, %v1533
  %v1546 = vmul.f32 %v1435, %v1535
  %v1547 = vmul.f32 %v1437, %v1537
  %1553 = vrot.lane.b32.xlu0 %v1543, 32
  %v1554 = vpop.permute.xlu0 %1553
  %1555 = vrot.lane.b32.xlu0 %v1544, 32
  %v1556 = vpop.permute.xlu0 %1555
  %1557 = vrot.lane.b32.xlu0 %v1545, 32
  %v1558 = vpop.permute.xlu0 %1557
  %1559 = vrot.lane.b32.xlu0 %v1546, 32
  %v1560 = vpop.permute.xlu0 %1559
  %1561 = vrot.lane.b32.xlu0 %v1547, 32
  %v1562 = vpop.permute.xlu0 %1561
  %1568 = vst.msk [vmem:[#allocation5] sm:$0xff] %vm828, %v1554
  %1569 = vst.msk [vmem:[#allocation5 + $0x8] sm:$0xff] %vm828, %v1556
  %1570 = vst.msk [vmem:[#allocation5 + $0x10] sm:$0xff] %vm828, %v1558
  %1571 = vst.msk [vmem:[#allocation5 + $0x18] sm:$0xff] %vm828, %v1560
  %1572 = vst.msk [vmem:[#allocation5 + $0x20] sm:$0x3f] %vm833, %v1562
  %1578 = vrot.lane.b32.xlu0 %v1513, 48
  %v1579 = vpop.permute.xlu0 %1578
  %1580 = vrot.lane.b32.xlu0 %v1514, 48
  %v1581 = vpop.permute.xlu0 %1580
  %1582 = vrot.lane.b32.xlu0 %v1515, 48
  %v1583 = vpop.permute.xlu0 %1582
  %1584 = vrot.lane.b32.xlu0 %v1516, 48
  %v1585 = vpop.permute.xlu0 %1584
  %1586 = vrot.lane.b32.xlu0 %v1517, 48
  %v1587 = vpop.permute.xlu0 %1586
  %1593 = vst.msk [vmem:[#allocation6] sm:$0xff] %vm828, %v1579
  %1594 = vst.msk [vmem:[#allocation6 + $0x8] sm:$0xff] %vm828, %v1581
  %1595 = vst.msk [vmem:[#allocation6 + $0x10] sm:$0xff] %vm828, %v1583
  %1596 = vst.msk [vmem:[#allocation6 + $0x18] sm:$0xff] %vm828, %v1585
  %1597 = vst.msk [vmem:[#allocation6 + $0x20] sm:$0x3f] %vm833, %v1587
  %s1598 = scalar_lea.vmem [#allocation8], 80
  %1599 = vst.msk [vmem:[%s1598] sm:$0xff] %vm828, %v1554
  %1600 = vst.msk [vmem:[%s1598 + $0x8] sm:$0xff] %vm828, %v1556
  %1601 = vst.msk [vmem:[%s1598 + $0x10] sm:$0xff] %vm828, %v1558
  %1602 = vst.msk [vmem:[%s1598 + $0x18] sm:$0xff] %vm828, %v1560
  %1603 = vst.msk [vmem:[%s1598 + $0x20] sm:$0x3f] %vm833, %v1562
  %v1604 = vld [vmem:[#allocation3] sm:$0xff]
  %v1605 = vld [vmem:[#allocation3 + $0x8] sm:$0xff]
  %v1606 = vld [vmem:[#allocation3 + $0x10] sm:$0xff]
  %v1607 = vld [vmem:[#allocation3 + $0x18] sm:$0xff]
  %v1608 = vld [vmem:[#allocation3 + $0x20] sm:$0x3f]
  %v1609 = vld [vmem:[#allocation5] sm:$0xff]
  %v1610 = vld [vmem:[#allocation5 + $0x8] sm:$0xff]
  %v1611 = vld [vmem:[#allocation5 + $0x10] sm:$0xff]
  %v1612 = vld [vmem:[#allocation5 + $0x18] sm:$0xff]
  %v1613 = vld [vmem:[#allocation5 + $0x20] sm:$0x3f]
  %v1619 = vrot.slane %v1604, 7
  %v1620 = vrot.slane %v1605, 7
  %v1621 = vsel %vm139, %v1619, %v1620
  %v1622 = vrot.slane %v1606, 7
  %v1623 = vsel %vm139, %v1620, %v1622
  %v1624 = vrot.slane %v1607, 7
  %v1625 = vsel %vm139, %v1622, %v1624
  %v1626 = vrot.slane %v1608, 7
  %v1627 = vsel %vm139, %v1624, %v1626
  %v1633 = vsel %vm139, 0.0, %v1619
  %v1634 = vsel %vm160, %v1633, 0.0
  %v1635 = vsel %vm161, %v1621, 0.0
  %v1636 = vsel %vm162, %v1623, 0.0
  %v1637 = vsel %vm163, %v1625, 0.0
  %v1638 = vsel %vm164, %v1627, 0.0
  %v1639 = vrot.slane %v1604, 1
  %v1640 = vrot.slane %v1605, 1
  %v1641 = vsel %vm170, %v1639, %v1640
  %v1642 = vrot.slane %v1606, 1
  %v1643 = vsel %vm170, %v1640, %v1642
  %v1644 = vrot.slane %v1607, 1
  %v1645 = vsel %vm170, %v1642, %v1644
  %v1646 = vrot.slane %v1608, 1
  %v1647 = vsel %vm170, %v1644, %v1646
  %v1653 = vsel %vm185, %v1646, 0.0
  %v1654 = vsel %vm192, %v1641, 0.0
  %v1655 = vsel %vm193, %v1643, 0.0
  %v1656 = vsel %vm194, %v1645, 0.0
  %v1657 = vsel %vm195, %v1647, 0.0
  %v1658 = vsel %vm196, %v1653, 0.0
  %v1664 = vrot.slane %v1609, 7
  %v1665 = vrot.slane %v1610, 7
  %v1666 = vsel %vm139, %v1664, %v1665
  %v1667 = vrot.slane %v1611, 7
  %v1668 = vsel %vm139, %v1665, %v1667
  %v1669 = vrot.slane %v1612, 7
  %v1670 = vsel %vm139, %v1667, %v1669
  %v1671 = vrot.slane %v1613, 7
  %v1672 = vsel %vm139, %v1669, %v1671
  %v1678 = vsel %vm139, 0.0, %v1664
  %v1679 = vsel %vm160, %v1678, 0.0
  %v1680 = vsel %vm161, %v1666, 0.0
  %v1681 = vsel %vm162, %v1668, 0.0
  %v1682 = vsel %vm163, %v1670, 0.0
  %v1683 = vsel %vm164, %v1672, 0.0
  %v1684 = vrot.slane %v1609, 1
  %v1685 = vrot.slane %v1610, 1
  %v1686 = vsel %vm170, %v1684, %v1685
  %v1687 = vrot.slane %v1611, 1
  %v1688 = vsel %vm170, %v1685, %v1687
  %v1689 = vrot.slane %v1612, 1
  %v1690 = vsel %vm170, %v1687, %v1689
  %v1691 = vrot.slane %v1613, 1
  %v1692 = vsel %vm170, %v1689, %v1691
  %v1698 = vsel %vm185, %v1691, 0.0
  %v1699 = vsel %vm192, %v1686, 0.0
  %v1700 = vsel %vm193, %v1688, 0.0
  %v1701 = vsel %vm194, %v1690, 0.0
  %v1702 = vsel %vm195, %v1692, 0.0
  %v1703 = vsel %vm196, %v1698, 0.0
  %1704 = vrot.lane.b32.xlu0 %v1604, 16
  %v1705 = vpop.permute.xlu0 %1704
  %1706 = vrot.lane.b32.xlu0 %v1605, 16
  %v1707 = vpop.permute.xlu0 %1706
  %1708 = vrot.lane.b32.xlu0 %v1606, 16
  %v1709 = vpop.permute.xlu0 %1708
  %1710 = vrot.lane.b32.xlu0 %v1607, 16
  %v1711 = vpop.permute.xlu0 %1710
  %1712 = vrot.lane.b32.xlu0 %v1608, 16
  %v1713 = vpop.permute.xlu0 %1712
  %1724 = vrot.lane.b32.xlu0 %v1654, 32
  %v1725 = vpop.permute.xlu0 %1724
  %1726 = vrot.lane.b32.xlu0 %v1655, 32
  %v1727 = vpop.permute.xlu0 %1726
  %1728 = vrot.lane.b32.xlu0 %v1656, 32
  %v1729 = vpop.permute.xlu0 %1728
  %1730 = vrot.lane.b32.xlu0 %v1657, 32
  %v1731 = vpop.permute.xlu0 %1730
  %1732 = vrot.lane.b32.xlu0 %v1658, 32
  %v1733 = vpop.permute.xlu0 %1732
  %1744 = vrot.lane.b32.xlu0 %v1679, 48
  %v1745 = vpop.permute.xlu0 %1744
  %1746 = vrot.lane.b32.xlu0 %v1680, 48
  %v1747 = vpop.permute.xlu0 %1746
  %1748 = vrot.lane.b32.xlu0 %v1681, 48
  %v1749 = vpop.permute.xlu0 %1748
  %1750 = vrot.lane.b32.xlu0 %v1682, 48
  %v1751 = vpop.permute.xlu0 %1750
  %1752 = vrot.lane.b32.xlu0 %v1683, 48
  %v1753 = vpop.permute.xlu0 %1752
  %1759 = vrot.lane.b32.xlu0 %v1609, 64
  %v1760 = vpop.permute.xlu0 %1759
  %1761 = vrot.lane.b32.xlu0 %v1610, 64
  %v1762 = vpop.permute.xlu0 %1761
  %1763 = vrot.lane.b32.xlu0 %v1611, 64
  %v1764 = vpop.permute.xlu0 %1763
  %1765 = vrot.lane.b32.xlu0 %v1612, 64
  %v1766 = vpop.permute.xlu0 %1765
  %1767 = vrot.lane.b32.xlu0 %v1613, 64
  %v1768 = vpop.permute.xlu0 %1767
  %1779 = vrot.lane.b32.xlu0 %v1699, 80
  %v1780 = vpop.permute.xlu0 %1779
  %1781 = vrot.lane.b32.xlu0 %v1700, 80
  %v1782 = vpop.permute.xlu0 %1781
  %1783 = vrot.lane.b32.xlu0 %v1701, 80
  %v1784 = vpop.permute.xlu0 %1783
  %1785 = vrot.lane.b32.xlu0 %v1702, 80
  %v1786 = vpop.permute.xlu0 %1785
  %1787 = vrot.lane.b32.xlu0 %v1703, 80
  %v1788 = vpop.permute.xlu0 %1787
  %v1794 = vsel %vm828, %v1634, %v1705
  %v1795 = vsel %vm828, %v1635, %v1707
  %v1796 = vsel %vm828, %v1636, %v1709
  %v1797 = vsel %vm828, %v1637, %v1711
  %v1798 = vsel %vm828, %v1638, %v1713
  %v1799 = vsel %vm237, %v1794, %v1725
  %v1800 = vsel %vm237, %v1795, %v1727
  %v1801 = vsel %vm237, %v1796, %v1729
  %v1802 = vsel %vm237, %v1797, %v1731
  %v1803 = vsel %vm237, %v1798, %v1733
  %v1804 = vsel %vm1050, %v1799, %v1745
  %v1805 = vsel %vm1050, %v1800, %v1747
  %v1806 = vsel %vm1050, %v1801, %v1749
  %v1807 = vsel %vm1050, %v1802, %v1751
  %v1808 = vsel %vm1050, %v1803, %v1753
  %v1809 = vsel %vm243, %v1804, %v1760
  %v1810 = vsel %vm243, %v1805, %v1762
  %v1811 = vsel %vm243, %v1806, %v1764
  %v1812 = vsel %vm243, %v1807, %v1766
  %v1813 = vsel %vm243, %v1808, %v1768
  %v1814 = vsel %vm1061, %v1809, %v1780
  %v1815 = vsel %vm1061, %v1810, %v1782
  %v1816 = vsel %vm1061, %v1811, %v1784
  %v1817 = vsel %vm1061, %v1812, %v1786
  %v1818 = vsel %vm1061, %v1813, %v1788
  %v1819 = vpack.c.bf16 %v1815, %v1814
  %v1820 = vpack.c.bf16 %v1817, %v1816
  %v1821 = vpack.c.bf16 %v1818, %v1818
  %v1822 = vld [vmem:[%s3] sm:$0xf]
  %v1823 = vld [vmem:[%s3 + $0x4] sm:$0xf]
  %v1824 = vld [vmem:[%s3 + $0x8] sm:$0xf]
  %v1825 = vld [vmem:[%s3 + $0xc] sm:$0xf]
  %v1826 = vld [vmem:[%s3 + $0x10] sm:$0xf]
  %v1827 = vld [vmem:[%s3 + $0x14] sm:$0xf]
  %v1828 = vld [vmem:[%s3 + $0x18] sm:$0xf]
  %v1829 = vld [vmem:[%s3 + $0x1c] sm:$0xf]
  %v1830 = vld [vmem:[%s3 + $0x20] sm:$0xf]
  %v1831 = vld [vmem:[%s3 + $0x24] sm:$0xf]
  %v1832 = vld [vmem:[%s3 + $0x28] sm:$0xf]
  %v1833 = vld [vmem:[%s3 + $0x2c] sm:$0xf]
  %v1846 = vunpack.c.l.b16 %v1822
  %v1847 = vunpack.c.l.b16 %v1823
  %v1848 = vunpack.c.l.b16 %v1824
  %v1849 = vunpack.c.l.b16 %v1825
  %v1850 = vunpack.c.l.b16 %v1826
  %v1851 = vunpack.c.l.b16 %v1827
  %v1852 = vunpack.c.l.b16 %v1828
  %v1853 = vunpack.c.l.b16 %v1829
  %v1854 = vunpack.c.l.b16 %v1830
  %v1855 = vunpack.c.l.b16 %v1831
  %v1856 = vunpack.c.l.b16 %v1832
  %v1857 = vunpack.c.l.b16 %v1833
  %v1858 = vpack.c.b16 %v1847, %v1846
  %v1859 = vpack.c.b16 %v1849, %v1848
  %v1860 = vpack.c.b16 %v1851, %v1850
  %v1861 = vpack.c.b16 %v1853, %v1852
  %v1862 = vpack.c.b16 %v1855, %v1854
  %v1863 = vpack.c.b16 %v1857, %v1856
  %v1871 = vsel %vm307, %v1819, 0
  %v1874 = vsel %vm307, %v1820, 0
  %v1877 = vsel %vm307, %v1821, 0
  %1879 = vmatprep.subr.bf16.mxu0 0
  %1880 = vmatpush1.bf16.msra.mxu0 0
  %1881 = vmatprep.subr.bf16.mxu0 0
  %1882 = vmatpush1.bf16.msra.mxu0 0
  %1883 = vmatprep.subr.bf16.mxu0 0
  %1884 = vmatpush1.bf16.msra.mxu0 %v1863
  %1885 = vmatprep.subr.bf16.mxu0 0
  %1886 = vmatpush1.bf16.msra.mxu0 %v1862
  %1887 = vmatprep.subr.bf16.mxu0 0
  %1888 = vmatpush1.bf16.msra.mxu0 %v1861
  %1889 = vmatprep.subr.bf16.mxu0 0
  %1890 = vmatpush1.bf16.msra.mxu0 %v1860
  %1891 = vmatprep.subr.bf16.mxu0 0
  %1892 = vmatpush1.bf16.msra.mxu0 %v1859
  %1893 = vmatprep.subr.bf16.mxu0 0
  %1894 = vmatpush1.bf16.msra.mxu0 %v1858
  %1895 = vmatprep.subr.bf16.mxu0 0
  %1896 = vmatpush2.bf16.msra.mxu0 0
  %1897 = vmatprep.subr.bf16.mxu0 0
  %1898 = vmatpush2.bf16.msra.mxu0 0
  %1899 = vmatprep.subr.bf16.mxu0 0
  %1900 = vmatpush2.bf16.msra.mxu0 0
  %1901 = vmatprep.subr.bf16.mxu0 0
  %1902 = vmatpush2.bf16.msra.mxu0 0
  %1903 = vmatprep.subr.bf16.mxu0 0
  %1904 = vmatpush2.bf16.msra.mxu0 0
  %1905 = vmatprep.subr.bf16.mxu0 0
  %1906 = vmatpush2.bf16.msra.mxu0 0
  %1907 = vmatprep.subr.bf16.mxu0 0
  %1908 = vmatpush2.bf16.msra.mxu0 0
  %1909 = vmatprep.subr.bf16.mxu0 0
  %1910 = vmatpush2.bf16.msra.mxu0 0
  %1911 = vmatprep.mubr.bf16.mxu0 0
  %1912 = vmatmul.mubr.bf16.gmra.mxu0 %v1871
  %v1913 = vpop.f32.mrf.mxu0
  %v1914 = vadd.f32 0.0, %v1913
  %v1915 = vpop.f32.mrf.mxu0
  %v1916 = vpop.f32.mrf.mxu0
  %v1917 = vadd.f32 0.0, %v1916
  %v1918 = vpop.f32.mrf.mxu0
  %1919 = vmatprep.mubr.bf16.mxu0 0
  %1920 = vmatmul.mubr.bf16.gmra.mxu0 %v1874
  %v1921 = vpop.f32.mrf.mxu0
  %v1922 = vadd.f32 0.0, %v1921
  %v1923 = vpop.f32.mrf.mxu0
  %v1924 = vpop.f32.mrf.mxu0
  %v1925 = vadd.f32 0.0, %v1924
  %v1926 = vpop.f32.mrf.mxu0
  %1927 = vmatprep.mubr.bf16.mxu0 0
  %1928 = vmatmul.mubr.bf16.gmra.mxu0 %v1877
  %v1929 = vpop.f32.mrf.mxu0
  %v1930 = vadd.f32 0.0, %v1929
  %v1931 = vpop.f32.mrf.mxu0
  %v1932 = vpop.f32.mrf.mxu0
  %v1933 = vpop.f32.mrf.mxu0
  %1934 = vdwg.mxu0
  %v1935 = vld [vmem:[%s597] sm:$0xff]
  %v1936 = vld [vmem:[%s597 + $0x8] sm:$0xff]
  %v1937 = vld [vmem:[%s597 + $0x10] sm:$0xff]
  %v1938 = vld [vmem:[%s597 + $0x18] sm:$0xff]
  %v1939 = vld [vmem:[%s597 + $0x20] sm:$0x3f]
  %v1940 = vadd.f32 %v1935, %v1914
  %v1941 = vadd.f32 %v1936, %v1917
  %v1942 = vadd.f32 %v1937, %v1922
  %v1943 = vadd.f32 %v1938, %v1925
  %v1944 = vadd.f32 %v1939, %v1930
  %v1945 = vld [vmem:[#allocation4] sm:$0xff]
  %v1946 = vld [vmem:[#allocation4 + $0x8] sm:$0xff]
  %v1947 = vld [vmem:[#allocation4 + $0x10] sm:$0xff]
  %v1948 = vld [vmem:[#allocation4 + $0x18] sm:$0xff]
  %v1949 = vld [vmem:[#allocation4 + $0x20] sm:$0x3f]
  %v1950 = vxor.u32 %v1940, 2147483648
  %v1951 = vxor.u32 %v1941, 2147483648
  %v1952 = vxor.u32 %v1942, 2147483648
  %v1953 = vxor.u32 %v1943, 2147483648
  %v1954 = vxor.u32 %v1944, 2147483648
  %v1955 = vmul.f32 %v1950, 1.442695
  %v1956 = vpow.pop %v1955
  %v1957 = vmul.f32 %v1951, 1.442695
  %v1958 = vpow.pop %v1957
  %v1959 = vmul.f32 %v1952, 1.442695
  %v1960 = vpow.pop %v1959
  %v1961 = vmul.f32 %v1953, 1.442695
  %v1962 = vpow.pop %v1961
  %v1963 = vmul.f32 %v1954, 1.442695
  %v1964 = vpow.pop %v1963
  %v1965 = vadd.f32 %v1956, 1.0
  %v1966 = vadd.f32 %v1958, 1.0
  %v1967 = vadd.f32 %v1960, 1.0
  %v1968 = vadd.f32 %v1962, 1.0
  %v1969 = vadd.f32 %v1964, 1.0
  %v1970 = vrcp.pop %v1965
  %v1971 = vmul.f32 1.0, %v1970
  %v1972 = vrcp.pop %v1966
  %v1973 = vmul.f32 1.0, %v1972
  %v1974 = vrcp.pop %v1967
  %v1975 = vmul.f32 1.0, %v1974
  %v1976 = vrcp.pop %v1968
  %v1977 = vmul.f32 1.0, %v1976
  %v1978 = vrcp.pop %v1969
  %v1979 = vmul.f32 1.0, %v1978
  %v1980 = vtanh.pop %v1940
  %v1981 = vtanh.pop %v1941
  %v1982 = vtanh.pop %v1942
  %v1983 = vtanh.pop %v1943
  %v1984 = vtanh.pop %v1944
  %1990 = vrot.lane.b32.xlu0 %v1945, 16
  %v1991 = vpop.permute.xlu0 %1990
  %1992 = vrot.lane.b32.xlu0 %v1946, 16
  %v1993 = vpop.permute.xlu0 %1992
  %1994 = vrot.lane.b32.xlu0 %v1947, 16
  %v1995 = vpop.permute.xlu0 %1994
  %1996 = vrot.lane.b32.xlu0 %v1948, 16
  %v1997 = vpop.permute.xlu0 %1996
  %1998 = vrot.lane.b32.xlu0 %v1949, 16
  %v1999 = vpop.permute.xlu0 %1998
  %v2005 = vmul.f32 %v1971, %v1991
  %v2006 = vmul.f32 %v1973, %v1993
  %v2007 = vmul.f32 %v1975, %v1995
  %v2008 = vmul.f32 %v1977, %v1997
  %v2009 = vmul.f32 %v1979, %v1999
  %2015 = vrot.lane.b32.xlu0 %v1980, 80
  %v2016 = vpop.permute.xlu0 %2015
  %2017 = vrot.lane.b32.xlu0 %v1981, 80
  %v2018 = vpop.permute.xlu0 %2017
  %2019 = vrot.lane.b32.xlu0 %v1982, 80
  %v2020 = vpop.permute.xlu0 %2019
  %2021 = vrot.lane.b32.xlu0 %v1983, 80
  %v2022 = vpop.permute.xlu0 %2021
  %2023 = vrot.lane.b32.xlu0 %v1984, 80
  %v2024 = vpop.permute.xlu0 %2023
  %v2030 = vmul.f32 %v1971, %v2016
  %v2031 = vmul.f32 %v1973, %v2018
  %v2032 = vmul.f32 %v1975, %v2020
  %v2033 = vmul.f32 %v1977, %v2022
  %v2034 = vmul.f32 %v1979, %v2024
  %2040 = vrot.lane.b32.xlu0 %v2030, 16
  %v2041 = vpop.permute.xlu0 %2040
  %2042 = vrot.lane.b32.xlu0 %v2031, 16
  %v2043 = vpop.permute.xlu0 %2042
  %2044 = vrot.lane.b32.xlu0 %v2032, 16
  %v2045 = vpop.permute.xlu0 %2044
  %2046 = vrot.lane.b32.xlu0 %v2033, 16
  %v2047 = vpop.permute.xlu0 %2046
  %2048 = vrot.lane.b32.xlu0 %v2034, 16
  %v2049 = vpop.permute.xlu0 %2048
  %v2055 = vadd.f32 %v2005, %v2041
  %v2056 = vadd.f32 %v2006, %v2043
  %v2057 = vadd.f32 %v2007, %v2045
  %v2058 = vadd.f32 %v2008, %v2047
  %v2059 = vadd.f32 %v2009, %v2049
  %v2060 = vtanh.pop %v2055
  %v2061 = vtanh.pop %v2056
  %v2062 = vtanh.pop %v2057
  %v2063 = vtanh.pop %v2058
  %v2064 = vtanh.pop %v2059
  %2070 = vrot.lane.b32.xlu0 %v2060, 16
  %v2071 = vpop.permute.xlu0 %2070
  %2072 = vrot.lane.b32.xlu0 %v2061, 16
  %v2073 = vpop.permute.xlu0 %2072
  %2074 = vrot.lane.b32.xlu0 %v2062, 16
  %v2075 = vpop.permute.xlu0 %2074
  %2076 = vrot.lane.b32.xlu0 %v2063, 16
  %v2077 = vpop.permute.xlu0 %2076
  %2078 = vrot.lane.b32.xlu0 %v2064, 16
  %v2079 = vpop.permute.xlu0 %2078
  %v2085 = vmul.f32 %v1971, %v2071
  %v2086 = vmul.f32 %v1973, %v2073
  %v2087 = vmul.f32 %v1975, %v2075
  %v2088 = vmul.f32 %v1977, %v2077
  %v2089 = vmul.f32 %v1979, %v2079
  %2095 = vrot.lane.b32.xlu0 %v2085, 96
  %v2096 = vpop.permute.xlu0 %2095
  %2097 = vrot.lane.b32.xlu0 %v2086, 96
  %v2098 = vpop.permute.xlu0 %2097
  %2099 = vrot.lane.b32.xlu0 %v2087, 96
  %v2100 = vpop.permute.xlu0 %2099
  %2101 = vrot.lane.b32.xlu0 %v2088, 96
  %v2102 = vpop.permute.xlu0 %2101
  %2103 = vrot.lane.b32.xlu0 %v2089, 96
  %v2104 = vpop.permute.xlu0 %2103
  %2110 = vst.msk [vmem:[#allocation3] sm:$0xff] %vm828, %v2096
  %2111 = vst.msk [vmem:[#allocation3 + $0x8] sm:$0xff] %vm828, %v2098
  %2112 = vst.msk [vmem:[#allocation3 + $0x10] sm:$0xff] %vm828, %v2100
  %2113 = vst.msk [vmem:[#allocation3 + $0x18] sm:$0xff] %vm828, %v2102
  %2114 = vst.msk [vmem:[#allocation3 + $0x20] sm:$0x3f] %vm833, %v2104
  %2120 = vrot.lane.b32.xlu0 %v2055, 112
  %v2121 = vpop.permute.xlu0 %2120
  %2122 = vrot.lane.b32.xlu0 %v2056, 112
  %v2123 = vpop.permute.xlu0 %2122
  %2124 = vrot.lane.b32.xlu0 %v2057, 112
  %v2125 = vpop.permute.xlu0 %2124
  %2126 = vrot.lane.b32.xlu0 %v2058, 112
  %v2127 = vpop.permute.xlu0 %2126
  %2128 = vrot.lane.b32.xlu0 %v2059, 112
  %v2129 = vpop.permute.xlu0 %2128
  %2135 = vst.msk [vmem:[#allocation4] sm:$0xff] %vm828, %v2121
  %2136 = vst.msk [vmem:[#allocation4 + $0x8] sm:$0xff] %vm828, %v2123
  %2137 = vst.msk [vmem:[#allocation4 + $0x10] sm:$0xff] %vm828, %v2125
  %2138 = vst.msk [vmem:[#allocation4 + $0x18] sm:$0xff] %vm828, %v2127
  %2139 = vst.msk [vmem:[#allocation4 + $0x20] sm:$0x3f] %vm833, %v2129
  %s2140 = scalar_lea.vmem [#allocation7], 40
  %2141 = vst.msk [vmem:[%s2140] sm:$0xff] %vm828, %v2096
  %2142 = vst.msk [vmem:[%s2140 + $0x8] sm:$0xff] %vm828, %v2098
  %2143 = vst.msk [vmem:[%s2140 + $0x10] sm:$0xff] %vm828, %v2100
  %2144 = vst.msk [vmem:[%s2140 + $0x18] sm:$0xff] %vm828, %v2102
  %2145 = vst.msk [vmem:[%s2140 + $0x20] sm:$0x3f] %vm833, %v2104
  %v2146 = vld [vmem:[#allocation6] sm:$0xff]
  %v2147 = vld [vmem:[#allocation6 + $0x8] sm:$0xff]
  %v2148 = vld [vmem:[#allocation6 + $0x10] sm:$0xff]
  %v2149 = vld [vmem:[#allocation6 + $0x18] sm:$0xff]
  %v2150 = vld [vmem:[#allocation6 + $0x20] sm:$0x3f]
  %2156 = vrot.lane.b32.xlu0 %v2146, 80
  %v2157 = vpop.permute.xlu0 %2156
  %2158 = vrot.lane.b32.xlu0 %v2147, 80
  %v2159 = vpop.permute.xlu0 %2158
  %2160 = vrot.lane.b32.xlu0 %v2148, 80
  %v2161 = vpop.permute.xlu0 %2160
  %2162 = vrot.lane.b32.xlu0 %v2149, 80
  %v2163 = vpop.permute.xlu0 %2162
  %2164 = vrot.lane.b32.xlu0 %v2150, 80
  %v2165 = vpop.permute.xlu0 %2164
  %v2171 = vmul.f32 %v1971, %v2157
  %v2172 = vmul.f32 %v1973, %v2159
  %v2173 = vmul.f32 %v1975, %v2161
  %v2174 = vmul.f32 %v1977, %v2163
  %v2175 = vmul.f32 %v1979, %v2165
  %v2176 = vadd.f32 %v2171, %v2041
  %v2177 = vadd.f32 %v2172, %v2043
  %v2178 = vadd.f32 %v2173, %v2045
  %v2179 = vadd.f32 %v2174, %v2047
  %v2180 = vadd.f32 %v2175, %v2049
  %v2181 = vtanh.pop %v2176
  %v2182 = vtanh.pop %v2177
  %v2183 = vtanh.pop %v2178
  %v2184 = vtanh.pop %v2179
  %v2185 = vtanh.pop %v2180
  %2191 = vrot.lane.b32.xlu0 %v2181, 16
  %v2192 = vpop.permute.xlu0 %2191
  %2193 = vrot.lane.b32.xlu0 %v2182, 16
  %v2194 = vpop.permute.xlu0 %2193
  %2195 = vrot.lane.b32.xlu0 %v2183, 16
  %v2196 = vpop.permute.xlu0 %2195
  %2197 = vrot.lane.b32.xlu0 %v2184, 16
  %v2198 = vpop.permute.xlu0 %2197
  %2199 = vrot.lane.b32.xlu0 %v2185, 16
  %v2200 = vpop.permute.xlu0 %2199
  %v2206 = vmul.f32 %v1971, %v2192
  %v2207 = vmul.f32 %v1973, %v2194
  %v2208 = vmul.f32 %v1975, %v2196
  %v2209 = vmul.f32 %v1977, %v2198
  %v2210 = vmul.f32 %v1979, %v2200
  %2216 = vrot.lane.b32.xlu0 %v2206, 32
  %v2217 = vpop.permute.xlu0 %2216
  %2218 = vrot.lane.b32.xlu0 %v2207, 32
  %v2219 = vpop.permute.xlu0 %2218
  %2220 = vrot.lane.b32.xlu0 %v2208, 32
  %v2221 = vpop.permute.xlu0 %2220
  %2222 = vrot.lane.b32.xlu0 %v2209, 32
  %v2223 = vpop.permute.xlu0 %2222
  %2224 = vrot.lane.b32.xlu0 %v2210, 32
  %v2225 = vpop.permute.xlu0 %2224
  %2231 = vst.msk [vmem:[#allocation5] sm:$0xff] %vm828, %v2217
  %2232 = vst.msk [vmem:[#allocation5 + $0x8] sm:$0xff] %vm828, %v2219
  %2233 = vst.msk [vmem:[#allocation5 + $0x10] sm:$0xff] %vm828, %v2221
  %2234 = vst.msk [vmem:[#allocation5 + $0x18] sm:$0xff] %vm828, %v2223
  %2235 = vst.msk [vmem:[#allocation5 + $0x20] sm:$0x3f] %vm833, %v2225
  %2241 = vrot.lane.b32.xlu0 %v2176, 48
  %v2242 = vpop.permute.xlu0 %2241
  %2243 = vrot.lane.b32.xlu0 %v2177, 48
  %v2244 = vpop.permute.xlu0 %2243
  %2245 = vrot.lane.b32.xlu0 %v2178, 48
  %v2246 = vpop.permute.xlu0 %2245
  %2247 = vrot.lane.b32.xlu0 %v2179, 48
  %v2248 = vpop.permute.xlu0 %2247
  %2249 = vrot.lane.b32.xlu0 %v2180, 48
  %v2250 = vpop.permute.xlu0 %2249
  %2256 = vst.msk [vmem:[#allocation6] sm:$0xff] %vm828, %v2242
  %2257 = vst.msk [vmem:[#allocation6 + $0x8] sm:$0xff] %vm828, %v2244
  %2258 = vst.msk [vmem:[#allocation6 + $0x10] sm:$0xff] %vm828, %v2246
  %2259 = vst.msk [vmem:[#allocation6 + $0x18] sm:$0xff] %vm828, %v2248
  %2260 = vst.msk [vmem:[#allocation6 + $0x20] sm:$0x3f] %vm833, %v2250
  %s2261 = scalar_lea.vmem [#allocation8], 40
  %2262 = vst.msk [vmem:[%s2261] sm:$0xff] %vm828, %v2217
  %2263 = vst.msk [vmem:[%s2261 + $0x8] sm:$0xff] %vm828, %v2219
  %2264 = vst.msk [vmem:[%s2261 + $0x10] sm:$0xff] %vm828, %v2221
  %2265 = vst.msk [vmem:[%s2261 + $0x18] sm:$0xff] %vm828, %v2223
  %2266 = vst.msk [vmem:[%s2261 + $0x20] sm:$0x3f] %vm833, %v2225
  %v2267 = vld [vmem:[#allocation3] sm:$0xff]
  %v2268 = vld [vmem:[#allocation3 + $0x8] sm:$0xff]
  %v2269 = vld [vmem:[#allocation3 + $0x10] sm:$0xff]
  %v2270 = vld [vmem:[#allocation3 + $0x18] sm:$0xff]
  %v2271 = vld [vmem:[#allocation3 + $0x20] sm:$0x3f]
  %v2272 = vld [vmem:[#allocation5] sm:$0xff]
  %v2273 = vld [vmem:[#allocation5 + $0x8] sm:$0xff]
  %v2274 = vld [vmem:[#allocation5 + $0x10] sm:$0xff]
  %v2275 = vld [vmem:[#allocation5 + $0x18] sm:$0xff]
  %v2276 = vld [vmem:[#allocation5 + $0x20] sm:$0x3f]
  %v2282 = vrot.slane %v2267, 7
  %v2283 = vrot.slane %v2268, 7
  %v2284 = vsel %vm139, %v2282, %v2283
  %v2285 = vrot.slane %v2269, 7
  %v2286 = vsel %vm139, %v2283, %v2285
  %v2287 = vrot.slane %v2270, 7
  %v2288 = vsel %vm139, %v2285, %v2287
  %v2289 = vrot.slane %v2271, 7
  %v2290 = vsel %vm139, %v2287, %v2289
  %v2296 = vsel %vm139, 0.0, %v2282
  %v2297 = vsel %vm160, %v2296, 0.0
  %v2298 = vsel %vm161, %v2284, 0.0
  %v2299 = vsel %vm162, %v2286, 0.0
  %v2300 = vsel %vm163, %v2288, 0.0
  %v2301 = vsel %vm164, %v2290, 0.0
  %v2302 = vrot.slane %v2267, 1
  %v2303 = vrot.slane %v2268, 1
  %v2304 = vsel %vm170, %v2302, %v2303
  %v2305 = vrot.slane %v2269, 1
  %v2306 = vsel %vm170, %v2303, %v2305
  %v2307 = vrot.slane %v2270, 1
  %v2308 = vsel %vm170, %v2305, %v2307
  %v2309 = vrot.slane %v2271, 1
  %v2310 = vsel %vm170, %v2307, %v2309
  %v2316 = vsel %vm185, %v2309, 0.0
  %v2317 = vsel %vm192, %v2304, 0.0
  %v2318 = vsel %vm193, %v2306, 0.0
  %v2319 = vsel %vm194, %v2308, 0.0
  %v2320 = vsel %vm195, %v2310, 0.0
  %v2321 = vsel %vm196, %v2316, 0.0
  %v2327 = vrot.slane %v2272, 7
  %v2328 = vrot.slane %v2273, 7
  %v2329 = vsel %vm139, %v2327, %v2328
  %v2330 = vrot.slane %v2274, 7
  %v2331 = vsel %vm139, %v2328, %v2330
  %v2332 = vrot.slane %v2275, 7
  %v2333 = vsel %vm139, %v2330, %v2332
  %v2334 = vrot.slane %v2276, 7
  %v2335 = vsel %vm139, %v2332, %v2334
  %v2341 = vsel %vm139, 0.0, %v2327
  %v2342 = vsel %vm160, %v2341, 0.0
  %v2343 = vsel %vm161, %v2329, 0.0
  %v2344 = vsel %vm162, %v2331, 0.0
  %v2345 = vsel %vm163, %v2333, 0.0
  %v2346 = vsel %vm164, %v2335, 0.0
  %v2347 = vrot.slane %v2272, 1
  %v2348 = vrot.slane %v2273, 1
  %v2349 = vsel %vm170, %v2347, %v2348
  %v2350 = vrot.slane %v2274, 1
  %v2351 = vsel %vm170, %v2348, %v2350
  %v2352 = vrot.slane %v2275, 1
  %v2353 = vsel %vm170, %v2350, %v2352
  %v2354 = vrot.slane %v2276, 1
  %v2355 = vsel %vm170, %v2352, %v2354
  %v2361 = vsel %vm185, %v2354, 0.0
  %v2362 = vsel %vm192, %v2349, 0.0
  %v2363 = vsel %vm193, %v2351, 0.0
  %v2364 = vsel %vm194, %v2353, 0.0
  %v2365 = vsel %vm195, %v2355, 0.0
  %v2366 = vsel %vm196, %v2361, 0.0
  %2367 = vrot.lane.b32.xlu0 %v2267, 16
  %v2368 = vpop.permute.xlu0 %2367
  %2369 = vrot.lane.b32.xlu0 %v2268, 16
  %v2370 = vpop.permute.xlu0 %2369
  %2371 = vrot.lane.b32.xlu0 %v2269, 16
  %v2372 = vpop.permute.xlu0 %2371
  %2373 = vrot.lane.b32.xlu0 %v2270, 16
  %v2374 = vpop.permute.xlu0 %2373
  %2375 = vrot.lane.b32.xlu0 %v2271, 16
  %v2376 = vpop.permute.xlu0 %2375
  %2387 = vrot.lane.b32.xlu0 %v2317, 32
  %v2388 = vpop.permute.xlu0 %2387
  %2389 = vrot.lane.b32.xlu0 %v2318, 32
  %v2390 = vpop.permute.xlu0 %2389
  %2391 = vrot.lane.b32.xlu0 %v2319, 32
  %v2392 = vpop.permute.xlu0 %2391
  %2393 = vrot.lane.b32.xlu0 %v2320, 32
  %v2394 = vpop.permute.xlu0 %2393
  %2395 = vrot.lane.b32.xlu0 %v2321, 32
  %v2396 = vpop.permute.xlu0 %2395
  %2407 = vrot.lane.b32.xlu0 %v2342, 48
  %v2408 = vpop.permute.xlu0 %2407
  %2409 = vrot.lane.b32.xlu0 %v2343, 48
  %v2410 = vpop.permute.xlu0 %2409
  %2411 = vrot.lane.b32.xlu0 %v2344, 48
  %v2412 = vpop.permute.xlu0 %2411
  %2413 = vrot.lane.b32.xlu0 %v2345, 48
  %v2414 = vpop.permute.xlu0 %2413
  %2415 = vrot.lane.b32.xlu0 %v2346, 48
  %v2416 = vpop.permute.xlu0 %2415
  %2422 = vrot.lane.b32.xlu0 %v2272, 64
  %v2423 = vpop.permute.xlu0 %2422
  %2424 = vrot.lane.b32.xlu0 %v2273, 64
  %v2425 = vpop.permute.xlu0 %2424
  %2426 = vrot.lane.b32.xlu0 %v2274, 64
  %v2427 = vpop.permute.xlu0 %2426
  %2428 = vrot.lane.b32.xlu0 %v2275, 64
  %v2429 = vpop.permute.xlu0 %2428
  %2430 = vrot.lane.b32.xlu0 %v2276, 64
  %v2431 = vpop.permute.xlu0 %2430
  %2442 = vrot.lane.b32.xlu0 %v2362, 80
  %v2443 = vpop.permute.xlu0 %2442
  %2444 = vrot.lane.b32.xlu0 %v2363, 80
  %v2445 = vpop.permute.xlu0 %2444
  %2446 = vrot.lane.b32.xlu0 %v2364, 80
  %v2447 = vpop.permute.xlu0 %2446
  %2448 = vrot.lane.b32.xlu0 %v2365, 80
  %v2449 = vpop.permute.xlu0 %2448
  %2450 = vrot.lane.b32.xlu0 %v2366, 80
  %v2451 = vpop.permute.xlu0 %2450
  %v2457 = vsel %vm828, %v2297, %v2368
  %v2458 = vsel %vm828, %v2298, %v2370
  %v2459 = vsel %vm828, %v2299, %v2372
  %v2460 = vsel %vm828, %v2300, %v2374
  %v2461 = vsel %vm828, %v2301, %v2376
  %v2462 = vsel %vm237, %v2457, %v2388
  %v2463 = vsel %vm237, %v2458, %v2390
  %v2464 = vsel %vm237, %v2459, %v2392
  %v2465 = vsel %vm237, %v2460, %v2394
  %v2466 = vsel %vm237, %v2461, %v2396
  %v2467 = vsel %vm1050, %v2462, %v2408
  %v2468 = vsel %vm1050, %v2463, %v2410
  %v2469 = vsel %vm1050, %v2464, %v2412
  %v2470 = vsel %vm1050, %v2465, %v2414
  %v2471 = vsel %vm1050, %v2466, %v2416
  %v2472 = vsel %vm243, %v2467, %v2423
  %v2473 = vsel %vm243, %v2468, %v2425
  %v2474 = vsel %vm243, %v2469, %v2427
  %v2475 = vsel %vm243, %v2470, %v2429
  %v2476 = vsel %vm243, %v2471, %v2431
  %v2477 = vsel %vm1061, %v2472, %v2443
  %v2478 = vsel %vm1061, %v2473, %v2445
  %v2479 = vsel %vm1061, %v2474, %v2447
  %v2480 = vsel %vm1061, %v2475, %v2449
  %v2481 = vsel %vm1061, %v2476, %v2451
  %v2482 = vpack.c.bf16 %v2478, %v2477
  %v2483 = vpack.c.bf16 %v2480, %v2479
  %v2484 = vpack.c.bf16 %v2481, %v2481
  %v2485 = vld [vmem:[%s3] sm:$0xf]
  %v2486 = vld [vmem:[%s3 + $0x4] sm:$0xf]
  %v2487 = vld [vmem:[%s3 + $0x8] sm:$0xf]
  %v2488 = vld [vmem:[%s3 + $0xc] sm:$0xf]
  %v2489 = vld [vmem:[%s3 + $0x10] sm:$0xf]
  %v2490 = vld [vmem:[%s3 + $0x14] sm:$0xf]
  %v2491 = vld [vmem:[%s3 + $0x18] sm:$0xf]
  %v2492 = vld [vmem:[%s3 + $0x1c] sm:$0xf]
  %v2493 = vld [vmem:[%s3 + $0x20] sm:$0xf]
  %v2494 = vld [vmem:[%s3 + $0x24] sm:$0xf]
  %v2495 = vld [vmem:[%s3 + $0x28] sm:$0xf]
  %v2496 = vld [vmem:[%s3 + $0x2c] sm:$0xf]
  %v2509 = vunpack.c.l.b16 %v2485
  %v2510 = vunpack.c.l.b16 %v2486
  %v2511 = vunpack.c.l.b16 %v2487
  %v2512 = vunpack.c.l.b16 %v2488
  %v2513 = vunpack.c.l.b16 %v2489
  %v2514 = vunpack.c.l.b16 %v2490
  %v2515 = vunpack.c.l.b16 %v2491
  %v2516 = vunpack.c.l.b16 %v2492
  %v2517 = vunpack.c.l.b16 %v2493
  %v2518 = vunpack.c.l.b16 %v2494
  %v2519 = vunpack.c.l.b16 %v2495
  %v2520 = vunpack.c.l.b16 %v2496
  %v2521 = vpack.c.b16 %v2510, %v2509
  %v2522 = vpack.c.b16 %v2512, %v2511
  %v2523 = vpack.c.b16 %v2514, %v2513
  %v2524 = vpack.c.b16 %v2516, %v2515
  %v2525 = vpack.c.b16 %v2518, %v2517
  %v2526 = vpack.c.b16 %v2520, %v2519
  %v2534 = vsel %vm307, %v2482, 0
  %v2537 = vsel %vm307, %v2483, 0
  %v2540 = vsel %vm307, %v2484, 0
  %2542 = vmatprep.subr.bf16.mxu0 0
  %2543 = vmatpush1.bf16.msra.mxu0 0
  %2544 = vmatprep.subr.bf16.mxu0 0
  %2545 = vmatpush1.bf16.msra.mxu0 0
  %2546 = vmatprep.subr.bf16.mxu0 0
  %2547 = vmatpush1.bf16.msra.mxu0 %v2526
  %2548 = vmatprep.subr.bf16.mxu0 0
  %2549 = vmatpush1.bf16.msra.mxu0 %v2525
  %2550 = vmatprep.subr.bf16.mxu0 0
  %2551 = vmatpush1.bf16.msra.mxu0 %v2524
  %2552 = vmatprep.subr.bf16.mxu0 0
  %2553 = vmatpush1.bf16.msra.mxu0 %v2523
  %2554 = vmatprep.subr.bf16.mxu0 0
  %2555 = vmatpush1.bf16.msra.mxu0 %v2522
  %2556 = vmatprep.subr.bf16.mxu0 0
  %2557 = vmatpush1.bf16.msra.mxu0 %v2521
  %2558 = vmatprep.subr.bf16.mxu0 0
  %2559 = vmatpush2.bf16.msra.mxu0 0
  %2560 = vmatprep.subr.bf16.mxu0 0
  %2561 = vmatpush2.bf16.msra.mxu0 0
  %2562 = vmatprep.subr.bf16.mxu0 0
  %2563 = vmatpush2.bf16.msra.mxu0 0
  %2564 = vmatprep.subr.bf16.mxu0 0
  %2565 = vmatpush2.bf16.msra.mxu0 0
  %2566 = vmatprep.subr.bf16.mxu0 0
  %2567 = vmatpush2.bf16.msra.mxu0 0
  %2568 = vmatprep.subr.bf16.mxu0 0
  %2569 = vmatpush2.bf16.msra.mxu0 0
  %2570 = vmatprep.subr.bf16.mxu0 0
  %2571 = vmatpush2.bf16.msra.mxu0 0
  %2572 = vmatprep.subr.bf16.mxu0 0
  %2573 = vmatpush2.bf16.msra.mxu0 0
  %2574 = vmatprep.mubr.bf16.mxu0 0
  %2575 = vmatmul.mubr.bf16.gmra.mxu0 %v2534
  %v2576 = vpop.f32.mrf.mxu0
  %v2577 = vadd.f32 0.0, %v2576
  %v2578 = vpop.f32.mrf.mxu0
  %v2579 = vpop.f32.mrf.mxu0
  %v2580 = vadd.f32 0.0, %v2579
  %v2581 = vpop.f32.mrf.mxu0
  %2582 = vmatprep.mubr.bf16.mxu0 0
  %2583 = vmatmul.mubr.bf16.gmra.mxu0 %v2537
  %v2584 = vpop.f32.mrf.mxu0
  %v2585 = vadd.f32 0.0, %v2584
  %v2586 = vpop.f32.mrf.mxu0
  %v2587 = vpop.f32.mrf.mxu0
  %v2588 = vadd.f32 0.0, %v2587
  %v2589 = vpop.f32.mrf.mxu0
  %2590 = vmatprep.mubr.bf16.mxu0 0
  %2591 = vmatmul.mubr.bf16.gmra.mxu0 %v2540
  %v2592 = vpop.f32.mrf.mxu0
  %v2593 = vadd.f32 0.0, %v2592
  %v2594 = vpop.f32.mrf.mxu0
  %v2595 = vpop.f32.mrf.mxu0
  %v2596 = vpop.f32.mrf.mxu0
  %2597 = vdwg.mxu0
  %v2598 = vld [vmem:[%s822] sm:$0xff]
  %v2599 = vld [vmem:[%s822 + $0x8] sm:$0xff]
  %v2600 = vld [vmem:[%s822 + $0x10] sm:$0xff]
  %v2601 = vld [vmem:[%s822 + $0x18] sm:$0xff]
  %v2602 = vld [vmem:[%s822 + $0x20] sm:$0x3f]
  %v2603 = vadd.f32 %v2598, %v2577
  %v2604 = vadd.f32 %v2599, %v2580
  %v2605 = vadd.f32 %v2600, %v2585
  %v2606 = vadd.f32 %v2601, %v2588
  %v2607 = vadd.f32 %v2602, %v2593
  %v2608 = vld [vmem:[#allocation2] sm:$0xff]
  %v2609 = vld [vmem:[#allocation2 + $0x8] sm:$0xff]
  %v2610 = vld [vmem:[#allocation2 + $0x10] sm:$0xff]
  %v2611 = vld [vmem:[#allocation2 + $0x18] sm:$0xff]
  %v2612 = vld [vmem:[#allocation2 + $0x20] sm:$0x3f]
  %v2613 = vadd.f32 %v2608, %v2577
  %v2614 = vadd.f32 %v2609, %v2580
  %v2615 = vadd.f32 %v2610, %v2585
  %v2616 = vadd.f32 %v2611, %v2588
  %v2617 = vadd.f32 %v2612, %v2593
  %v2618 = vld [vmem:[#allocation4] sm:$0xff]
  %v2619 = vld [vmem:[#allocation4 + $0x8] sm:$0xff]
  %v2620 = vld [vmem:[#allocation4 + $0x10] sm:$0xff]
  %v2621 = vld [vmem:[#allocation4 + $0x18] sm:$0xff]
  %v2622 = vld [vmem:[#allocation4 + $0x20] sm:$0x3f]
  %v2623 = vxor.u32 %v2603, 2147483648
  %v2624 = vxor.u32 %v2604, 2147483648
  %v2625 = vxor.u32 %v2605, 2147483648
  %v2626 = vxor.u32 %v2606, 2147483648
  %v2627 = vxor.u32 %v2607, 2147483648
  %v2628 = vmul.f32 %v2623, 1.442695
  %v2629 = vpow.pop %v2628
  %v2630 = vmul.f32 %v2624, 1.442695
  %v2631 = vpow.pop %v2630
  %v2632 = vmul.f32 %v2625, 1.442695
  %v2633 = vpow.pop %v2632
  %v2634 = vmul.f32 %v2626, 1.442695
  %v2635 = vpow.pop %v2634
  %v2636 = vmul.f32 %v2627, 1.442695
  %v2637 = vpow.pop %v2636
  %v2638 = vadd.f32 %v2629, 1.0
  %v2639 = vadd.f32 %v2631, 1.0
  %v2640 = vadd.f32 %v2633, 1.0
  %v2641 = vadd.f32 %v2635, 1.0
  %v2642 = vadd.f32 %v2637, 1.0
  %v2643 = vrcp.pop %v2638
  %v2644 = vmul.f32 1.0, %v2643
  %v2645 = vrcp.pop %v2639
  %v2646 = vmul.f32 1.0, %v2645
  %v2647 = vrcp.pop %v2640
  %v2648 = vmul.f32 1.0, %v2647
  %v2649 = vrcp.pop %v2641
  %v2650 = vmul.f32 1.0, %v2649
  %v2651 = vrcp.pop %v2642
  %v2652 = vmul.f32 1.0, %v2651
  %v2653 = vtanh.pop %v2603
  %v2654 = vtanh.pop %v2604
  %v2655 = vtanh.pop %v2605
  %v2656 = vtanh.pop %v2606
  %v2657 = vtanh.pop %v2607
  %2663 = vrot.lane.b32.xlu0 %v2618, 16
  %v2664 = vpop.permute.xlu0 %2663
  %2665 = vrot.lane.b32.xlu0 %v2619, 16
  %v2666 = vpop.permute.xlu0 %2665
  %2667 = vrot.lane.b32.xlu0 %v2620, 16
  %v2668 = vpop.permute.xlu0 %2667
  %2669 = vrot.lane.b32.xlu0 %v2621, 16
  %v2670 = vpop.permute.xlu0 %2669
  %2671 = vrot.lane.b32.xlu0 %v2622, 16
  %v2672 = vpop.permute.xlu0 %2671
  %v2678 = vmul.f32 %v2644, %v2664
  %v2679 = vmul.f32 %v2646, %v2666
  %v2680 = vmul.f32 %v2648, %v2668
  %v2681 = vmul.f32 %v2650, %v2670
  %v2682 = vmul.f32 %v2652, %v2672
  %2688 = vrot.lane.b32.xlu0 %v2653, 80
  %v2689 = vpop.permute.xlu0 %2688
  %2690 = vrot.lane.b32.xlu0 %v2654, 80
  %v2691 = vpop.permute.xlu0 %2690
  %2692 = vrot.lane.b32.xlu0 %v2655, 80
  %v2693 = vpop.permute.xlu0 %2692
  %2694 = vrot.lane.b32.xlu0 %v2656, 80
  %v2695 = vpop.permute.xlu0 %2694
  %2696 = vrot.lane.b32.xlu0 %v2657, 80
  %v2697 = vpop.permute.xlu0 %2696
  %v2703 = vmul.f32 %v2644, %v2689
  %v2704 = vmul.f32 %v2646, %v2691
  %v2705 = vmul.f32 %v2648, %v2693
  %v2706 = vmul.f32 %v2650, %v2695
  %v2707 = vmul.f32 %v2652, %v2697
  %2713 = vrot.lane.b32.xlu0 %v2703, 16
  %v2714 = vpop.permute.xlu0 %2713
  %2715 = vrot.lane.b32.xlu0 %v2704, 16
  %v2716 = vpop.permute.xlu0 %2715
  %2717 = vrot.lane.b32.xlu0 %v2705, 16
  %v2718 = vpop.permute.xlu0 %2717
  %2719 = vrot.lane.b32.xlu0 %v2706, 16
  %v2720 = vpop.permute.xlu0 %2719
  %2721 = vrot.lane.b32.xlu0 %v2707, 16
  %v2722 = vpop.permute.xlu0 %2721
  %v2728 = vadd.f32 %v2678, %v2714
  %v2729 = vadd.f32 %v2679, %v2716
  %v2730 = vadd.f32 %v2680, %v2718
  %v2731 = vadd.f32 %v2681, %v2720
  %v2732 = vadd.f32 %v2682, %v2722
  %v2733 = vtanh.pop %v2728
  %v2734 = vtanh.pop %v2729
  %v2735 = vtanh.pop %v2730
  %v2736 = vtanh.pop %v2731
  %v2737 = vtanh.pop %v2732
  %2743 = vrot.lane.b32.xlu0 %v2733, 16
  %v2744 = vpop.permute.xlu0 %2743
  %2745 = vrot.lane.b32.xlu0 %v2734, 16
  %v2746 = vpop.permute.xlu0 %2745
  %2747 = vrot.lane.b32.xlu0 %v2735, 16
  %v2748 = vpop.permute.xlu0 %2747
  %2749 = vrot.lane.b32.xlu0 %v2736, 16
  %v2750 = vpop.permute.xlu0 %2749
  %2751 = vrot.lane.b32.xlu0 %v2737, 16
  %v2752 = vpop.permute.xlu0 %2751
  %v2758 = vmul.f32 %v2644, %v2744
  %v2759 = vmul.f32 %v2646, %v2746
  %v2760 = vmul.f32 %v2648, %v2748
  %v2761 = vmul.f32 %v2650, %v2750
  %v2762 = vmul.f32 %v2652, %v2752
  %2768 = vrot.lane.b32.xlu0 %v2758, 96
  %v2769 = vpop.permute.xlu0 %2768
  %2770 = vrot.lane.b32.xlu0 %v2759, 96
  %v2771 = vpop.permute.xlu0 %2770
  %2772 = vrot.lane.b32.xlu0 %v2760, 96
  %v2773 = vpop.permute.xlu0 %2772
  %2774 = vrot.lane.b32.xlu0 %v2761, 96
  %v2775 = vpop.permute.xlu0 %2774
  %2776 = vrot.lane.b32.xlu0 %v2762, 96
  %v2777 = vpop.permute.xlu0 %2776
  %2783 = vst.msk [vmem:[#allocation3] sm:$0xff] %vm828, %v2769
  %2784 = vst.msk [vmem:[#allocation3 + $0x8] sm:$0xff] %vm828, %v2771
  %2785 = vst.msk [vmem:[#allocation3 + $0x10] sm:$0xff] %vm828, %v2773
  %2786 = vst.msk [vmem:[#allocation3 + $0x18] sm:$0xff] %vm828, %v2775
  %2787 = vst.msk [vmem:[#allocation3 + $0x20] sm:$0x3f] %vm833, %v2777
  %2793 = vrot.lane.b32.xlu0 %v2728, 112
  %v2794 = vpop.permute.xlu0 %2793
  %2795 = vrot.lane.b32.xlu0 %v2729, 112
  %v2796 = vpop.permute.xlu0 %2795
  %2797 = vrot.lane.b32.xlu0 %v2730, 112
  %v2798 = vpop.permute.xlu0 %2797
  %2799 = vrot.lane.b32.xlu0 %v2731, 112
  %v2800 = vpop.permute.xlu0 %2799
  %2801 = vrot.lane.b32.xlu0 %v2732, 112
  %v2802 = vpop.permute.xlu0 %2801
  %2808 = vst.msk [vmem:[#allocation4] sm:$0xff] %vm828, %v2794
  %2809 = vst.msk [vmem:[#allocation4 + $0x8] sm:$0xff] %vm828, %v2796
  %2810 = vst.msk [vmem:[#allocation4 + $0x10] sm:$0xff] %vm828, %v2798
  %2811 = vst.msk [vmem:[#allocation4 + $0x18] sm:$0xff] %vm828, %v2800
  %2812 = vst.msk [vmem:[#allocation4 + $0x20] sm:$0x3f] %vm833, %v2802
  %s2813 = scalar_lea.vmem [#allocation7], 80
  %2814 = vst.msk [vmem:[%s2813] sm:$0xff] %vm828, %v2769
  %2815 = vst.msk [vmem:[%s2813 + $0x8] sm:$0xff] %vm828, %v2771
  %2816 = vst.msk [vmem:[%s2813 + $0x10] sm:$0xff] %vm828, %v2773
  %2817 = vst.msk [vmem:[%s2813 + $0x18] sm:$0xff] %vm828, %v2775
  %2818 = vst.msk [vmem:[%s2813 + $0x20] sm:$0x3f] %vm833, %v2777
  %v2819 = vld [vmem:[#allocation6] sm:$0xff]
  %v2820 = vld [vmem:[#allocation6 + $0x8] sm:$0xff]
  %v2821 = vld [vmem:[#allocation6 + $0x10] sm:$0xff]
  %v2822 = vld [vmem:[#allocation6 + $0x18] sm:$0xff]
  %v2823 = vld [vmem:[#allocation6 + $0x20] sm:$0x3f]
  %v2824 = vxor.u32 %v2613, 2147483648
  %v2825 = vxor.u32 %v2614, 2147483648
  %v2826 = vxor.u32 %v2615, 2147483648
  %v2827 = vxor.u32 %v2616, 2147483648
  %v2828 = vxor.u32 %v2617, 2147483648
  %v2829 = vmul.f32 %v2824, 1.442695
  %v2830 = vpow.pop %v2829
  %v2831 = vmul.f32 %v2825, 1.442695
  %v2832 = vpow.pop %v2831
  %v2833 = vmul.f32 %v2826, 1.442695
  %v2834 = vpow.pop %v2833
  %v2835 = vmul.f32 %v2827, 1.442695
  %v2836 = vpow.pop %v2835
  %v2837 = vmul.f32 %v2828, 1.442695
  %v2838 = vpow.pop %v2837
  %v2839 = vadd.f32 %v2830, 1.0
  %v2840 = vadd.f32 %v2832, 1.0
  %v2841 = vadd.f32 %v2834, 1.0
  %v2842 = vadd.f32 %v2836, 1.0
  %v2843 = vadd.f32 %v2838, 1.0
  %v2844 = vrcp.pop %v2839
  %v2845 = vmul.f32 1.0, %v2844
  %v2846 = vrcp.pop %v2840
  %v2847 = vmul.f32 1.0, %v2846
  %v2848 = vrcp.pop %v2841
  %v2849 = vmul.f32 1.0, %v2848
  %v2850 = vrcp.pop %v2842
  %v2851 = vmul.f32 1.0, %v2850
  %v2852 = vrcp.pop %v2843
  %v2853 = vmul.f32 1.0, %v2852
  %v2854 = vtanh.pop %v2613
  %v2855 = vtanh.pop %v2614
  %v2856 = vtanh.pop %v2615
  %v2857 = vtanh.pop %v2616
  %v2858 = vtanh.pop %v2617
  %2864 = vrot.lane.b32.xlu0 %v2819, 80
  %v2865 = vpop.permute.xlu0 %2864
  %2866 = vrot.lane.b32.xlu0 %v2820, 80
  %v2867 = vpop.permute.xlu0 %2866
  %2868 = vrot.lane.b32.xlu0 %v2821, 80
  %v2869 = vpop.permute.xlu0 %2868
  %2870 = vrot.lane.b32.xlu0 %v2822, 80
  %v2871 = vpop.permute.xlu0 %2870
  %2872 = vrot.lane.b32.xlu0 %v2823, 80
  %v2873 = vpop.permute.xlu0 %2872
  %v2879 = vmul.f32 %v2845, %v2865
  %v2880 = vmul.f32 %v2847, %v2867
  %v2881 = vmul.f32 %v2849, %v2869
  %v2882 = vmul.f32 %v2851, %v2871
  %v2883 = vmul.f32 %v2853, %v2873
  %2889 = vrot.lane.b32.xlu0 %v2854, 80
  %v2890 = vpop.permute.xlu0 %2889
  %2891 = vrot.lane.b32.xlu0 %v2855, 80
  %v2892 = vpop.permute.xlu0 %2891
  %2893 = vrot.lane.b32.xlu0 %v2856, 80
  %v2894 = vpop.permute.xlu0 %2893
  %2895 = vrot.lane.b32.xlu0 %v2857, 80
  %v2896 = vpop.permute.xlu0 %2895
  %2897 = vrot.lane.b32.xlu0 %v2858, 80
  %v2898 = vpop.permute.xlu0 %2897
  %v2904 = vmul.f32 %v2845, %v2890
  %v2905 = vmul.f32 %v2847, %v2892
  %v2906 = vmul.f32 %v2849, %v2894
  %v2907 = vmul.f32 %v2851, %v2896
  %v2908 = vmul.f32 %v2853, %v2898
  %2914 = vrot.lane.b32.xlu0 %v2904, 16
  %v2915 = vpop.permute.xlu0 %2914
  %2916 = vrot.lane.b32.xlu0 %v2905, 16
  %v2917 = vpop.permute.xlu0 %2916
  %2918 = vrot.lane.b32.xlu0 %v2906, 16
  %v2919 = vpop.permute.xlu0 %2918
  %2920 = vrot.lane.b32.xlu0 %v2907, 16
  %v2921 = vpop.permute.xlu0 %2920
  %2922 = vrot.lane.b32.xlu0 %v2908, 16
  %v2923 = vpop.permute.xlu0 %2922
  %v2929 = vadd.f32 %v2879, %v2915
  %v2930 = vadd.f32 %v2880, %v2917
  %v2931 = vadd.f32 %v2881, %v2919
  %v2932 = vadd.f32 %v2882, %v2921
  %v2933 = vadd.f32 %v2883, %v2923
  %v2934 = vtanh.pop %v2929
  %v2935 = vtanh.pop %v2930
  %v2936 = vtanh.pop %v2931
  %v2937 = vtanh.pop %v2932
  %v2938 = vtanh.pop %v2933
  %2944 = vrot.lane.b32.xlu0 %v2934, 16
  %v2945 = vpop.permute.xlu0 %2944
  %2946 = vrot.lane.b32.xlu0 %v2935, 16
  %v2947 = vpop.permute.xlu0 %2946
  %2948 = vrot.lane.b32.xlu0 %v2936, 16
  %v2949 = vpop.permute.xlu0 %2948
  %2950 = vrot.lane.b32.xlu0 %v2937, 16
  %v2951 = vpop.permute.xlu0 %2950
  %2952 = vrot.lane.b32.xlu0 %v2938, 16
  %v2953 = vpop.permute.xlu0 %2952
  %v2959 = vmul.f32 %v2845, %v2945
  %v2960 = vmul.f32 %v2847, %v2947
  %v2961 = vmul.f32 %v2849, %v2949
  %v2962 = vmul.f32 %v2851, %v2951
  %v2963 = vmul.f32 %v2853, %v2953
  %2969 = vrot.lane.b32.xlu0 %v2959, 32
  %v2970 = vpop.permute.xlu0 %2969
  %2971 = vrot.lane.b32.xlu0 %v2960, 32
  %v2972 = vpop.permute.xlu0 %2971
  %2973 = vrot.lane.b32.xlu0 %v2961, 32
  %v2974 = vpop.permute.xlu0 %2973
  %2975 = vrot.lane.b32.xlu0 %v2962, 32
  %v2976 = vpop.permute.xlu0 %2975
  %2977 = vrot.lane.b32.xlu0 %v2963, 32
  %v2978 = vpop.permute.xlu0 %2977
  %2984 = vst.msk [vmem:[#allocation5] sm:$0xff] %vm828, %v2970
  %2985 = vst.msk [vmem:[#allocation5 + $0x8] sm:$0xff] %vm828, %v2972
  %2986 = vst.msk [vmem:[#allocation5 + $0x10] sm:$0xff] %vm828, %v2974
  %2987 = vst.msk [vmem:[#allocation5 + $0x18] sm:$0xff] %vm828, %v2976
  %2988 = vst.msk [vmem:[#allocation5 + $0x20] sm:$0x3f] %vm833, %v2978
  %2994 = vrot.lane.b32.xlu0 %v2929, 48
  %v2995 = vpop.permute.xlu0 %2994
  %2996 = vrot.lane.b32.xlu0 %v2930, 48
  %v2997 = vpop.permute.xlu0 %2996
  %2998 = vrot.lane.b32.xlu0 %v2931, 48
  %v2999 = vpop.permute.xlu0 %2998
  %3000 = vrot.lane.b32.xlu0 %v2932, 48
  %v3001 = vpop.permute.xlu0 %3000
  %3002 = vrot.lane.b32.xlu0 %v2933, 48
  %v3003 = vpop.permute.xlu0 %3002
  %3009 = vst.msk [vmem:[#allocation6] sm:$0xff] %vm828, %v2995
  %3010 = vst.msk [vmem:[#allocation6 + $0x8] sm:$0xff] %vm828, %v2997
  %3011 = vst.msk [vmem:[#allocation6 + $0x10] sm:$0xff] %vm828, %v2999
  %3012 = vst.msk [vmem:[#allocation6 + $0x18] sm:$0xff] %vm828, %v3001
  %3013 = vst.msk [vmem:[#allocation6 + $0x20] sm:$0x3f] %vm833, %v3003
  %3014 = vst.msk [vmem:[#allocation8] sm:$0xff] %vm828, %v2970
  %3015 = vst.msk [vmem:[#allocation8 + $0x8] sm:$0xff] %vm828, %v2972
  %3016 = vst.msk [vmem:[#allocation8 + $0x10] sm:$0xff] %vm828, %v2974
  %3017 = vst.msk [vmem:[#allocation8 + $0x18] sm:$0xff] %vm828, %v2976
  %3018 = vst.msk [vmem:[#allocation8 + $0x20] sm:$0x3f] %vm833, %v2978
  %v3019 = vld [vmem:[#allocation7] sm:$0xff]
  %v3020 = vld [vmem:[#allocation7 + $0x8] sm:$0xff]
  %v3021 = vld [vmem:[#allocation7 + $0x10] sm:$0xff]
  %v3022 = vld [vmem:[#allocation7 + $0x18] sm:$0xff]
  %v3023 = vld [vmem:[#allocation7 + $0x20] sm:$0x3f]
  %v3024 = vld [vmem:[#allocation7 + $0x28] sm:$0xff]
  %v3025 = vld [vmem:[#allocation7 + $0x30] sm:$0xff]
  %v3026 = vld [vmem:[#allocation7 + $0x38] sm:$0xff]
  %v3027 = vld [vmem:[#allocation7 + $0x40] sm:$0xff]
  %v3028 = vld [vmem:[#allocation7 + $0x48] sm:$0x3f]
  %v3029 = vld [vmem:[#allocation7 + $0x50] sm:$0xff]
  %v3030 = vld [vmem:[#allocation7 + $0x58] sm:$0xff]
  %v3031 = vld [vmem:[#allocation7 + $0x60] sm:$0xff]
  %v3032 = vld [vmem:[#allocation7 + $0x68] sm:$0xff]
  %v3033 = vld [vmem:[#allocation7 + $0x70] sm:$0x3f]
  %v3034 = vld [vmem:[#allocation8] sm:$0xff]
  %v3035 = vld [vmem:[#allocation8 + $0x8] sm:$0xff]
  %v3036 = vld [vmem:[#allocation8 + $0x10] sm:$0xff]
  %v3037 = vld [vmem:[#allocation8 + $0x18] sm:$0xff]
  %v3038 = vld [vmem:[#allocation8 + $0x20] sm:$0x3f]
  %v3039 = vld [vmem:[#allocation8 + $0x28] sm:$0xff]
  %v3040 = vld [vmem:[#allocation8 + $0x30] sm:$0xff]
  %v3041 = vld [vmem:[#allocation8 + $0x38] sm:$0xff]
  %v3042 = vld [vmem:[#allocation8 + $0x40] sm:$0xff]
  %v3043 = vld [vmem:[#allocation8 + $0x48] sm:$0x3f]
  %v3044 = vld [vmem:[#allocation8 + $0x50] sm:$0xff]
  %v3045 = vld [vmem:[#allocation8 + $0x58] sm:$0xff]
  %v3046 = vld [vmem:[#allocation8 + $0x60] sm:$0xff]
  %v3047 = vld [vmem:[#allocation8 + $0x68] sm:$0xff]
  %v3048 = vld [vmem:[#allocation8 + $0x70] sm:$0x3f]
  %3064 = vrot.lane.b32.xlu0 %v3034, 16
  %v3065 = vpop.permute.xlu0 %3064
  %3066 = vrot.lane.b32.xlu0 %v3035, 16
  %v3067 = vpop.permute.xlu0 %3066
  %3068 = vrot.lane.b32.xlu0 %v3036, 16
  %v3069 = vpop.permute.xlu0 %3068
  %3070 = vrot.lane.b32.xlu0 %v3037, 16
  %v3071 = vpop.permute.xlu0 %3070
  %3072 = vrot.lane.b32.xlu0 %v3038, 16
  %v3073 = vpop.permute.xlu0 %3072
  %3074 = vrot.lane.b32.xlu0 %v3039, 16
  %v3075 = vpop.permute.xlu0 %3074
  %3076 = vrot.lane.b32.xlu0 %v3040, 16
  %v3077 = vpop.permute.xlu0 %3076
  %3078 = vrot.lane.b32.xlu0 %v3041, 16
  %v3079 = vpop.permute.xlu0 %3078
  %3080 = vrot.lane.b32.xlu0 %v3042, 16
  %v3081 = vpop.permute.xlu0 %3080
  %3082 = vrot.lane.b32.xlu0 %v3043, 16
  %v3083 = vpop.permute.xlu0 %3082
  %3084 = vrot.lane.b32.xlu0 %v3044, 16
  %v3085 = vpop.permute.xlu0 %3084
  %3086 = vrot.lane.b32.xlu0 %v3045, 16
  %v3087 = vpop.permute.xlu0 %3086
  %3088 = vrot.lane.b32.xlu0 %v3046, 16
  %v3089 = vpop.permute.xlu0 %3088
  %3090 = vrot.lane.b32.xlu0 %v3047, 16
  %v3091 = vpop.permute.xlu0 %3090
  %3092 = vrot.lane.b32.xlu0 %v3048, 16
  %v3093 = vpop.permute.xlu0 %3092
  %v3109 = vsel %vm828, %v3019, %v3065
  %v3110 = vsel %vm828, %v3020, %v3067
  %v3111 = vsel %vm828, %v3021, %v3069
  %v3112 = vsel %vm828, %v3022, %v3071
  %v3113 = vsel %vm828, %v3023, %v3073
  %v3114 = vsel %vm828, %v3024, %v3075
  %v3115 = vsel %vm828, %v3025, %v3077
  %v3116 = vsel %vm828, %v3026, %v3079
  %v3117 = vsel %vm828, %v3027, %v3081
  %v3118 = vsel %vm828, %v3028, %v3083
  %v3119 = vsel %vm828, %v3029, %v3085
  %v3120 = vsel %vm828, %v3030, %v3087
  %v3121 = vsel %vm828, %v3031, %v3089
  %v3122 = vsel %vm828, %v3032, %v3091
  %v3123 = vsel %vm828, %v3033, %v3093
  %3124 = vst.msk [vmem:[%s4] sm:$0xff] %vm237, %v3109
  %3125 = vst.msk [vmem:[%s4 + $0x8] sm:$0xff] %vm237, %v3110
  %3126 = vst.msk [vmem:[%s4 + $0x10] sm:$0xff] %vm237, %v3111
  %3127 = vst.msk [vmem:[%s4 + $0x18] sm:$0xff] %vm237, %v3112
  %vm3128 = vcmask 259072
  %3129 = vst.msk [vmem:[%s4 + $0x20] sm:$0x3f] %vm3128, %v3113
  %3130 = vst.msk [vmem:[%s4 + $0x28] sm:$0xff] %vm237, %v3114
  %3131 = vst.msk [vmem:[%s4 + $0x30] sm:$0xff] %vm237, %v3115
  %3132 = vst.msk [vmem:[%s4 + $0x38] sm:$0xff] %vm237, %v3116
  %3133 = vst.msk [vmem:[%s4 + $0x40] sm:$0xff] %vm237, %v3117
  %3134 = vst.msk [vmem:[%s4 + $0x48] sm:$0x3f] %vm3128, %v3118
  %3135 = vst.msk [vmem:[%s4 + $0x50] sm:$0xff] %vm237, %v3119
  %3136 = vst.msk [vmem:[%s4 + $0x58] sm:$0xff] %vm237, %v3120
  %3137 = vst.msk [vmem:[%s4 + $0x60] sm:$0xff] %vm237, %v3121
  %3138 = vst.msk [vmem:[%s4 + $0x68] sm:$0xff] %vm237, %v3122
  %3139 = vst.msk [vmem:[%s4 + $0x70] sm:$0x3f] %vm3128, %v3123
  // Predicated region
  $region18: #{encoder_forward.11} parent=0 // pred_check
    _
  $region19: #{encoder_forward.11} parent=0 // pred_check_branch
    %3141 = sbr.rel (0) target = $region21
  $region20: #{encoder_forward.11} parent=0 // pred_region
    _
  $region21: #{encoder_forward.11} parent=0 // pred_fallthru
    _
  // Predicated region
  $region22: #{encoder_forward.11} parent=0 // pred_check
    _
  $region23: #{encoder_forward.11} parent=0 // pred_check_branch
    %3143 = sbr.rel (0) target = $region25
  $region24: #{encoder_forward.11} parent=0 // pred_region
    _
  $region25: #{encoder_forward.11} parent=0 // pred_fallthru
    _

// kernel: encoder_forward.12
$region0: #{encoder_forward.12}
  #allocation0 [shape = 'u32[]', space=smem, size = 0x4, offset = 0x4, fixed_abs, tag = 'smem constant byte address 0x4 - core index']
  #allocation1 [shape = 'u32[144,128]{1,0:T(1,128)}', space=vmem, size = 0x12000, scoped, tag = 'internal scratch']
  #allocation2 [shape = 'f32[3,2,256]{2,1,0:T(2,128)}', space=vmem, size = 0x1800, scoped, tag = 'scratch operand']
  #allocation3 [shape = 'f32[2,32]{1,0:T(2,128)}', space=vmem, size = 0x400, scoped, tag = 'scratch operand']
  #allocation4 [shape = 'f32[2,32]{1,0:T(2,128)}', space=vmem, size = 0x400, scoped, tag = 'scratch operand']
  #allocation5 [shape = 'f32[2,32]{1,0:T(2,128)}', space=vmem, size = 0x400, scoped, tag = 'scratch operand']
  #allocation6 [shape = 'f32[2,32]{1,0:T(2,128)}', space=vmem, size = 0x400, scoped, tag = 'scratch operand']
  #allocation7 [shape = 'f32[3,2,32]{2,1,0:T(2,128)}', space=vmem, size = 0xc00, scoped, tag = 'scratch operand']
  #allocation8 [shape = 'f32[3,2,32]{2,1,0:T(2,128)}', space=vmem, size = 0xc00, scoped, tag = 'scratch operand']
  %s0 = inlined_call_operand.vmem [shape: f32[3,2,608], index: 0, kind: input, shape index: {}]
  %s1 = inlined_call_operand.vmem [shape: bf16[608,256], index: 1, kind: input, shape index: {}]
  %s2 = inlined_call_operand.vmem [shape: f32[1,256], index: 2, kind: input, shape index: {}]
  %s3 = inlined_call_operand.vmem [shape: bf16[64,256], index: 3, kind: input, shape index: {}]
  %s4 = inlined_call_operand.vmem [shape: f32[3,2,64], index: 4, kind: output, shape index: {}]
  %s5 = sld [smem:[#allocation0]]
  $region26: #{encoder_forward.12} parent=0
    _
  %s7 = ssub.s32 1, %s5
  %s8 = scalar_select 0, %s7, %s5
  // Predicated region
  $region2: #{encoder_forward.12} parent=0 // pred_check
    _
  $region3: #{encoder_forward.12} parent=0 // pred_check_branch
    %10 = sbr.rel (0) target = $region5
  $region4: #{encoder_forward.12} parent=0 // pred_region
    _
  $region5: #{encoder_forward.12} parent=0 // pred_fallthru
    _
  // Predicated region
  $region6: #{encoder_forward.12} parent=0 // pred_check
    _
  $region7: #{encoder_forward.12} parent=0 // pred_check_branch
    %12 = sbr.rel (0) target = $region9
  $region8: #{encoder_forward.12} parent=0 // pred_region
    _
  $region9: #{encoder_forward.12} parent=0 // pred_fallthru
    _
  // Predicated region
  $region10: #{encoder_forward.12} parent=0 // pred_check
    _
  $region11: #{encoder_forward.12} parent=0 // pred_check_branch
    %14 = sbr.rel (0) target = $region13
  $region12: #{encoder_forward.12} parent=0 // pred_region
    _
  $region13: #{encoder_forward.12} parent=0 // pred_fallthru
    _
  // Predicated region
  $region14: #{encoder_forward.12} parent=0 // pred_check
    _
  $region15: #{encoder_forward.12} parent=0 // pred_check_branch
    %16 = sbr.rel (0) target = $region17
  $region16: #{encoder_forward.12} parent=0 // pred_region
    _
  $region17: #{encoder_forward.12} parent=0 // pred_fallthru
    _
  %v18 = vld [vmem:[%s0] sm:$0xff]
  %v19 = vld [vmem:[%s0 + $0x8] sm:$0x3]
  %v22 = vcombine.high %v18, %v18
  %v24 = vunpack.c.l.s4 1983009808
  %v25 = vunpack.c.0.s8 %v24
  %v26 = vlaneseq
  %v27 = vshrl.u32 %v26, 7
  %v28 = vsub.s32 %v25, %v27
  %v29 = vrot.slane %v18, %v28
  %v31 = vunpack.c.l.s4 1983009808
  %v32 = vunpack.c.0.s8 %v31
  %v33 = vlaneseq
  %v34 = vshrl.u32 %v33, 7
  %v35 = vsub.s32 %v32, %v34
  %v36 = vrot.slane %v22, %v35
  %v37 = vcombine.high %v29, %v29
  %v38 = vcombine.high %v36, %v36
  %v40 = vunpack.c.l.s4 1983009808
  %v41 = vunpack.c.0.s8 %v40
  %v42 = vlaneseq
  %v43 = vshrl.u32 %v42, 7
  %v44 = vsub.s32 %v41, %v43
  %v45 = vrot.slane %v19, %v44
  %v51 = vpack.c.bf16 %v29, %v29
  %v52 = vpack.c.bf16 %v37, %v37
  %v53 = vpack.c.bf16 %v36, %v36
  %v54 = vpack.c.bf16 %v38, %v38
  %v55 = vpack.c.bf16 %v45, %v45
  %v56 = vld [vmem:[%s1] sm:$0xff]
  %v57 = vld [vmem:[%s1 + $0x8] sm:$0xff]
  %v58 = vld [vmem:[%s1 + $0x10] sm:$0xff]
  %v59 = vld [vmem:[%s1 + $0x18] sm:$0xff]
  %v60 = vld [vmem:[%s1 + $0x20] sm:$0xff]
  %v61 = vld [vmem:[%s1 + $0x28] sm:$0xff]
  %v62 = vld [vmem:[%s1 + $0x30] sm:$0xff]
  %v63 = vld [vmem:[%s1 + $0x38] sm:$0xff]
  %v64 = vld [vmem:[%s1 + $0x40] sm:$0xff]
  %v65 = vld [vmem:[%s1 + $0x48] sm:$0xff]
  %v66 = vld [vmem:[%s1 + $0x50] sm:$0xff]
  %v67 = vld [vmem:[%s1 + $0x58] sm:$0xff]
  %v68 = vld [vmem:[%s1 + $0x60] sm:$0xff]
  %v69 = vld [vmem:[%s1 + $0x68] sm:$0xff]
  %v70 = vld [vmem:[%s1 + $0x70] sm:$0xff]
  %v71 = vld [vmem:[%s1 + $0x78] sm:$0xff]
  %v72 = vld [vmem:[%s1 + $0x80] sm:$0xff]
  %v73 = vld [vmem:[%s1 + $0x88] sm:$0xff]
  %v74 = vld [vmem:[%s1 + $0x90] sm:$0xff]
  %v75 = vld [vmem:[%s1 + $0x98] sm:$0xff]
  %v76 = vld [vmem:[%s1 + $0xa0] sm:$0xff]
  %v77 = vld [vmem:[%s1 + $0xa8] sm:$0xff]
  %v78 = vld [vmem:[%s1 + $0xb0] sm:$0xff]
  %v79 = vld [vmem:[%s1 + $0xb8] sm:$0xff]
  %v80 = vld [vmem:[%s1 + $0xc0] sm:$0xff]
  %v81 = vld [vmem:[%s1 + $0xc8] sm:$0xff]
  %v82 = vld [vmem:[%s1 + $0xd0] sm:$0xff]
  %v83 = vld [vmem:[%s1 + $0xd8] sm:$0xff]
  %v84 = vld [vmem:[%s1 + $0xe0] sm:$0xff]
  %v85 = vld [vmem:[%s1 + $0xe8] sm:$0xff]
  %v86 = vld [vmem:[%s1 + $0xf0] sm:$0xff]
  %v87 = vld [vmem:[%s1 + $0xf8] sm:$0xff]
  %v88 = vld [vmem:[%s1 + $0x100] sm:$0xff]
  %v89 = vld [vmem:[%s1 + $0x108] sm:$0xff]
  %v90 = vld [vmem:[%s1 + $0x110] sm:$0xff]
  %v91 = vld [vmem:[%s1 + $0x118] sm:$0xff]
  %v92 = vld [vmem:[%s1 + $0x120] sm:$0xff]
  %v93 = vld [vmem:[%s1 + $0x128] sm:$0xff]
  %v94 = vld [vmem:[%s1 + $0x130] sm:$0xff]
  %v95 = vld [vmem:[%s1 + $0x138] sm:$0xff]
  %v96 = vld [vmem:[%s1 + $0x140] sm:$0xff]
  %v97 = vld [vmem:[%s1 + $0x148] sm:$0xff]
  %v98 = vld [vmem:[%s1 + $0x150] sm:$0xff]
  %v99 = vld [vmem:[%s1 + $0x158] sm:$0xff]
  %v100 = vld [vmem:[%s1 + $0x160] sm:$0xff]
  %v101 = vld [vmem:[%s1 + $0x168] sm:$0xff]
  %v102 = vld [vmem:[%s1 + $0x170] sm:$0xff]
  %v103 = vld [vmem:[%s1 + $0x178] sm:$0xff]
  %v104 = vld [vmem:[%s1 + $0x180] sm:$0xff]
  %v105 = vld [vmem:[%s1 + $0x188] sm:$0xff]
  %v106 = vld [vmem:[%s1 + $0x190] sm:$0xff]
  %v107 = vld [vmem:[%s1 + $0x198] sm:$0xff]
  %v108 = vld [vmem:[%s1 + $0x1a0] sm:$0xff]
  %v109 = vld [vmem:[%s1 + $0x1a8] sm:$0xff]
  %v110 = vld [vmem:[%s1 + $0x1b0] sm:$0xff]
  %v111 = vld [vmem:[%s1 + $0x1b8] sm:$0xff]
  %v112 = vld [vmem:[%s1 + $0x1c0] sm:$0xff]
  %v113 = vld [vmem:[%s1 + $0x1c8] sm:$0xff]
  %v114 = vld [vmem:[%s1 + $0x1d0] sm:$0xff]
  %v115 = vld [vmem:[%s1 + $0x1d8] sm:$0xff]
  %v116 = vld [vmem:[%s1 + $0x1e0] sm:$0xff]
  %v117 = vld [vmem:[%s1 + $0x1e8] sm:$0xff]
  %v118 = vld [vmem:[%s1 + $0x1f0] sm:$0xff]
  %v119 = vld [vmem:[%s1 + $0x1f8] sm:$0xff]
  %v120 = vld [vmem:[%s1 + $0x200] sm:$0xff]
  %v121 = vld [vmem:[%s1 + $0x208] sm:$0xff]
  %v122 = vld [vmem:[%s1 + $0x210] sm:$0xff]
  %v123 = vld [vmem:[%s1 + $0x218] sm:$0xff]
  %v124 = vld [vmem:[%s1 + $0x220] sm:$0xff]
  %v125 = vld [vmem:[%s1 + $0x228] sm:$0xff]
  %v126 = vld [vmem:[%s1 + $0x230] sm:$0xff]
  %v127 = vld [vmem:[%s1 + $0x238] sm:$0xff]
  %v128 = vld [vmem:[%s1 + $0x240] sm:$0xff]
  %v129 = vld [vmem:[%s1 + $0x248] sm:$0xff]
  %v130 = vld [vmem:[%s1 + $0x250] sm:$0xff]
  %v131 = vld [vmem:[%s1 + $0x258] sm:$0xff]
  %v132 = vld [vmem:[%s2] sm:$0x3]
  %v134 = vlaneseq
  %v135 = vshrl.u32 %v134, 7
  %v136 = vsub.s32 0, %v135
  %v137 = vrot.slane %v132, %v136
  %v138 = vlaneseq
  %v139 = vshrl.u32 %v138, 7
  %v140 = vsub.s32 1, %v139
  %v141 = vrot.slane %v132, %v140
  %v220 = vunpack.c.l.b16 %v56
  %v221 = vunpack.c.h.b16 %v56
  %v222 = vunpack.c.l.b16 %v57
  %v223 = vunpack.c.h.b16 %v57
  %v224 = vunpack.c.l.b16 %v58
  %v225 = vunpack.c.h.b16 %v58
  %v226 = vunpack.c.l.b16 %v59
  %v227 = vunpack.c.h.b16 %v59
  %v228 = vunpack.c.l.b16 %v60
  %v229 = vunpack.c.h.b16 %v60
  %v230 = vunpack.c.l.b16 %v61
  %v231 = vunpack.c.h.b16 %v61
  %v232 = vunpack.c.l.b16 %v62
  %v233 = vunpack.c.h.b16 %v62
  %v234 = vunpack.c.l.b16 %v63
  %v235 = vunpack.c.h.b16 %v63
  %v236 = vunpack.c.l.b16 %v64
  %v237 = vunpack.c.h.b16 %v64
  %v238 = vunpack.c.l.b16 %v65
  %v239 = vunpack.c.h.b16 %v65
  %v240 = vunpack.c.l.b16 %v66
  %v241 = vunpack.c.h.b16 %v66
  %v242 = vunpack.c.l.b16 %v67
  %v243 = vunpack.c.h.b16 %v67
  %v244 = vunpack.c.l.b16 %v68
  %v245 = vunpack.c.h.b16 %v68
  %v246 = vunpack.c.l.b16 %v69
  %v247 = vunpack.c.h.b16 %v69
  %v248 = vunpack.c.l.b16 %v70
  %v249 = vunpack.c.h.b16 %v70
  %v250 = vunpack.c.l.b16 %v71
  %v251 = vunpack.c.h.b16 %v71
  %v252 = vunpack.c.l.b16 %v72
  %v253 = vunpack.c.h.b16 %v72
  %v254 = vunpack.c.l.b16 %v73
  %v255 = vunpack.c.h.b16 %v73
  %v256 = vunpack.c.l.b16 %v74
  %v257 = vunpack.c.h.b16 %v74
  %v258 = vunpack.c.l.b16 %v75
  %v259 = vunpack.c.h.b16 %v75
  %v260 = vunpack.c.l.b16 %v76
  %v261 = vunpack.c.h.b16 %v76
  %v262 = vunpack.c.l.b16 %v77
  %v263 = vunpack.c.h.b16 %v77
  %v264 = vunpack.c.l.b16 %v78
  %v265 = vunpack.c.h.b16 %v78
  %v266 = vunpack.c.l.b16 %v79
  %v267 = vunpack.c.h.b16 %v79
  %v268 = vunpack.c.l.b16 %v80
  %v269 = vunpack.c.h.b16 %v80
  %v270 = vunpack.c.l.b16 %v81
  %v271 = vunpack.c.h.b16 %v81
  %v272 = vunpack.c.l.b16 %v82
  %v273 = vunpack.c.h.b16 %v82
  %v274 = vunpack.c.l.b16 %v83
  %v275 = vunpack.c.h.b16 %v83
  %v276 = vunpack.c.l.b16 %v84
  %v277 = vunpack.c.h.b16 %v84
  %v278 = vunpack.c.l.b16 %v85
  %v279 = vunpack.c.h.b16 %v85
  %v280 = vunpack.c.l.b16 %v86
  %v281 = vunpack.c.h.b16 %v86
  %v282 = vunpack.c.l.b16 %v87
  %v283 = vunpack.c.h.b16 %v87
  %v284 = vunpack.c.l.b16 %v88
  %v285 = vunpack.c.h.b16 %v88
  %v286 = vunpack.c.l.b16 %v89
  %v287 = vunpack.c.h.b16 %v89
  %v288 = vunpack.c.l.b16 %v90
  %v289 = vunpack.c.h.b16 %v90
  %v290 = vunpack.c.l.b16 %v91
  %v291 = vunpack.c.h.b16 %v91
  %v292 = vunpack.c.l.b16 %v92
  %v293 = vunpack.c.h.b16 %v92
  %v294 = vunpack.c.l.b16 %v93
  %v295 = vunpack.c.h.b16 %v93
  %v296 = vunpack.c.l.b16 %v94
  %v297 = vunpack.c.h.b16 %v94
  %v298 = vunpack.c.l.b16 %v95
  %v299 = vunpack.c.h.b16 %v95
  %v300 = vunpack.c.l.b16 %v96
  %v301 = vunpack.c.h.b16 %v96
  %v302 = vunpack.c.l.b16 %v97
  %v303 = vunpack.c.h.b16 %v97
  %v304 = vunpack.c.l.b16 %v98
  %v305 = vunpack.c.h.b16 %v98
  %v306 = vunpack.c.l.b16 %v99
  %v307 = vunpack.c.h.b16 %v99
  %v308 = vunpack.c.l.b16 %v100
  %v309 = vunpack.c.h.b16 %v100
  %v310 = vunpack.c.l.b16 %v101
  %v311 = vunpack.c.h.b16 %v101
  %v312 = vunpack.c.l.b16 %v102
  %v313 = vunpack.c.h.b16 %v102
  %v314 = vunpack.c.l.b16 %v103
  %v315 = vunpack.c.h.b16 %v103
  %v316 = vunpack.c.l.b16 %v104
  %v317 = vunpack.c.h.b16 %v104
  %v318 = vunpack.c.l.b16 %v105
  %v319 = vunpack.c.h.b16 %v105
  %v320 = vunpack.c.l.b16 %v106
  %v321 = vunpack.c.h.b16 %v106
  %v322 = vunpack.c.l.b16 %v107
  %v323 = vunpack.c.h.b16 %v107
  %v324 = vunpack.c.l.b16 %v108
  %v325 = vunpack.c.h.b16 %v108
  %v326 = vunpack.c.l.b16 %v109
  %v327 = vunpack.c.h.b16 %v109
  %v328 = vunpack.c.l.b16 %v110
  %v329 = vunpack.c.h.b16 %v110
  %v330 = vunpack.c.l.b16 %v111
  %v331 = vunpack.c.h.b16 %v111
  %v332 = vunpack.c.l.b16 %v112
  %v333 = vunpack.c.h.b16 %v112
  %v334 = vunpack.c.l.b16 %v113
  %v335 = vunpack.c.h.b16 %v113
  %v336 = vunpack.c.l.b16 %v114
  %v337 = vunpack.c.h.b16 %v114
  %v338 = vunpack.c.l.b16 %v115
  %v339 = vunpack.c.h.b16 %v115
  %v340 = vunpack.c.l.b16 %v116
  %v341 = vunpack.c.h.b16 %v116
  %v342 = vunpack.c.l.b16 %v117
  %v343 = vunpack.c.h.b16 %v117
  %v344 = vunpack.c.l.b16 %v118
  %v345 = vunpack.c.h.b16 %v118
  %v346 = vunpack.c.l.b16 %v119
  %v347 = vunpack.c.h.b16 %v119
  %v348 = vunpack.c.l.b16 %v120
  %v349 = vunpack.c.h.b16 %v120
  %v350 = vunpack.c.l.b16 %v121
  %v351 = vunpack.c.h.b16 %v121
  %v352 = vunpack.c.l.b16 %v122
  %v353 = vunpack.c.h.b16 %v122
  %v354 = vunpack.c.l.b16 %v123
  %v355 = vunpack.c.h.b16 %v123
  %v356 = vunpack.c.l.b16 %v124
  %v357 = vunpack.c.h.b16 %v124
  %v358 = vunpack.c.l.b16 %v125
  %v359 = vunpack.c.h.b16 %v125
  %v360 = vunpack.c.l.b16 %v126
  %v361 = vunpack.c.h.b16 %v126
  %v362 = vunpack.c.l.b16 %v127
  %v363 = vunpack.c.h.b16 %v127
  %v364 = vunpack.c.l.b16 %v128
  %v365 = vunpack.c.h.b16 %v128
  %v366 = vunpack.c.l.b16 %v129
  %v367 = vunpack.c.h.b16 %v129
  %v368 = vunpack.c.l.b16 %v130
  %v369 = vunpack.c.h.b16 %v130
  %v370 = vunpack.c.l.b16 %v131
  %v371 = vunpack.c.h.b16 %v131
  %v372 = vpack.c.b16 %v222, %v220
  %v373 = vpack.c.b16 %v223, %v221
  %v374 = vpack.c.b16 %v226, %v224
  %v375 = vpack.c.b16 %v227, %v225
  %v376 = vpack.c.b16 %v230, %v228
  %v377 = vpack.c.b16 %v231, %v229
  %v378 = vpack.c.b16 %v234, %v232
  %v379 = vpack.c.b16 %v235, %v233
  %v380 = vpack.c.b16 %v238, %v236
  %v381 = vpack.c.b16 %v239, %v237
  %v382 = vpack.c.b16 %v242, %v240
  %v383 = vpack.c.b16 %v243, %v241
  %v384 = vpack.c.b16 %v246, %v244
  %v385 = vpack.c.b16 %v247, %v245
  %v386 = vpack.c.b16 %v250, %v248
  %v387 = vpack.c.b16 %v251, %v249
  %v388 = vpack.c.b16 %v254, %v252
  %v389 = vpack.c.b16 %v255, %v253
  %v390 = vpack.c.b16 %v258, %v256
  %v391 = vpack.c.b16 %v259, %v257
  %v392 = vpack.c.b16 %v262, %v260
  %v393 = vpack.c.b16 %v263, %v261
  %v394 = vpack.c.b16 %v266, %v264
  %v395 = vpack.c.b16 %v267, %v265
  %v396 = vpack.c.b16 %v270, %v268
  %v397 = vpack.c.b16 %v271, %v269
  %v398 = vpack.c.b16 %v274, %v272
  %v399 = vpack.c.b16 %v275, %v273
  %v400 = vpack.c.b16 %v278, %v276
  %v401 = vpack.c.b16 %v279, %v277
  %v402 = vpack.c.b16 %v282, %v280
  %v403 = vpack.c.b16 %v283, %v281
  %v404 = vpack.c.b16 %v286, %v284
  %v405 = vpack.c.b16 %v287, %v285
  %v406 = vpack.c.b16 %v290, %v288
  %v407 = vpack.c.b16 %v291, %v289
  %v408 = vpack.c.b16 %v294, %v292
  %v409 = vpack.c.b16 %v295, %v293
  %v410 = vpack.c.b16 %v298, %v296
  %v411 = vpack.c.b16 %v299, %v297
  %v412 = vpack.c.b16 %v302, %v300
  %v413 = vpack.c.b16 %v303, %v301
  %v414 = vpack.c.b16 %v306, %v304
  %v415 = vpack.c.b16 %v307, %v305
  %v416 = vpack.c.b16 %v310, %v308
  %v417 = vpack.c.b16 %v311, %v309
  %v418 = vpack.c.b16 %v314, %v312
  %v419 = vpack.c.b16 %v315, %v313
  %v420 = vpack.c.b16 %v318, %v316
  %v421 = vpack.c.b16 %v319, %v317
  %v422 = vpack.c.b16 %v322, %v320
  %v423 = vpack.c.b16 %v323, %v321
  %v424 = vpack.c.b16 %v326, %v324
  %v425 = vpack.c.b16 %v327, %v325
  %v426 = vpack.c.b16 %v330, %v328
  %v427 = vpack.c.b16 %v331, %v329
  %v428 = vpack.c.b16 %v334, %v332
  %v429 = vpack.c.b16 %v335, %v333
  %v430 = vpack.c.b16 %v338, %v336
  %v431 = vpack.c.b16 %v339, %v337
  %v432 = vpack.c.b16 %v342, %v340
  %v433 = vpack.c.b16 %v343, %v341
  %v434 = vpack.c.b16 %v346, %v344
  %v435 = vpack.c.b16 %v347, %v345
  %v436 = vpack.c.b16 %v350, %v348
  %v437 = vpack.c.b16 %v351, %v349
  %v438 = vpack.c.b16 %v354, %v352
  %v439 = vpack.c.b16 %v355, %v353
  %v440 = vpack.c.b16 %v358, %v356
  %v441 = vpack.c.b16 %v359, %v357
  %v442 = vpack.c.b16 %v362, %v360
  %v443 = vpack.c.b16 %v363, %v361
  %v444 = vpack.c.b16 %v366, %v364
  %v445 = vpack.c.b16 %v367, %v365
  %v446 = vpack.c.b16 %v370, %v368
  %v447 = vpack.c.b16 %v371, %v369
  %vm524 = vcmask 785408
  %v526 = vsel %vm524, %v55, 0
  %528 = vmatprep.subr.bf16.mxu0 %v387
  %529 = vmatpush1.bf16.msra.mxu0 %v386
  %530 = vmatprep.subr.bf16.mxu0 %v385
  %531 = vmatpush1.bf16.msra.mxu0 %v384
  %532 = vmatprep.subr.bf16.mxu0 %v383
  %533 = vmatpush1.bf16.msra.mxu0 %v382
  %534 = vmatprep.subr.bf16.mxu0 %v381
  %535 = vmatpush1.bf16.msra.mxu0 %v380
  %536 = vmatprep.subr.bf16.mxu0 %v379
  %537 = vmatpush1.bf16.msra.mxu0 %v378
  %538 = vmatprep.subr.bf16.mxu0 %v377
  %539 = vmatpush1.bf16.msra.mxu0 %v376
  %540 = vmatprep.subr.bf16.mxu0 %v375
  %541 = vmatpush1.bf16.msra.mxu0 %v374
  %542 = vmatprep.subr.bf16.mxu0 %v373
  %543 = vmatpush1.bf16.msra.mxu0 %v372
  %544 = vmatprep.subr.bf16.mxu0 %v403
  %545 = vmatpush2.bf16.msra.mxu0 %v402
  %546 = vmatprep.subr.bf16.mxu0 %v401
  %547 = vmatpush2.bf16.msra.mxu0 %v400
  %548 = vmatprep.subr.bf16.mxu0 %v399
  %549 = vmatpush2.bf16.msra.mxu0 %v398
  %550 = vmatprep.subr.bf16.mxu0 %v397
  %551 = vmatpush2.bf16.msra.mxu0 %v396
  %552 = vmatprep.subr.bf16.mxu0 %v395
  %553 = vmatpush2.bf16.msra.mxu0 %v394
  %554 = vmatprep.subr.bf16.mxu0 %v393
  %555 = vmatpush2.bf16.msra.mxu0 %v392
  %556 = vmatprep.subr.bf16.mxu0 %v391
  %557 = vmatpush2.bf16.msra.mxu0 %v390
  %558 = vmatprep.subr.bf16.mxu0 %v389
  %559 = vmatpush2.bf16.msra.mxu0 %v388
  %560 = vmatprep.mubr.bf16.mxu0 %v52
  %561 = vmatmul.mubr.bf16.gmra.mxu0 %v51
  %v562 = vpop.f32.mrf.mxu0
  %v563 = vadd.f32 %v137, %v562
  %v564 = vpop.f32.mrf.mxu0
  %v565 = vadd.f32 %v141, %v564
  %v566 = vpop.f32.mrf.mxu0
  %v567 = vpop.f32.mrf.mxu0
  %568 = vdwg.mxu0
  %569 = vmatprep.subr.bf16.mxu0 %v419
  %570 = vmatpush1.bf16.msra.mxu0 %v418
  %571 = vmatprep.subr.bf16.mxu0 %v417
  %572 = vmatpush1.bf16.msra.mxu0 %v416
  %573 = vmatprep.subr.bf16.mxu0 %v415
  %574 = vmatpush1.bf16.msra.mxu0 %v414
  %575 = vmatprep.subr.bf16.mxu0 %v413
  %576 = vmatpush1.bf16.msra.mxu0 %v412
  %577 = vmatprep.subr.bf16.mxu0 %v411
  %578 = vmatpush1.bf16.msra.mxu0 %v410
  %579 = vmatprep.subr.bf16.mxu0 %v409
  %580 = vmatpush1.bf16.msra.mxu0 %v408
  %581 = vmatprep.subr.bf16.mxu0 %v407
  %582 = vmatpush1.bf16.msra.mxu0 %v406
  %583 = vmatprep.subr.bf16.mxu0 %v405
  %584 = vmatpush1.bf16.msra.mxu0 %v404
  %585 = vmatprep.subr.bf16.mxu0 %v435
  %586 = vmatpush2.bf16.msra.mxu0 %v434
  %587 = vmatprep.subr.bf16.mxu0 %v433
  %588 = vmatpush2.bf16.msra.mxu0 %v432
  %589 = vmatprep.subr.bf16.mxu0 %v431
  %590 = vmatpush2.bf16.msra.mxu0 %v430
  %591 = vmatprep.subr.bf16.mxu0 %v429
  %592 = vmatpush2.bf16.msra.mxu0 %v428
  %593 = vmatprep.subr.bf16.mxu0 %v427
  %594 = vmatpush2.bf16.msra.mxu0 %v426
  %595 = vmatprep.subr.bf16.mxu0 %v425
  %596 = vmatpush2.bf16.msra.mxu0 %v424
  %597 = vmatprep.subr.bf16.mxu0 %v423
  %598 = vmatpush2.bf16.msra.mxu0 %v422
  %599 = vmatprep.subr.bf16.mxu0 %v421
  %600 = vmatpush2.bf16.msra.mxu0 %v420
  %601 = vmatprep.mubr.bf16.mxu0 %v54
  %602 = vmatmul.mubr.bf16.gmra.mxu0 %v53
  %v603 = vpop.f32.mrf.mxu0
  %v604 = vadd.f32 %v563, %v603
  %v605 = vpop.f32.mrf.mxu0
  %v606 = vadd.f32 %v565, %v605
  %v607 = vpop.f32.mrf.mxu0
  %v608 = vpop.f32.mrf.mxu0
  %609 = vdwg.mxu0
  %610 = vmatprep.subr.bf16.mxu0 0
  %611 = vmatpush1.bf16.msra.mxu0 0
  %612 = vmatprep.subr.bf16.mxu0 0
  %613 = vmatpush1.bf16.msra.mxu0 0
  %614 = vmatprep.subr.bf16.mxu0 %v447
  %615 = vmatpush1.bf16.msra.mxu0 %v446
  %616 = vmatprep.subr.bf16.mxu0 %v445
  %617 = vmatpush1.bf16.msra.mxu0 %v444
  %618 = vmatprep.subr.bf16.mxu0 %v443
  %619 = vmatpush1.bf16.msra.mxu0 %v442
  %620 = vmatprep.subr.bf16.mxu0 %v441
  %621 = vmatpush1.bf16.msra.mxu0 %v440
  %622 = vmatprep.subr.bf16.mxu0 %v439
  %623 = vmatpush1.bf16.msra.mxu0 %v438
  %624 = vmatprep.subr.bf16.mxu0 %v437
  %625 = vmatpush1.bf16.msra.mxu0 %v436
  %626 = vmatprep.subr.bf16.mxu0 0
  %627 = vmatpush2.bf16.msra.mxu0 0
  %628 = vmatprep.subr.bf16.mxu0 0
  %629 = vmatpush2.bf16.msra.mxu0 0
  %630 = vmatprep.subr.bf16.mxu0 0
  %631 = vmatpush2.bf16.msra.mxu0 0
  %632 = vmatprep.subr.bf16.mxu0 0
  %633 = vmatpush2.bf16.msra.mxu0 0
  %634 = vmatprep.subr.bf16.mxu0 0
  %635 = vmatpush2.bf16.msra.mxu0 0
  %636 = vmatprep.subr.bf16.mxu0 0
  %637 = vmatpush2.bf16.msra.mxu0 0
  %638 = vmatprep.subr.bf16.mxu0 0
  %639 = vmatpush2.bf16.msra.mxu0 0
  %640 = vmatprep.subr.bf16.mxu0 0
  %641 = vmatpush2.bf16.msra.mxu0 0
  %642 = vmatprep.mubr.bf16.mxu0 0
  %643 = vmatmul.mubr.bf16.gmra.mxu0 %v526
  %v644 = vpop.f32.mrf.mxu0
  %v645 = vadd.f32 %v604, %v644
  %v646 = vpop.f32.mrf.mxu0
  %v647 = vadd.f32 %v606, %v646
  %v648 = vpop.f32.mrf.mxu0
  %v649 = vpop.f32.mrf.mxu0
  %650 = vdwg.mxu0
  %v653 = vcombine.low %v645, %v647
  %v655 = vunpack.c.l.s4 1983009808
  %v656 = vunpack.c.0.s8 %v655
  %v657 = vlaneseq
  %v658 = vshrl.u32 %v657, 7
  %v659 = vsub.s32 %v656, %v658
  %v660 = vrot.slane %v653, %v659
  %662 = vst [vmem:[#allocation2] sm:$0xf] %v660
  %s663 = scalar_lea.vmem %s0, 10
  %v664 = vld [vmem:[%s663] sm:$0xff]
  %v665 = vld [vmem:[%s663 + $0x8] sm:$0x3]
  %v668 = vcombine.high %v664, %v664
  %v670 = vunpack.c.l.s4 1983009808
  %v671 = vunpack.c.0.s8 %v670
  %v672 = vlaneseq
  %v673 = vshrl.u32 %v672, 7
  %v674 = vsub.s32 %v671, %v673
  %v675 = vrot.slane %v664, %v674
  %v677 = vunpack.c.l.s4 1983009808
  %v678 = vunpack.c.0.s8 %v677
  %v679 = vlaneseq
  %v680 = vshrl.u32 %v679, 7
  %v681 = vsub.s32 %v678, %v680
  %v682 = vrot.slane %v668, %v681
  %v683 = vcombine.high %v675, %v675
  %v684 = vcombine.high %v682, %v682
  %v686 = vunpack.c.l.s4 1983009808
  %v687 = vunpack.c.0.s8 %v686
  %v688 = vlaneseq
  %v689 = vshrl.u32 %v688, 7
  %v690 = vsub.s32 %v687, %v689
  %v691 = vrot.slane %v665, %v690
  %v697 = vpack.c.bf16 %v675, %v675
  %v698 = vpack.c.bf16 %v683, %v683
  %v699 = vpack.c.bf16 %v682, %v682
  %v700 = vpack.c.bf16 %v684, %v684
  %v701 = vpack.c.bf16 %v691, %v691
  %v702 = vld [vmem:[%s1] sm:$0xff]
  %v703 = vld [vmem:[%s1 + $0x8] sm:$0xff]
  %v704 = vld [vmem:[%s1 + $0x10] sm:$0xff]
  %v705 = vld [vmem:[%s1 + $0x18] sm:$0xff]
  %v706 = vld [vmem:[%s1 + $0x20] sm:$0xff]
  %v707 = vld [vmem:[%s1 + $0x28] sm:$0xff]
  %v708 = vld [vmem:[%s1 + $0x30] sm:$0xff]
  %v709 = vld [vmem:[%s1 + $0x38] sm:$0xff]
  %v710 = vld [vmem:[%s1 + $0x40] sm:$0xff]
  %v711 = vld [vmem:[%s1 + $0x48] sm:$0xff]
  %v712 = vld [vmem:[%s1 + $0x50] sm:$0xff]
  %v713 = vld [vmem:[%s1 + $0x58] sm:$0xff]
  %v714 = vld [vmem:[%s1 + $0x60] sm:$0xff]
  %v715 = vld [vmem:[%s1 + $0x68] sm:$0xff]
  %v716 = vld [vmem:[%s1 + $0x70] sm:$0xff]
  %v717 = vld [vmem:[%s1 + $0x78] sm:$0xff]
  %v718 = vld [vmem:[%s1 + $0x80] sm:$0xff]
  %v719 = vld [vmem:[%s1 + $0x88] sm:$0xff]
  %v720 = vld [vmem:[%s1 + $0x90] sm:$0xff]
  %v721 = vld [vmem:[%s1 + $0x98] sm:$0xff]
  %v722 = vld [vmem:[%s1 + $0xa0] sm:$0xff]
  %v723 = vld [vmem:[%s1 + $0xa8] sm:$0xff]
  %v724 = vld [vmem:[%s1 + $0xb0] sm:$0xff]
  %v725 = vld [vmem:[%s1 + $0xb8] sm:$0xff]
  %v726 = vld [vmem:[%s1 + $0xc0] sm:$0xff]
  %v727 = vld [vmem:[%s1 + $0xc8] sm:$0xff]
  %v728 = vld [vmem:[%s1 + $0xd0] sm:$0xff]
  %v729 = vld [vmem:[%s1 + $0xd8] sm:$0xff]
  %v730 = vld [vmem:[%s1 + $0xe0] sm:$0xff]
  %v731 = vld [vmem:[%s1 + $0xe8] sm:$0xff]
  %v732 = vld [vmem:[%s1 + $0xf0] sm:$0xff]
  %v733 = vld [vmem:[%s1 + $0xf8] sm:$0xff]
  %v734 = vld [vmem:[%s1 + $0x100] sm:$0xff]
  %v735 = vld [vmem:[%s1 + $0x108] sm:$0xff]
  %v736 = vld [vmem:[%s1 + $0x110] sm:$0xff]
  %v737 = vld [vmem:[%s1 + $0x118] sm:$0xff]
  %v738 = vld [vmem:[%s1 + $0x120] sm:$0xff]
  %v739 = vld [vmem:[%s1 + $0x128] sm:$0xff]
  %v740 = vld [vmem:[%s1 + $0x130] sm:$0xff]
  %v741 = vld [vmem:[%s1 + $0x138] sm:$0xff]
  %v742 = vld [vmem:[%s1 + $0x140] sm:$0xff]
  %v743 = vld [vmem:[%s1 + $0x148] sm:$0xff]
  %v744 = vld [vmem:[%s1 + $0x150] sm:$0xff]
  %v745 = vld [vmem:[%s1 + $0x158] sm:$0xff]
  %v746 = vld [vmem:[%s1 + $0x160] sm:$0xff]
  %v747 = vld [vmem:[%s1 + $0x168] sm:$0xff]
  %v748 = vld [vmem:[%s1 + $0x170] sm:$0xff]
  %v749 = vld [vmem:[%s1 + $0x178] sm:$0xff]
  %v750 = vld [vmem:[%s1 + $0x180] sm:$0xff]
  %v751 = vld [vmem:[%s1 + $0x188] sm:$0xff]
  %v752 = vld [vmem:[%s1 + $0x190] sm:$0xff]
  %v753 = vld [vmem:[%s1 + $0x198] sm:$0xff]
  %v754 = vld [vmem:[%s1 + $0x1a0] sm:$0xff]
  %v755 = vld [vmem:[%s1 + $0x1a8] sm:$0xff]
  %v756 = vld [vmem:[%s1 + $0x1b0] sm:$0xff]
  %v757 = vld [vmem:[%s1 + $0x1b8] sm:$0xff]
  %v758 = vld [vmem:[%s1 + $0x1c0] sm:$0xff]
  %v759 = vld [vmem:[%s1 + $0x1c8] sm:$0xff]
  %v760 = vld [vmem:[%s1 + $0x1d0] sm:$0xff]
  %v761 = vld [vmem:[%s1 + $0x1d8] sm:$0xff]
  %v762 = vld [vmem:[%s1 + $0x1e0] sm:$0xff]
  %v763 = vld [vmem:[%s1 + $0x1e8] sm:$0xff]
  %v764 = vld [vmem:[%s1 + $0x1f0] sm:$0xff]
  %v765 = vld [vmem:[%s1 + $0x1f8] sm:$0xff]
  %v766 = vld [vmem:[%s1 + $0x200] sm:$0xff]
  %v767 = vld [vmem:[%s1 + $0x208] sm:$0xff]
  %v768 = vld [vmem:[%s1 + $0x210] sm:$0xff]
  %v769 = vld [vmem:[%s1 + $0x218] sm:$0xff]
  %v770 = vld [vmem:[%s1 + $0x220] sm:$0xff]
  %v771 = vld [vmem:[%s1 + $0x228] sm:$0xff]
  %v772 = vld [vmem:[%s1 + $0x230] sm:$0xff]
  %v773 = vld [vmem:[%s1 + $0x238] sm:$0xff]
  %v774 = vld [vmem:[%s1 + $0x240] sm:$0xff]
  %v775 = vld [vmem:[%s1 + $0x248] sm:$0xff]
  %v776 = vld [vmem:[%s1 + $0x250] sm:$0xff]
  %v777 = vld [vmem:[%s1 + $0x258] sm:$0xff]
  %v778 = vld [vmem:[%s2] sm:$0x3]
  %v780 = vlaneseq
  %v781 = vshrl.u32 %v780, 7
  %v782 = vsub.s32 0, %v781
  %v783 = vrot.slane %v778, %v782
  %v784 = vlaneseq
  %v785 = vshrl.u32 %v784, 7
  %v786 = vsub.s32 1, %v785
  %v787 = vrot.slane %v778, %v786
  %v866 = vunpack.c.l.b16 %v702
  %v867 = vunpack.c.h.b16 %v702
  %v868 = vunpack.c.l.b16 %v703
  %v869 = vunpack.c.h.b16 %v703
  %v870 = vunpack.c.l.b16 %v704
  %v871 = vunpack.c.h.b16 %v704
  %v872 = vunpack.c.l.b16 %v705
  %v873 = vunpack.c.h.b16 %v705
  %v874 = vunpack.c.l.b16 %v706
  %v875 = vunpack.c.h.b16 %v706
  %v876 = vunpack.c.l.b16 %v707
  %v877 = vunpack.c.h.b16 %v707
  %v878 = vunpack.c.l.b16 %v708
  %v879 = vunpack.c.h.b16 %v708
  %v880 = vunpack.c.l.b16 %v709
  %v881 = vunpack.c.h.b16 %v709
  %v882 = vunpack.c.l.b16 %v710
  %v883 = vunpack.c.h.b16 %v710
  %v884 = vunpack.c.l.b16 %v711
  %v885 = vunpack.c.h.b16 %v711
  %v886 = vunpack.c.l.b16 %v712
  %v887 = vunpack.c.h.b16 %v712
  %v888 = vunpack.c.l.b16 %v713
  %v889 = vunpack.c.h.b16 %v713
  %v890 = vunpack.c.l.b16 %v714
  %v891 = vunpack.c.h.b16 %v714
  %v892 = vunpack.c.l.b16 %v715
  %v893 = vunpack.c.h.b16 %v715
  %v894 = vunpack.c.l.b16 %v716
  %v895 = vunpack.c.h.b16 %v716
  %v896 = vunpack.c.l.b16 %v717
  %v897 = vunpack.c.h.b16 %v717
  %v898 = vunpack.c.l.b16 %v718
  %v899 = vunpack.c.h.b16 %v718
  %v900 = vunpack.c.l.b16 %v719
  %v901 = vunpack.c.h.b16 %v719
  %v902 = vunpack.c.l.b16 %v720
  %v903 = vunpack.c.h.b16 %v720
  %v904 = vunpack.c.l.b16 %v721
  %v905 = vunpack.c.h.b16 %v721
  %v906 = vunpack.c.l.b16 %v722
  %v907 = vunpack.c.h.b16 %v722
  %v908 = vunpack.c.l.b16 %v723
  %v909 = vunpack.c.h.b16 %v723
  %v910 = vunpack.c.l.b16 %v724
  %v911 = vunpack.c.h.b16 %v724
  %v912 = vunpack.c.l.b16 %v725
  %v913 = vunpack.c.h.b16 %v725
  %v914 = vunpack.c.l.b16 %v726
  %v915 = vunpack.c.h.b16 %v726
  %v916 = vunpack.c.l.b16 %v727
  %v917 = vunpack.c.h.b16 %v727
  %v918 = vunpack.c.l.b16 %v728
  %v919 = vunpack.c.h.b16 %v728
  %v920 = vunpack.c.l.b16 %v729
  %v921 = vunpack.c.h.b16 %v729
  %v922 = vunpack.c.l.b16 %v730
  %v923 = vunpack.c.h.b16 %v730
  %v924 = vunpack.c.l.b16 %v731
  %v925 = vunpack.c.h.b16 %v731
  %v926 = vunpack.c.l.b16 %v732
  %v927 = vunpack.c.h.b16 %v732
  %v928 = vunpack.c.l.b16 %v733
  %v929 = vunpack.c.h.b16 %v733
  %v930 = vunpack.c.l.b16 %v734
  %v931 = vunpack.c.h.b16 %v734
  %v932 = vunpack.c.l.b16 %v735
  %v933 = vunpack.c.h.b16 %v735
  %v934 = vunpack.c.l.b16 %v736
  %v935 = vunpack.c.h.b16 %v736
  %v936 = vunpack.c.l.b16 %v737
  %v937 = vunpack.c.h.b16 %v737
  %v938 = vunpack.c.l.b16 %v738
  %v939 = vunpack.c.h.b16 %v738
  %v940 = vunpack.c.l.b16 %v739
  %v941 = vunpack.c.h.b16 %v739
  %v942 = vunpack.c.l.b16 %v740
  %v943 = vunpack.c.h.b16 %v740
  %v944 = vunpack.c.l.b16 %v741
  %v945 = vunpack.c.h.b16 %v741
  %v946 = vunpack.c.l.b16 %v742
  %v947 = vunpack.c.h.b16 %v742
  %v948 = vunpack.c.l.b16 %v743
  %v949 = vunpack.c.h.b16 %v743
  %v950 = vunpack.c.l.b16 %v744
  %v951 = vunpack.c.h.b16 %v744
  %v952 = vunpack.c.l.b16 %v745
  %v953 = vunpack.c.h.b16 %v745
  %v954 = vunpack.c.l.b16 %v746
  %v955 = vunpack.c.h.b16 %v746
  %v956 = vunpack.c.l.b16 %v747
  %v957 = vunpack.c.h.b16 %v747
  %v958 = vunpack.c.l.b16 %v748
  %v959 = vunpack.c.h.b16 %v748
  %v960 = vunpack.c.l.b16 %v749
  %v961 = vunpack.c.h.b16 %v749
  %v962 = vunpack.c.l.b16 %v750
  %v963 = vunpack.c.h.b16 %v750
  %v964 = vunpack.c.l.b16 %v751
  %v965 = vunpack.c.h.b16 %v751
  %v966 = vunpack.c.l.b16 %v752
  %v967 = vunpack.c.h.b16 %v752
  %v968 = vunpack.c.l.b16 %v753
  %v969 = vunpack.c.h.b16 %v753
  %v970 = vunpack.c.l.b16 %v754
  %v971 = vunpack.c.h.b16 %v754
  %v972 = vunpack.c.l.b16 %v755
  %v973 = vunpack.c.h.b16 %v755
  %v974 = vunpack.c.l.b16 %v756
  %v975 = vunpack.c.h.b16 %v756
  %v976 = vunpack.c.l.b16 %v757
  %v977 = vunpack.c.h.b16 %v757
  %v978 = vunpack.c.l.b16 %v758
  %v979 = vunpack.c.h.b16 %v758
  %v980 = vunpack.c.l.b16 %v759
  %v981 = vunpack.c.h.b16 %v759
  %v982 = vunpack.c.l.b16 %v760
  %v983 = vunpack.c.h.b16 %v760
  %v984 = vunpack.c.l.b16 %v761
  %v985 = vunpack.c.h.b16 %v761
  %v986 = vunpack.c.l.b16 %v762
  %v987 = vunpack.c.h.b16 %v762
  %v988 = vunpack.c.l.b16 %v763
  %v989 = vunpack.c.h.b16 %v763
  %v990 = vunpack.c.l.b16 %v764
  %v991 = vunpack.c.h.b16 %v764
  %v992 = vunpack.c.l.b16 %v765
  %v993 = vunpack.c.h.b16 %v765
  %v994 = vunpack.c.l.b16 %v766
  %v995 = vunpack.c.h.b16 %v766
  %v996 = vunpack.c.l.b16 %v767
  %v997 = vunpack.c.h.b16 %v767
  %v998 = vunpack.c.l.b16 %v768
  %v999 = vunpack.c.h.b16 %v768
  %v1000 = vunpack.c.l.b16 %v769
  %v1001 = vunpack.c.h.b16 %v769
  %v1002 = vunpack.c.l.b16 %v770
  %v1003 = vunpack.c.h.b16 %v770
  %v1004 = vunpack.c.l.b16 %v771
  %v1005 = vunpack.c.h.b16 %v771
  %v1006 = vunpack.c.l.b16 %v772
  %v1007 = vunpack.c.h.b16 %v772
  %v1008 = vunpack.c.l.b16 %v773
  %v1009 = vunpack.c.h.b16 %v773
  %v1010 = vunpack.c.l.b16 %v774
  %v1011 = vunpack.c.h.b16 %v774
  %v1012 = vunpack.c.l.b16 %v775
  %v1013 = vunpack.c.h.b16 %v775
  %v1014 = vunpack.c.l.b16 %v776
  %v1015 = vunpack.c.h.b16 %v776
  %v1016 = vunpack.c.l.b16 %v777
  %v1017 = vunpack.c.h.b16 %v777
  %v1018 = vpack.c.b16 %v868, %v866
  %v1019 = vpack.c.b16 %v869, %v867
  %v1020 = vpack.c.b16 %v872, %v870
  %v1021 = vpack.c.b16 %v873, %v871
  %v1022 = vpack.c.b16 %v876, %v874
  %v1023 = vpack.c.b16 %v877, %v875
  %v1024 = vpack.c.b16 %v880, %v878
  %v1025 = vpack.c.b16 %v881, %v879
  %v1026 = vpack.c.b16 %v884, %v882
  %v1027 = vpack.c.b16 %v885, %v883
  %v1028 = vpack.c.b16 %v888, %v886
  %v1029 = vpack.c.b16 %v889, %v887
  %v1030 = vpack.c.b16 %v892, %v890
  %v1031 = vpack.c.b16 %v893, %v891
  %v1032 = vpack.c.b16 %v896, %v894
  %v1033 = vpack.c.b16 %v897, %v895
  %v1034 = vpack.c.b16 %v900, %v898
  %v1035 = vpack.c.b16 %v901, %v899
  %v1036 = vpack.c.b16 %v904, %v902
  %v1037 = vpack.c.b16 %v905, %v903
  %v1038 = vpack.c.b16 %v908, %v906
  %v1039 = vpack.c.b16 %v909, %v907
  %v1040 = vpack.c.b16 %v912, %v910
  %v1041 = vpack.c.b16 %v913, %v911
  %v1042 = vpack.c.b16 %v916, %v914
  %v1043 = vpack.c.b16 %v917, %v915
  %v1044 = vpack.c.b16 %v920, %v918
  %v1045 = vpack.c.b16 %v921, %v919
  %v1046 = vpack.c.b16 %v924, %v922
  %v1047 = vpack.c.b16 %v925, %v923
  %v1048 = vpack.c.b16 %v928, %v926
  %v1049 = vpack.c.b16 %v929, %v927
  %v1050 = vpack.c.b16 %v932, %v930
  %v1051 = vpack.c.b16 %v933, %v931
  %v1052 = vpack.c.b16 %v936, %v934
  %v1053 = vpack.c.b16 %v937, %v935
  %v1054 = vpack.c.b16 %v940, %v938
  %v1055 = vpack.c.b16 %v941, %v939
  %v1056 = vpack.c.b16 %v944, %v942
  %v1057 = vpack.c.b16 %v945, %v943
  %v1058 = vpack.c.b16 %v948, %v946
  %v1059 = vpack.c.b16 %v949, %v947
  %v1060 = vpack.c.b16 %v952, %v950
  %v1061 = vpack.c.b16 %v953, %v951
  %v1062 = vpack.c.b16 %v956, %v954
  %v1063 = vpack.c.b16 %v957, %v955
  %v1064 = vpack.c.b16 %v960, %v958
  %v1065 = vpack.c.b16 %v961, %v959
  %v1066 = vpack.c.b16 %v964, %v962
  %v1067 = vpack.c.b16 %v965, %v963
  %v1068 = vpack.c.b16 %v968, %v966
  %v1069 = vpack.c.b16 %v969, %v967
  %v1070 = vpack.c.b16 %v972, %v970
  %v1071 = vpack.c.b16 %v973, %v971
  %v1072 = vpack.c.b16 %v976, %v974
  %v1073 = vpack.c.b16 %v977, %v975
  %v1074 = vpack.c.b16 %v980, %v978
  %v1075 = vpack.c.b16 %v981, %v979
  %v1076 = vpack.c.b16 %v984, %v982
  %v1077 = vpack.c.b16 %v985, %v983
  %v1078 = vpack.c.b16 %v988, %v986
  %v1079 = vpack.c.b16 %v989, %v987
  %v1080 = vpack.c.b16 %v992, %v990
  %v1081 = vpack.c.b16 %v993, %v991
  %v1082 = vpack.c.b16 %v996, %v994
  %v1083 = vpack.c.b16 %v997, %v995
  %v1084 = vpack.c.b16 %v1000, %v998
  %v1085 = vpack.c.b16 %v1001, %v999
  %v1086 = vpack.c.b16 %v1004, %v1002
  %v1087 = vpack.c.b16 %v1005, %v1003
  %v1088 = vpack.c.b16 %v1008, %v1006
  %v1089 = vpack.c.b16 %v1009, %v1007
  %v1090 = vpack.c.b16 %v1012, %v1010
  %v1091 = vpack.c.b16 %v1013, %v1011
  %v1092 = vpack.c.b16 %v1016, %v1014
  %v1093 = vpack.c.b16 %v1017, %v1015
  %v1171 = vsel %vm524, %v701, 0
  %1173 = vmatprep.subr.bf16.mxu0 %v1033
  %1174 = vmatpush1.bf16.msra.mxu0 %v1032
  %1175 = vmatprep.subr.bf16.mxu0 %v1031
  %1176 = vmatpush1.bf16.msra.mxu0 %v1030
  %1177 = vmatprep.subr.bf16.mxu0 %v1029
  %1178 = vmatpush1.bf16.msra.mxu0 %v1028
  %1179 = vmatprep.subr.bf16.mxu0 %v1027
  %1180 = vmatpush1.bf16.msra.mxu0 %v1026
  %1181 = vmatprep.subr.bf16.mxu0 %v1025
  %1182 = vmatpush1.bf16.msra.mxu0 %v1024
  %1183 = vmatprep.subr.bf16.mxu0 %v1023
  %1184 = vmatpush1.bf16.msra.mxu0 %v1022
  %1185 = vmatprep.subr.bf16.mxu0 %v1021
  %1186 = vmatpush1.bf16.msra.mxu0 %v1020
  %1187 = vmatprep.subr.bf16.mxu0 %v1019
  %1188 = vmatpush1.bf16.msra.mxu0 %v1018
  %1189 = vmatprep.subr.bf16.mxu0 %v1049
  %1190 = vmatpush2.bf16.msra.mxu0 %v1048
  %1191 = vmatprep.subr.bf16.mxu0 %v1047
  %1192 = vmatpush2.bf16.msra.mxu0 %v1046
  %1193 = vmatprep.subr.bf16.mxu0 %v1045
  %1194 = vmatpush2.bf16.msra.mxu0 %v1044
  %1195 = vmatprep.subr.bf16.mxu0 %v1043
  %1196 = vmatpush2.bf16.msra.mxu0 %v1042
  %1197 = vmatprep.subr.bf16.mxu0 %v1041
  %1198 = vmatpush2.bf16.msra.mxu0 %v1040
  %1199 = vmatprep.subr.bf16.mxu0 %v1039
  %1200 = vmatpush2.bf16.msra.mxu0 %v1038
  %1201 = vmatprep.subr.bf16.mxu0 %v1037
  %1202 = vmatpush2.bf16.msra.mxu0 %v1036
  %1203 = vmatprep.subr.bf16.mxu0 %v1035
  %1204 = vmatpush2.bf16.msra.mxu0 %v1034
  %1205 = vmatprep.mubr.bf16.mxu0 %v698
  %1206 = vmatmul.mubr.bf16.gmra.mxu0 %v697
  %v1207 = vpop.f32.mrf.mxu0
  %v1208 = vadd.f32 %v783, %v1207
  %v1209 = vpop.f32.mrf.mxu0
  %v1210 = vadd.f32 %v787, %v1209
  %v1211 = vpop.f32.mrf.mxu0
  %v1212 = vpop.f32.mrf.mxu0
  %1213 = vdwg.mxu0
  %1214 = vmatprep.subr.bf16.mxu0 %v1065
  %1215 = vmatpush1.bf16.msra.mxu0 %v1064
  %1216 = vmatprep.subr.bf16.mxu0 %v1063
  %1217 = vmatpush1.bf16.msra.mxu0 %v1062
  %1218 = vmatprep.subr.bf16.mxu0 %v1061
  %1219 = vmatpush1.bf16.msra.mxu0 %v1060
  %1220 = vmatprep.subr.bf16.mxu0 %v1059
  %1221 = vmatpush1.bf16.msra.mxu0 %v1058
  %1222 = vmatprep.subr.bf16.mxu0 %v1057
  %1223 = vmatpush1.bf16.msra.mxu0 %v1056
  %1224 = vmatprep.subr.bf16.mxu0 %v1055
  %1225 = vmatpush1.bf16.msra.mxu0 %v1054
  %1226 = vmatprep.subr.bf16.mxu0 %v1053
  %1227 = vmatpush1.bf16.msra.mxu0 %v1052
  %1228 = vmatprep.subr.bf16.mxu0 %v1051
  %1229 = vmatpush1.bf16.msra.mxu0 %v1050
  %1230 = vmatprep.subr.bf16.mxu0 %v1081
  %1231 = vmatpush2.bf16.msra.mxu0 %v1080
  %1232 = vmatprep.subr.bf16.mxu0 %v1079
  %1233 = vmatpush2.bf16.msra.mxu0 %v1078
  %1234 = vmatprep.subr.bf16.mxu0 %v1077
  %1235 = vmatpush2.bf16.msra.mxu0 %v1076
  %1236 = vmatprep.subr.bf16.mxu0 %v1075
  %1237 = vmatpush2.bf16.msra.mxu0 %v1074
  %1238 = vmatprep.subr.bf16.mxu0 %v1073
  %1239 = vmatpush2.bf16.msra.mxu0 %v1072
  %1240 = vmatprep.subr.bf16.mxu0 %v1071
  %1241 = vmatpush2.bf16.msra.mxu0 %v1070
  %1242 = vmatprep.subr.bf16.mxu0 %v1069
  %1243 = vmatpush2.bf16.msra.mxu0 %v1068
  %1244 = vmatprep.subr.bf16.mxu0 %v1067
  %1245 = vmatpush2.bf16.msra.mxu0 %v1066
  %1246 = vmatprep.mubr.bf16.mxu0 %v700
  %1247 = vmatmul.mubr.bf16.gmra.mxu0 %v699
  %v1248 = vpop.f32.mrf.mxu0
  %v1249 = vadd.f32 %v1208, %v1248
  %v1250 = vpop.f32.mrf.mxu0
  %v1251 = vadd.f32 %v1210, %v1250
  %v1252 = vpop.f32.mrf.mxu0
  %v1253 = vpop.f32.mrf.mxu0
  %1254 = vdwg.mxu0
  %1255 = vmatprep.subr.bf16.mxu0 0
  %1256 = vmatpush1.bf16.msra.mxu0 0
  %1257 = vmatprep.subr.bf16.mxu0 0
  %1258 = vmatpush1.bf16.msra.mxu0 0
  %1259 = vmatprep.subr.bf16.mxu0 %v1093
  %1260 = vmatpush1.bf16.msra.mxu0 %v1092
  %1261 = vmatprep.subr.bf16.mxu0 %v1091
  %1262 = vmatpush1.bf16.msra.mxu0 %v1090
  %1263 = vmatprep.subr.bf16.mxu0 %v1089
  %1264 = vmatpush1.bf16.msra.mxu0 %v1088
  %1265 = vmatprep.subr.bf16.mxu0 %v1087
  %1266 = vmatpush1.bf16.msra.mxu0 %v1086
  %1267 = vmatprep.subr.bf16.mxu0 %v1085
  %1268 = vmatpush1.bf16.msra.mxu0 %v1084
  %1269 = vmatprep.subr.bf16.mxu0 %v1083
  %1270 = vmatpush1.bf16.msra.mxu0 %v1082
  %1271 = vmatprep.subr.bf16.mxu0 0
  %1272 = vmatpush2.bf16.msra.mxu0 0
  %1273 = vmatprep.subr.bf16.mxu0 0
  %1274 = vmatpush2.bf16.msra.mxu0 0
  %1275 = vmatprep.subr.bf16.mxu0 0
  %1276 = vmatpush2.bf16.msra.mxu0 0
  %1277 = vmatprep.subr.bf16.mxu0 0
  %1278 = vmatpush2.bf16.msra.mxu0 0
  %1279 = vmatprep.subr.bf16.mxu0 0
  %1280 = vmatpush2.bf16.msra.mxu0 0
  %1281 = vmatprep.subr.bf16.mxu0 0
  %1282 = vmatpush2.bf16.msra.mxu0 0
  %1283 = vmatprep.subr.bf16.mxu0 0
  %1284 = vmatpush2.bf16.msra.mxu0 0
  %1285 = vmatprep.subr.bf16.mxu0 0
  %1286 = vmatpush2.bf16.msra.mxu0 0
  %1287 = vmatprep.mubr.bf16.mxu0 0
  %1288 = vmatmul.mubr.bf16.gmra.mxu0 %v1171
  %v1289 = vpop.f32.mrf.mxu0
  %v1290 = vadd.f32 %v1249, %v1289
  %v1291 = vpop.f32.mrf.mxu0
  %v1292 = vadd.f32 %v1251, %v1291
  %v1293 = vpop.f32.mrf.mxu0
  %v1294 = vpop.f32.mrf.mxu0
  %1295 = vdwg.mxu0
  %v1298 = vcombine.low %v1290, %v1292
  %v1300 = vunpack.c.l.s4 1983009808
  %v1301 = vunpack.c.0.s8 %v1300
  %v1302 = vlaneseq
  %v1303 = vshrl.u32 %v1302, 7
  %v1304 = vsub.s32 %v1301, %v1303
  %v1305 = vrot.slane %v1298, %v1304
  %s1307 = scalar_lea.vmem [#allocation2], 4
  %1308 = vst [vmem:[%s1307] sm:$0xf] %v1305
  %s1309 = scalar_lea.vmem %s0, 20
  %v1310 = vld [vmem:[%s1309] sm:$0xff]
  %v1311 = vld [vmem:[%s1309 + $0x8] sm:$0x3]
  %v1314 = vcombine.high %v1310, %v1310
  %v1316 = vunpack.c.l.s4 1983009808
  %v1317 = vunpack.c.0.s8 %v1316
  %v1318 = vlaneseq
  %v1319 = vshrl.u32 %v1318, 7
  %v1320 = vsub.s32 %v1317, %v1319
  %v1321 = vrot.slane %v1310, %v1320
  %v1323 = vunpack.c.l.s4 1983009808
  %v1324 = vunpack.c.0.s8 %v1323
  %v1325 = vlaneseq
  %v1326 = vshrl.u32 %v1325, 7
  %v1327 = vsub.s32 %v1324, %v1326
  %v1328 = vrot.slane %v1314, %v1327
  %v1329 = vcombine.high %v1321, %v1321
  %v1330 = vcombine.high %v1328, %v1328
  %v1332 = vunpack.c.l.s4 1983009808
  %v1333 = vunpack.c.0.s8 %v1332
  %v1334 = vlaneseq
  %v1335 = vshrl.u32 %v1334, 7
  %v1336 = vsub.s32 %v1333, %v1335
  %v1337 = vrot.slane %v1311, %v1336
  %v1343 = vpack.c.bf16 %v1321, %v1321
  %v1344 = vpack.c.bf16 %v1329, %v1329
  %v1345 = vpack.c.bf16 %v1328, %v1328
  %v1346 = vpack.c.bf16 %v1330, %v1330
  %v1347 = vpack.c.bf16 %v1337, %v1337
  %v1348 = vld [vmem:[%s1] sm:$0xff]
  %v1349 = vld [vmem:[%s1 + $0x8] sm:$0xff]
  %v1350 = vld [vmem:[%s1 + $0x10] sm:$0xff]
  %v1351 = vld [vmem:[%s1 + $0x18] sm:$0xff]
  %v1352 = vld [vmem:[%s1 + $0x20] sm:$0xff]
  %v1353 = vld [vmem:[%s1 + $0x28] sm:$0xff]
  %v1354 = vld [vmem:[%s1 + $0x30] sm:$0xff]
  %v1355 = vld [vmem:[%s1 + $0x38] sm:$0xff]
  %v1356 = vld [vmem:[%s1 + $0x40] sm:$0xff]
  %v1357 = vld [vmem:[%s1 + $0x48] sm:$0xff]
  %v1358 = vld [vmem:[%s1 + $0x50] sm:$0xff]
  %v1359 = vld [vmem:[%s1 + $0x58] sm:$0xff]
  %v1360 = vld [vmem:[%s1 + $0x60] sm:$0xff]
  %v1361 = vld [vmem:[%s1 + $0x68] sm:$0xff]
  %v1362 = vld [vmem:[%s1 + $0x70] sm:$0xff]
  %v1363 = vld [vmem:[%s1 + $0x78] sm:$0xff]
  %v1364 = vld [vmem:[%s1 + $0x80] sm:$0xff]
  %v1365 = vld [vmem:[%s1 + $0x88] sm:$0xff]
  %v1366 = vld [vmem:[%s1 + $0x90] sm:$0xff]
  %v1367 = vld [vmem:[%s1 + $0x98] sm:$0xff]
  %v1368 = vld [vmem:[%s1 + $0xa0] sm:$0xff]
  %v1369 = vld [vmem:[%s1 + $0xa8] sm:$0xff]
  %v1370 = vld [vmem:[%s1 + $0xb0] sm:$0xff]
  %v1371 = vld [vmem:[%s1 + $0xb8] sm:$0xff]
  %v1372 = vld [vmem:[%s1 + $0xc0] sm:$0xff]
  %v1373 = vld [vmem:[%s1 + $0xc8] sm:$0xff]
  %v1374 = vld [vmem:[%s1 + $0xd0] sm:$0xff]
  %v1375 = vld [vmem:[%s1 + $0xd8] sm:$0xff]
  %v1376 = vld [vmem:[%s1 + $0xe0] sm:$0xff]
  %v1377 = vld [vmem:[%s1 + $0xe8] sm:$0xff]
  %v1378 = vld [vmem:[%s1 + $0xf0] sm:$0xff]
  %v1379 = vld [vmem:[%s1 + $0xf8] sm:$0xff]
  %v1380 = vld [vmem:[%s1 + $0x100] sm:$0xff]
  %v1381 = vld [vmem:[%s1 + $0x108] sm:$0xff]
  %v1382 = vld [vmem:[%s1 + $0x110] sm:$0xff]
  %v1383 = vld [vmem:[%s1 + $0x118] sm:$0xff]
  %v1384 = vld [vmem:[%s1 + $0x120] sm:$0xff]
  %v1385 = vld [vmem:[%s1 + $0x128] sm:$0xff]
  %v1386 = vld [vmem:[%s1 + $0x130] sm:$0xff]
  %v1387 = vld [vmem:[%s1 + $0x138] sm:$0xff]
  %v1388 = vld [vmem:[%s1 + $0x140] sm:$0xff]
  %v1389 = vld [vmem:[%s1 + $0x148] sm:$0xff]
  %v1390 = vld [vmem:[%s1 + $0x150] sm:$0xff]
  %v1391 = vld [vmem:[%s1 + $0x158] sm:$0xff]
  %v1392 = vld [vmem:[%s1 + $0x160] sm:$0xff]
  %v1393 = vld [vmem:[%s1 + $0x168] sm:$0xff]
  %v1394 = vld [vmem:[%s1 + $0x170] sm:$0xff]
  %v1395 = vld [vmem:[%s1 + $0x178] sm:$0xff]
  %v1396 = vld [vmem:[%s1 + $0x180] sm:$0xff]
  %v1397 = vld [vmem:[%s1 + $0x188] sm:$0xff]
  %v1398 = vld [vmem:[%s1 + $0x190] sm:$0xff]
  %v1399 = vld [vmem:[%s1 + $0x198] sm:$0xff]
  %v1400 = vld [vmem:[%s1 + $0x1a0] sm:$0xff]
  %v1401 = vld [vmem:[%s1 + $0x1a8] sm:$0xff]
  %v1402 = vld [vmem:[%s1 + $0x1b0] sm:$0xff]
  %v1403 = vld [vmem:[%s1 + $0x1b8] sm:$0xff]
  %v1404 = vld [vmem:[%s1 + $0x1c0] sm:$0xff]
  %v1405 = vld [vmem:[%s1 + $0x1c8] sm:$0xff]
  %v1406 = vld [vmem:[%s1 + $0x1d0] sm:$0xff]
  %v1407 = vld [vmem:[%s1 + $0x1d8] sm:$0xff]
  %v1408 = vld [vmem:[%s1 + $0x1e0] sm:$0xff]
  %v1409 = vld [vmem:[%s1 + $0x1e8] sm:$0xff]
  %v1410 = vld [vmem:[%s1 + $0x1f0] sm:$0xff]
  %v1411 = vld [vmem:[%s1 + $0x1f8] sm:$0xff]
  %v1412 = vld [vmem:[%s1 + $0x200] sm:$0xff]
  %v1413 = vld [vmem:[%s1 + $0x208] sm:$0xff]
  %v1414 = vld [vmem:[%s1 + $0x210] sm:$0xff]
  %v1415 = vld [vmem:[%s1 + $0x218] sm:$0xff]
  %v1416 = vld [vmem:[%s1 + $0x220] sm:$0xff]
  %v1417 = vld [vmem:[%s1 + $0x228] sm:$0xff]
  %v1418 = vld [vmem:[%s1 + $0x230] sm:$0xff]
  %v1419 = vld [vmem:[%s1 + $0x238] sm:$0xff]
  %v1420 = vld [vmem:[%s1 + $0x240] sm:$0xff]
  %v1421 = vld [vmem:[%s1 + $0x248] sm:$0xff]
  %v1422 = vld [vmem:[%s1 + $0x250] sm:$0xff]
  %v1423 = vld [vmem:[%s1 + $0x258] sm:$0xff]
  %v1424 = vld [vmem:[%s2] sm:$0x3]
  %v1426 = vlaneseq
  %v1427 = vshrl.u32 %v1426, 7
  %v1428 = vsub.s32 0, %v1427
  %v1429 = vrot.slane %v1424, %v1428
  %v1430 = vlaneseq
  %v1431 = vshrl.u32 %v1430, 7
  %v1432 = vsub.s32 1, %v1431
  %v1433 = vrot.slane %v1424, %v1432
  %v1512 = vunpack.c.l.b16 %v1348
  %v1513 = vunpack.c.h.b16 %v1348
  %v1514 = vunpack.c.l.b16 %v1349
  %v1515 = vunpack.c.h.b16 %v1349
  %v1516 = vunpack.c.l.b16 %v1350
  %v1517 = vunpack.c.h.b16 %v1350
  %v1518 = vunpack.c.l.b16 %v1351
  %v1519 = vunpack.c.h.b16 %v1351
  %v1520 = vunpack.c.l.b16 %v1352
  %v1521 = vunpack.c.h.b16 %v1352
  %v1522 = vunpack.c.l.b16 %v1353
  %v1523 = vunpack.c.h.b16 %v1353
  %v1524 = vunpack.c.l.b16 %v1354
  %v1525 = vunpack.c.h.b16 %v1354
  %v1526 = vunpack.c.l.b16 %v1355
  %v1527 = vunpack.c.h.b16 %v1355
  %v1528 = vunpack.c.l.b16 %v1356
  %v1529 = vunpack.c.h.b16 %v1356
  %v1530 = vunpack.c.l.b16 %v1357
  %v1531 = vunpack.c.h.b16 %v1357
  %v1532 = vunpack.c.l.b16 %v1358
  %v1533 = vunpack.c.h.b16 %v1358
  %v1534 = vunpack.c.l.b16 %v1359
  %v1535 = vunpack.c.h.b16 %v1359
  %v1536 = vunpack.c.l.b16 %v1360
  %v1537 = vunpack.c.h.b16 %v1360
  %v1538 = vunpack.c.l.b16 %v1361
  %v1539 = vunpack.c.h.b16 %v1361
  %v1540 = vunpack.c.l.b16 %v1362
  %v1541 = vunpack.c.h.b16 %v1362
  %v1542 = vunpack.c.l.b16 %v1363
  %v1543 = vunpack.c.h.b16 %v1363
  %v1544 = vunpack.c.l.b16 %v1364
  %v1545 = vunpack.c.h.b16 %v1364
  %v1546 = vunpack.c.l.b16 %v1365
  %v1547 = vunpack.c.h.b16 %v1365
  %v1548 = vunpack.c.l.b16 %v1366
  %v1549 = vunpack.c.h.b16 %v1366
  %v1550 = vunpack.c.l.b16 %v1367
  %v1551 = vunpack.c.h.b16 %v1367
  %v1552 = vunpack.c.l.b16 %v1368
  %v1553 = vunpack.c.h.b16 %v1368
  %v1554 = vunpack.c.l.b16 %v1369
  %v1555 = vunpack.c.h.b16 %v1369
  %v1556 = vunpack.c.l.b16 %v1370
  %v1557 = vunpack.c.h.b16 %v1370
  %v1558 = vunpack.c.l.b16 %v1371
  %v1559 = vunpack.c.h.b16 %v1371
  %v1560 = vunpack.c.l.b16 %v1372
  %v1561 = vunpack.c.h.b16 %v1372
  %v1562 = vunpack.c.l.b16 %v1373
  %v1563 = vunpack.c.h.b16 %v1373
  %v1564 = vunpack.c.l.b16 %v1374
  %v1565 = vunpack.c.h.b16 %v1374
  %v1566 = vunpack.c.l.b16 %v1375
  %v1567 = vunpack.c.h.b16 %v1375
  %v1568 = vunpack.c.l.b16 %v1376
  %v1569 = vunpack.c.h.b16 %v1376
  %v1570 = vunpack.c.l.b16 %v1377
  %v1571 = vunpack.c.h.b16 %v1377
  %v1572 = vunpack.c.l.b16 %v1378
  %v1573 = vunpack.c.h.b16 %v1378
  %v1574 = vunpack.c.l.b16 %v1379
  %v1575 = vunpack.c.h.b16 %v1379
  %v1576 = vunpack.c.l.b16 %v1380
  %v1577 = vunpack.c.h.b16 %v1380
  %v1578 = vunpack.c.l.b16 %v1381
  %v1579 = vunpack.c.h.b16 %v1381
  %v1580 = vunpack.c.l.b16 %v1382
  %v1581 = vunpack.c.h.b16 %v1382
  %v1582 = vunpack.c.l.b16 %v1383
  %v1583 = vunpack.c.h.b16 %v1383
  %v1584 = vunpack.c.l.b16 %v1384
  %v1585 = vunpack.c.h.b16 %v1384
  %v1586 = vunpack.c.l.b16 %v1385
  %v1587 = vunpack.c.h.b16 %v1385
  %v1588 = vunpack.c.l.b16 %v1386
  %v1589 = vunpack.c.h.b16 %v1386
  %v1590 = vunpack.c.l.b16 %v1387
  %v1591 = vunpack.c.h.b16 %v1387
  %v1592 = vunpack.c.l.b16 %v1388
  %v1593 = vunpack.c.h.b16 %v1388
  %v1594 = vunpack.c.l.b16 %v1389
  %v1595 = vunpack.c.h.b16 %v1389
  %v1596 = vunpack.c.l.b16 %v1390
  %v1597 = vunpack.c.h.b16 %v1390
  %v1598 = vunpack.c.l.b16 %v1391
  %v1599 = vunpack.c.h.b16 %v1391
  %v1600 = vunpack.c.l.b16 %v1392
  %v1601 = vunpack.c.h.b16 %v1392
  %v1602 = vunpack.c.l.b16 %v1393
  %v1603 = vunpack.c.h.b16 %v1393
  %v1604 = vunpack.c.l.b16 %v1394
  %v1605 = vunpack.c.h.b16 %v1394
  %v1606 = vunpack.c.l.b16 %v1395
  %v1607 = vunpack.c.h.b16 %v1395
  %v1608 = vunpack.c.l.b16 %v1396
  %v1609 = vunpack.c.h.b16 %v1396
  %v1610 = vunpack.c.l.b16 %v1397
  %v1611 = vunpack.c.h.b16 %v1397
  %v1612 = vunpack.c.l.b16 %v1398
  %v1613 = vunpack.c.h.b16 %v1398
  %v1614 = vunpack.c.l.b16 %v1399
  %v1615 = vunpack.c.h.b16 %v1399
  %v1616 = vunpack.c.l.b16 %v1400
  %v1617 = vunpack.c.h.b16 %v1400
  %v1618 = vunpack.c.l.b16 %v1401
  %v1619 = vunpack.c.h.b16 %v1401
  %v1620 = vunpack.c.l.b16 %v1402
  %v1621 = vunpack.c.h.b16 %v1402
  %v1622 = vunpack.c.l.b16 %v1403
  %v1623 = vunpack.c.h.b16 %v1403
  %v1624 = vunpack.c.l.b16 %v1404
  %v1625 = vunpack.c.h.b16 %v1404
  %v1626 = vunpack.c.l.b16 %v1405
  %v1627 = vunpack.c.h.b16 %v1405
  %v1628 = vunpack.c.l.b16 %v1406
  %v1629 = vunpack.c.h.b16 %v1406
  %v1630 = vunpack.c.l.b16 %v1407
  %v1631 = vunpack.c.h.b16 %v1407
  %v1632 = vunpack.c.l.b16 %v1408
  %v1633 = vunpack.c.h.b16 %v1408
  %v1634 = vunpack.c.l.b16 %v1409
  %v1635 = vunpack.c.h.b16 %v1409
  %v1636 = vunpack.c.l.b16 %v1410
  %v1637 = vunpack.c.h.b16 %v1410
  %v1638 = vunpack.c.l.b16 %v1411
  %v1639 = vunpack.c.h.b16 %v1411
  %v1640 = vunpack.c.l.b16 %v1412
  %v1641 = vunpack.c.h.b16 %v1412
  %v1642 = vunpack.c.l.b16 %v1413
  %v1643 = vunpack.c.h.b16 %v1413
  %v1644 = vunpack.c.l.b16 %v1414
  %v1645 = vunpack.c.h.b16 %v1414
  %v1646 = vunpack.c.l.b16 %v1415
  %v1647 = vunpack.c.h.b16 %v1415
  %v1648 = vunpack.c.l.b16 %v1416
  %v1649 = vunpack.c.h.b16 %v1416
  %v1650 = vunpack.c.l.b16 %v1417
  %v1651 = vunpack.c.h.b16 %v1417
  %v1652 = vunpack.c.l.b16 %v1418
  %v1653 = vunpack.c.h.b16 %v1418
  %v1654 = vunpack.c.l.b16 %v1419
  %v1655 = vunpack.c.h.b16 %v1419
  %v1656 = vunpack.c.l.b16 %v1420
  %v1657 = vunpack.c.h.b16 %v1420
  %v1658 = vunpack.c.l.b16 %v1421
  %v1659 = vunpack.c.h.b16 %v1421
  %v1660 = vunpack.c.l.b16 %v1422
  %v1661 = vunpack.c.h.b16 %v1422
  %v1662 = vunpack.c.l.b16 %v1423
  %v1663 = vunpack.c.h.b16 %v1423
  %v1664 = vpack.c.b16 %v1514, %v1512
  %v1665 = vpack.c.b16 %v1515, %v1513
  %v1666 = vpack.c.b16 %v1518, %v1516
  %v1667 = vpack.c.b16 %v1519, %v1517
  %v1668 = vpack.c.b16 %v1522, %v1520
  %v1669 = vpack.c.b16 %v1523, %v1521
  %v1670 = vpack.c.b16 %v1526, %v1524
  %v1671 = vpack.c.b16 %v1527, %v1525
  %v1672 = vpack.c.b16 %v1530, %v1528
  %v1673 = vpack.c.b16 %v1531, %v1529
  %v1674 = vpack.c.b16 %v1534, %v1532
  %v1675 = vpack.c.b16 %v1535, %v1533
  %v1676 = vpack.c.b16 %v1538, %v1536
  %v1677 = vpack.c.b16 %v1539, %v1537
  %v1678 = vpack.c.b16 %v1542, %v1540
  %v1679 = vpack.c.b16 %v1543, %v1541
  %v1680 = vpack.c.b16 %v1546, %v1544
  %v1681 = vpack.c.b16 %v1547, %v1545
  %v1682 = vpack.c.b16 %v1550, %v1548
  %v1683 = vpack.c.b16 %v1551, %v1549
  %v1684 = vpack.c.b16 %v1554, %v1552
  %v1685 = vpack.c.b16 %v1555, %v1553
  %v1686 = vpack.c.b16 %v1558, %v1556
  %v1687 = vpack.c.b16 %v1559, %v1557
  %v1688 = vpack.c.b16 %v1562, %v1560
  %v1689 = vpack.c.b16 %v1563, %v1561
  %v1690 = vpack.c.b16 %v1566, %v1564
  %v1691 = vpack.c.b16 %v1567, %v1565
  %v1692 = vpack.c.b16 %v1570, %v1568
  %v1693 = vpack.c.b16 %v1571, %v1569
  %v1694 = vpack.c.b16 %v1574, %v1572
  %v1695 = vpack.c.b16 %v1575, %v1573
  %v1696 = vpack.c.b16 %v1578, %v1576
  %v1697 = vpack.c.b16 %v1579, %v1577
  %v1698 = vpack.c.b16 %v1582, %v1580
  %v1699 = vpack.c.b16 %v1583, %v1581
  %v1700 = vpack.c.b16 %v1586, %v1584
  %v1701 = vpack.c.b16 %v1587, %v1585
  %v1702 = vpack.c.b16 %v1590, %v1588
  %v1703 = vpack.c.b16 %v1591, %v1589
  %v1704 = vpack.c.b16 %v1594, %v1592
  %v1705 = vpack.c.b16 %v1595, %v1593
  %v1706 = vpack.c.b16 %v1598, %v1596
  %v1707 = vpack.c.b16 %v1599, %v1597
  %v1708 = vpack.c.b16 %v1602, %v1600
  %v1709 = vpack.c.b16 %v1603, %v1601
  %v1710 = vpack.c.b16 %v1606, %v1604
  %v1711 = vpack.c.b16 %v1607, %v1605
  %v1712 = vpack.c.b16 %v1610, %v1608
  %v1713 = vpack.c.b16 %v1611, %v1609
  %v1714 = vpack.c.b16 %v1614, %v1612
  %v1715 = vpack.c.b16 %v1615, %v1613
  %v1716 = vpack.c.b16 %v1618, %v1616
  %v1717 = vpack.c.b16 %v1619, %v1617
  %v1718 = vpack.c.b16 %v1622, %v1620
  %v1719 = vpack.c.b16 %v1623, %v1621
  %v1720 = vpack.c.b16 %v1626, %v1624
  %v1721 = vpack.c.b16 %v1627, %v1625
  %v1722 = vpack.c.b16 %v1630, %v1628
  %v1723 = vpack.c.b16 %v1631, %v1629
  %v1724 = vpack.c.b16 %v1634, %v1632
  %v1725 = vpack.c.b16 %v1635, %v1633
  %v1726 = vpack.c.b16 %v1638, %v1636
  %v1727 = vpack.c.b16 %v1639, %v1637
  %v1728 = vpack.c.b16 %v1642, %v1640
  %v1729 = vpack.c.b16 %v1643, %v1641
  %v1730 = vpack.c.b16 %v1646, %v1644
  %v1731 = vpack.c.b16 %v1647, %v1645
  %v1732 = vpack.c.b16 %v1650, %v1648
  %v1733 = vpack.c.b16 %v1651, %v1649
  %v1734 = vpack.c.b16 %v1654, %v1652
  %v1735 = vpack.c.b16 %v1655, %v1653
  %v1736 = vpack.c.b16 %v1658, %v1656
  %v1737 = vpack.c.b16 %v1659, %v1657
  %v1738 = vpack.c.b16 %v1662, %v1660
  %v1739 = vpack.c.b16 %v1663, %v1661
  %v1817 = vsel %vm524, %v1347, 0
  %1819 = vmatprep.subr.bf16.mxu0 %v1679
  %1820 = vmatpush1.bf16.msra.mxu0 %v1678
  %1821 = vmatprep.subr.bf16.mxu0 %v1677
  %1822 = vmatpush1.bf16.msra.mxu0 %v1676
  %1823 = vmatprep.subr.bf16.mxu0 %v1675
  %1824 = vmatpush1.bf16.msra.mxu0 %v1674
  %1825 = vmatprep.subr.bf16.mxu0 %v1673
  %1826 = vmatpush1.bf16.msra.mxu0 %v1672
  %1827 = vmatprep.subr.bf16.mxu0 %v1671
  %1828 = vmatpush1.bf16.msra.mxu0 %v1670
  %1829 = vmatprep.subr.bf16.mxu0 %v1669
  %1830 = vmatpush1.bf16.msra.mxu0 %v1668
  %1831 = vmatprep.subr.bf16.mxu0 %v1667
  %1832 = vmatpush1.bf16.msra.mxu0 %v1666
  %1833 = vmatprep.subr.bf16.mxu0 %v1665
  %1834 = vmatpush1.bf16.msra.mxu0 %v1664
  %1835 = vmatprep.subr.bf16.mxu0 %v1695
  %1836 = vmatpush2.bf16.msra.mxu0 %v1694
  %1837 = vmatprep.subr.bf16.mxu0 %v1693
  %1838 = vmatpush2.bf16.msra.mxu0 %v1692
  %1839 = vmatprep.subr.bf16.mxu0 %v1691
  %1840 = vmatpush2.bf16.msra.mxu0 %v1690
  %1841 = vmatprep.subr.bf16.mxu0 %v1689
  %1842 = vmatpush2.bf16.msra.mxu0 %v1688
  %1843 = vmatprep.subr.bf16.mxu0 %v1687
  %1844 = vmatpush2.bf16.msra.mxu0 %v1686
  %1845 = vmatprep.subr.bf16.mxu0 %v1685
  %1846 = vmatpush2.bf16.msra.mxu0 %v1684
  %1847 = vmatprep.subr.bf16.mxu0 %v1683
  %1848 = vmatpush2.bf16.msra.mxu0 %v1682
  %1849 = vmatprep.subr.bf16.mxu0 %v1681
  %1850 = vmatpush2.bf16.msra.mxu0 %v1680
  %1851 = vmatprep.mubr.bf16.mxu0 %v1344
  %1852 = vmatmul.mubr.bf16.gmra.mxu0 %v1343
  %v1853 = vpop.f32.mrf.mxu0
  %v1854 = vadd.f32 %v1429, %v1853
  %v1855 = vpop.f32.mrf.mxu0
  %v1856 = vadd.f32 %v1433, %v1855
  %v1857 = vpop.f32.mrf.mxu0
  %v1858 = vpop.f32.mrf.mxu0
  %1859 = vdwg.mxu0
  %1860 = vmatprep.subr.bf16.mxu0 %v1711
  %1861 = vmatpush1.bf16.msra.mxu0 %v1710
  %1862 = vmatprep.subr.bf16.mxu0 %v1709
  %1863 = vmatpush1.bf16.msra.mxu0 %v1708
  %1864 = vmatprep.subr.bf16.mxu0 %v1707
  %1865 = vmatpush1.bf16.msra.mxu0 %v1706
  %1866 = vmatprep.subr.bf16.mxu0 %v1705
  %1867 = vmatpush1.bf16.msra.mxu0 %v1704
  %1868 = vmatprep.subr.bf16.mxu0 %v1703
  %1869 = vmatpush1.bf16.msra.mxu0 %v1702
  %1870 = vmatprep.subr.bf16.mxu0 %v1701
  %1871 = vmatpush1.bf16.msra.mxu0 %v1700
  %1872 = vmatprep.subr.bf16.mxu0 %v1699
  %1873 = vmatpush1.bf16.msra.mxu0 %v1698
  %1874 = vmatprep.subr.bf16.mxu0 %v1697
  %1875 = vmatpush1.bf16.msra.mxu0 %v1696
  %1876 = vmatprep.subr.bf16.mxu0 %v1727
  %1877 = vmatpush2.bf16.msra.mxu0 %v1726
  %1878 = vmatprep.subr.bf16.mxu0 %v1725
  %1879 = vmatpush2.bf16.msra.mxu0 %v1724
  %1880 = vmatprep.subr.bf16.mxu0 %v1723
  %1881 = vmatpush2.bf16.msra.mxu0 %v1722
  %1882 = vmatprep.subr.bf16.mxu0 %v1721
  %1883 = vmatpush2.bf16.msra.mxu0 %v1720
  %1884 = vmatprep.subr.bf16.mxu0 %v1719
  %1885 = vmatpush2.bf16.msra.mxu0 %v1718
  %1886 = vmatprep.subr.bf16.mxu0 %v1717
  %1887 = vmatpush2.bf16.msra.mxu0 %v1716
  %1888 = vmatprep.subr.bf16.mxu0 %v1715
  %1889 = vmatpush2.bf16.msra.mxu0 %v1714
  %1890 = vmatprep.subr.bf16.mxu0 %v1713
  %1891 = vmatpush2.bf16.msra.mxu0 %v1712
  %1892 = vmatprep.mubr.bf16.mxu0 %v1346
  %1893 = vmatmul.mubr.bf16.gmra.mxu0 %v1345
  %v1894 = vpop.f32.mrf.mxu0
  %v1895 = vadd.f32 %v1854, %v1894
  %v1896 = vpop.f32.mrf.mxu0
  %v1897 = vadd.f32 %v1856, %v1896
  %v1898 = vpop.f32.mrf.mxu0
  %v1899 = vpop.f32.mrf.mxu0
  %1900 = vdwg.mxu0
  %1901 = vmatprep.subr.bf16.mxu0 0
  %1902 = vmatpush1.bf16.msra.mxu0 0
  %1903 = vmatprep.subr.bf16.mxu0 0
  %1904 = vmatpush1.bf16.msra.mxu0 0
  %1905 = vmatprep.subr.bf16.mxu0 %v1739
  %1906 = vmatpush1.bf16.msra.mxu0 %v1738
  %1907 = vmatprep.subr.bf16.mxu0 %v1737
  %1908 = vmatpush1.bf16.msra.mxu0 %v1736
  %1909 = vmatprep.subr.bf16.mxu0 %v1735
  %1910 = vmatpush1.bf16.msra.mxu0 %v1734
  %1911 = vmatprep.subr.bf16.mxu0 %v1733
  %1912 = vmatpush1.bf16.msra.mxu0 %v1732
  %1913 = vmatprep.subr.bf16.mxu0 %v1731
  %1914 = vmatpush1.bf16.msra.mxu0 %v1730
  %1915 = vmatprep.subr.bf16.mxu0 %v1729
  %1916 = vmatpush1.bf16.msra.mxu0 %v1728
  %1917 = vmatprep.subr.bf16.mxu0 0
  %1918 = vmatpush2.bf16.msra.mxu0 0
  %1919 = vmatprep.subr.bf16.mxu0 0
  %1920 = vmatpush2.bf16.msra.mxu0 0
  %1921 = vmatprep.subr.bf16.mxu0 0
  %1922 = vmatpush2.bf16.msra.mxu0 0
  %1923 = vmatprep.subr.bf16.mxu0 0
  %1924 = vmatpush2.bf16.msra.mxu0 0
  %1925 = vmatprep.subr.bf16.mxu0 0
  %1926 = vmatpush2.bf16.msra.mxu0 0
  %1927 = vmatprep.subr.bf16.mxu0 0
  %1928 = vmatpush2.bf16.msra.mxu0 0
  %1929 = vmatprep.subr.bf16.mxu0 0
  %1930 = vmatpush2.bf16.msra.mxu0 0
  %1931 = vmatprep.subr.bf16.mxu0 0
  %1932 = vmatpush2.bf16.msra.mxu0 0
  %1933 = vmatprep.mubr.bf16.mxu0 0
  %1934 = vmatmul.mubr.bf16.gmra.mxu0 %v1817
  %v1935 = vpop.f32.mrf.mxu0
  %v1936 = vadd.f32 %v1895, %v1935
  %v1937 = vpop.f32.mrf.mxu0
  %v1938 = vadd.f32 %v1897, %v1937
  %v1939 = vpop.f32.mrf.mxu0
  %v1940 = vpop.f32.mrf.mxu0
  %1941 = vdwg.mxu0
  %v1944 = vcombine.low %v1936, %v1938
  %v1946 = vunpack.c.l.s4 1983009808
  %v1947 = vunpack.c.0.s8 %v1946
  %v1948 = vlaneseq
  %v1949 = vshrl.u32 %v1948, 7
  %v1950 = vsub.s32 %v1947, %v1949
  %v1951 = vrot.slane %v1944, %v1950
  %s1953 = scalar_lea.vmem [#allocation2], 8
  %1954 = vst [vmem:[%s1953] sm:$0xf] %v1951
  %vm1955 = vcmask 254976
  %1956 = vst.msk [vmem:[#allocation3] sm:$0x3] %vm1955, 0.0
  %1957 = vst.msk [vmem:[#allocation4] sm:$0x3] %vm1955, 0.0
  %1958 = vst.msk [vmem:[#allocation5] sm:$0x3] %vm1955, 0.0
  %1959 = vst.msk [vmem:[#allocation6] sm:$0x3] %vm1955, 0.0
  %v1960 = vld [vmem:[#allocation3] sm:$0x3]
  %v1961 = vld [vmem:[#allocation5] sm:$0x3]
  %1963 = vrot.lane.b32.xlu0 %v1961, 32
  %v1964 = vpop.permute.xlu0 %1963
  %vm1966 = vcmask 261120
  %v1967 = vsel %vm1966, %v1960, %v1964
  %v1968 = vpack.c.bf16 %v1967, %v1967
  %v1969 = vld [vmem:[%s3] sm:$0xff]
  %v1970 = vld [vmem:[%s3 + $0x8] sm:$0xff]
  %v1971 = vld [vmem:[%s3 + $0x10] sm:$0xff]
  %v1972 = vld [vmem:[%s3 + $0x18] sm:$0xff]
  %v1973 = vld [vmem:[%s3 + $0x20] sm:$0xff]
  %v1974 = vld [vmem:[%s3 + $0x28] sm:$0xff]
  %v1975 = vld [vmem:[%s3 + $0x30] sm:$0xff]
  %v1976 = vld [vmem:[%s3 + $0x38] sm:$0xff]
  %v1985 = vunpack.c.l.b16 %v1969
  %v1986 = vunpack.c.h.b16 %v1969
  %v1987 = vunpack.c.l.b16 %v1970
  %v1988 = vunpack.c.h.b16 %v1970
  %v1989 = vunpack.c.l.b16 %v1971
  %v1990 = vunpack.c.h.b16 %v1971
  %v1991 = vunpack.c.l.b16 %v1972
  %v1992 = vunpack.c.h.b16 %v1972
  %v1993 = vunpack.c.l.b16 %v1973
  %v1994 = vunpack.c.h.b16 %v1973
  %v1995 = vunpack.c.l.b16 %v1974
  %v1996 = vunpack.c.h.b16 %v1974
  %v1997 = vunpack.c.l.b16 %v1975
  %v1998 = vunpack.c.h.b16 %v1975
  %v1999 = vunpack.c.l.b16 %v1976
  %v2000 = vunpack.c.h.b16 %v1976
  %v2001 = vpack.c.b16 %v1987, %v1985
  %v2002 = vpack.c.b16 %v1988, %v1986
  %v2003 = vpack.c.b16 %v1991, %v1989
  %v2004 = vpack.c.b16 %v1992, %v1990
  %v2005 = vpack.c.b16 %v1995, %v1993
  %v2006 = vpack.c.b16 %v1996, %v1994
  %v2007 = vpack.c.b16 %v1999, %v1997
  %v2008 = vpack.c.b16 %v2000, %v1998
  %vm2017 = vcmask 523264
  %v2019 = vsel %vm2017, %v1968, 0
  %2021 = vmatprep.subr.bf16.mxu0 0
  %2022 = vmatpush1.bf16.msra.mxu0 0
  %2023 = vmatprep.subr.bf16.mxu0 0
  %2024 = vmatpush1.bf16.msra.mxu0 0
  %2025 = vmatprep.subr.bf16.mxu0 0
  %2026 = vmatpush1.bf16.msra.mxu0 0
  %2027 = vmatprep.subr.bf16.mxu0 0
  %2028 = vmatpush1.bf16.msra.mxu0 0
  %2029 = vmatprep.subr.bf16.mxu0 %v2008
  %2030 = vmatpush1.bf16.msra.mxu0 %v2007
  %2031 = vmatprep.subr.bf16.mxu0 %v2006
  %2032 = vmatpush1.bf16.msra.mxu0 %v2005
  %2033 = vmatprep.subr.bf16.mxu0 %v2004
  %2034 = vmatpush1.bf16.msra.mxu0 %v2003
  %2035 = vmatprep.subr.bf16.mxu0 %v2002
  %2036 = vmatpush1.bf16.msra.mxu0 %v2001
  %2037 = vmatprep.subr.bf16.mxu0 0
  %2038 = vmatpush2.bf16.msra.mxu0 0
  %2039 = vmatprep.subr.bf16.mxu0 0
  %2040 = vmatpush2.bf16.msra.mxu0 0
  %2041 = vmatprep.subr.bf16.mxu0 0
  %2042 = vmatpush2.bf16.msra.mxu0 0
  %2043 = vmatprep.subr.bf16.mxu0 0
  %2044 = vmatpush2.bf16.msra.mxu0 0
  %2045 = vmatprep.subr.bf16.mxu0 0
  %2046 = vmatpush2.bf16.msra.mxu0 0
  %2047 = vmatprep.subr.bf16.mxu0 0
  %2048 = vmatpush2.bf16.msra.mxu0 0
  %2049 = vmatprep.subr.bf16.mxu0 0
  %2050 = vmatpush2.bf16.msra.mxu0 0
  %2051 = vmatprep.subr.bf16.mxu0 0
  %2052 = vmatpush2.bf16.msra.mxu0 0
  %2053 = vmatprep.mubr.bf16.mxu0 0
  %2054 = vmatmul.mubr.bf16.gmra.mxu0 %v2019
  %v2055 = vpop.f32.mrf.mxu0
  %v2056 = vadd.f32 0.0, %v2055
  %v2057 = vpop.f32.mrf.mxu0
  %v2058 = vadd.f32 0.0, %v2057
  %v2059 = vpop.f32.mrf.mxu0
  %v2060 = vpop.f32.mrf.mxu0
  %2061 = vdwg.mxu0
  %v2062 = vld [vmem:[#allocation2] sm:$0xf]
  %v2063 = vadd.f32 %v2062, %v2056
  %v2064 = vld [vmem:[%s1953] sm:$0xf]
  %v2066 = vrot.slane %v2064, 2
  %v2068 = vadd.f32 %v2066, %v2058
  %v2069 = vld [vmem:[#allocation4] sm:$0x3]
  %v2070 = vxor.u32 %v2063, 2147483648
  %v2071 = vmul.f32 %v2070, 1.442695
  %v2072 = vpow.pop %v2071
  %v2073 = vadd.f32 %v2072, 1.0
  %v2074 = vrcp.pop %v2073
  %v2075 = vmul.f32 1.0, %v2074
  %v2076 = vtanh.pop %v2063
  %v2079 = vunpack.c.l.s4 1983009808
  %v2080 = vunpack.c.0.s8 %v2079
  %v2081 = vlaneseq
  %v2082 = vshrl.u32 %v2081, 7
  %v2083 = vsub.s32 %v2080, %v2082
  %v2084 = vrot.slane %v2069, %v2083
  %2085 = vrot.lane.b32.xlu0 %v2084, 32
  %v2086 = vpop.permute.xlu0 %2085
  %v2088 = vmul.f32 %v2075, %v2086
  %2090 = vrot.lane.b32.xlu0 %v2076, 64
  %v2091 = vpop.permute.xlu0 %2090
  %v2093 = vmul.f32 %v2075, %v2091
  %2095 = vrot.lane.b32.xlu0 %v2093, 32
  %v2096 = vpop.permute.xlu0 %2095
  %v2098 = vadd.f32 %v2088, %v2096
  %v2099 = vtanh.pop %v2098
  %2101 = vrot.lane.b32.xlu0 %v2099, 64
  %v2102 = vpop.permute.xlu0 %2101
  %v2104 = vmul.f32 %v2075, %v2102
  %v2107 = vunpack.c.l.s4 1983009808
  %v2108 = vunpack.c.0.s8 %v2107
  %v2109 = vlaneseq
  %v2110 = vshrl.u32 %v2109, 7
  %v2111 = vsub.s32 %v2108, %v2110
  %v2112 = vrot.slane %v2104, %v2111
  %2113 = vrot.lane.b32.xlu0 %v2112, 32
  %v2114 = vpop.permute.xlu0 %2113
  %2116 = vst.msk [vmem:[#allocation3] sm:$0x3] %vm1955, %v2114
  %v2119 = vunpack.c.l.s4 1983009808
  %v2120 = vunpack.c.0.s8 %v2119
  %v2121 = vlaneseq
  %v2122 = vshrl.u32 %v2121, 7
  %v2123 = vsub.s32 %v2120, %v2122
  %v2124 = vrot.slane %v2098, %v2123
  %2125 = vrot.lane.b32.xlu0 %v2124, 96
  %v2126 = vpop.permute.xlu0 %2125
  %2128 = vst.msk [vmem:[#allocation4] sm:$0x3] %vm1955, %v2126
  %2129 = vst.msk [vmem:[#allocation7] sm:$0x3] %vm1955, %v2114
  %v2130 = vld [vmem:[#allocation6] sm:$0x3]
  %v2131 = vxor.u32 %v2068, 2147483648
  %v2132 = vmul.f32 %v2131, 1.442695
  %v2133 = vpow.pop %v2132
  %v2134 = vadd.f32 %v2133, 1.0
  %v2135 = vrcp.pop %v2134
  %v2136 = vmul.f32 1.0, %v2135
  %v2137 = vtanh.pop %v2068
  %v2140 = vunpack.c.l.s4 1983009808
  %v2141 = vunpack.c.0.s8 %v2140
  %v2142 = vlaneseq
  %v2143 = vshrl.u32 %v2142, 7
  %v2144 = vsub.s32 %v2141, %v2143
  %v2145 = vrot.slane %v2130, %v2144
  %2146 = vrot.lane.b32.xlu0 %v2145, 32
  %v2147 = vpop.permute.xlu0 %2146
  %v2149 = vmul.f32 %v2136, %v2147
  %2151 = vrot.lane.b32.xlu0 %v2137, 64
  %v2152 = vpop.permute.xlu0 %2151
  %v2154 = vmul.f32 %v2136, %v2152
  %2156 = vrot.lane.b32.xlu0 %v2154, 32
  %v2157 = vpop.permute.xlu0 %2156
  %v2159 = vadd.f32 %v2149, %v2157
  %v2160 = vtanh.pop %v2159
  %2162 = vrot.lane.b32.xlu0 %v2160, 64
  %v2163 = vpop.permute.xlu0 %2162
  %v2165 = vmul.f32 %v2136, %v2163
  %v2168 = vunpack.c.l.s4 1983009808
  %v2169 = vunpack.c.0.s8 %v2168
  %v2170 = vlaneseq
  %v2171 = vshrl.u32 %v2170, 7
  %v2172 = vsub.s32 %v2169, %v2171
  %v2173 = vrot.slane %v2165, %v2172
  %2174 = vrot.lane.b32.xlu0 %v2173, 32
  %v2175 = vpop.permute.xlu0 %2174
  %2177 = vst.msk [vmem:[#allocation5] sm:$0x3] %vm1955, %v2175
  %v2180 = vunpack.c.l.s4 1983009808
  %v2181 = vunpack.c.0.s8 %v2180
  %v2182 = vlaneseq
  %v2183 = vshrl.u32 %v2182, 7
  %v2184 = vsub.s32 %v2181, %v2183
  %v2185 = vrot.slane %v2159, %v2184
  %2186 = vrot.lane.b32.xlu0 %v2185, 96
  %v2187 = vpop.permute.xlu0 %2186
  %2189 = vst.msk [vmem:[#allocation6] sm:$0x3] %vm1955, %v2187
  %s2190 = scalar_lea.vmem [#allocation8], 4
  %2191 = vst.msk [vmem:[%s2190] sm:$0x3] %vm1955, %v2175
  %v2192 = vld [vmem:[#allocation3] sm:$0x3]
  %v2193 = vld [vmem:[#allocation5] sm:$0x3]
  %2195 = vrot.lane.b32.xlu0 %v2193, 32
  %v2196 = vpop.permute.xlu0 %2195
  %v2198 = vsel %vm1966, %v2192, %v2196
  %v2199 = vpack.c.bf16 %v2198, %v2198
  %v2200 = vld [vmem:[%s3] sm:$0xff]
  %v2201 = vld [vmem:[%s3 + $0x8] sm:$0xff]
  %v2202 = vld [vmem:[%s3 + $0x10] sm:$0xff]
  %v2203 = vld [vmem:[%s3 + $0x18] sm:$0xff]
  %v2204 = vld [vmem:[%s3 + $0x20] sm:$0xff]
  %v2205 = vld [vmem:[%s3 + $0x28] sm:$0xff]
  %v2206 = vld [vmem:[%s3 + $0x30] sm:$0xff]
  %v2207 = vld [vmem:[%s3 + $0x38] sm:$0xff]
  %v2216 = vunpack.c.l.b16 %v2200
  %v2217 = vunpack.c.h.b16 %v2200
  %v2218 = vunpack.c.l.b16 %v2201
  %v2219 = vunpack.c.h.b16 %v2201
  %v2220 = vunpack.c.l.b16 %v2202
  %v2221 = vunpack.c.h.b16 %v2202
  %v2222 = vunpack.c.l.b16 %v2203
  %v2223 = vunpack.c.h.b16 %v2203
  %v2224 = vunpack.c.l.b16 %v2204
  %v2225 = vunpack.c.h.b16 %v2204
  %v2226 = vunpack.c.l.b16 %v2205
  %v2227 = vunpack.c.h.b16 %v2205
  %v2228 = vunpack.c.l.b16 %v2206
  %v2229 = vunpack.c.h.b16 %v2206
  %v2230 = vunpack.c.l.b16 %v2207
  %v2231 = vunpack.c.h.b16 %v2207
  %v2232 = vpack.c.b16 %v2218, %v2216
  %v2233 = vpack.c.b16 %v2219, %v2217
  %v2234 = vpack.c.b16 %v2222, %v2220
  %v2235 = vpack.c.b16 %v2223, %v2221
  %v2236 = vpack.c.b16 %v2226, %v2224
  %v2237 = vpack.c.b16 %v2227, %v2225
  %v2238 = vpack.c.b16 %v2230, %v2228
  %v2239 = vpack.c.b16 %v2231, %v2229
  %v2249 = vsel %vm2017, %v2199, 0
  %2251 = vmatprep.subr.bf16.mxu0 0
  %2252 = vmatpush1.bf16.msra.mxu0 0
  %2253 = vmatprep.subr.bf16.mxu0 0
  %2254 = vmatpush1.bf16.msra.mxu0 0
  %2255 = vmatprep.subr.bf16.mxu0 0
  %2256 = vmatpush1.bf16.msra.mxu0 0
  %2257 = vmatprep.subr.bf16.mxu0 0
  %2258 = vmatpush1.bf16.msra.mxu0 0
  %2259 = vmatprep.subr.bf16.mxu0 %v2239
  %2260 = vmatpush1.bf16.msra.mxu0 %v2238
  %2261 = vmatprep.subr.bf16.mxu0 %v2237
  %2262 = vmatpush1.bf16.msra.mxu0 %v2236
  %2263 = vmatprep.subr.bf16.mxu0 %v2235
  %2264 = vmatpush1.bf16.msra.mxu0 %v2234
  %2265 = vmatprep.subr.bf16.mxu0 %v2233
  %2266 = vmatpush1.bf16.msra.mxu0 %v2232
  %2267 = vmatprep.subr.bf16.mxu0 0
  %2268 = vmatpush2.bf16.msra.mxu0 0
  %2269 = vmatprep.subr.bf16.mxu0 0
  %2270 = vmatpush2.bf16.msra.mxu0 0
  %2271 = vmatprep.subr.bf16.mxu0 0
  %2272 = vmatpush2.bf16.msra.mxu0 0
  %2273 = vmatprep.subr.bf16.mxu0 0
  %2274 = vmatpush2.bf16.msra.mxu0 0
  %2275 = vmatprep.subr.bf16.mxu0 0
  %2276 = vmatpush2.bf16.msra.mxu0 0
  %2277 = vmatprep.subr.bf16.mxu0 0
  %2278 = vmatpush2.bf16.msra.mxu0 0
  %2279 = vmatprep.subr.bf16.mxu0 0
  %2280 = vmatpush2.bf16.msra.mxu0 0
  %2281 = vmatprep.subr.bf16.mxu0 0
  %2282 = vmatpush2.bf16.msra.mxu0 0
  %2283 = vmatprep.mubr.bf16.mxu0 0
  %2284 = vmatmul.mubr.bf16.gmra.mxu0 %v2249
  %v2285 = vpop.f32.mrf.mxu0
  %v2286 = vadd.f32 0.0, %v2285
  %v2287 = vpop.f32.mrf.mxu0
  %v2288 = vadd.f32 0.0, %v2287
  %v2289 = vpop.f32.mrf.mxu0
  %v2290 = vpop.f32.mrf.mxu0
  %2291 = vdwg.mxu0
  %v2292 = vld [vmem:[%s1307] sm:$0xf]
  %v2293 = vadd.f32 %v2292, %v2286
  %v2295 = vrot.slane %v2292, 2
  %v2297 = vadd.f32 %v2295, %v2288
  %v2298 = vld [vmem:[#allocation4] sm:$0x3]
  %v2299 = vxor.u32 %v2293, 2147483648
  %v2300 = vmul.f32 %v2299, 1.442695
  %v2301 = vpow.pop %v2300
  %v2302 = vadd.f32 %v2301, 1.0
  %v2303 = vrcp.pop %v2302
  %v2304 = vmul.f32 1.0, %v2303
  %v2305 = vtanh.pop %v2293
  %v2308 = vunpack.c.l.s4 1983009808
  %v2309 = vunpack.c.0.s8 %v2308
  %v2310 = vlaneseq
  %v2311 = vshrl.u32 %v2310, 7
  %v2312 = vsub.s32 %v2309, %v2311
  %v2313 = vrot.slane %v2298, %v2312
  %2314 = vrot.lane.b32.xlu0 %v2313, 32
  %v2315 = vpop.permute.xlu0 %2314
  %v2317 = vmul.f32 %v2304, %v2315
  %2319 = vrot.lane.b32.xlu0 %v2305, 64
  %v2320 = vpop.permute.xlu0 %2319
  %v2322 = vmul.f32 %v2304, %v2320
  %2324 = vrot.lane.b32.xlu0 %v2322, 32
  %v2325 = vpop.permute.xlu0 %2324
  %v2327 = vadd.f32 %v2317, %v2325
  %v2328 = vtanh.pop %v2327
  %2330 = vrot.lane.b32.xlu0 %v2328, 64
  %v2331 = vpop.permute.xlu0 %2330
  %v2333 = vmul.f32 %v2304, %v2331
  %v2336 = vunpack.c.l.s4 1983009808
  %v2337 = vunpack.c.0.s8 %v2336
  %v2338 = vlaneseq
  %v2339 = vshrl.u32 %v2338, 7
  %v2340 = vsub.s32 %v2337, %v2339
  %v2341 = vrot.slane %v2333, %v2340
  %2342 = vrot.lane.b32.xlu0 %v2341, 32
  %v2343 = vpop.permute.xlu0 %2342
  %2345 = vst.msk [vmem:[#allocation3] sm:$0x3] %vm1955, %v2343
  %v2348 = vunpack.c.l.s4 1983009808
  %v2349 = vunpack.c.0.s8 %v2348
  %v2350 = vlaneseq
  %v2351 = vshrl.u32 %v2350, 7
  %v2352 = vsub.s32 %v2349, %v2351
  %v2353 = vrot.slane %v2327, %v2352
  %2354 = vrot.lane.b32.xlu0 %v2353, 96
  %v2355 = vpop.permute.xlu0 %2354
  %2357 = vst.msk [vmem:[#allocation4] sm:$0x3] %vm1955, %v2355
  %s2358 = scalar_lea.vmem [#allocation7], 2
  %2359 = vst.msk [vmem:[%s2358] sm:$0x3] %vm1955, %v2343
  %v2360 = vld [vmem:[#allocation6] sm:$0x3]
  %v2361 = vxor.u32 %v2297, 2147483648
  %v2362 = vmul.f32 %v2361, 1.442695
  %v2363 = vpow.pop %v2362
  %v2364 = vadd.f32 %v2363, 1.0
  %v2365 = vrcp.pop %v2364
  %v2366 = vmul.f32 1.0, %v2365
  %v2367 = vtanh.pop %v2297
  %v2370 = vunpack.c.l.s4 1983009808
  %v2371 = vunpack.c.0.s8 %v2370
  %v2372 = vlaneseq
  %v2373 = vshrl.u32 %v2372, 7
  %v2374 = vsub.s32 %v2371, %v2373
  %v2375 = vrot.slane %v2360, %v2374
  %2376 = vrot.lane.b32.xlu0 %v2375, 32
  %v2377 = vpop.permute.xlu0 %2376
  %v2379 = vmul.f32 %v2366, %v2377
  %2381 = vrot.lane.b32.xlu0 %v2367, 64
  %v2382 = vpop.permute.xlu0 %2381
  %v2384 = vmul.f32 %v2366, %v2382
  %2386 = vrot.lane.b32.xlu0 %v2384, 32
  %v2387 = vpop.permute.xlu0 %2386
  %v2389 = vadd.f32 %v2379, %v2387
  %v2390 = vtanh.pop %v2389
  %2392 = vrot.lane.b32.xlu0 %v2390, 64
  %v2393 = vpop.permute.xlu0 %2392
  %v2395 = vmul.f32 %v2366, %v2393
  %v2398 = vunpack.c.l.s4 1983009808
  %v2399 = vunpack.c.0.s8 %v2398
  %v2400 = vlaneseq
  %v2401 = vshrl.u32 %v2400, 7
  %v2402 = vsub.s32 %v2399, %v2401
  %v2403 = vrot.slane %v2395, %v2402
  %2404 = vrot.lane.b32.xlu0 %v2403, 32
  %v2405 = vpop.permute.xlu0 %2404
  %2407 = vst.msk [vmem:[#allocation5] sm:$0x3] %vm1955, %v2405
  %v2410 = vunpack.c.l.s4 1983009808
  %v2411 = vunpack.c.0.s8 %v2410
  %v2412 = vlaneseq
  %v2413 = vshrl.u32 %v2412, 7
  %v2414 = vsub.s32 %v2411, %v2413
  %v2415 = vrot.slane %v2389, %v2414
  %2416 = vrot.lane.b32.xlu0 %v2415, 96
  %v2417 = vpop.permute.xlu0 %2416
  %2419 = vst.msk [vmem:[#allocation6] sm:$0x3] %vm1955, %v2417
  %s2420 = scalar_lea.vmem [#allocation8], 2
  %2421 = vst.msk [vmem:[%s2420] sm:$0x3] %vm1955, %v2405
  %v2422 = vld [vmem:[#allocation3] sm:$0x3]
  %v2423 = vld [vmem:[#allocation5] sm:$0x3]
  %2425 = vrot.lane.b32.xlu0 %v2423, 32
  %v2426 = vpop.permute.xlu0 %2425
  %v2428 = vsel %vm1966, %v2422, %v2426
  %v2429 = vpack.c.bf16 %v2428, %v2428
  %v2430 = vld [vmem:[%s3] sm:$0xff]
  %v2431 = vld [vmem:[%s3 + $0x8] sm:$0xff]
  %v2432 = vld [vmem:[%s3 + $0x10] sm:$0xff]
  %v2433 = vld [vmem:[%s3 + $0x18] sm:$0xff]
  %v2434 = vld [vmem:[%s3 + $0x20] sm:$0xff]
  %v2435 = vld [vmem:[%s3 + $0x28] sm:$0xff]
  %v2436 = vld [vmem:[%s3 + $0x30] sm:$0xff]
  %v2437 = vld [vmem:[%s3 + $0x38] sm:$0xff]
  %v2446 = vunpack.c.l.b16 %v2430
  %v2447 = vunpack.c.h.b16 %v2430
  %v2448 = vunpack.c.l.b16 %v2431
  %v2449 = vunpack.c.h.b16 %v2431
  %v2450 = vunpack.c.l.b16 %v2432
  %v2451 = vunpack.c.h.b16 %v2432
  %v2452 = vunpack.c.l.b16 %v2433
  %v2453 = vunpack.c.h.b16 %v2433
  %v2454 = vunpack.c.l.b16 %v2434
  %v2455 = vunpack.c.h.b16 %v2434
  %v2456 = vunpack.c.l.b16 %v2435
  %v2457 = vunpack.c.h.b16 %v2435
  %v2458 = vunpack.c.l.b16 %v2436
  %v2459 = vunpack.c.h.b16 %v2436
  %v2460 = vunpack.c.l.b16 %v2437
  %v2461 = vunpack.c.h.b16 %v2437
  %v2462 = vpack.c.b16 %v2448, %v2446
  %v2463 = vpack.c.b16 %v2449, %v2447
  %v2464 = vpack.c.b16 %v2452, %v2450
  %v2465 = vpack.c.b16 %v2453, %v2451
  %v2466 = vpack.c.b16 %v2456, %v2454
  %v2467 = vpack.c.b16 %v2457, %v2455
  %v2468 = vpack.c.b16 %v2460, %v2458
  %v2469 = vpack.c.b16 %v2461, %v2459
  %v2479 = vsel %vm2017, %v2429, 0
  %2481 = vmatprep.subr.bf16.mxu0 0
  %2482 = vmatpush1.bf16.msra.mxu0 0
  %2483 = vmatprep.subr.bf16.mxu0 0
  %2484 = vmatpush1.bf16.msra.mxu0 0
  %2485 = vmatprep.subr.bf16.mxu0 0
  %2486 = vmatpush1.bf16.msra.mxu0 0
  %2487 = vmatprep.subr.bf16.mxu0 0
  %2488 = vmatpush1.bf16.msra.mxu0 0
  %2489 = vmatprep.subr.bf16.mxu0 %v2469
  %2490 = vmatpush1.bf16.msra.mxu0 %v2468
  %2491 = vmatprep.subr.bf16.mxu0 %v2467
  %2492 = vmatpush1.bf16.msra.mxu0 %v2466
  %2493 = vmatprep.subr.bf16.mxu0 %v2465
  %2494 = vmatpush1.bf16.msra.mxu0 %v2464
  %2495 = vmatprep.subr.bf16.mxu0 %v2463
  %2496 = vmatpush1.bf16.msra.mxu0 %v2462
  %2497 = vmatprep.subr.bf16.mxu0 0
  %2498 = vmatpush2.bf16.msra.mxu0 0
  %2499 = vmatprep.subr.bf16.mxu0 0
  %2500 = vmatpush2.bf16.msra.mxu0 0
  %2501 = vmatprep.subr.bf16.mxu0 0
  %2502 = vmatpush2.bf16.msra.mxu0 0
  %2503 = vmatprep.subr.bf16.mxu0 0
  %2504 = vmatpush2.bf16.msra.mxu0 0
  %2505 = vmatprep.subr.bf16.mxu0 0
  %2506 = vmatpush2.bf16.msra.mxu0 0
  %2507 = vmatprep.subr.bf16.mxu0 0
  %2508 = vmatpush2.bf16.msra.mxu0 0
  %2509 = vmatprep.subr.bf16.mxu0 0
  %2510 = vmatpush2.bf16.msra.mxu0 0
  %2511 = vmatprep.subr.bf16.mxu0 0
  %2512 = vmatpush2.bf16.msra.mxu0 0
  %2513 = vmatprep.mubr.bf16.mxu0 0
  %2514 = vmatmul.mubr.bf16.gmra.mxu0 %v2479
  %v2515 = vpop.f32.mrf.mxu0
  %v2516 = vadd.f32 0.0, %v2515
  %v2517 = vpop.f32.mrf.mxu0
  %v2518 = vadd.f32 0.0, %v2517
  %v2519 = vpop.f32.mrf.mxu0
  %v2520 = vpop.f32.mrf.mxu0
  %2521 = vdwg.mxu0
  %v2522 = vld [vmem:[%s1953] sm:$0xf]
  %v2523 = vadd.f32 %v2522, %v2516
  %v2524 = vld [vmem:[#allocation2] sm:$0xf]
  %v2526 = vrot.slane %v2524, 2
  %v2528 = vadd.f32 %v2526, %v2518
  %v2529 = vld [vmem:[#allocation4] sm:$0x3]
  %v2530 = vxor.u32 %v2523, 2147483648
  %v2531 = vmul.f32 %v2530, 1.442695
  %v2532 = vpow.pop %v2531
  %v2533 = vadd.f32 %v2532, 1.0
  %v2534 = vrcp.pop %v2533
  %v2535 = vmul.f32 1.0, %v2534
  %v2536 = vtanh.pop %v2523
  %v2539 = vunpack.c.l.s4 1983009808
  %v2540 = vunpack.c.0.s8 %v2539
  %v2541 = vlaneseq
  %v2542 = vshrl.u32 %v2541, 7
  %v2543 = vsub.s32 %v2540, %v2542
  %v2544 = vrot.slane %v2529, %v2543
  %2545 = vrot.lane.b32.xlu0 %v2544, 32
  %v2546 = vpop.permute.xlu0 %2545
  %v2548 = vmul.f32 %v2535, %v2546
  %2550 = vrot.lane.b32.xlu0 %v2536, 64
  %v2551 = vpop.permute.xlu0 %2550
  %v2553 = vmul.f32 %v2535, %v2551
  %2555 = vrot.lane.b32.xlu0 %v2553, 32
  %v2556 = vpop.permute.xlu0 %2555
  %v2558 = vadd.f32 %v2548, %v2556
  %v2559 = vtanh.pop %v2558
  %2561 = vrot.lane.b32.xlu0 %v2559, 64
  %v2562 = vpop.permute.xlu0 %2561
  %v2564 = vmul.f32 %v2535, %v2562
  %v2567 = vunpack.c.l.s4 1983009808
  %v2568 = vunpack.c.0.s8 %v2567
  %v2569 = vlaneseq
  %v2570 = vshrl.u32 %v2569, 7
  %v2571 = vsub.s32 %v2568, %v2570
  %v2572 = vrot.slane %v2564, %v2571
  %2573 = vrot.lane.b32.xlu0 %v2572, 32
  %v2574 = vpop.permute.xlu0 %2573
  %2576 = vst.msk [vmem:[#allocation3] sm:$0x3] %vm1955, %v2574
  %v2579 = vunpack.c.l.s4 1983009808
  %v2580 = vunpack.c.0.s8 %v2579
  %v2581 = vlaneseq
  %v2582 = vshrl.u32 %v2581, 7
  %v2583 = vsub.s32 %v2580, %v2582
  %v2584 = vrot.slane %v2558, %v2583
  %2585 = vrot.lane.b32.xlu0 %v2584, 96
  %v2586 = vpop.permute.xlu0 %2585
  %2588 = vst.msk [vmem:[#allocation4] sm:$0x3] %vm1955, %v2586
  %s2589 = scalar_lea.vmem [#allocation7], 4
  %2590 = vst.msk [vmem:[%s2589] sm:$0x3] %vm1955, %v2574
  %v2591 = vld [vmem:[#allocation6] sm:$0x3]
  %v2592 = vxor.u32 %v2528, 2147483648
  %v2593 = vmul.f32 %v2592, 1.442695
  %v2594 = vpow.pop %v2593
  %v2595 = vadd.f32 %v2594, 1.0
  %v2596 = vrcp.pop %v2595
  %v2597 = vmul.f32 1.0, %v2596
  %v2598 = vtanh.pop %v2528
  %v2601 = vunpack.c.l.s4 1983009808
  %v2602 = vunpack.c.0.s8 %v2601
  %v2603 = vlaneseq
  %v2604 = vshrl.u32 %v2603, 7
  %v2605 = vsub.s32 %v2602, %v2604
  %v2606 = vrot.slane %v2591, %v2605
  %2607 = vrot.lane.b32.xlu0 %v2606, 32
  %v2608 = vpop.permute.xlu0 %2607
  %v2610 = vmul.f32 %v2597, %v2608
  %2612 = vrot.lane.b32.xlu0 %v2598, 64
  %v2613 = vpop.permute.xlu0 %2612
  %v2615 = vmul.f32 %v2597, %v2613
  %2617 = vrot.lane.b32.xlu0 %v2615, 32
  %v2618 = vpop.permute.xlu0 %2617
  %v2620 = vadd.f32 %v2610, %v2618
  %v2621 = vtanh.pop %v2620
  %2623 = vrot.lane.b32.xlu0 %v2621, 64
  %v2624 = vpop.permute.xlu0 %2623
  %v2626 = vmul.f32 %v2597, %v2624
  %v2629 = vunpack.c.l.s4 1983009808
  %v2630 = vunpack.c.0.s8 %v2629
  %v2631 = vlaneseq
  %v2632 = vshrl.u32 %v2631, 7
  %v2633 = vsub.s32 %v2630, %v2632
  %v2634 = vrot.slane %v2626, %v2633
  %2635 = vrot.lane.b32.xlu0 %v2634, 32
  %v2636 = vpop.permute.xlu0 %2635
  %2638 = vst.msk [vmem:[#allocation5] sm:$0x3] %vm1955, %v2636
  %v2641 = vunpack.c.l.s4 1983009808
  %v2642 = vunpack.c.0.s8 %v2641
  %v2643 = vlaneseq
  %v2644 = vshrl.u32 %v2643, 7
  %v2645 = vsub.s32 %v2642, %v2644
  %v2646 = vrot.slane %v2620, %v2645
  %2647 = vrot.lane.b32.xlu0 %v2646, 96
  %v2648 = vpop.permute.xlu0 %2647
  %2650 = vst.msk [vmem:[#allocation6] sm:$0x3] %vm1955, %v2648
  %2651 = vst.msk [vmem:[#allocation8] sm:$0x3] %vm1955, %v2636
  %v2652 = vld [vmem:[#allocation7] sm:$0x3]
  %v2653 = vld [vmem:[#allocation7 + $0x2] sm:$0x3]
  %v2654 = vld [vmem:[#allocation7 + $0x4] sm:$0x3]
  %v2655 = vld [vmem:[#allocation8] sm:$0x3]
  %v2656 = vld [vmem:[#allocation8 + $0x2] sm:$0x3]
  %v2657 = vld [vmem:[#allocation8 + $0x4] sm:$0x3]
  %2661 = vrot.lane.b32.xlu0 %v2655, 32
  %v2662 = vpop.permute.xlu0 %2661
  %2663 = vrot.lane.b32.xlu0 %v2656, 32
  %v2664 = vpop.permute.xlu0 %2663
  %2665 = vrot.lane.b32.xlu0 %v2657, 32
  %v2666 = vpop.permute.xlu0 %2665
  %v2670 = vsel %vm1966, %v2652, %v2662
  %v2671 = vsel %vm1966, %v2653, %v2664
  %v2672 = vsel %vm1966, %v2654, %v2666
  %vm2673 = vcmask 517120
  %2674 = vst.msk [vmem:[%s4] sm:$0x3] %vm2673, %v2670
  %2675 = vst.msk [vmem:[%s4 + $0x2] sm:$0x3] %vm2673, %v2671
  %2676 = vst.msk [vmem:[%s4 + $0x4] sm:$0x3] %vm2673, %v2672
  // Predicated region
  $region18: #{encoder_forward.12} parent=0 // pred_check
    _
  $region19: #{encoder_forward.12} parent=0 // pred_check_branch
    %2678 = sbr.rel (0) target = $region21
  $region20: #{encoder_forward.12} parent=0 // pred_region
    _
  $region21: #{encoder_forward.12} parent=0 // pred_fallthru
    _
  // Predicated region
  $region22: #{encoder_forward.12} parent=0 // pred_check
    _
  $region23: #{encoder_forward.12} parent=0 // pred_check_branch
    %2680 = sbr.rel (0) target = $region25
  $region24: #{encoder_forward.12} parent=0 // pred_region
    _
  $region25: #{encoder_forward.12} parent=0 // pred_fallthru
    _

// kernel: encoder_forward.14
$region0: #{encoder_forward.14}
  #allocation0 [shape = 'u32[]', space=smem, size = 0x4, offset = 0x4, fixed_abs, tag = 'smem constant byte address 0x4 - core index']
  #allocation1 [shape = 'u32[144,128]{1,0:T(1,128)}', space=vmem, size = 0x12000, scoped, tag = 'internal scratch']
  #allocation2 [shape = 'f32[3,2,256]{2,1,0:T(2,128)}', space=vmem, size = 0x1800, scoped, tag = 'scratch operand']
  #allocation3 [shape = 'f32[2,32]{1,0:T(2,128)}', space=vmem, size = 0x400, scoped, tag = 'scratch operand']
  #allocation4 [shape = 'f32[2,32]{1,0:T(2,128)}', space=vmem, size = 0x400, scoped, tag = 'scratch operand']
  #allocation5 [shape = 'f32[2,32]{1,0:T(2,128)}', space=vmem, size = 0x400, scoped, tag = 'scratch operand']
  #allocation6 [shape = 'f32[2,32]{1,0:T(2,128)}', space=vmem, size = 0x400, scoped, tag = 'scratch operand']
  #allocation7 [shape = 'f32[3,2,32]{2,1,0:T(2,128)}', space=vmem, size = 0xc00, scoped, tag = 'scratch operand']
  #allocation8 [shape = 'f32[3,2,32]{2,1,0:T(2,128)}', space=vmem, size = 0xc00, scoped, tag = 'scratch operand']
  %s0 = inlined_call_operand.vmem [shape: f32[3,2,64], index: 0, kind: input, shape index: {}]
  %s1 = inlined_call_operand.vmem [shape: bf16[64,256], index: 1, kind: input, shape index: {}]
  %s2 = inlined_call_operand.vmem [shape: f32[1,256], index: 2, kind: input, shape index: {}]
  %s3 = inlined_call_operand.vmem [shape: bf16[64,256], index: 3, kind: input, shape index: {}]
  %s4 = inlined_call_operand.vmem [shape: f32[3,2,64], index: 4, kind: output, shape index: {}]
  %s5 = sld [smem:[#allocation0]]
  $region26: #{encoder_forward.14} parent=0
    _
  %s7 = ssub.s32 1, %s5
  %s8 = scalar_select 0, %s7, %s5
  // Predicated region
  $region2: #{encoder_forward.14} parent=0 // pred_check
    _
  $region3: #{encoder_forward.14} parent=0 // pred_check_branch
    %10 = sbr.rel (0) target = $region5
  $region4: #{encoder_forward.14} parent=0 // pred_region
    _
  $region5: #{encoder_forward.14} parent=0 // pred_fallthru
    _
  // Predicated region
  $region6: #{encoder_forward.14} parent=0 // pred_check
    _
  $region7: #{encoder_forward.14} parent=0 // pred_check_branch
    %12 = sbr.rel (0) target = $region9
  $region8: #{encoder_forward.14} parent=0 // pred_region
    _
  $region9: #{encoder_forward.14} parent=0 // pred_fallthru
    _
  // Predicated region
  $region10: #{encoder_forward.14} parent=0 // pred_check
    _
  $region11: #{encoder_forward.14} parent=0 // pred_check_branch
    %14 = sbr.rel (0) target = $region13
  $region12: #{encoder_forward.14} parent=0 // pred_region
    _
  $region13: #{encoder_forward.14} parent=0 // pred_fallthru
    _
  // Predicated region
  $region14: #{encoder_forward.14} parent=0 // pred_check
    _
  $region15: #{encoder_forward.14} parent=0 // pred_check_branch
    %16 = sbr.rel (0) target = $region17
  $region16: #{encoder_forward.14} parent=0 // pred_region
    _
  $region17: #{encoder_forward.14} parent=0 // pred_fallthru
    _
  %v18 = vld [vmem:[%s0] sm:$0x3]
  %v19 = vpack.c.bf16 %v18, %v18
  %v20 = vld [vmem:[%s1] sm:$0xff]
  %v21 = vld [vmem:[%s1 + $0x8] sm:$0xff]
  %v22 = vld [vmem:[%s1 + $0x10] sm:$0xff]
  %v23 = vld [vmem:[%s1 + $0x18] sm:$0xff]
  %v24 = vld [vmem:[%s1 + $0x20] sm:$0xff]
  %v25 = vld [vmem:[%s1 + $0x28] sm:$0xff]
  %v26 = vld [vmem:[%s1 + $0x30] sm:$0xff]
  %v27 = vld [vmem:[%s1 + $0x38] sm:$0xff]
  %v28 = vld [vmem:[%s2] sm:$0x3]
  %v30 = vlaneseq
  %v31 = vshrl.u32 %v30, 7
  %v32 = vsub.s32 0, %v31
  %v33 = vrot.slane %v28, %v32
  %v34 = vlaneseq
  %v35 = vshrl.u32 %v34, 7
  %v36 = vsub.s32 1, %v35
  %v37 = vrot.slane %v28, %v36
  %v48 = vunpack.c.l.b16 %v20
  %v49 = vunpack.c.h.b16 %v20
  %v50 = vunpack.c.l.b16 %v21
  %v51 = vunpack.c.h.b16 %v21
  %v52 = vunpack.c.l.b16 %v22
  %v53 = vunpack.c.h.b16 %v22
  %v54 = vunpack.c.l.b16 %v23
  %v55 = vunpack.c.h.b16 %v23
  %v56 = vunpack.c.l.b16 %v24
  %v57 = vunpack.c.h.b16 %v24
  %v58 = vunpack.c.l.b16 %v25
  %v59 = vunpack.c.h.b16 %v25
  %v60 = vunpack.c.l.b16 %v26
  %v61 = vunpack.c.h.b16 %v26
  %v62 = vunpack.c.l.b16 %v27
  %v63 = vunpack.c.h.b16 %v27
  %v64 = vpack.c.b16 %v50, %v48
  %v65 = vpack.c.b16 %v51, %v49
  %v66 = vpack.c.b16 %v54, %v52
  %v67 = vpack.c.b16 %v55, %v53
  %v68 = vpack.c.b16 %v58, %v56
  %v69 = vpack.c.b16 %v59, %v57
  %v70 = vpack.c.b16 %v62, %v60
  %v71 = vpack.c.b16 %v63, %v61
  %vm80 = vcmask 523264
  %v82 = vsel %vm80, %v19, 0
  %84 = vmatprep.subr.bf16.mxu0 0
  %85 = vmatpush1.bf16.msra.mxu0 0
  %86 = vmatprep.subr.bf16.mxu0 0
  %87 = vmatpush1.bf16.msra.mxu0 0
  %88 = vmatprep.subr.bf16.mxu0 0
  %89 = vmatpush1.bf16.msra.mxu0 0
  %90 = vmatprep.subr.bf16.mxu0 0
  %91 = vmatpush1.bf16.msra.mxu0 0
  %92 = vmatprep.subr.bf16.mxu0 %v71
  %93 = vmatpush1.bf16.msra.mxu0 %v70
  %94 = vmatprep.subr.bf16.mxu0 %v69
  %95 = vmatpush1.bf16.msra.mxu0 %v68
  %96 = vmatprep.subr.bf16.mxu0 %v67
  %97 = vmatpush1.bf16.msra.mxu0 %v66
  %98 = vmatprep.subr.bf16.mxu0 %v65
  %99 = vmatpush1.bf16.msra.mxu0 %v64
  %100 = vmatprep.subr.bf16.mxu0 0
  %101 = vmatpush2.bf16.msra.mxu0 0
  %102 = vmatprep.subr.bf16.mxu0 0
  %103 = vmatpush2.bf16.msra.mxu0 0
  %104 = vmatprep.subr.bf16.mxu0 0
  %105 = vmatpush2.bf16.msra.mxu0 0
  %106 = vmatprep.subr.bf16.mxu0 0
  %107 = vmatpush2.bf16.msra.mxu0 0
  %108 = vmatprep.subr.bf16.mxu0 0
  %109 = vmatpush2.bf16.msra.mxu0 0
  %110 = vmatprep.subr.bf16.mxu0 0
  %111 = vmatpush2.bf16.msra.mxu0 0
  %112 = vmatprep.subr.bf16.mxu0 0
  %113 = vmatpush2.bf16.msra.mxu0 0
  %114 = vmatprep.subr.bf16.mxu0 0
  %115 = vmatpush2.bf16.msra.mxu0 0
  %116 = vmatprep.mubr.bf16.mxu0 0
  %117 = vmatmul.mubr.bf16.gmra.mxu0 %v82
  %v118 = vpop.f32.mrf.mxu0
  %v119 = vadd.f32 %v33, %v118
  %v120 = vpop.f32.mrf.mxu0
  %v121 = vadd.f32 %v37, %v120
  %v122 = vpop.f32.mrf.mxu0
  %v123 = vpop.f32.mrf.mxu0
  %124 = vdwg.mxu0
  %v127 = vcombine.low %v119, %v121
  %v129 = vunpack.c.l.s4 1983009808
  %v130 = vunpack.c.0.s8 %v129
  %v131 = vlaneseq
  %v132 = vshrl.u32 %v131, 7
  %v133 = vsub.s32 %v130, %v132
  %v134 = vrot.slane %v127, %v133
  %136 = vst [vmem:[#allocation2] sm:$0xf] %v134
  %s137 = scalar_lea.vmem %s0, 2
  %v138 = vld [vmem:[%s137] sm:$0x3]
  %v139 = vpack.c.bf16 %v138, %v138
  %v140 = vld [vmem:[%s1] sm:$0xff]
  %v141 = vld [vmem:[%s1 + $0x8] sm:$0xff]
  %v142 = vld [vmem:[%s1 + $0x10] sm:$0xff]
  %v143 = vld [vmem:[%s1 + $0x18] sm:$0xff]
  %v144 = vld [vmem:[%s1 + $0x20] sm:$0xff]
  %v145 = vld [vmem:[%s1 + $0x28] sm:$0xff]
  %v146 = vld [vmem:[%s1 + $0x30] sm:$0xff]
  %v147 = vld [vmem:[%s1 + $0x38] sm:$0xff]
  %v148 = vld [vmem:[%s2] sm:$0x3]
  %v150 = vlaneseq
  %v151 = vshrl.u32 %v150, 7
  %v152 = vsub.s32 0, %v151
  %v153 = vrot.slane %v148, %v152
  %v154 = vlaneseq
  %v155 = vshrl.u32 %v154, 7
  %v156 = vsub.s32 1, %v155
  %v157 = vrot.slane %v148, %v156
  %v168 = vunpack.c.l.b16 %v140
  %v169 = vunpack.c.h.b16 %v140
  %v170 = vunpack.c.l.b16 %v141
  %v171 = vunpack.c.h.b16 %v141
  %v172 = vunpack.c.l.b16 %v142
  %v173 = vunpack.c.h.b16 %v142
  %v174 = vunpack.c.l.b16 %v143
  %v175 = vunpack.c.h.b16 %v143
  %v176 = vunpack.c.l.b16 %v144
  %v177 = vunpack.c.h.b16 %v144
  %v178 = vunpack.c.l.b16 %v145
  %v179 = vunpack.c.h.b16 %v145
  %v180 = vunpack.c.l.b16 %v146
  %v181 = vunpack.c.h.b16 %v146
  %v182 = vunpack.c.l.b16 %v147
  %v183 = vunpack.c.h.b16 %v147
  %v184 = vpack.c.b16 %v170, %v168
  %v185 = vpack.c.b16 %v171, %v169
  %v186 = vpack.c.b16 %v174, %v172
  %v187 = vpack.c.b16 %v175, %v173
  %v188 = vpack.c.b16 %v178, %v176
  %v189 = vpack.c.b16 %v179, %v177
  %v190 = vpack.c.b16 %v182, %v180
  %v191 = vpack.c.b16 %v183, %v181
  %v201 = vsel %vm80, %v139, 0
  %203 = vmatprep.subr.bf16.mxu0 0
  %204 = vmatpush1.bf16.msra.mxu0 0
  %205 = vmatprep.subr.bf16.mxu0 0
  %206 = vmatpush1.bf16.msra.mxu0 0
  %207 = vmatprep.subr.bf16.mxu0 0
  %208 = vmatpush1.bf16.msra.mxu0 0
  %209 = vmatprep.subr.bf16.mxu0 0
  %210 = vmatpush1.bf16.msra.mxu0 0
  %211 = vmatprep.subr.bf16.mxu0 %v191
  %212 = vmatpush1.bf16.msra.mxu0 %v190
  %213 = vmatprep.subr.bf16.mxu0 %v189
  %214 = vmatpush1.bf16.msra.mxu0 %v188
  %215 = vmatprep.subr.bf16.mxu0 %v187
  %216 = vmatpush1.bf16.msra.mxu0 %v186
  %217 = vmatprep.subr.bf16.mxu0 %v185
  %218 = vmatpush1.bf16.msra.mxu0 %v184
  %219 = vmatprep.subr.bf16.mxu0 0
  %220 = vmatpush2.bf16.msra.mxu0 0
  %221 = vmatprep.subr.bf16.mxu0 0
  %222 = vmatpush2.bf16.msra.mxu0 0
  %223 = vmatprep.subr.bf16.mxu0 0
  %224 = vmatpush2.bf16.msra.mxu0 0
  %225 = vmatprep.subr.bf16.mxu0 0
  %226 = vmatpush2.bf16.msra.mxu0 0
  %227 = vmatprep.subr.bf16.mxu0 0
  %228 = vmatpush2.bf16.msra.mxu0 0
  %229 = vmatprep.subr.bf16.mxu0 0
  %230 = vmatpush2.bf16.msra.mxu0 0
  %231 = vmatprep.subr.bf16.mxu0 0
  %232 = vmatpush2.bf16.msra.mxu0 0
  %233 = vmatprep.subr.bf16.mxu0 0
  %234 = vmatpush2.bf16.msra.mxu0 0
  %235 = vmatprep.mubr.bf16.mxu0 0
  %236 = vmatmul.mubr.bf16.gmra.mxu0 %v201
  %v237 = vpop.f32.mrf.mxu0
  %v238 = vadd.f32 %v153, %v237
  %v239 = vpop.f32.mrf.mxu0
  %v240 = vadd.f32 %v157, %v239
  %v241 = vpop.f32.mrf.mxu0
  %v242 = vpop.f32.mrf.mxu0
  %243 = vdwg.mxu0
  %v246 = vcombine.low %v238, %v240
  %v248 = vunpack.c.l.s4 1983009808
  %v249 = vunpack.c.0.s8 %v248
  %v250 = vlaneseq
  %v251 = vshrl.u32 %v250, 7
  %v252 = vsub.s32 %v249, %v251
  %v253 = vrot.slane %v246, %v252
  %s255 = scalar_lea.vmem [#allocation2], 4
  %256 = vst [vmem:[%s255] sm:$0xf] %v253
  %s257 = scalar_lea.vmem %s0, 4
  %v258 = vld [vmem:[%s257] sm:$0x3]
  %v259 = vpack.c.bf16 %v258, %v258
  %v260 = vld [vmem:[%s1] sm:$0xff]
  %v261 = vld [vmem:[%s1 + $0x8] sm:$0xff]
  %v262 = vld [vmem:[%s1 + $0x10] sm:$0xff]
  %v263 = vld [vmem:[%s1 + $0x18] sm:$0xff]
  %v264 = vld [vmem:[%s1 + $0x20] sm:$0xff]
  %v265 = vld [vmem:[%s1 + $0x28] sm:$0xff]
  %v266 = vld [vmem:[%s1 + $0x30] sm:$0xff]
  %v267 = vld [vmem:[%s1 + $0x38] sm:$0xff]
  %v268 = vld [vmem:[%s2] sm:$0x3]
  %v270 = vlaneseq
  %v271 = vshrl.u32 %v270, 7
  %v272 = vsub.s32 0, %v271
  %v273 = vrot.slane %v268, %v272
  %v274 = vlaneseq
  %v275 = vshrl.u32 %v274, 7
  %v276 = vsub.s32 1, %v275
  %v277 = vrot.slane %v268, %v276
  %v288 = vunpack.c.l.b16 %v260
  %v289 = vunpack.c.h.b16 %v260
  %v290 = vunpack.c.l.b16 %v261
  %v291 = vunpack.c.h.b16 %v261
  %v292 = vunpack.c.l.b16 %v262
  %v293 = vunpack.c.h.b16 %v262
  %v294 = vunpack.c.l.b16 %v263
  %v295 = vunpack.c.h.b16 %v263
  %v296 = vunpack.c.l.b16 %v264
  %v297 = vunpack.c.h.b16 %v264
  %v298 = vunpack.c.l.b16 %v265
  %v299 = vunpack.c.h.b16 %v265
  %v300 = vunpack.c.l.b16 %v266
  %v301 = vunpack.c.h.b16 %v266
  %v302 = vunpack.c.l.b16 %v267
  %v303 = vunpack.c.h.b16 %v267
  %v304 = vpack.c.b16 %v290, %v288
  %v305 = vpack.c.b16 %v291, %v289
  %v306 = vpack.c.b16 %v294, %v292
  %v307 = vpack.c.b16 %v295, %v293
  %v308 = vpack.c.b16 %v298, %v296
  %v309 = vpack.c.b16 %v299, %v297
  %v310 = vpack.c.b16 %v302, %v300
  %v311 = vpack.c.b16 %v303, %v301
  %v321 = vsel %vm80, %v259, 0
  %323 = vmatprep.subr.bf16.mxu0 0
  %324 = vmatpush1.bf16.msra.mxu0 0
  %325 = vmatprep.subr.bf16.mxu0 0
  %326 = vmatpush1.bf16.msra.mxu0 0
  %327 = vmatprep.subr.bf16.mxu0 0
  %328 = vmatpush1.bf16.msra.mxu0 0
  %329 = vmatprep.subr.bf16.mxu0 0
  %330 = vmatpush1.bf16.msra.mxu0 0
  %331 = vmatprep.subr.bf16.mxu0 %v311
  %332 = vmatpush1.bf16.msra.mxu0 %v310
  %333 = vmatprep.subr.bf16.mxu0 %v309
  %334 = vmatpush1.bf16.msra.mxu0 %v308
  %335 = vmatprep.subr.bf16.mxu0 %v307
  %336 = vmatpush1.bf16.msra.mxu0 %v306
  %337 = vmatprep.subr.bf16.mxu0 %v305
  %338 = vmatpush1.bf16.msra.mxu0 %v304
  %339 = vmatprep.subr.bf16.mxu0 0
  %340 = vmatpush2.bf16.msra.mxu0 0
  %341 = vmatprep.subr.bf16.mxu0 0
  %342 = vmatpush2.bf16.msra.mxu0 0
  %343 = vmatprep.subr.bf16.mxu0 0
  %344 = vmatpush2.bf16.msra.mxu0 0
  %345 = vmatprep.subr.bf16.mxu0 0
  %346 = vmatpush2.bf16.msra.mxu0 0
  %347 = vmatprep.subr.bf16.mxu0 0
  %348 = vmatpush2.bf16.msra.mxu0 0
  %349 = vmatprep.subr.bf16.mxu0 0
  %350 = vmatpush2.bf16.msra.mxu0 0
  %351 = vmatprep.subr.bf16.mxu0 0
  %352 = vmatpush2.bf16.msra.mxu0 0
  %353 = vmatprep.subr.bf16.mxu0 0
  %354 = vmatpush2.bf16.msra.mxu0 0
  %355 = vmatprep.mubr.bf16.mxu0 0
  %356 = vmatmul.mubr.bf16.gmra.mxu0 %v321
  %v357 = vpop.f32.mrf.mxu0
  %v358 = vadd.f32 %v273, %v357
  %v359 = vpop.f32.mrf.mxu0
  %v360 = vadd.f32 %v277, %v359
  %v361 = vpop.f32.mrf.mxu0
  %v362 = vpop.f32.mrf.mxu0
  %363 = vdwg.mxu0
  %v366 = vcombine.low %v358, %v360
  %v368 = vunpack.c.l.s4 1983009808
  %v369 = vunpack.c.0.s8 %v368
  %v370 = vlaneseq
  %v371 = vshrl.u32 %v370, 7
  %v372 = vsub.s32 %v369, %v371
  %v373 = vrot.slane %v366, %v372
  %s375 = scalar_lea.vmem [#allocation2], 8
  %376 = vst [vmem:[%s375] sm:$0xf] %v373
  %vm377 = vcmask 254976
  %378 = vst.msk [vmem:[#allocation3] sm:$0x3] %vm377, 0.0
  %379 = vst.msk [vmem:[#allocation4] sm:$0x3] %vm377, 0.0
  %380 = vst.msk [vmem:[#allocation5] sm:$0x3] %vm377, 0.0
  %381 = vst.msk [vmem:[#allocation6] sm:$0x3] %vm377, 0.0
  %v382 = vld [vmem:[#allocation3] sm:$0x3]
  %v383 = vld [vmem:[#allocation5] sm:$0x3]
  %385 = vrot.lane.b32.xlu0 %v383, 32
  %v386 = vpop.permute.xlu0 %385
  %vm388 = vcmask 261120
  %v389 = vsel %vm388, %v382, %v386
  %v390 = vpack.c.bf16 %v389, %v389
  %v391 = vld [vmem:[%s3] sm:$0xff]
  %v392 = vld [vmem:[%s3 + $0x8] sm:$0xff]
  %v393 = vld [vmem:[%s3 + $0x10] sm:$0xff]
  %v394 = vld [vmem:[%s3 + $0x18] sm:$0xff]
  %v395 = vld [vmem:[%s3 + $0x20] sm:$0xff]
  %v396 = vld [vmem:[%s3 + $0x28] sm:$0xff]
  %v397 = vld [vmem:[%s3 + $0x30] sm:$0xff]
  %v398 = vld [vmem:[%s3 + $0x38] sm:$0xff]
  %v407 = vunpack.c.l.b16 %v391
  %v408 = vunpack.c.h.b16 %v391
  %v409 = vunpack.c.l.b16 %v392
  %v410 = vunpack.c.h.b16 %v392
  %v411 = vunpack.c.l.b16 %v393
  %v412 = vunpack.c.h.b16 %v393
  %v413 = vunpack.c.l.b16 %v394
  %v414 = vunpack.c.h.b16 %v394
  %v415 = vunpack.c.l.b16 %v395
  %v416 = vunpack.c.h.b16 %v395
  %v417 = vunpack.c.l.b16 %v396
  %v418 = vunpack.c.h.b16 %v396
  %v419 = vunpack.c.l.b16 %v397
  %v420 = vunpack.c.h.b16 %v397
  %v421 = vunpack.c.l.b16 %v398
  %v422 = vunpack.c.h.b16 %v398
  %v423 = vpack.c.b16 %v409, %v407
  %v424 = vpack.c.b16 %v410, %v408
  %v425 = vpack.c.b16 %v413, %v411
  %v426 = vpack.c.b16 %v414, %v412
  %v427 = vpack.c.b16 %v417, %v415
  %v428 = vpack.c.b16 %v418, %v416
  %v429 = vpack.c.b16 %v421, %v419
  %v430 = vpack.c.b16 %v422, %v420
  %v440 = vsel %vm80, %v390, 0
  %442 = vmatprep.subr.bf16.mxu0 0
  %443 = vmatpush1.bf16.msra.mxu0 0
  %444 = vmatprep.subr.bf16.mxu0 0
  %445 = vmatpush1.bf16.msra.mxu0 0
  %446 = vmatprep.subr.bf16.mxu0 0
  %447 = vmatpush1.bf16.msra.mxu0 0
  %448 = vmatprep.subr.bf16.mxu0 0
  %449 = vmatpush1.bf16.msra.mxu0 0
  %450 = vmatprep.subr.bf16.mxu0 %v430
  %451 = vmatpush1.bf16.msra.mxu0 %v429
  %452 = vmatprep.subr.bf16.mxu0 %v428
  %453 = vmatpush1.bf16.msra.mxu0 %v427
  %454 = vmatprep.subr.bf16.mxu0 %v426
  %455 = vmatpush1.bf16.msra.mxu0 %v425
  %456 = vmatprep.subr.bf16.mxu0 %v424
  %457 = vmatpush1.bf16.msra.mxu0 %v423
  %458 = vmatprep.subr.bf16.mxu0 0
  %459 = vmatpush2.bf16.msra.mxu0 0
  %460 = vmatprep.subr.bf16.mxu0 0
  %461 = vmatpush2.bf16.msra.mxu0 0
  %462 = vmatprep.subr.bf16.mxu0 0
  %463 = vmatpush2.bf16.msra.mxu0 0
  %464 = vmatprep.subr.bf16.mxu0 0
  %465 = vmatpush2.bf16.msra.mxu0 0
  %466 = vmatprep.subr.bf16.mxu0 0
  %467 = vmatpush2.bf16.msra.mxu0 0
  %468 = vmatprep.subr.bf16.mxu0 0
  %469 = vmatpush2.bf16.msra.mxu0 0
  %470 = vmatprep.subr.bf16.mxu0 0
  %471 = vmatpush2.bf16.msra.mxu0 0
  %472 = vmatprep.subr.bf16.mxu0 0
  %473 = vmatpush2.bf16.msra.mxu0 0
  %474 = vmatprep.mubr.bf16.mxu0 0
  %475 = vmatmul.mubr.bf16.gmra.mxu0 %v440
  %v476 = vpop.f32.mrf.mxu0
  %v477 = vadd.f32 0.0, %v476
  %v478 = vpop.f32.mrf.mxu0
  %v479 = vadd.f32 0.0, %v478
  %v480 = vpop.f32.mrf.mxu0
  %v481 = vpop.f32.mrf.mxu0
  %482 = vdwg.mxu0
  %v483 = vld [vmem:[#allocation2] sm:$0xf]
  %v484 = vadd.f32 %v483, %v477
  %v485 = vld [vmem:[%s375] sm:$0xf]
  %v487 = vrot.slane %v485, 2
  %v489 = vadd.f32 %v487, %v479
  %v490 = vld [vmem:[#allocation4] sm:$0x3]
  %v491 = vxor.u32 %v484, 2147483648
  %v492 = vmul.f32 %v491, 1.442695
  %v493 = vpow.pop %v492
  %v494 = vadd.f32 %v493, 1.0
  %v495 = vrcp.pop %v494
  %v496 = vmul.f32 1.0, %v495
  %v497 = vtanh.pop %v484
  %v500 = vunpack.c.l.s4 1983009808
  %v501 = vunpack.c.0.s8 %v500
  %v502 = vlaneseq
  %v503 = vshrl.u32 %v502, 7
  %v504 = vsub.s32 %v501, %v503
  %v505 = vrot.slane %v490, %v504
  %506 = vrot.lane.b32.xlu0 %v505, 32
  %v507 = vpop.permute.xlu0 %506
  %v509 = vmul.f32 %v496, %v507
  %511 = vrot.lane.b32.xlu0 %v497, 64
  %v512 = vpop.permute.xlu0 %511
  %v514 = vmul.f32 %v496, %v512
  %516 = vrot.lane.b32.xlu0 %v514, 32
  %v517 = vpop.permute.xlu0 %516
  %v519 = vadd.f32 %v509, %v517
  %v520 = vtanh.pop %v519
  %522 = vrot.lane.b32.xlu0 %v520, 64
  %v523 = vpop.permute.xlu0 %522
  %v525 = vmul.f32 %v496, %v523
  %v528 = vunpack.c.l.s4 1983009808
  %v529 = vunpack.c.0.s8 %v528
  %v530 = vlaneseq
  %v531 = vshrl.u32 %v530, 7
  %v532 = vsub.s32 %v529, %v531
  %v533 = vrot.slane %v525, %v532
  %534 = vrot.lane.b32.xlu0 %v533, 32
  %v535 = vpop.permute.xlu0 %534
  %537 = vst.msk [vmem:[#allocation3] sm:$0x3] %vm377, %v535
  %v540 = vunpack.c.l.s4 1983009808
  %v541 = vunpack.c.0.s8 %v540
  %v542 = vlaneseq
  %v543 = vshrl.u32 %v542, 7
  %v544 = vsub.s32 %v541, %v543
  %v545 = vrot.slane %v519, %v544
  %546 = vrot.lane.b32.xlu0 %v545, 96
  %v547 = vpop.permute.xlu0 %546
  %549 = vst.msk [vmem:[#allocation4] sm:$0x3] %vm377, %v547
  %550 = vst.msk [vmem:[#allocation7] sm:$0x3] %vm377, %v535
  %v551 = vld [vmem:[#allocation6] sm:$0x3]
  %v552 = vxor.u32 %v489, 2147483648
  %v553 = vmul.f32 %v552, 1.442695
  %v554 = vpow.pop %v553
  %v555 = vadd.f32 %v554, 1.0
  %v556 = vrcp.pop %v555
  %v557 = vmul.f32 1.0, %v556
  %v558 = vtanh.pop %v489
  %v561 = vunpack.c.l.s4 1983009808
  %v562 = vunpack.c.0.s8 %v561
  %v563 = vlaneseq
  %v564 = vshrl.u32 %v563, 7
  %v565 = vsub.s32 %v562, %v564
  %v566 = vrot.slane %v551, %v565
  %567 = vrot.lane.b32.xlu0 %v566, 32
  %v568 = vpop.permute.xlu0 %567
  %v570 = vmul.f32 %v557, %v568
  %572 = vrot.lane.b32.xlu0 %v558, 64
  %v573 = vpop.permute.xlu0 %572
  %v575 = vmul.f32 %v557, %v573
  %577 = vrot.lane.b32.xlu0 %v575, 32
  %v578 = vpop.permute.xlu0 %577
  %v580 = vadd.f32 %v570, %v578
  %v581 = vtanh.pop %v580
  %583 = vrot.lane.b32.xlu0 %v581, 64
  %v584 = vpop.permute.xlu0 %583
  %v586 = vmul.f32 %v557, %v584
  %v589 = vunpack.c.l.s4 1983009808
  %v590 = vunpack.c.0.s8 %v589
  %v591 = vlaneseq
  %v592 = vshrl.u32 %v591, 7
  %v593 = vsub.s32 %v590, %v592
  %v594 = vrot.slane %v586, %v593
  %595 = vrot.lane.b32.xlu0 %v594, 32
  %v596 = vpop.permute.xlu0 %595
  %598 = vst.msk [vmem:[#allocation5] sm:$0x3] %vm377, %v596
  %v601 = vunpack.c.l.s4 1983009808
  %v602 = vunpack.c.0.s8 %v601
  %v603 = vlaneseq
  %v604 = vshrl.u32 %v603, 7
  %v605 = vsub.s32 %v602, %v604
  %v606 = vrot.slane %v580, %v605
  %607 = vrot.lane.b32.xlu0 %v606, 96
  %v608 = vpop.permute.xlu0 %607
  %610 = vst.msk [vmem:[#allocation6] sm:$0x3] %vm377, %v608
  %s611 = scalar_lea.vmem [#allocation8], 4
  %612 = vst.msk [vmem:[%s611] sm:$0x3] %vm377, %v596
  %v613 = vld [vmem:[#allocation3] sm:$0x3]
  %v614 = vld [vmem:[#allocation5] sm:$0x3]
  %616 = vrot.lane.b32.xlu0 %v614, 32
  %v617 = vpop.permute.xlu0 %616
  %v619 = vsel %vm388, %v613, %v617
  %v620 = vpack.c.bf16 %v619, %v619
  %v621 = vld [vmem:[%s3] sm:$0xff]
  %v622 = vld [vmem:[%s3 + $0x8] sm:$0xff]
  %v623 = vld [vmem:[%s3 + $0x10] sm:$0xff]
  %v624 = vld [vmem:[%s3 + $0x18] sm:$0xff]
  %v625 = vld [vmem:[%s3 + $0x20] sm:$0xff]
  %v626 = vld [vmem:[%s3 + $0x28] sm:$0xff]
  %v627 = vld [vmem:[%s3 + $0x30] sm:$0xff]
  %v628 = vld [vmem:[%s3 + $0x38] sm:$0xff]
  %v637 = vunpack.c.l.b16 %v621
  %v638 = vunpack.c.h.b16 %v621
  %v639 = vunpack.c.l.b16 %v622
  %v640 = vunpack.c.h.b16 %v622
  %v641 = vunpack.c.l.b16 %v623
  %v642 = vunpack.c.h.b16 %v623
  %v643 = vunpack.c.l.b16 %v624
  %v644 = vunpack.c.h.b16 %v624
  %v645 = vunpack.c.l.b16 %v625
  %v646 = vunpack.c.h.b16 %v625
  %v647 = vunpack.c.l.b16 %v626
  %v648 = vunpack.c.h.b16 %v626
  %v649 = vunpack.c.l.b16 %v627
  %v650 = vunpack.c.h.b16 %v627
  %v651 = vunpack.c.l.b16 %v628
  %v652 = vunpack.c.h.b16 %v628
  %v653 = vpack.c.b16 %v639, %v637
  %v654 = vpack.c.b16 %v640, %v638
  %v655 = vpack.c.b16 %v643, %v641
  %v656 = vpack.c.b16 %v644, %v642
  %v657 = vpack.c.b16 %v647, %v645
  %v658 = vpack.c.b16 %v648, %v646
  %v659 = vpack.c.b16 %v651, %v649
  %v660 = vpack.c.b16 %v652, %v650
  %v670 = vsel %vm80, %v620, 0
  %672 = vmatprep.subr.bf16.mxu0 0
  %673 = vmatpush1.bf16.msra.mxu0 0
  %674 = vmatprep.subr.bf16.mxu0 0
  %675 = vmatpush1.bf16.msra.mxu0 0
  %676 = vmatprep.subr.bf16.mxu0 0
  %677 = vmatpush1.bf16.msra.mxu0 0
  %678 = vmatprep.subr.bf16.mxu0 0
  %679 = vmatpush1.bf16.msra.mxu0 0
  %680 = vmatprep.subr.bf16.mxu0 %v660
  %681 = vmatpush1.bf16.msra.mxu0 %v659
  %682 = vmatprep.subr.bf16.mxu0 %v658
  %683 = vmatpush1.bf16.msra.mxu0 %v657
  %684 = vmatprep.subr.bf16.mxu0 %v656
  %685 = vmatpush1.bf16.msra.mxu0 %v655
  %686 = vmatprep.subr.bf16.mxu0 %v654
  %687 = vmatpush1.bf16.msra.mxu0 %v653
  %688 = vmatprep.subr.bf16.mxu0 0
  %689 = vmatpush2.bf16.msra.mxu0 0
  %690 = vmatprep.subr.bf16.mxu0 0
  %691 = vmatpush2.bf16.msra.mxu0 0
  %692 = vmatprep.subr.bf16.mxu0 0
  %693 = vmatpush2.bf16.msra.mxu0 0
  %694 = vmatprep.subr.bf16.mxu0 0
  %695 = vmatpush2.bf16.msra.mxu0 0
  %696 = vmatprep.subr.bf16.mxu0 0
  %697 = vmatpush2.bf16.msra.mxu0 0
  %698 = vmatprep.subr.bf16.mxu0 0
  %699 = vmatpush2.bf16.msra.mxu0 0
  %700 = vmatprep.subr.bf16.mxu0 0
  %701 = vmatpush2.bf16.msra.mxu0 0
  %702 = vmatprep.subr.bf16.mxu0 0
  %703 = vmatpush2.bf16.msra.mxu0 0
  %704 = vmatprep.mubr.bf16.mxu0 0
  %705 = vmatmul.mubr.bf16.gmra.mxu0 %v670
  %v706 = vpop.f32.mrf.mxu0
  %v707 = vadd.f32 0.0, %v706
  %v708 = vpop.f32.mrf.mxu0
  %v709 = vadd.f32 0.0, %v708
  %v710 = vpop.f32.mrf.mxu0
  %v711 = vpop.f32.mrf.mxu0
  %712 = vdwg.mxu0
  %v713 = vld [vmem:[%s255] sm:$0xf]
  %v714 = vadd.f32 %v713, %v707
  %v716 = vrot.slane %v713, 2
  %v718 = vadd.f32 %v716, %v709
  %v719 = vld [vmem:[#allocation4] sm:$0x3]
  %v720 = vxor.u32 %v714, 2147483648
  %v721 = vmul.f32 %v720, 1.442695
  %v722 = vpow.pop %v721
  %v723 = vadd.f32 %v722, 1.0
  %v724 = vrcp.pop %v723
  %v725 = vmul.f32 1.0, %v724
  %v726 = vtanh.pop %v714
  %v729 = vunpack.c.l.s4 1983009808
  %v730 = vunpack.c.0.s8 %v729
  %v731 = vlaneseq
  %v732 = vshrl.u32 %v731, 7
  %v733 = vsub.s32 %v730, %v732
  %v734 = vrot.slane %v719, %v733
  %735 = vrot.lane.b32.xlu0 %v734, 32
  %v736 = vpop.permute.xlu0 %735
  %v738 = vmul.f32 %v725, %v736
  %740 = vrot.lane.b32.xlu0 %v726, 64
  %v741 = vpop.permute.xlu0 %740
  %v743 = vmul.f32 %v725, %v741
  %745 = vrot.lane.b32.xlu0 %v743, 32
  %v746 = vpop.permute.xlu0 %745
  %v748 = vadd.f32 %v738, %v746
  %v749 = vtanh.pop %v748
  %751 = vrot.lane.b32.xlu0 %v749, 64
  %v752 = vpop.permute.xlu0 %751
  %v754 = vmul.f32 %v725, %v752
  %v757 = vunpack.c.l.s4 1983009808
  %v758 = vunpack.c.0.s8 %v757
  %v759 = vlaneseq
  %v760 = vshrl.u32 %v759, 7
  %v761 = vsub.s32 %v758, %v760
  %v762 = vrot.slane %v754, %v761
  %763 = vrot.lane.b32.xlu0 %v762, 32
  %v764 = vpop.permute.xlu0 %763
  %766 = vst.msk [vmem:[#allocation3] sm:$0x3] %vm377, %v764
  %v769 = vunpack.c.l.s4 1983009808
  %v770 = vunpack.c.0.s8 %v769
  %v771 = vlaneseq
  %v772 = vshrl.u32 %v771, 7
  %v773 = vsub.s32 %v770, %v772
  %v774 = vrot.slane %v748, %v773
  %775 = vrot.lane.b32.xlu0 %v774, 96
  %v776 = vpop.permute.xlu0 %775
  %778 = vst.msk [vmem:[#allocation4] sm:$0x3] %vm377, %v776
  %s779 = scalar_lea.vmem [#allocation7], 2
  %780 = vst.msk [vmem:[%s779] sm:$0x3] %vm377, %v764
  %v781 = vld [vmem:[#allocation6] sm:$0x3]
  %v782 = vxor.u32 %v718, 2147483648
  %v783 = vmul.f32 %v782, 1.442695
  %v784 = vpow.pop %v783
  %v785 = vadd.f32 %v784, 1.0
  %v786 = vrcp.pop %v785
  %v787 = vmul.f32 1.0, %v786
  %v788 = vtanh.pop %v718
  %v791 = vunpack.c.l.s4 1983009808
  %v792 = vunpack.c.0.s8 %v791
  %v793 = vlaneseq
  %v794 = vshrl.u32 %v793, 7
  %v795 = vsub.s32 %v792, %v794
  %v796 = vrot.slane %v781, %v795
  %797 = vrot.lane.b32.xlu0 %v796, 32
  %v798 = vpop.permute.xlu0 %797
  %v800 = vmul.f32 %v787, %v798
  %802 = vrot.lane.b32.xlu0 %v788, 64
  %v803 = vpop.permute.xlu0 %802
  %v805 = vmul.f32 %v787, %v803
  %807 = vrot.lane.b32.xlu0 %v805, 32
  %v808 = vpop.permute.xlu0 %807
  %v810 = vadd.f32 %v800, %v808
  %v811 = vtanh.pop %v810
  %813 = vrot.lane.b32.xlu0 %v811, 64
  %v814 = vpop.permute.xlu0 %813
  %v816 = vmul.f32 %v787, %v814
  %v819 = vunpack.c.l.s4 1983009808
  %v820 = vunpack.c.0.s8 %v819
  %v821 = vlaneseq
  %v822 = vshrl.u32 %v821, 7
  %v823 = vsub.s32 %v820, %v822
  %v824 = vrot.slane %v816, %v823
  %825 = vrot.lane.b32.xlu0 %v824, 32
  %v826 = vpop.permute.xlu0 %825
  %828 = vst.msk [vmem:[#allocation5] sm:$0x3] %vm377, %v826
  %v831 = vunpack.c.l.s4 1983009808
  %v832 = vunpack.c.0.s8 %v831
  %v833 = vlaneseq
  %v834 = vshrl.u32 %v833, 7
  %v835 = vsub.s32 %v832, %v834
  %v836 = vrot.slane %v810, %v835
  %837 = vrot.lane.b32.xlu0 %v836, 96
  %v838 = vpop.permute.xlu0 %837
  %840 = vst.msk [vmem:[#allocation6] sm:$0x3] %vm377, %v838
  %s841 = scalar_lea.vmem [#allocation8], 2
  %842 = vst.msk [vmem:[%s841] sm:$0x3] %vm377, %v826
  %v843 = vld [vmem:[#allocation3] sm:$0x3]
  %v844 = vld [vmem:[#allocation5] sm:$0x3]
  %846 = vrot.lane.b32.xlu0 %v844, 32
  %v847 = vpop.permute.xlu0 %846
  %v849 = vsel %vm388, %v843, %v847
  %v850 = vpack.c.bf16 %v849, %v849
  %v851 = vld [vmem:[%s3] sm:$0xff]
  %v852 = vld [vmem:[%s3 + $0x8] sm:$0xff]
  %v853 = vld [vmem:[%s3 + $0x10] sm:$0xff]
  %v854 = vld [vmem:[%s3 + $0x18] sm:$0xff]
  %v855 = vld [vmem:[%s3 + $0x20] sm:$0xff]
  %v856 = vld [vmem:[%s3 + $0x28] sm:$0xff]
  %v857 = vld [vmem:[%s3 + $0x30] sm:$0xff]
  %v858 = vld [vmem:[%s3 + $0x38] sm:$0xff]
  %v867 = vunpack.c.l.b16 %v851
  %v868 = vunpack.c.h.b16 %v851
  %v869 = vunpack.c.l.b16 %v852
  %v870 = vunpack.c.h.b16 %v852
  %v871 = vunpack.c.l.b16 %v853
  %v872 = vunpack.c.h.b16 %v853
  %v873 = vunpack.c.l.b16 %v854
  %v874 = vunpack.c.h.b16 %v854
  %v875 = vunpack.c.l.b16 %v855
  %v876 = vunpack.c.h.b16 %v855
  %v877 = vunpack.c.l.b16 %v856
  %v878 = vunpack.c.h.b16 %v856
  %v879 = vunpack.c.l.b16 %v857
  %v880 = vunpack.c.h.b16 %v857
  %v881 = vunpack.c.l.b16 %v858
  %v882 = vunpack.c.h.b16 %v858
  %v883 = vpack.c.b16 %v869, %v867
  %v884 = vpack.c.b16 %v870, %v868
  %v885 = vpack.c.b16 %v873, %v871
  %v886 = vpack.c.b16 %v874, %v872
  %v887 = vpack.c.b16 %v877, %v875
  %v888 = vpack.c.b16 %v878, %v876
  %v889 = vpack.c.b16 %v881, %v879
  %v890 = vpack.c.b16 %v882, %v880
  %v900 = vsel %vm80, %v850, 0
  %902 = vmatprep.subr.bf16.mxu0 0
  %903 = vmatpush1.bf16.msra.mxu0 0
  %904 = vmatprep.subr.bf16.mxu0 0
  %905 = vmatpush1.bf16.msra.mxu0 0
  %906 = vmatprep.subr.bf16.mxu0 0
  %907 = vmatpush1.bf16.msra.mxu0 0
  %908 = vmatprep.subr.bf16.mxu0 0
  %909 = vmatpush1.bf16.msra.mxu0 0
  %910 = vmatprep.subr.bf16.mxu0 %v890
  %911 = vmatpush1.bf16.msra.mxu0 %v889
  %912 = vmatprep.subr.bf16.mxu0 %v888
  %913 = vmatpush1.bf16.msra.mxu0 %v887
  %914 = vmatprep.subr.bf16.mxu0 %v886
  %915 = vmatpush1.bf16.msra.mxu0 %v885
  %916 = vmatprep.subr.bf16.mxu0 %v884
  %917 = vmatpush1.bf16.msra.mxu0 %v883
  %918 = vmatprep.subr.bf16.mxu0 0
  %919 = vmatpush2.bf16.msra.mxu0 0
  %920 = vmatprep.subr.bf16.mxu0 0
  %921 = vmatpush2.bf16.msra.mxu0 0
  %922 = vmatprep.subr.bf16.mxu0 0
  %923 = vmatpush2.bf16.msra.mxu0 0
  %924 = vmatprep.subr.bf16.mxu0 0
  %925 = vmatpush2.bf16.msra.mxu0 0
  %926 = vmatprep.subr.bf16.mxu0 0
  %927 = vmatpush2.bf16.msra.mxu0 0
  %928 = vmatprep.subr.bf16.mxu0 0
  %929 = vmatpush2.bf16.msra.mxu0 0
  %930 = vmatprep.subr.bf16.mxu0 0
  %931 = vmatpush2.bf16.msra.mxu0 0
  %932 = vmatprep.subr.bf16.mxu0 0
  %933 = vmatpush2.bf16.msra.mxu0 0
  %934 = vmatprep.mubr.bf16.mxu0 0
  %935 = vmatmul.mubr.bf16.gmra.mxu0 %v900
  %v936 = vpop.f32.mrf.mxu0
  %v937 = vadd.f32 0.0, %v936
  %v938 = vpop.f32.mrf.mxu0
  %v939 = vadd.f32 0.0, %v938
  %v940 = vpop.f32.mrf.mxu0
  %v941 = vpop.f32.mrf.mxu0
  %942 = vdwg.mxu0
  %v943 = vld [vmem:[%s375] sm:$0xf]
  %v944 = vadd.f32 %v943, %v937
  %v945 = vld [vmem:[#allocation2] sm:$0xf]
  %v947 = vrot.slane %v945, 2
  %v949 = vadd.f32 %v947, %v939
  %v950 = vld [vmem:[#allocation4] sm:$0x3]
  %v951 = vxor.u32 %v944, 2147483648
  %v952 = vmul.f32 %v951, 1.442695
  %v953 = vpow.pop %v952
  %v954 = vadd.f32 %v953, 1.0
  %v955 = vrcp.pop %v954
  %v956 = vmul.f32 1.0, %v955
  %v957 = vtanh.pop %v944
  %v960 = vunpack.c.l.s4 1983009808
  %v961 = vunpack.c.0.s8 %v960
  %v962 = vlaneseq
  %v963 = vshrl.u32 %v962, 7
  %v964 = vsub.s32 %v961, %v963
  %v965 = vrot.slane %v950, %v964
  %966 = vrot.lane.b32.xlu0 %v965, 32
  %v967 = vpop.permute.xlu0 %966
  %v969 = vmul.f32 %v956, %v967
  %971 = vrot.lane.b32.xlu0 %v957, 64
  %v972 = vpop.permute.xlu0 %971
  %v974 = vmul.f32 %v956, %v972
  %976 = vrot.lane.b32.xlu0 %v974, 32
  %v977 = vpop.permute.xlu0 %976
  %v979 = vadd.f32 %v969, %v977
  %v980 = vtanh.pop %v979
  %982 = vrot.lane.b32.xlu0 %v980, 64
  %v983 = vpop.permute.xlu0 %982
  %v985 = vmul.f32 %v956, %v983
  %v988 = vunpack.c.l.s4 1983009808
  %v989 = vunpack.c.0.s8 %v988
  %v990 = vlaneseq
  %v991 = vshrl.u32 %v990, 7
  %v992 = vsub.s32 %v989, %v991
  %v993 = vrot.slane %v985, %v992
  %994 = vrot.lane.b32.xlu0 %v993, 32
  %v995 = vpop.permute.xlu0 %994
  %997 = vst.msk [vmem:[#allocation3] sm:$0x3] %vm377, %v995
  %v1000 = vunpack.c.l.s4 1983009808
  %v1001 = vunpack.c.0.s8 %v1000
  %v1002 = vlaneseq
  %v1003 = vshrl.u32 %v1002, 7
  %v1004 = vsub.s32 %v1001, %v1003
  %v1005 = vrot.slane %v979, %v1004
  %1006 = vrot.lane.b32.xlu0 %v1005, 96
  %v1007 = vpop.permute.xlu0 %1006
  %1009 = vst.msk [vmem:[#allocation4] sm:$0x3] %vm377, %v1007
  %s1010 = scalar_lea.vmem [#allocation7], 4
  %1011 = vst.msk [vmem:[%s1010] sm:$0x3] %vm377, %v995
  %v1012 = vld [vmem:[#allocation6] sm:$0x3]
  %v1013 = vxor.u32 %v949, 2147483648
  %v1014 = vmul.f32 %v1013, 1.442695
  %v1015 = vpow.pop %v1014
  %v1016 = vadd.f32 %v1015, 1.0
  %v1017 = vrcp.pop %v1016
  %v1018 = vmul.f32 1.0, %v1017
  %v1019 = vtanh.pop %v949
  %v1022 = vunpack.c.l.s4 1983009808
  %v1023 = vunpack.c.0.s8 %v1022
  %v1024 = vlaneseq
  %v1025 = vshrl.u32 %v1024, 7
  %v1026 = vsub.s32 %v1023, %v1025
  %v1027 = vrot.slane %v1012, %v1026
  %1028 = vrot.lane.b32.xlu0 %v1027, 32
  %v1029 = vpop.permute.xlu0 %1028
  %v1031 = vmul.f32 %v1018, %v1029
  %1033 = vrot.lane.b32.xlu0 %v1019, 64
  %v1034 = vpop.permute.xlu0 %1033
  %v1036 = vmul.f32 %v1018, %v1034
  %1038 = vrot.lane.b32.xlu0 %v1036, 32
  %v1039 = vpop.permute.xlu0 %1038
  %v1041 = vadd.f32 %v1031, %v1039
  %v1042 = vtanh.pop %v1041
  %1044 = vrot.lane.b32.xlu0 %v1042, 64
  %v1045 = vpop.permute.xlu0 %1044
  %v1047 = vmul.f32 %v1018, %v1045
  %v1050 = vunpack.c.l.s4 1983009808
  %v1051 = vunpack.c.0.s8 %v1050
  %v1052 = vlaneseq
  %v1053 = vshrl.u32 %v1052, 7
  %v1054 = vsub.s32 %v1051, %v1053
  %v1055 = vrot.slane %v1047, %v1054
  %1056 = vrot.lane.b32.xlu0 %v1055, 32
  %v1057 = vpop.permute.xlu0 %1056
  %1059 = vst.msk [vmem:[#allocation5] sm:$0x3] %vm377, %v1057
  %v1062 = vunpack.c.l.s4 1983009808
  %v1063 = vunpack.c.0.s8 %v1062
  %v1064 = vlaneseq
  %v1065 = vshrl.u32 %v1064, 7
  %v1066 = vsub.s32 %v1063, %v1065
  %v1067 = vrot.slane %v1041, %v1066
  %1068 = vrot.lane.b32.xlu0 %v1067, 96
  %v1069 = vpop.permute.xlu0 %1068
  %1071 = vst.msk [vmem:[#allocation6] sm:$0x3] %vm377, %v1069
  %1072 = vst.msk [vmem:[#allocation8] sm:$0x3] %vm377, %v1057
  %v1073 = vld [vmem:[#allocation7] sm:$0x3]
  %v1074 = vld [vmem:[#allocation7 + $0x2] sm:$0x3]
  %v1075 = vld [vmem:[#allocation7 + $0x4] sm:$0x3]
  %v1076 = vld [vmem:[#allocation8] sm:$0x3]
  %v1077 = vld [vmem:[#allocation8 + $0x2] sm:$0x3]
  %v1078 = vld [vmem:[#allocation8 + $0x4] sm:$0x3]
  %1082 = vrot.lane.b32.xlu0 %v1076, 32
  %v1083 = vpop.permute.xlu0 %1082
  %1084 = vrot.lane.b32.xlu0 %v1077, 32
  %v1085 = vpop.permute.xlu0 %1084
  %1086 = vrot.lane.b32.xlu0 %v1078, 32
  %v1087 = vpop.permute.xlu0 %1086
  %v1091 = vsel %vm388, %v1073, %v1083
  %v1092 = vsel %vm388, %v1074, %v1085
  %v1093 = vsel %vm388, %v1075, %v1087
  %vm1094 = vcmask 517120
  %1095 = vst.msk [vmem:[%s4] sm:$0x3] %vm1094, %v1091
  %1096 = vst.msk [vmem:[%s4 + $0x2] sm:$0x3] %vm1094, %v1092
  %1097 = vst.msk [vmem:[%s4 + $0x4] sm:$0x3] %vm1094, %v1093
  // Predicated region
  $region18: #{encoder_forward.14} parent=0 // pred_check
    _
  $region19: #{encoder_forward.14} parent=0 // pred_check_branch
    %1099 = sbr.rel (0) target = $region21
  $region20: #{encoder_forward.14} parent=0 // pred_region
    _
  $region21: #{encoder_forward.14} parent=0 // pred_fallthru
    _
  // Predicated region
  $region22: #{encoder_forward.14} parent=0 // pred_check
    _
  $region23: #{encoder_forward.14} parent=0 // pred_check_branch
    %1101 = sbr.rel (0) target = $region25
  $region24: #{encoder_forward.14} parent=0 // pred_region
    _
  $region25: #{encoder_forward.14} parent=0 // pred_fallthru
    _

</llo_original>
